<compile_context>
chip_gen: v7x
topology: tpu7x:2x2x1
jax: 0.10.0
libtpu: 0.0.40
codegen_flags: <defaults>
</compile_context>

<pallas_src>
import functools

import jax
import jax.numpy as jnp
from jax import lax
from jax.experimental import pallas as pl
from jax.experimental.pallas import tpu as pltpu

BN_EPS = 1e-5

# MXU operand dtype: bf16 operands + f32 accumulation (native on v5e/v6e/v7x).
MXU_DTYPE = jnp.bfloat16
# Dtype of conv outputs that round-trip HBM between passes (halves activation traffic).
ACT_DTYPE = jnp.bfloat16
# Scoped VMEM limit: safe on v5e/v6e (128 MiB physical) and v7x (64 MiB physical).
VMEM_LIMIT_BYTES = 32 * 1024 * 1024


def _pick_row_tile(H, W, cin, cout, *, budget_bytes=20 << 20):
    """Largest row tile TR dividing H whose double-buffered working set fits the budget."""
    best = 1
    for tr in range(1, H + 1):
        if H % tr:
            continue
        halo = (tr + 2) * (W + 2) * cin * 4                 # f32 halo scratch
        per_step = (tr * W * cin * 4                        # main input block (f32 worst case)
                    + 2 * W * cin * 4                       # two halo rows
                    + tr * W * cout * 2                     # bf16 conv output block
                    + tr * W * max(cin, cout) * 4)          # f32 final output block
        if halo + 2 * per_step <= budget_bytes:             # x2: double-buffered pipeline
            best = tr
    return best


# ---------------------------------------------------------------------------
# Kernel 1: 3x3 conv on one (image, row-block) with in-kernel zero padding,
#           optional fused input BN+ReLU, per-block BN partial stats,
#           optional 1x1-residual partial stats (no residual HBM writeback).
# ---------------------------------------------------------------------------
def _make_conv3x3_kernel(*, tr, width, fuse_bn_relu_in, residual_stats):
    """Ref order: x_main, x_top, x_bot, w, [s_in, t_in], [w_res], y, stats, [rstats], xhal.

    x_main : [1, TR, W, Cin]   current row block
    x_top  : [1, 1,  W, Cin]   row above (edge-clamped; zeroed in-kernel at the border)
    x_bot  : [1, 1,  W, Cin]   row below (edge-clamped; zeroed in-kernel at the border)
    w      : [9, Cin, Cout]    resident 3x3 weights, tap-major (dy*3+dx)
    s_in,t_in : [1, Cin]       fused previous-layer BN scale/shift (h = max(x*s+t, 0))
    w_res  : [Cin, Cres]       resident 1x1 residual weights (stats only)
    y      : [1, TR, W, Cout]  raw conv output (pre-BN), ACT_DTYPE
    stats  : [1, 1, 2, Cout]   per-block (sum, sum of squares) of the f32 accumulator
    rstats : [1, 1, 2, Cres]   per-block stats of the 1x1 residual conv
    xhal   : [TR+2, W+2, Cin]  f32 VMEM scratch: zero-padded halo tile
    """
    TR, W = tr, width

    def kernel(*refs):
        it = iter(refs)
        x_main = next(it)
        x_top = next(it)
        x_bot = next(it)
        w_ref = next(it)
        if fuse_bn_relu_in:
            s_in_ref = next(it)
            t_in_ref = next(it)
        if residual_stats:
            w_res_ref = next(it)
        y_ref = next(it)
        stats_ref = next(it)
        if residual_stats:
            rstats_ref = next(it)
        xhal = next(it)

        Cin = x_main.shape[3]
        Cout = y_ref.shape[3]
        r = pl.program_id(1)
        nrow = pl.num_programs(1)

        if fuse_bn_relu_in:
            s_in = s_in_ref[...].reshape(1, 1, Cin)
            t_in = t_in_ref[...].reshape(1, 1, Cin)

            def act(v):                       # previous layer's BN + ReLU, fused here
                return jnp.maximum(v * s_in + t_in, 0.0)
        else:
            def act(v):
                return v

        # ---- assemble the zero-padded halo tile in VMEM (no jnp.pad in HBM) -----------
        zero_col = jnp.zeros((TR + 2, 1, Cin), jnp.float32)
        xhal[:, 0:1, :] = zero_col                       # left zero-pad column
        xhal[:, W + 1:W + 2, :] = zero_col               # right zero-pad column

        # One upcast per element (no full-tile astype copy kept around); the activation
        # (and its BN+ReLU when fused) is applied BEFORE padding, so the halo zeros are
        # the zero padding of the activation, exactly as PyTorch pads conv2's input.
        xhal[1:TR + 1, 1:W + 1, :] = act(x_main[0].astype(jnp.float32))

        top = act(x_top[0].astype(jnp.float32))          # [1, W, Cin]
        bot = act(x_bot[0].astype(jnp.float32))
        xhal[0:1, 1:W + 1, :] = jnp.where(r > 0, top, 0.0)
        xhal[TR + 1:TR + 2, 1:W + 1, :] = jnp.where(r < nrow - 1, bot, 0.0)

        # ---- 9 accumulating MXU matmuls on shifted views (K = Cin each) ---------------
        # No patch scratch: avoids writing/re-reading 9x TR*W*Cin of VMEM and all the
        # lane-misaligned column stores of the previous version.  The per-tap f32->bf16
        # cast is VPU filler that overlaps the MXU.
        acc = jnp.zeros((TR * W, Cout), jnp.float32)
        for dy in range(3):
            for dx in range(3):
                tap = xhal[dy:dy + TR, dx:dx + W, :].reshape(TR * W, Cin)
                acc = acc + jnp.dot(tap.astype(MXU_DTYPE), w_ref[dy * 3 + dx],
                                    preferred_element_type=jnp.float32)

        y_ref[...] = acc.reshape(1, TR, W, Cout).astype(y_ref.dtype)

        # Per-block partial BatchNorm statistics (f32, pre-cast accumulator); the tiny
        # cross-block reduction happens outside so both grid axes stay "parallel".
        stats_ref[0, 0, 0:1, :] = jnp.sum(acc, axis=0, keepdims=True)
        stats_ref[0, 0, 1:2, :] = jnp.sum(acc * acc, axis=0, keepdims=True)

        if residual_stats:
            # 1x1 residual conv: only its statistics leave the kernel; the activation is
            # recomputed in the final fused pass instead of round-tripping HBM.
            xm = x_main[0].reshape(TR * W, Cin).astype(MXU_DTYPE)
            rv = jnp.dot(xm, w_res_ref[...], preferred_element_type=jnp.float32)
            rstats_ref[0, 0, 0:1, :] = jnp.sum(rv, axis=0, keepdims=True)
            rstats_ref[0, 0, 1:2, :] = jnp.sum(rv * rv, axis=0, keepdims=True)

    return kernel


def conv3x3_pass(x, w_oihw, *, row_tile, bn_in=None, w_res_oihw=None):
    """Conv2d(3x3, padding=1) over NHWC `x`.

    Bias is intentionally NOT added: the training-mode BatchNorm that always follows
    cancels it exactly.  Optionally fuses the previous BN+ReLU onto the input and/or
    emits the per-channel batch statistics of the 1x1 residual conv of `x`.

    Returns (y [N,H,W,Cout] ACT_DTYPE, (mean, var), (mean_r, var_r) or None).
    """
    N, H, W, Cin = x.shape
    Cout = w_oihw.shape[0]
    TR = row_tile
    assert H % TR == 0, (H, TR)
    R = H // TR
    fuse = bn_in is not None
    res = w_res_oihw is not None

    # [Cout, Cin, kh, kw] -> [kh*kw, Cin, Cout]  (tap-major; matches the kernel loop)
    wr = jnp.transpose(w_oihw, (2, 3, 1, 0)).reshape(9, Cin, Cout).astype(MXU_DTYPE)

    in_specs = [
        pl.BlockSpec((1, TR, W, Cin), lambda n, r: (n, r, 0, 0)),
        # 1-row halo above/below the block; index clamped at the image edge (the kernel
        # zeroes the halo when the block touches the edge).
        pl.BlockSpec((1, 1, W, Cin),
                     lambda n, r: (n, jnp.maximum(r * TR - 1, 0), 0, 0)),
        pl.BlockSpec((1, 1, W, Cin),
                     lambda n, r: (n, jnp.minimum(r * TR + TR, H - 1), 0, 0)),
        pl.BlockSpec((9, Cin, Cout), lambda n, r: (0, 0, 0)),         # resident weights
    ]
    args = [x, x, x, wr]

    if fuse:
        s_in, t_in = bn_in
        in_specs += [pl.BlockSpec((1, Cin), lambda n, r: (0, 0)),
                     pl.BlockSpec((1, Cin), lambda n, r: (0, 0))]
        args += [s_in.reshape(1, Cin).astype(jnp.float32),
                 t_in.reshape(1, Cin).astype(jnp.float32)]
    if res:
        Cres = w_res_oihw.shape[0]
        wres = jnp.transpose(w_res_oihw[:, :, 0, 0], (1, 0)).astype(MXU_DTYPE)
        in_specs += [pl.BlockSpec((Cin, Cres), lambda n, r: (0, 0))]
        args += [wres]

    out_specs = [
        pl.BlockSpec((1, TR, W, Cout), lambda n, r: (n, r, 0, 0)),
        pl.BlockSpec((1, 1, 2, Cout), lambda n, r: (n, r, 0, 0)),
    ]
    out_shape = [
        jax.ShapeDtypeStruct((N, H, W, Cout), ACT_DTYPE),
        jax.ShapeDtypeStruct((N, R, 2, Cout), jnp.float32),
    ]
    if res:
        out_specs += [pl.BlockSpec((1, 1, 2, Cres), lambda n, r: (n, r, 0, 0))]
        out_shape += [jax.ShapeDtypeStruct((N, R, 2, Cres), jnp.float32)]

    kernel = _make_conv3x3_kernel(tr=TR, width=W,
                                  fuse_bn_relu_in=fuse, residual_stats=res)

    outs = pl.pallas_call(
        kernel,
        grid=(N, R),
        in_specs=in_specs,
        out_specs=out_specs,
        out_shape=out_shape,
        scratch_shapes=[pltpu.VMEM((TR + 2, W + 2, Cin), jnp.float32)],
        compiler_params=pltpu.CompilerParams(
            dimension_semantics=("parallel", "parallel"),
            vmem_limit_bytes=VMEM_LIMIT_BYTES),
    )(*args)

    count = float(N * H * W)

    def finish(stats):
        tot = jnp.sum(stats, axis=(0, 1))                     # [2, C]
        mean = tot[0] / count
        var = jnp.maximum(tot[1] / count - mean * mean, 0.0)  # biased (training) var
        return mean, var

    if res:
        y, st, rst = outs
        return y, finish(st), finish(rst)
    y, st = outs
    return y, finish(st), None


# ---------------------------------------------------------------------------
# Kernel 2: elementwise BN (precomputed scale/shift) + ReLU.
# ---------------------------------------------------------------------------
def _bn_relu_kernel(y_ref, s_ref, t_ref, o_ref):
    C = y_ref.shape[-1]
    s = s_ref[...].reshape(1, 1, 1, C)
    t = t_ref[...].reshape(1, 1, 1, C)
    o_ref[...] = jnp.maximum(y_ref[...].astype(jnp.float32) * s + t, 0.0
                             ).astype(o_ref.dtype)


# ---------------------------------------------------------------------------
# Kernel 3 (residual=True): ReLU(BN2(conv2)) + BN_r(1x1 conv recomputed in-kernel).
# ---------------------------------------------------------------------------
def _bn_relu_residual_kernel(y_ref, x_ref, wres_ref, s_ref, t_ref, sr_ref, tr_ref,
                             o_ref):
    _, TR, W, C2 = y_ref.shape
    Cin = x_ref.shape[-1]
    s = s_ref[...].reshape(1, 1, 1, C2)
    t = t_ref[...].reshape(1, 1, 1, C2)
    sr = sr_ref[...].reshape(1, 1, 1, C2)
    tr_ = tr_ref[...].reshape(1, 1, 1, C2)

    main = jnp.maximum(y_ref[...].astype(jnp.float32) * s + t, 0.0)
    # Recompute the 1x1 residual conv from the resident weights (same bf16 operands the
    # stats were computed from) instead of reading a second activation from HBM.
    xm = x_ref[0].reshape(TR * W, Cin).astype(MXU_DTYPE)
    rv = jnp.dot(xm, wres_ref[...], preferred_element_type=jnp.float32)
    rv = rv.reshape(1, TR, W, C2)
    o_ref[...] = (main + rv * sr + tr_).astype(o_ref.dtype)


def _bn_affine(mean, var, gamma, beta):
    inv = lax.rsqrt(var + BN_EPS)
    scale = (gamma * inv).astype(jnp.float32)
    shift = (beta - mean * gamma * inv).astype(jnp.float32)
    return scale.reshape(1, -1), shift.reshape(1, -1)


def bn_relu_pass(y, scale, shift, *, row_tile, out_dtype=jnp.float32):
    N, H, W, C = y.shape
    TR = row_tile
    R = H // TR
    img = pl.BlockSpec((1, TR, W, C), lambda n, r: (n, r, 0, 0))
    vec = pl.BlockSpec((1, C), lambda n, r: (0, 0))
    return pl.pallas_call(
        _bn_relu_kernel,
        grid=(N, R),
        in_specs=[img, vec, vec],
        out_specs=img,
        out_shape=jax.ShapeDtypeStruct((N, H, W, C), out_dtype),
        compiler_params=pltpu.CompilerParams(
            dimension_semantics=("parallel", "parallel"),
            vmem_limit_bytes=VMEM_LIMIT_BYTES),
    )(y, scale, shift)


def bn_relu_residual_pass(y, scale, shift, x, w_res_oihw, scale_r, shift_r,
                          *, row_tile, out_dtype=jnp.float32):
    N, H, W, C2 = y.shape
    Cin = x.shape[-1]
    TR = row_tile
    R = H // TR
    wres = jnp.transpose(w_res_oihw[:, :, 0, 0], (1, 0)).astype(MXU_DTYPE)
    imgy = pl.BlockSpec((1, TR, W, C2), lambda n, r: (n, r, 0, 0))
    imgx = pl.BlockSpec((1, TR, W, Cin), lambda n, r: (n, r, 0, 0))
    wsp = pl.BlockSpec((Cin, C2), lambda n, r: (0, 0))
    vec = pl.BlockSpec((1, C2), lambda n, r: (0, 0))
    return pl.pallas_call(
        _bn_relu_residual_kernel,
        grid=(N, R),
        in_specs=[imgy, imgx, wsp, vec, vec, vec, vec],
        out_specs=imgy,
        out_shape=jax.ShapeDtypeStruct((N, H, W, C2), out_dtype),
        compiler_params=pltpu.CompilerParams(
            dimension_semantics=("parallel", "parallel"),
            vmem_limit_bytes=VMEM_LIMIT_BYTES),
    )(y, x, wres, scale, shift, scale_r, shift_r)


# ---------------------------------------------------------------------------
# Forward pass (BatchNorm in training mode, matching a fresh PyTorch module).
# ---------------------------------------------------------------------------
def double_conv_forward(x_nchw, params, residual=False, row_tile=None):
    x = jnp.transpose(x_nchw, (0, 2, 3, 1)).astype(jnp.float32)      # NCHW -> NHWC
    N, H, W, C0 = x.shape
    C1 = params["c1_w"].shape[0]
    C2 = params["c2_w"].shape[0]
    if row_tile is None:
        row_tile = _pick_row_tile(H, W, max(C0, C1), max(C1, C2))
    TR = row_tile

    # conv1 (+ residual 1x1 stats, sharing the same read of x; no bias: BN cancels it).
    w_res = params["res_w"] if residual else None
    y1, (m1, v1), rstats = conv3x3_pass(x, params["c1_w"], row_tile=TR,
                                        w_res_oihw=w_res)
    s1, t1 = _bn_affine(m1, v1, params["bn1_g"], params["bn1_b"])

    # conv2 with BN1+ReLU fused onto its input: h1 never round-trips HBM.
    y2, (m2, v2), _ = conv3x3_pass(y1, params["c2_w"], row_tile=TR, bn_in=(s1, t1))
    s2, t2 = _bn_affine(m2, v2, params["bn2_g"], params["bn2_b"])

    if residual:
        mr, vr = rstats
        sr, tr_ = _bn_affine(mr, vr, params["bnr_g"], params["bnr_b"])
        out = bn_relu_residual_pass(y2, s2, t2, x, params["res_w"], sr, tr_,
                                    row_tile=TR)
    else:
        out = bn_relu_pass(y2, s2, t2, row_tile=TR)

    return jnp.transpose(out, (0, 3, 1, 2))                          # NHWC -> NCHW


# ---------------------------------------------------------------------------
# Pure-JAX f32 reference (faithful to the PyTorch module, incl. conv biases).
# ---------------------------------------------------------------------------
def _reference(x_nchw, params, residual):
    def conv(x, w, b, pad):
        y = lax.conv_general_dilated(
            x, w, window_strides=(1, 1), padding=[(pad, pad), (pad, pad)],
            dimension_numbers=("NCHW", "OIHW", "NCHW"))
        return y + b.reshape(1, -1, 1, 1)

    def bn(y, g, b):                                   # training mode, biased variance
        mean = jnp.mean(y, axis=(0, 2, 3), keepdims=True)
        var = jnp.mean((y - mean) ** 2, axis=(0, 2, 3), keepdims=True)
        return (y - mean) * lax.rsqrt(var + BN_EPS) * g.reshape(1, -1, 1, 1) \
            + b.reshape(1, -1, 1, 1)

    h = jax.nn.relu(bn(conv(x_nchw, params["c1_w"], params["c1_b"], 1),
                       params["bn1_g"], params["bn1_b"]))
    out = jax.nn.relu(bn(conv(h, params["c2_w"], params["c2_b"], 1),
                         params["bn2_g"], params["bn2_b"]))
    if residual:
        out = out + bn(conv(x_nchw, params["res_w"], params["res_b"], 0),
                       params["bnr_g"], params["bnr_b"])
    return out


# ---------------------------------------------------------------------------
# Deterministic parameter init (shapes match the PyTorch module; conv biases exist for
# parity but are exactly cancelled by the training-mode BatchNorm, so the kernels skip
# adding them).
# ---------------------------------------------------------------------------
def init_params(key, channels):
    c0, c1, c2 = channels
    ks = jax.random.split(key, 10)
    return {
        "c1_w": 0.1 * jax.random.normal(ks[0], (c1, c0, 3, 3), jnp.float32),
        "c1_b": 0.05 * jax.random.normal(ks[1], (c1,), jnp.float32),
        "bn1_g": 1.0 + 0.1 * jax.random.normal(ks[2], (c1,), jnp.float32),
        "bn1_b": 0.05 * jax.random.normal(ks[3], (c1,), jnp.float32),
        "c2_w": 0.1 * jax.random.normal(ks[4], (c2, c1, 3, 3), jnp.float32),
        "c2_b": 0.05 * jax.random.normal(ks[5], (c2,), jnp.float32),
        "bn2_g": 1.0 + 0.1 * jax.random.normal(ks[6], (c2,), jnp.float32),
        "bn2_b": 0.05 * jax.random.normal(ks[7], (c2,), jnp.float32),
        # residual branch: Conv2d(c0, c2, 1) + BN(c2) (used only when residual=True)
        "res_w": 0.1 * jax.random.normal(ks[8], (c2, c0, 1, 1), jnp.float32),
        "res_b": 0.05 * jax.random.normal(ks[9], (c2,), jnp.float32),
        "bnr_g": jnp.ones((c2,), jnp.float32),
        "bnr_b": jnp.zeros((c2,), jnp.float32),
    }


if __name__ == "__main__":
    key = jax.random.PRNGKey(0)
    k_x, k_p = jax.random.split(key)

    N, H, W = 2, 16, 16
    channels = (4, 8, 4)                       # DoubleConv(channels=(in, mid, out))
    x = jax.random.normal(k_x, (N, channels[0], H, W), jnp.float32)
    params = init_params(k_p, channels)

    # residual=False, auto row tile (whole image per block at this small size).
    fwd = jax.jit(functools.partial(double_conv_forward, params=params,
                                    residual=False))
    out = jax.block_until_ready(fwd(x))
    assert out.shape == (N, channels[2], H, W), out.shape
    assert bool(jnp.all(jnp.isfinite(out)))
    ref = _reference(x, params, residual=False)
    assert bool(jnp.allclose(out, ref, rtol=5e-2, atol=5e-2)), \
        float(jnp.max(jnp.abs(out - ref)))

    # residual=True with an explicit row tile of 8: exercises the 1-row halo stitching
    # across row blocks and the fused residual (stats-only 1x1 + in-kernel recompute).
    fwd_res = jax.jit(functools.partial(double_conv_forward, params=params,
                                        residual=True, row_tile=8))
    out_res = jax.block_until_ready(fwd_res(x))
    assert out_res.shape == (N, channels[2], H, W), out_res.shape
    assert bool(jnp.all(jnp.isfinite(out_res)))
    ref_res = _reference(x, params, residual=True)
    assert bool(jnp.allclose(out_res, ref_res, rtol=5e-2, atol=5e-2)), \
        float(jnp.max(jnp.abs(out_res - ref_res)))

    print("KERNEL_OK")
</pallas_src>

<mosaic_0001>
module attributes {stable_mosaic.version = 11 : i64} {
  func.func @kernel(%arg0: i32, %arg1: i32, %arg2: memref<1x16x16x4xf32, #tpu.memory_space<vmem>>, %arg3: memref<1x1x16x4xf32, #tpu.memory_space<vmem>>, %arg4: memref<1x1x16x4xf32, #tpu.memory_space<vmem>>, %arg5: memref<9x4x8xbf16, #tpu.memory_space<vmem>>, %arg6: memref<1x16x16x8xbf16, #tpu.memory_space<vmem>>, %arg7: memref<1x1x2x8xf32, #tpu.memory_space<vmem>>, %arg8: memref<18x18x4xf32, #tpu.memory_space<vmem>>) attributes {dimension_semantics = [#tpu.dimension_semantics<parallel>, #tpu.dimension_semantics<parallel>], iteration_bounds = array<i64: 2, 1>, scalar_prefetch = 0 : i64, scratch_operands = 1 : i64, tpu.core_type = #tpu.core_type<tc>, window_params = [{transform_indices = @transform_0, window_bounds = array<i64: 1, 16, 16, 4>}, {transform_indices = @transform_1, window_bounds = array<i64: 1, 1, 16, 4>}, {transform_indices = @transform_2, window_bounds = array<i64: 1, 1, 16, 4>}, {pipeline_mode = #tpu.pipeline_mode<synchronous>, transform_indices = @transform_3, window_bounds = array<i64: 9, 4, 8>}, {transform_indices = @transform_4, window_bounds = array<i64: 1, 16, 16, 8>}, {transform_indices = @transform_5, window_bounds = array<i64: 1, 1, 2, 8>}]} {
    %cst = arith.constant 0.000000e+00 : f32
    %0 = vector.broadcast %cst : f32 to vector<18x1x4xf32>
    %c0 = arith.constant 0 : index
    %c0_0 = arith.constant 0 : index
    %c0_1 = arith.constant 0 : index
    %1 = vector.load %arg8[%c0, %c0_0, %c0_1] : memref<18x18x4xf32, #tpu.memory_space<vmem>>, vector<18x1x4xf32>
    tpu.vector_store %arg8[%c0, %c0_0, %c0_1], %0 {strides = array<i32>} : memref<18x18x4xf32, #tpu.memory_space<vmem>>, vector<18x1x4xf32>,
    %c0_2 = arith.constant 0 : index
    %c17 = arith.constant 17 : index
    %c0_3 = arith.constant 0 : index
    %2 = vector.load %arg8[%c0_2, %c17, %c0_3] : memref<18x18x4xf32, #tpu.memory_space<vmem>>, vector<18x1x4xf32>
    tpu.vector_store %arg8[%c0_2, %c17, %c0_3], %0 {strides = array<i32>} : memref<18x18x4xf32, #tpu.memory_space<vmem>>, vector<18x1x4xf32>,
    %c0_4 = arith.constant 0 : index
    %c0_5 = arith.constant 0 : index
    %c0_6 = arith.constant 0 : index
    %c0_7 = arith.constant 0 : index
    %3 = vector.load %arg2[%c0_4, %c0_5, %c0_6, %c0_7] : memref<1x16x16x4xf32, #tpu.memory_space<vmem>>, vector<1x16x16x4xf32>
    %4 = vector.shape_cast %3 : vector<1x16x16x4xf32> to vector<16x16x4xf32>
    %c1 = arith.constant 1 : index
    %c1_8 = arith.constant 1 : index
    %c0_9 = arith.constant 0 : index
    %5 = vector.load %arg8[%c1, %c1_8, %c0_9] : memref<18x18x4xf32, #tpu.memory_space<vmem>>, vector<16x16x4xf32>
    tpu.vector_store %arg8[%c1, %c1_8, %c0_9], %4 {strides = array<i32>} : memref<18x18x4xf32, #tpu.memory_space<vmem>>, vector<16x16x4xf32>,
    %c0_10 = arith.constant 0 : index
    %c0_11 = arith.constant 0 : index
    %c0_12 = arith.constant 0 : index
    %c0_13 = arith.constant 0 : index
    %6 = vector.load %arg3[%c0_10, %c0_11, %c0_12, %c0_13] : memref<1x1x16x4xf32, #tpu.memory_space<vmem>>, vector<1x1x16x4xf32>
    %7 = vector.shape_cast %6 : vector<1x1x16x4xf32> to vector<1x16x4xf32>
    %c0_14 = arith.constant 0 : index
    %c0_15 = arith.constant 0 : index
    %c0_16 = arith.constant 0 : index
    %c0_17 = arith.constant 0 : index
    %8 = vector.load %arg4[%c0_14, %c0_15, %c0_16, %c0_17] : memref<1x1x16x4xf32, #tpu.memory_space<vmem>>, vector<1x1x16x4xf32>
    %9 = vector.shape_cast %8 : vector<1x1x16x4xf32> to vector<1x16x4xf32>
    %c0_i32 = arith.constant 0 : i32
    %10 = arith.cmpi sgt, %arg1, %c0_i32 : i32
    %cst_18 = arith.constant 0.000000e+00 : f32
    %11 = vector.broadcast %cst_18 : f32 to vector<1x16x4xf32>
    %12 = arith.select %10, %7, %11 : vector<1x16x4xf32>
    %c0_19 = arith.constant 0 : index
    %c1_20 = arith.constant 1 : index
    %c0_21 = arith.constant 0 : index
    %13 = vector.load %arg8[%c0_19, %c1_20, %c0_21] : memref<18x18x4xf32, #tpu.memory_space<vmem>>, vector<1x16x4xf32>
    tpu.vector_store %arg8[%c0_19, %c1_20, %c0_21], %12 {strides = array<i32>} : memref<18x18x4xf32, #tpu.memory_space<vmem>>, vector<1x16x4xf32>,
    %c0_i32_22 = arith.constant 0 : i32
    %14 = arith.cmpi slt, %arg1, %c0_i32_22 : i32
    %cst_23 = arith.constant 0.000000e+00 : f32
    %15 = vector.broadcast %cst_23 : f32 to vector<1x16x4xf32>
    %16 = arith.select %14, %9, %15 : vector<1x16x4xf32>
    %c17_24 = arith.constant 17 : index
    %c1_25 = arith.constant 1 : index
    %c0_26 = arith.constant 0 : index
    %17 = vector.load %arg8[%c17_24, %c1_25, %c0_26] : memref<18x18x4xf32, #tpu.memory_space<vmem>>, vector<1x16x4xf32>
    tpu.vector_store %arg8[%c17_24, %c1_25, %c0_26], %16 {strides = array<i32>} : memref<18x18x4xf32, #tpu.memory_space<vmem>>, vector<1x16x4xf32>,
    %cst_27 = arith.constant 0.000000e+00 : f32
    %18 = vector.broadcast %cst_27 : f32 to vector<256x8xf32>
    %c0_28 = arith.constant 0 : index
    %c0_29 = arith.constant 0 : index
    %c0_30 = arith.constant 0 : index
    %19 = vector.load %arg8[%c0_28, %c0_29, %c0_30] : memref<18x18x4xf32, #tpu.memory_space<vmem>>, vector<16x16x4xf32>
    %20 = vector.shape_cast %19 : vector<16x16x4xf32> to vector<256x4xf32>
    %21 = arith.truncf %20 : vector<256x4xf32> to vector<256x4xbf16>
    %c0_31 = arith.constant 0 : index
    %c0_32 = arith.constant 0 : index
    %c0_33 = arith.constant 0 : index
    %22 = vector.load %arg5[%c0_31, %c0_32, %c0_33] : memref<9x4x8xbf16, #tpu.memory_space<vmem>>, vector<1x4x8xbf16>
    %23 = vector.shape_cast %22 : vector<1x4x8xbf16> to vector<4x8xbf16>
    %cst_34 = arith.constant dense<0.000000e+00> : vector<256x8xf32>
    %24 = tpu.matmul %21, %23, %cst_34 {dimension_numbers = #tpu.dot_dimension_numbers<[1], [0], [0], [1], [0, 0, 1, 1], [], []>} : vector<256x4xbf16>, vector<4x8xbf16>, vector<256x8xf32> -> vector<256x8xf32>
    %25 = arith.addf %18, %24 : vector<256x8xf32>
    %c0_35 = arith.constant 0 : index
    %c1_36 = arith.constant 1 : index
    %c0_37 = arith.constant 0 : index
    %26 = vector.load %arg8[%c0_35, %c1_36, %c0_37] : memref<18x18x4xf32, #tpu.memory_space<vmem>>, vector<16x16x4xf32>
    %27 = vector.shape_cast %26 : vector<16x16x4xf32> to vector<256x4xf32>
    %28 = arith.truncf %27 : vector<256x4xf32> to vector<256x4xbf16>
    %c1_38 = arith.constant 1 : index
    %c0_39 = arith.constant 0 : index
    %c0_40 = arith.constant 0 : index
    %29 = vector.load %arg5[%c1_38, %c0_39, %c0_40] : memref<9x4x8xbf16, #tpu.memory_space<vmem>>, vector<1x4x8xbf16>
    %30 = vector.shape_cast %29 : vector<1x4x8xbf16> to vector<4x8xbf16>
    %cst_41 = arith.constant dense<0.000000e+00> : vector<256x8xf32>
    %31 = tpu.matmul %28, %30, %cst_41 {dimension_numbers = #tpu.dot_dimension_numbers<[1], [0], [0], [1], [0, 0, 1, 1], [], []>} : vector<256x4xbf16>, vector<4x8xbf16>, vector<256x8xf32> -> vector<256x8xf32>
    %32 = arith.addf %25, %31 : vector<256x8xf32>
    %c0_42 = arith.constant 0 : index
    %c2 = arith.constant 2 : index
    %c0_43 = arith.constant 0 : index
    %33 = vector.load %arg8[%c0_42, %c2, %c0_43] : memref<18x18x4xf32, #tpu.memory_space<vmem>>, vector<16x16x4xf32>
    %34 = vector.shape_cast %33 : vector<16x16x4xf32> to vector<256x4xf32>
    %35 = arith.truncf %34 : vector<256x4xf32> to vector<256x4xbf16>
    %c2_44 = arith.constant 2 : index
    %c0_45 = arith.constant 0 : index
    %c0_46 = arith.constant 0 : index
    %36 = vector.load %arg5[%c2_44, %c0_45, %c0_46] : memref<9x4x8xbf16, #tpu.memory_space<vmem>>, vector<1x4x8xbf16>
    %37 = vector.shape_cast %36 : vector<1x4x8xbf16> to vector<4x8xbf16>
    %cst_47 = arith.constant dense<0.000000e+00> : vector<256x8xf32>
    %38 = tpu.matmul %35, %37, %cst_47 {dimension_numbers = #tpu.dot_dimension_numbers<[1], [0], [0], [1], [0, 0, 1, 1], [], []>} : vector<256x4xbf16>, vector<4x8xbf16>, vector<256x8xf32> -> vector<256x8xf32>
    %39 = arith.addf %32, %38 : vector<256x8xf32>
    %c1_48 = arith.constant 1 : index
    %c0_49 = arith.constant 0 : index
    %c0_50 = arith.constant 0 : index
    %40 = vector.load %arg8[%c1_48, %c0_49, %c0_50] : memref<18x18x4xf32, #tpu.memory_space<vmem>>, vector<16x16x4xf32>
    %41 = vector.shape_cast %40 : vector<16x16x4xf32> to vector<256x4xf32>
    %42 = arith.truncf %41 : vector<256x4xf32> to vector<256x4xbf16>
    %c3 = arith.constant 3 : index
    %c0_51 = arith.constant 0 : index
    %c0_52 = arith.constant 0 : index
    %43 = vector.load %arg5[%c3, %c0_51, %c0_52] : memref<9x4x8xbf16, #tpu.memory_space<vmem>>, vector<1x4x8xbf16>
    %44 = vector.shape_cast %43 : vector<1x4x8xbf16> to vector<4x8xbf16>
    %cst_53 = arith.constant dense<0.000000e+00> : vector<256x8xf32>
    %45 = tpu.matmul %42, %44, %cst_53 {dimension_numbers = #tpu.dot_dimension_numbers<[1], [0], [0], [1], [0, 0, 1, 1], [], []>} : vector<256x4xbf16>, vector<4x8xbf16>, vector<256x8xf32> -> vector<256x8xf32>
    %46 = arith.addf %39, %45 : vector<256x8xf32>
    %c1_54 = arith.constant 1 : index
    %c1_55 = arith.constant 1 : index
    %c0_56 = arith.constant 0 : index
    %47 = vector.load %arg8[%c1_54, %c1_55, %c0_56] : memref<18x18x4xf32, #tpu.memory_space<vmem>>, vector<16x16x4xf32>
    %48 = vector.shape_cast %47 : vector<16x16x4xf32> to vector<256x4xf32>
    %49 = arith.truncf %48 : vector<256x4xf32> to vector<256x4xbf16>
    %c4 = arith.constant 4 : index
    %c0_57 = arith.constant 0 : index
    %c0_58 = arith.constant 0 : index
    %50 = vector.load %arg5[%c4, %c0_57, %c0_58] : memref<9x4x8xbf16, #tpu.memory_space<vmem>>, vector<1x4x8xbf16>
    %51 = vector.shape_cast %50 : vector<1x4x8xbf16> to vector<4x8xbf16>
    %cst_59 = arith.constant dense<0.000000e+00> : vector<256x8xf32>
    %52 = tpu.matmul %49, %51, %cst_59 {dimension_numbers = #tpu.dot_dimension_numbers<[1], [0], [0], [1], [0, 0, 1, 1], [], []>} : vector<256x4xbf16>, vector<4x8xbf16>, vector<256x8xf32> -> vector<256x8xf32>
    %53 = arith.addf %46, %52 : vector<256x8xf32>
    %c1_60 = arith.constant 1 : index
    %c2_61 = arith.constant 2 : index
    %c0_62 = arith.constant 0 : index
    %54 = vector.load %arg8[%c1_60, %c2_61, %c0_62] : memref<18x18x4xf32, #tpu.memory_space<vmem>>, vector<16x16x4xf32>
    %55 = vector.shape_cast %54 : vector<16x16x4xf32> to vector<256x4xf32>
    %56 = arith.truncf %55 : vector<256x4xf32> to vector<256x4xbf16>
    %c5 = arith.constant 5 : index
    %c0_63 = arith.constant 0 : index
    %c0_64 = arith.constant 0 : index
    %57 = vector.load %arg5[%c5, %c0_63, %c0_64] : memref<9x4x8xbf16, #tpu.memory_space<vmem>>, vector<1x4x8xbf16>
    %58 = vector.shape_cast %57 : vector<1x4x8xbf16> to vector<4x8xbf16>
    %cst_65 = arith.constant dense<0.000000e+00> : vector<256x8xf32>
    %59 = tpu.matmul %56, %58, %cst_65 {dimension_numbers = #tpu.dot_dimension_numbers<[1], [0], [0], [1], [0, 0, 1, 1], [], []>} : vector<256x4xbf16>, vector<4x8xbf16>, vector<256x8xf32> -> vector<256x8xf32>
    %60 = arith.addf %53, %59 : vector<256x8xf32>
    %c2_66 = arith.constant 2 : index
    %c0_67 = arith.constant 0 : index
    %c0_68 = arith.constant 0 : index
    %61 = vector.load %arg8[%c2_66, %c0_67, %c0_68] : memref<18x18x4xf32, #tpu.memory_space<vmem>>, vector<16x16x4xf32>
    %62 = vector.shape_cast %61 : vector<16x16x4xf32> to vector<256x4xf32>
    %63 = arith.truncf %62 : vector<256x4xf32> to vector<256x4xbf16>
    %c6 = arith.constant 6 : index
    %c0_69 = arith.constant 0 : index
    %c0_70 = arith.constant 0 : index
    %64 = vector.load %arg5[%c6, %c0_69, %c0_70] : memref<9x4x8xbf16, #tpu.memory_space<vmem>>, vector<1x4x8xbf16>
    %65 = vector.shape_cast %64 : vector<1x4x8xbf16> to vector<4x8xbf16>
    %cst_71 = arith.constant dense<0.000000e+00> : vector<256x8xf32>
    %66 = tpu.matmul %63, %65, %cst_71 {dimension_numbers = #tpu.dot_dimension_numbers<[1], [0], [0], [1], [0, 0, 1, 1], [], []>} : vector<256x4xbf16>, vector<4x8xbf16>, vector<256x8xf32> -> vector<256x8xf32>
    %67 = arith.addf %60, %66 : vector<256x8xf32>
    %c2_72 = arith.constant 2 : index
    %c1_73 = arith.constant 1 : index
    %c0_74 = arith.constant 0 : index
    %68 = vector.load %arg8[%c2_72, %c1_73, %c0_74] : memref<18x18x4xf32, #tpu.memory_space<vmem>>, vector<16x16x4xf32>
    %69 = vector.shape_cast %68 : vector<16x16x4xf32> to vector<256x4xf32>
    %70 = arith.truncf %69 : vector<256x4xf32> to vector<256x4xbf16>
    %c7 = arith.constant 7 : index
    %c0_75 = arith.constant 0 : index
    %c0_76 = arith.constant 0 : index
    %71 = vector.load %arg5[%c7, %c0_75, %c0_76] : memref<9x4x8xbf16, #tpu.memory_space<vmem>>, vector<1x4x8xbf16>
    %72 = vector.shape_cast %71 : vector<1x4x8xbf16> to vector<4x8xbf16>
    %cst_77 = arith.constant dense<0.000000e+00> : vector<256x8xf32>
    %73 = tpu.matmul %70, %72, %cst_77 {dimension_numbers = #tpu.dot_dimension_numbers<[1], [0], [0], [1], [0, 0, 1, 1], [], []>} : vector<256x4xbf16>, vector<4x8xbf16>, vector<256x8xf32> -> vector<256x8xf32>
    %74 = arith.addf %67, %73 : vector<256x8xf32>
    %c2_78 = arith.constant 2 : index
    %c2_79 = arith.constant 2 : index
    %c0_80 = arith.constant 0 : index
    %75 = vector.load %arg8[%c2_78, %c2_79, %c0_80] : memref<18x18x4xf32, #tpu.memory_space<vmem>>, vector<16x16x4xf32>
    %76 = vector.shape_cast %75 : vector<16x16x4xf32> to vector<256x4xf32>
    %77 = arith.truncf %76 : vector<256x4xf32> to vector<256x4xbf16>
    %c8 = arith.constant 8 : index
    %c0_81 = arith.constant 0 : index
    %c0_82 = arith.constant 0 : index
    %78 = vector.load %arg5[%c8, %c0_81, %c0_82] : memref<9x4x8xbf16, #tpu.memory_space<vmem>>, vector<1x4x8xbf16>
    %79 = vector.shape_cast %78 : vector<1x4x8xbf16> to vector<4x8xbf16>
    %cst_83 = arith.constant dense<0.000000e+00> : vector<256x8xf32>
    %80 = tpu.matmul %77, %79, %cst_83 {dimension_numbers = #tpu.dot_dimension_numbers<[1], [0], [0], [1], [0, 0, 1, 1], [], []>} : vector<256x4xbf16>, vector<4x8xbf16>, vector<256x8xf32> -> vector<256x8xf32>
    %81 = arith.addf %74, %80 : vector<256x8xf32>
    %82 = vector.shape_cast %81 : vector<256x8xf32> to vector<1x16x16x8xf32>
    %83 = arith.truncf %82 : vector<1x16x16x8xf32> to vector<1x16x16x8xbf16>
    %c0_84 = arith.constant 0 : index
    %c0_85 = arith.constant 0 : index
    %c0_86 = arith.constant 0 : index
    %c0_87 = arith.constant 0 : index
    %84 = vector.load %arg6[%c0_84, %c0_85, %c0_86, %c0_87] : memref<1x16x16x8xbf16, #tpu.memory_space<vmem>>, vector<1x16x16x8xbf16>
    tpu.vector_store %arg6[%c0_84, %c0_85, %c0_86, %c0_87], %83 {strides = array<i32>} : memref<1x16x16x8xbf16, #tpu.memory_space<vmem>>, vector<1x16x16x8xbf16>,
    %cst_88 = arith.constant dense<0.000000e+00> : vector<8xf32>
    %85 = vector.multi_reduction <add>, %81, %cst_88 [0] : vector<256x8xf32> to vector<8xf32>
    %86 = vector.shape_cast %85 : vector<8xf32> to vector<1x8xf32>
    %c0_89 = arith.constant 0 : index
    %c0_90 = arith.constant 0 : index
    %c0_91 = arith.constant 0 : index
    %c0_92 = arith.constant 0 : index
    %87 = vector.load %arg7[%c0_89, %c0_90, %c0_91, %c0_92] : memref<1x1x2x8xf32, #tpu.memory_space<vmem>>, vector<1x1x1x8xf32>
    %88 = vector.shape_cast %87 : vector<1x1x1x8xf32> to vector<1x8xf32>
    %89 = vector.shape_cast %86 : vector<1x8xf32> to vector<1x1x1x8xf32>
    tpu.vector_store %arg7[%c0_89, %c0_90, %c0_91, %c0_92], %89 {strides = array<i32>} : memref<1x1x2x8xf32, #tpu.memory_space<vmem>>, vector<1x1x1x8xf32>,
    %90 = arith.mulf %81, %81 : vector<256x8xf32>
    %cst_93 = arith.constant dense<0.000000e+00> : vector<8xf32>
    %91 = vector.multi_reduction <add>, %90, %cst_93 [0] : vector<256x8xf32> to vector<8xf32>
    %92 = vector.shape_cast %91 : vector<8xf32> to vector<1x8xf32>
    %c0_94 = arith.constant 0 : index
    %c0_95 = arith.constant 0 : index
    %c1_96 = arith.constant 1 : index
    %c0_97 = arith.constant 0 : index
    %93 = vector.load %arg7[%c0_94, %c0_95, %c1_96, %c0_97] : memref<1x1x2x8xf32, #tpu.memory_space<vmem>>, vector<1x1x1x8xf32>
    %94 = vector.shape_cast %93 : vector<1x1x1x8xf32> to vector<1x8xf32>
    %95 = vector.shape_cast %92 : vector<1x8xf32> to vector<1x1x1x8xf32>
    tpu.vector_store %arg7[%c0_94, %c0_95, %c1_96, %c0_97], %95 {strides = array<i32>} : memref<1x1x2x8xf32, #tpu.memory_space<vmem>>, vector<1x1x1x8xf32>,
    return
  }
  func.func @transform_0(%arg0: i32, %arg1: i32) -> (i32, i32, i32, i32) {
    %c0_i32 = arith.constant 0 : i32
    %c0_i32_0 = arith.constant 0 : i32
    %c0_i32_1 = arith.constant 0 : i32
    return %arg0, %arg1, %c0_i32, %c0_i32_0 : i32, i32, i32, i32
  }
  func.func @transform_1(%arg0: i32, %arg1: i32) -> (i32, i32, i32, i32) {
    %c16_i32 = arith.constant 16 : i32
    %0 = arith.muli %arg1, %c16_i32 : i32
    %c1_i32 = arith.constant 1 : i32
    %1 = arith.subi %0, %c1_i32 : i32
    %c0_i32 = arith.constant 0 : i32
    %2 = arith.maxsi %1, %c0_i32 : i32
    %c0_i32_0 = arith.constant 0 : i32
    %c0_i32_1 = arith.constant 0 : i32
    %c0_i32_2 = arith.constant 0 : i32
    return %arg0, %2, %c0_i32_0, %c0_i32_1 : i32, i32, i32, i32
  }
  func.func @transform_2(%arg0: i32, %arg1: i32) -> (i32, i32, i32, i32) {
    %c16_i32 = arith.constant 16 : i32
    %0 = arith.muli %arg1, %c16_i32 : i32
    %c16_i32_0 = arith.constant 16 : i32
    %1 = arith.addi %0, %c16_i32_0 : i32
    %c15_i32 = arith.constant 15 : i32
    %2 = arith.minsi %1, %c15_i32 : i32
    %c0_i32 = arith.constant 0 : i32
    %c0_i32_1 = arith.constant 0 : i32
    %c0_i32_2 = arith.constant 0 : i32
    return %arg0, %2, %c0_i32, %c0_i32_1 : i32, i32, i32, i32
  }
  func.func @transform_3(%arg0: i32, %arg1: i32) -> (i32, i32, i32) {
    %c0_i32 = arith.constant 0 : i32
    %c0_i32_0 = arith.constant 0 : i32
    %c0_i32_1 = arith.constant 0 : i32
    %c0_i32_2 = arith.constant 0 : i32
    return %c0_i32, %c0_i32_0, %c0_i32_1 : i32, i32, i32
  }
  func.func @transform_4(%arg0: i32, %arg1: i32) -> (i32, i32, i32, i32) {
    %c0_i32 = arith.constant 0 : i32
    %c0_i32_0 = arith.constant 0 : i32
    %c0_i32_1 = arith.constant 0 : i32
    return %arg0, %arg1, %c0_i32, %c0_i32_0 : i32, i32, i32, i32
  }
  func.func @transform_5(%arg0: i32, %arg1: i32) -> (i32, i32, i32, i32) {
    %c0_i32 = arith.constant 0 : i32
    %c0_i32_0 = arith.constant 0 : i32
    %c0_i32_1 = arith.constant 0 : i32
    return %arg0, %arg1, %c0_i32, %c0_i32_0 : i32, i32, i32, i32
  }
}

module attributes {stable_mosaic.version = 11 : i64} {
  func.func @_bn_relu_kernel(%arg0: i32, %arg1: i32, %arg2: memref<1x16x16x4xbf16, #tpu.memory_space<vmem>>, %arg3: memref<1x4xf32, #tpu.memory_space<vmem>>, %arg4: memref<1x4xf32, #tpu.memory_space<vmem>>, %arg5: memref<1x16x16x4xf32, #tpu.memory_space<vmem>>) attributes {dimension_semantics = [#tpu.dimension_semantics<parallel>, #tpu.dimension_semantics<parallel>], iteration_bounds = array<i64: 2, 1>, scalar_prefetch = 0 : i64, scratch_operands = 0 : i64, tpu.core_type = #tpu.core_type<tc>, window_params = [{transform_indices = @transform_0, window_bounds = array<i64: 1, 16, 16, 4>}, {pipeline_mode = #tpu.pipeline_mode<synchronous>, transform_indices = @transform_1, window_bounds = array<i64: 1, 4>}, {pipeline_mode = #tpu.pipeline_mode<synchronous>, transform_indices = @transform_2, window_bounds = array<i64: 1, 4>}, {transform_indices = @transform_3, window_bounds = array<i64: 1, 16, 16, 4>}]} {
    %c0 = arith.constant 0 : index
    %c0_0 = arith.constant 0 : index
    %0 = vector.load %arg3[%c0, %c0_0] : memref<1x4xf32, #tpu.memory_space<vmem>>, vector<1x4xf32>
    %1 = vector.shape_cast %0 : vector<1x4xf32> to vector<1x1x1x4xf32>
    %c0_1 = arith.constant 0 : index
    %c0_2 = arith.constant 0 : index
    %2 = vector.load %arg4[%c0_1, %c0_2] : memref<1x4xf32, #tpu.memory_space<vmem>>, vector<1x4xf32>
    %3 = vector.shape_cast %2 : vector<1x4xf32> to vector<1x1x1x4xf32>
    %c0_3 = arith.constant 0 : index
    %c0_4 = arith.constant 0 : index
    %c0_5 = arith.constant 0 : index
    %c0_6 = arith.constant 0 : index
    %4 = vector.load %arg2[%c0_3, %c0_4, %c0_5, %c0_6] : memref<1x16x16x4xbf16, #tpu.memory_space<vmem>>, vector<1x16x16x4xbf16>
    %5 = arith.extf %4 : vector<1x16x16x4xbf16> to vector<1x16x16x4xf32>
    %6 = vector.broadcast %1 : vector<1x1x1x4xf32> to vector<1x16x16x4xf32>
    %7 = arith.mulf %5, %6 : vector<1x16x16x4xf32>
    %8 = vector.broadcast %3 : vector<1x1x1x4xf32> to vector<1x16x16x4xf32>
    %9 = arith.addf %7, %8 : vector<1x16x16x4xf32>
    %cst = arith.constant 0.000000e+00 : f32
    %10 = vector.broadcast %cst : f32 to vector<1x16x16x4xf32>
    %11 = arith.maximumf %9, %10 : vector<1x16x16x4xf32>
    %c0_7 = arith.constant 0 : index
    %c0_8 = arith.constant 0 : index
    %c0_9 = arith.constant 0 : index
    %c0_10 = arith.constant 0 : index
    %12 = vector.load %arg5[%c0_7, %c0_8, %c0_9, %c0_10] : memref<1x16x16x4xf32, #tpu.memory_space<vmem>>, vector<1x16x16x4xf32>
    tpu.vector_store %arg5[%c0_7, %c0_8, %c0_9, %c0_10], %11 {strides = array<i32>} : memref<1x16x16x4xf32, #tpu.memory_space<vmem>>, vector<1x16x16x4xf32>,
    return
  }
  func.func @transform_0(%arg0: i32, %arg1: i32) -> (i32, i32, i32, i32) {
    %c0_i32 = arith.constant 0 : i32
    %c0_i32_0 = arith.constant 0 : i32
    %c0_i32_1 = arith.constant 0 : i32
    return %arg0, %arg1, %c0_i32, %c0_i32_0 : i32, i32, i32, i32
  }
  func.func @transform_1(%arg0: i32, %arg1: i32) -> (i32, i32) {
    %c0_i32 = arith.constant 0 : i32
    %c0_i32_0 = arith.constant 0 : i32
    %c0_i32_1 = arith.constant 0 : i32
    return %c0_i32, %c0_i32_0 : i32, i32
  }
  func.func @transform_2(%arg0: i32, %arg1: i32) -> (i32, i32) {
    %c0_i32 = arith.constant 0 : i32
    %c0_i32_0 = arith.constant 0 : i32
    %c0_i32_1 = arith.constant 0 : i32
    return %c0_i32, %c0_i32_0 : i32, i32
  }
  func.func @transform_3(%arg0: i32, %arg1: i32) -> (i32, i32, i32, i32) {
    %c0_i32 = arith.constant 0 : i32
    %c0_i32_0 = arith.constant 0 : i32
    %c0_i32_1 = arith.constant 0 : i32
    return %arg0, %arg1, %c0_i32, %c0_i32_0 : i32, i32, i32, i32
  }
}

module attributes {stable_mosaic.version = 11 : i64} {
  func.func @kernel(%arg0: i32, %arg1: i32, %arg2: memref<1x16x16x8xbf16, #tpu.memory_space<vmem>>, %arg3: memref<1x1x16x8xbf16, #tpu.memory_space<vmem>>, %arg4: memref<1x1x16x8xbf16, #tpu.memory_space<vmem>>, %arg5: memref<9x8x4xbf16, #tpu.memory_space<vmem>>, %arg6: memref<1x8xf32, #tpu.memory_space<vmem>>, %arg7: memref<1x8xf32, #tpu.memory_space<vmem>>, %arg8: memref<1x16x16x4xbf16, #tpu.memory_space<vmem>>, %arg9: memref<1x1x2x4xf32, #tpu.memory_space<vmem>>, %arg10: memref<18x18x8xf32, #tpu.memory_space<vmem>>) attributes {dimension_semantics = [#tpu.dimension_semantics<parallel>, #tpu.dimension_semantics<parallel>], iteration_bounds = array<i64: 2, 1>, scalar_prefetch = 0 : i64, scratch_operands = 1 : i64, tpu.core_type = #tpu.core_type<tc>, window_params = [{transform_indices = @transform_0, window_bounds = array<i64: 1, 16, 16, 8>}, {transform_indices = @transform_1, window_bounds = array<i64: 1, 1, 16, 8>}, {transform_indices = @transform_2, window_bounds = array<i64: 1, 1, 16, 8>}, {pipeline_mode = #tpu.pipeline_mode<synchronous>, transform_indices = @transform_3, window_bounds = array<i64: 9, 8, 4>}, {pipeline_mode = #tpu.pipeline_mode<synchronous>, transform_indices = @transform_4, window_bounds = array<i64: 1, 8>}, {pipeline_mode = #tpu.pipeline_mode<synchronous>, transform_indices = @transform_5, window_bounds = array<i64: 1, 8>}, {transform_indices = @transform_6, window_bounds = array<i64: 1, 16, 16, 4>}, {transform_indices = @transform_7, window_bounds = array<i64: 1, 1, 2, 4>}]} {
    %c0 = arith.constant 0 : index
    %c0_0 = arith.constant 0 : index
    %0 = vector.load %arg6[%c0, %c0_0] : memref<1x8xf32, #tpu.memory_space<vmem>>, vector<1x8xf32>
    %1 = vector.shape_cast %0 : vector<1x8xf32> to vector<1x1x8xf32>
    %c0_1 = arith.constant 0 : index
    %c0_2 = arith.constant 0 : index
    %2 = vector.load %arg7[%c0_1, %c0_2] : memref<1x8xf32, #tpu.memory_space<vmem>>, vector<1x8xf32>
    %3 = vector.shape_cast %2 : vector<1x8xf32> to vector<1x1x8xf32>
    %cst = arith.constant 0.000000e+00 : f32
    %4 = vector.broadcast %cst : f32 to vector<18x1x8xf32>
    %c0_3 = arith.constant 0 : index
    %c0_4 = arith.constant 0 : index
    %c0_5 = arith.constant 0 : index
    %5 = vector.load %arg10[%c0_3, %c0_4, %c0_5] : memref<18x18x8xf32, #tpu.memory_space<vmem>>, vector<18x1x8xf32>
    tpu.vector_store %arg10[%c0_3, %c0_4, %c0_5], %4 {strides = array<i32>} : memref<18x18x8xf32, #tpu.memory_space<vmem>>, vector<18x1x8xf32>,
    %c0_6 = arith.constant 0 : index
    %c17 = arith.constant 17 : index
    %c0_7 = arith.constant 0 : index
    %6 = vector.load %arg10[%c0_6, %c17, %c0_7] : memref<18x18x8xf32, #tpu.memory_space<vmem>>, vector<18x1x8xf32>
    tpu.vector_store %arg10[%c0_6, %c17, %c0_7], %4 {strides = array<i32>} : memref<18x18x8xf32, #tpu.memory_space<vmem>>, vector<18x1x8xf32>,
    %c0_8 = arith.constant 0 : index
    %c0_9 = arith.constant 0 : index
    %c0_10 = arith.constant 0 : index
    %c0_11 = arith.constant 0 : index
    %7 = vector.load %arg2[%c0_8, %c0_9, %c0_10, %c0_11] : memref<1x16x16x8xbf16, #tpu.memory_space<vmem>>, vector<1x16x16x8xbf16>
    %8 = vector.shape_cast %7 : vector<1x16x16x8xbf16> to vector<16x16x8xbf16>
    %9 = arith.extf %8 : vector<16x16x8xbf16> to vector<16x16x8xf32>
    %10 = vector.broadcast %1 : vector<1x1x8xf32> to vector<16x16x8xf32>
    %11 = arith.mulf %9, %10 : vector<16x16x8xf32>
    %12 = vector.broadcast %3 : vector<1x1x8xf32> to vector<16x16x8xf32>
    %13 = arith.addf %11, %12 : vector<16x16x8xf32>
    %cst_12 = arith.constant 0.000000e+00 : f32
    %14 = vector.broadcast %cst_12 : f32 to vector<16x16x8xf32>
    %15 = arith.maximumf %13, %14 : vector<16x16x8xf32>
    %c1 = arith.constant 1 : index
    %c1_13 = arith.constant 1 : index
    %c0_14 = arith.constant 0 : index
    %16 = vector.load %arg10[%c1, %c1_13, %c0_14] : memref<18x18x8xf32, #tpu.memory_space<vmem>>, vector<16x16x8xf32>
    tpu.vector_store %arg10[%c1, %c1_13, %c0_14], %15 {strides = array<i32>} : memref<18x18x8xf32, #tpu.memory_space<vmem>>, vector<16x16x8xf32>,
    %c0_15 = arith.constant 0 : index
    %c0_16 = arith.constant 0 : index
    %c0_17 = arith.constant 0 : index
    %c0_18 = arith.constant 0 : index
    %17 = vector.load %arg3[%c0_15, %c0_16, %c0_17, %c0_18] : memref<1x1x16x8xbf16, #tpu.memory_space<vmem>>, vector<1x1x16x8xbf16>
    %18 = vector.shape_cast %17 : vector<1x1x16x8xbf16> to vector<1x16x8xbf16>
    %19 = arith.extf %18 : vector<1x16x8xbf16> to vector<1x16x8xf32>
    %20 = vector.broadcast %1 : vector<1x1x8xf32> to vector<1x16x8xf32>
    %21 = arith.mulf %19, %20 : vector<1x16x8xf32>
    %22 = vector.broadcast %3 : vector<1x1x8xf32> to vector<1x16x8xf32>
    %23 = arith.addf %21, %22 : vector<1x16x8xf32>
    %cst_19 = arith.constant 0.000000e+00 : f32
    %24 = vector.broadcast %cst_19 : f32 to vector<1x16x8xf32>
    %25 = arith.maximumf %23, %24 : vector<1x16x8xf32>
    %c0_20 = arith.constant 0 : index
    %c0_21 = arith.constant 0 : index
    %c0_22 = arith.constant 0 : index
    %c0_23 = arith.constant 0 : index
    %26 = vector.load %arg4[%c0_20, %c0_21, %c0_22, %c0_23] : memref<1x1x16x8xbf16, #tpu.memory_space<vmem>>, vector<1x1x16x8xbf16>
    %27 = vector.shape_cast %26 : vector<1x1x16x8xbf16> to vector<1x16x8xbf16>
    %28 = arith.extf %27 : vector<1x16x8xbf16> to vector<1x16x8xf32>
    %29 = vector.broadcast %1 : vector<1x1x8xf32> to vector<1x16x8xf32>
    %30 = arith.mulf %28, %29 : vector<1x16x8xf32>
    %31 = vector.broadcast %3 : vector<1x1x8xf32> to vector<1x16x8xf32>
    %32 = arith.addf %30, %31 : vector<1x16x8xf32>
    %cst_24 = arith.constant 0.000000e+00 : f32
    %33 = vector.broadcast %cst_24 : f32 to vector<1x16x8xf32>
    %34 = arith.maximumf %32, %33 : vector<1x16x8xf32>
    %c0_i32 = arith.constant 0 : i32
    %35 = arith.cmpi sgt, %arg1, %c0_i32 : i32
    %cst_25 = arith.constant 0.000000e+00 : f32
    %36 = vector.broadcast %cst_25 : f32 to vector<1x16x8xf32>
    %37 = arith.select %35, %25, %36 : vector<1x16x8xf32>
    %c0_26 = arith.constant 0 : index
    %c1_27 = arith.constant 1 : index
    %c0_28 = arith.constant 0 : index
    %38 = vector.load %arg10[%c0_26, %c1_27, %c0_28] : memref<18x18x8xf32, #tpu.memory_space<vmem>>, vector<1x16x8xf32>
    tpu.vector_store %arg10[%c0_26, %c1_27, %c0_28], %37 {strides = array<i32>} : memref<18x18x8xf32, #tpu.memory_space<vmem>>, vector<1x16x8xf32>,
    %c0_i32_29 = arith.constant 0 : i32
    %39 = arith.cmpi slt, %arg1, %c0_i32_29 : i32
    %cst_30 = arith.constant 0.000000e+00 : f32
    %40 = vector.broadcast %cst_30 : f32 to vector<1x16x8xf32>
    %41 = arith.select %39, %34, %40 : vector<1x16x8xf32>
    %c17_31 = arith.constant 17 : index
    %c1_32 = arith.constant 1 : index
    %c0_33 = arith.constant 0 : index
    %42 = vector.load %arg10[%c17_31, %c1_32, %c0_33] : memref<18x18x8xf32, #tpu.memory_space<vmem>>, vector<1x16x8xf32>
    tpu.vector_store %arg10[%c17_31, %c1_32, %c0_33], %41 {strides = array<i32>} : memref<18x18x8xf32, #tpu.memory_space<vmem>>, vector<1x16x8xf32>,
    %cst_34 = arith.constant 0.000000e+00 : f32
    %43 = vector.broadcast %cst_34 : f32 to vector<256x4xf32>
    %c0_35 = arith.constant 0 : index
    %c0_36 = arith.constant 0 : index
    %c0_37 = arith.constant 0 : index
    %44 = vector.load %arg10[%c0_35, %c0_36, %c0_37] : memref<18x18x8xf32, #tpu.memory_space<vmem>>, vector<16x16x8xf32>
    %45 = vector.shape_cast %44 : vector<16x16x8xf32> to vector<256x8xf32>
    %46 = arith.truncf %45 : vector<256x8xf32> to vector<256x8xbf16>
    %c0_38 = arith.constant 0 : index
    %c0_39 = arith.constant 0 : index
    %c0_40 = arith.constant 0 : index
    %47 = vector.load %arg5[%c0_38, %c0_39, %c0_40] : memref<9x8x4xbf16, #tpu.memory_space<vmem>>, vector<1x8x4xbf16>
    %48 = vector.shape_cast %47 : vector<1x8x4xbf16> to vector<8x4xbf16>
    %cst_41 = arith.constant dense<0.000000e+00> : vector<256x4xf32>
    %49 = tpu.matmul %46, %48, %cst_41 {dimension_numbers = #tpu.dot_dimension_numbers<[1], [0], [0], [1], [0, 0, 1, 1], [], []>} : vector<256x8xbf16>, vector<8x4xbf16>, vector<256x4xf32> -> vector<256x4xf32>
    %50 = arith.addf %43, %49 : vector<256x4xf32>
    %c0_42 = arith.constant 0 : index
    %c1_43 = arith.constant 1 : index
    %c0_44 = arith.constant 0 : index
    %51 = vector.load %arg10[%c0_42, %c1_43, %c0_44] : memref<18x18x8xf32, #tpu.memory_space<vmem>>, vector<16x16x8xf32>
    %52 = vector.shape_cast %51 : vector<16x16x8xf32> to vector<256x8xf32>
    %53 = arith.truncf %52 : vector<256x8xf32> to vector<256x8xbf16>
    %c1_45 = arith.constant 1 : index
    %c0_46 = arith.constant 0 : index
    %c0_47 = arith.constant 0 : index
    %54 = vector.load %arg5[%c1_45, %c0_46, %c0_47] : memref<9x8x4xbf16, #tpu.memory_space<vmem>>, vector<1x8x4xbf16>
    %55 = vector.shape_cast %54 : vector<1x8x4xbf16> to vector<8x4xbf16>
    %cst_48 = arith.constant dense<0.000000e+00> : vector<256x4xf32>
    %56 = tpu.matmul %53, %55, %cst_48 {dimension_numbers = #tpu.dot_dimension_numbers<[1], [0], [0], [1], [0, 0, 1, 1], [], []>} : vector<256x8xbf16>, vector<8x4xbf16>, vector<256x4xf32> -> vector<256x4xf32>
    %57 = arith.addf %50, %56 : vector<256x4xf32>
    %c0_49 = arith.constant 0 : index
    %c2 = arith.constant 2 : index
    %c0_50 = arith.constant 0 : index
    %58 = vector.load %arg10[%c0_49, %c2, %c0_50] : memref<18x18x8xf32, #tpu.memory_space<vmem>>, vector<16x16x8xf32>
    %59 = vector.shape_cast %58 : vector<16x16x8xf32> to vector<256x8xf32>
    %60 = arith.truncf %59 : vector<256x8xf32> to vector<256x8xbf16>
    %c2_51 = arith.constant 2 : index
    %c0_52 = arith.constant 0 : index
    %c0_53 = arith.constant 0 : index
    %61 = vector.load %arg5[%c2_51, %c0_52, %c0_53] : memref<9x8x4xbf16, #tpu.memory_space<vmem>>, vector<1x8x4xbf16>
    %62 = vector.shape_cast %61 : vector<1x8x4xbf16> to vector<8x4xbf16>
    %cst_54 = arith.constant dense<0.000000e+00> : vector<256x4xf32>
    %63 = tpu.matmul %60, %62, %cst_54 {dimension_numbers = #tpu.dot_dimension_numbers<[1], [0], [0], [1], [0, 0, 1, 1], [], []>} : vector<256x8xbf16>, vector<8x4xbf16>, vector<256x4xf32> -> vector<256x4xf32>
    %64 = arith.addf %57, %63 : vector<256x4xf32>
    %c1_55 = arith.constant 1 : index
    %c0_56 = arith.constant 0 : index
    %c0_57 = arith.constant 0 : index
    %65 = vector.load %arg10[%c1_55, %c0_56, %c0_57] : memref<18x18x8xf32, #tpu.memory_space<vmem>>, vector<16x16x8xf32>
    %66 = vector.shape_cast %65 : vector<16x16x8xf32> to vector<256x8xf32>
    %67 = arith.truncf %66 : vector<256x8xf32> to vector<256x8xbf16>
    %c3 = arith.constant 3 : index
    %c0_58 = arith.constant 0 : index
    %c0_59 = arith.constant 0 : index
    %68 = vector.load %arg5[%c3, %c0_58, %c0_59] : memref<9x8x4xbf16, #tpu.memory_space<vmem>>, vector<1x8x4xbf16>
    %69 = vector.shape_cast %68 : vector<1x8x4xbf16> to vector<8x4xbf16>
    %cst_60 = arith.constant dense<0.000000e+00> : vector<256x4xf32>
    %70 = tpu.matmul %67, %69, %cst_60 {dimension_numbers = #tpu.dot_dimension_numbers<[1], [0], [0], [1], [0, 0, 1, 1], [], []>} : vector<256x8xbf16>, vector<8x4xbf16>, vector<256x4xf32> -> vector<256x4xf32>
    %71 = arith.addf %64, %70 : vector<256x4xf32>
    %c1_61 = arith.constant 1 : index
    %c1_62 = arith.constant 1 : index
    %c0_63 = arith.constant 0 : index
    %72 = vector.load %arg10[%c1_61, %c1_62, %c0_63] : memref<18x18x8xf32, #tpu.memory_space<vmem>>, vector<16x16x8xf32>
    %73 = vector.shape_cast %72 : vector<16x16x8xf32> to vector<256x8xf32>
    %74 = arith.truncf %73 : vector<256x8xf32> to vector<256x8xbf16>
    %c4 = arith.constant 4 : index
    %c0_64 = arith.constant 0 : index
    %c0_65 = arith.constant 0 : index
    %75 = vector.load %arg5[%c4, %c0_64, %c0_65] : memref<9x8x4xbf16, #tpu.memory_space<vmem>>, vector<1x8x4xbf16>
    %76 = vector.shape_cast %75 : vector<1x8x4xbf16> to vector<8x4xbf16>
    %cst_66 = arith.constant dense<0.000000e+00> : vector<256x4xf32>
    %77 = tpu.matmul %74, %76, %cst_66 {dimension_numbers = #tpu.dot_dimension_numbers<[1], [0], [0], [1], [0, 0, 1, 1], [], []>} : vector<256x8xbf16>, vector<8x4xbf16>, vector<256x4xf32> -> vector<256x4xf32>
    %78 = arith.addf %71, %77 : vector<256x4xf32>
    %c1_67 = arith.constant 1 : index
    %c2_68 = arith.constant 2 : index
    %c0_69 = arith.constant 0 : index
    %79 = vector.load %arg10[%c1_67, %c2_68, %c0_69] : memref<18x18x8xf32, #tpu.memory_space<vmem>>, vector<16x16x8xf32>
    %80 = vector.shape_cast %79 : vector<16x16x8xf32> to vector<256x8xf32>
    %81 = arith.truncf %80 : vector<256x8xf32> to vector<256x8xbf16>
    %c5 = arith.constant 5 : index
    %c0_70 = arith.constant 0 : index
    %c0_71 = arith.constant 0 : index
    %82 = vector.load %arg5[%c5, %c0_70, %c0_71] : memref<9x8x4xbf16, #tpu.memory_space<vmem>>, vector<1x8x4xbf16>
    %83 = vector.shape_cast %82 : vector<1x8x4xbf16> to vector<8x4xbf16>
    %cst_72 = arith.constant dense<0.000000e+00> : vector<256x4xf32>
    %84 = tpu.matmul %81, %83, %cst_72 {dimension_numbers = #tpu.dot_dimension_numbers<[1], [0], [0], [1], [0, 0, 1, 1], [], []>} : vector<256x8xbf16>, vector<8x4xbf16>, vector<256x4xf32> -> vector<256x4xf32>
    %85 = arith.addf %78, %84 : vector<256x4xf32>
    %c2_73 = arith.constant 2 : index
    %c0_74 = arith.constant 0 : index
    %c0_75 = arith.constant 0 : index
    %86 = vector.load %arg10[%c2_73, %c0_74, %c0_75] : memref<18x18x8xf32, #tpu.memory_space<vmem>>, vector<16x16x8xf32>
    %87 = vector.shape_cast %86 : vector<16x16x8xf32> to vector<256x8xf32>
    %88 = arith.truncf %87 : vector<256x8xf32> to vector<256x8xbf16>
    %c6 = arith.constant 6 : index
    %c0_76 = arith.constant 0 : index
    %c0_77 = arith.constant 0 : index
    %89 = vector.load %arg5[%c6, %c0_76, %c0_77] : memref<9x8x4xbf16, #tpu.memory_space<vmem>>, vector<1x8x4xbf16>
    %90 = vector.shape_cast %89 : vector<1x8x4xbf16> to vector<8x4xbf16>
    %cst_78 = arith.constant dense<0.000000e+00> : vector<256x4xf32>
    %91 = tpu.matmul %88, %90, %cst_78 {dimension_numbers = #tpu.dot_dimension_numbers<[1], [0], [0], [1], [0, 0, 1, 1], [], []>} : vector<256x8xbf16>, vector<8x4xbf16>, vector<256x4xf32> -> vector<256x4xf32>
    %92 = arith.addf %85, %91 : vector<256x4xf32>
    %c2_79 = arith.constant 2 : index
    %c1_80 = arith.constant 1 : index
    %c0_81 = arith.constant 0 : index
    %93 = vector.load %arg10[%c2_79, %c1_80, %c0_81] : memref<18x18x8xf32, #tpu.memory_space<vmem>>, vector<16x16x8xf32>
    %94 = vector.shape_cast %93 : vector<16x16x8xf32> to vector<256x8xf32>
    %95 = arith.truncf %94 : vector<256x8xf32> to vector<256x8xbf16>
    %c7 = arith.constant 7 : index
    %c0_82 = arith.constant 0 : index
    %c0_83 = arith.constant 0 : index
    %96 = vector.load %arg5[%c7, %c0_82, %c0_83] : memref<9x8x4xbf16, #tpu.memory_space<vmem>>, vector<1x8x4xbf16>
    %97 = vector.shape_cast %96 : vector<1x8x4xbf16> to vector<8x4xbf16>
    %cst_84 = arith.constant dense<0.000000e+00> : vector<256x4xf32>
    %98 = tpu.matmul %95, %97, %cst_84 {dimension_numbers = #tpu.dot_dimension_numbers<[1], [0], [0], [1], [0, 0, 1, 1], [], []>} : vector<256x8xbf16>, vector<8x4xbf16>, vector<256x4xf32> -> vector<256x4xf32>
    %99 = arith.addf %92, %98 : vector<256x4xf32>
    %c2_85 = arith.constant 2 : index
    %c2_86 = arith.constant 2 : index
    %c0_87 = arith.constant 0 : index
    %100 = vector.load %arg10[%c2_85, %c2_86, %c0_87] : memref<18x18x8xf32, #tpu.memory_space<vmem>>, vector<16x16x8xf32>
    %101 = vector.shape_cast %100 : vector<16x16x8xf32> to vector<256x8xf32>
    %102 = arith.truncf %101 : vector<256x8xf32> to vector<256x8xbf16>
    %c8 = arith.constant 8 : index
    %c0_88 = arith.constant 0 : index
    %c0_89 = arith.constant 0 : index
    %103 = vector.load %arg5[%c8, %c0_88, %c0_89] : memref<9x8x4xbf16, #tpu.memory_space<vmem>>, vector<1x8x4xbf16>
    %104 = vector.shape_cast %103 : vector<1x8x4xbf16> to vector<8x4xbf16>
    %cst_90 = arith.constant dense<0.000000e+00> : vector<256x4xf32>
    %105 = tpu.matmul %102, %104, %cst_90 {dimension_numbers = #tpu.dot_dimension_numbers<[1], [0], [0], [1], [0, 0, 1, 1], [], []>} : vector<256x8xbf16>, vector<8x4xbf16>, vector<256x4xf32> -> vector<256x4xf32>
    %106 = arith.addf %99, %105 : vector<256x4xf32>
    %107 = vector.shape_cast %106 : vector<256x4xf32> to vector<1x16x16x4xf32>
    %108 = arith.truncf %107 : vector<1x16x16x4xf32> to vector<1x16x16x4xbf16>
    %c0_91 = arith.constant 0 : index
    %c0_92 = arith.constant 0 : index
    %c0_93 = arith.constant 0 : index
    %c0_94 = arith.constant 0 : index
    %109 = vector.load %arg8[%c0_91, %c0_92, %c0_93, %c0_94] : memref<1x16x16x4xbf16, #tpu.memory_space<vmem>>, vector<1x16x16x4xbf16>
    tpu.vector_store %arg8[%c0_91, %c0_92, %c0_93, %c0_94], %108 {strides = array<i32>} : memref<1x16x16x4xbf16, #tpu.memory_space<vmem>>, vector<1x16x16x4xbf16>,
    %cst_95 = arith.constant dense<0.000000e+00> : vector<4xf32>
    %110 = vector.multi_reduction <add>, %106, %cst_95 [0] : vector<256x4xf32> to vector<4xf32>
    %111 = vector.shape_cast %110 : vector<4xf32> to vector<1x4xf32>
    %c0_96 = arith.constant 0 : index
    %c0_97 = arith.constant 0 : index
    %c0_98 = arith.constant 0 : index
    %c0_99 = arith.constant 0 : index
    %112 = vector.load %arg9[%c0_96, %c0_97, %c0_98, %c0_99] : memref<1x1x2x4xf32, #tpu.memory_space<vmem>>, vector<1x1x1x4xf32>
    %113 = vector.shape_cast %112 : vector<1x1x1x4xf32> to vector<1x4xf32>
    %114 = vector.shape_cast %111 : vector<1x4xf32> to vector<1x1x1x4xf32>
    tpu.vector_store %arg9[%c0_96, %c0_97, %c0_98, %c0_99], %114 {strides = array<i32>} : memref<1x1x2x4xf32, #tpu.memory_space<vmem>>, vector<1x1x1x4xf32>,
    %115 = arith.mulf %106, %106 : vector<256x4xf32>
    %cst_100 = arith.constant dense<0.000000e+00> : vector<4xf32>
    %116 = vector.multi_reduction <add>, %115, %cst_100 [0] : vector<256x4xf32> to vector<4xf32>
    %117 = vector.shape_cast %116 : vector<4xf32> to vector<1x4xf32>
    %c0_101 = arith.constant 0 : index
    %c0_102 = arith.constant 0 : index
    %c1_103 = arith.constant 1 : index
    %c0_104 = arith.constant 0 : index
    %118 = vector.load %arg9[%c0_101, %c0_102, %c1_103, %c0_104] : memref<1x1x2x4xf32, #tpu.memory_space<vmem>>, vector<1x1x1x4xf32>
    %119 = vector.shape_cast %118 : vector<1x1x1x4xf32> to vector<1x4xf32>
    %120 = vector.shape_cast %117 : vector<1x4xf32> to vector<1x1x1x4xf32>
    tpu.vector_store %arg9[%c0_101, %c0_102, %c1_103, %c0_104], %120 {strides = array<i32>} : memref<1x1x2x4xf32, #tpu.memory_space<vmem>>, vector<1x1x1x4xf32>,
    return
  }
  func.func @transform_0(%arg0: i32, %arg1: i32) -> (i32, i32, i32, i32) {
    %c0_i32 = arith.constant 0 : i32
    %c0_i32_0 = arith.constant 0 : i32
    %c0_i32_1 = arith.constant 0 : i32
    return %arg0, %arg1, %c0_i32, %c0_i32_0 : i32, i32, i32, i32
  }
  func.func @transform_1(%arg0: i32, %arg1: i32) -> (i32, i32, i32, i32) {
    %c16_i32 = arith.constant 16 : i32
    %0 = arith.muli %arg1, %c16_i32 : i32
    %c1_i32 = arith.constant 1 : i32
    %1 = arith.subi %0, %c1_i32 : i32
    %c0_i32 = arith.constant 0 : i32
    %2 = arith.maxsi %1, %c0_i32 : i32
    %c0_i32_0 = arith.constant 0 : i32
    %c0_i32_1 = arith.constant 0 : i32
    %c0_i32_2 = arith.constant 0 : i32
    return %arg0, %2, %c0_i32_0, %c0_i32_1 : i32, i32, i32, i32
  }
  func.func @transform_2(%arg0: i32, %arg1: i32) -> (i32, i32, i32, i32) {
    %c16_i32 = arith.constant 16 : i32
    %0 = arith.muli %arg1, %c16_i32 : i32
    %c16_i32_0 = arith.constant 16 : i32
    %1 = arith.addi %0, %c16_i32_0 : i32
    %c15_i32 = arith.constant 15 : i32
    %2 = arith.minsi %1, %c15_i32 : i32
    %c0_i32 = arith.constant 0 : i32
    %c0_i32_1 = arith.constant 0 : i32
    %c0_i32_2 = arith.constant 0 : i32
    return %arg0, %2, %c0_i32, %c0_i32_1 : i32, i32, i32, i32
  }
  func.func @transform_3(%arg0: i32, %arg1: i32) -> (i32, i32, i32) {
    %c0_i32 = arith.constant 0 : i32
    %c0_i32_0 = arith.constant 0 : i32
    %c0_i32_1 = arith.constant 0 : i32
    %c0_i32_2 = arith.constant 0 : i32
    return %c0_i32, %c0_i32_0, %c0_i32_1 : i32, i32, i32
  }
  func.func @transform_4(%arg0: i32, %arg1: i32) -> (i32, i32) {
    %c0_i32 = arith.constant 0 : i32
    %c0_i32_0 = arith.constant 0 : i32
    %c0_i32_1 = arith.constant 0 : i32
    return %c0_i32, %c0_i32_0 : i32, i32
  }
  func.func @transform_5(%arg0: i32, %arg1: i32) -> (i32, i32) {
    %c0_i32 = arith.constant 0 : i32
    %c0_i32_0 = arith.constant 0 : i32
    %c0_i32_1 = arith.constant 0 : i32
    return %c0_i32, %c0_i32_0 : i32, i32
  }
  func.func @transform_6(%arg0: i32, %arg1: i32) -> (i32, i32, i32, i32) {
    %c0_i32 = arith.constant 0 : i32
    %c0_i32_0 = arith.constant 0 : i32
    %c0_i32_1 = arith.constant 0 : i32
    return %arg0, %arg1, %c0_i32, %c0_i32_0 : i32, i32, i32, i32
  }
  func.func @transform_7(%arg0: i32, %arg1: i32) -> (i32, i32, i32, i32) {
    %c0_i32 = arith.constant 0 : i32
    %c0_i32_0 = arith.constant 0 : i32
    %c0_i32_1 = arith.constant 0 : i32
    return %arg0, %arg1, %c0_i32, %c0_i32_0 : i32, i32, i32, i32
  }
}

</mosaic_0001>

<llo_original>
// kernel: mul.1
$region0: #{mul.1}
  #allocation0 [shape = 's32[1]{0}', space=sflag, size = 0x4, scoped, tag = 'scoped memory for mul.1']
  %s0 = inlined_call_operand.vmem [shape: f32[1,8], index: 0, kind: input, shape index: {}]
  %s1 = inlined_call_operand.vmem [shape: f32[1,8], index: 1, kind: input, shape index: {}]
  %s2 = inlined_call_operand.vmem [shape: f32[1,8], index: 2, kind: output, shape index: {}]
  %v3 = vld [vmem:[%s0] sm:$0x1]
  %v4 = vld [vmem:[%s1] sm:$0x1]
  %5 = xla_tuple %v3, %v4
  %6 = xla_tuple %5
  %v7 = vmul.f32 %v3, %v4
  %8 = xla_tuple %v7
  %9 = vst [vmem:[%s2] sm:$0x1] %v7

// kernel: mul.6
$region0: #{mul.6}
  #allocation0 [shape = 's32[1]{0}', space=sflag, size = 0x4, scoped, tag = 'scoped memory for mul.6']
  %s0 = inlined_call_operand.vmem [shape: f32[1,4], index: 0, kind: input, shape index: {}]
  %s1 = inlined_call_operand.vmem [shape: f32[1,4], index: 1, kind: input, shape index: {}]
  %s2 = inlined_call_operand.vmem [shape: f32[1,4], index: 2, kind: output, shape index: {}]
  %v3 = vld [vmem:[%s0] sm:$0x1]
  %v4 = vld [vmem:[%s1] sm:$0x1]
  %5 = xla_tuple %v3, %v4
  %6 = xla_tuple %5
  %v7 = vmul.f32 %v3, %v4
  %8 = xla_tuple %v7
  %9 = vst [vmem:[%s2] sm:$0x1] %v7

// kernel: double_conv_forward.5
$region0: #{double_conv_forward.5}
  #allocation0 [shape = 'u32[]', space=smem, size = 0x4, offset = 0x4, fixed_abs, tag = 'smem constant byte address 0x4 - core index']
  #allocation1 [shape = 'u32[144,128]{1,0:T(1,128)}', space=vmem, size = 0x12000, scoped, tag = 'internal scratch']
  %s0 = inlined_call_operand.vmem [shape: bf16[2,16,16,4], index: 0, kind: input, shape index: {}]
  %s1 = inlined_call_operand.vmem [shape: f32[1,4], index: 1, kind: input, shape index: {}]
  %s2 = inlined_call_operand.vmem [shape: f32[1,4], index: 2, kind: input, shape index: {}]
  %s3 = inlined_call_operand.vmem [shape: f32[2,16,16,4], index: 3, kind: output, shape index: {}]
  %s4 = sld [smem:[#allocation0]]
  $region45: #{double_conv_forward.5} parent=0
    _
  %s6 = ssub.s32 1, %s4
  %s7 = scalar_select 0, %s6, %s4
  loop: start=0, step=1, limit=4
  $region2: #{double_conv_forward.5} parent=0 // loop_pre_header
    _
  $region3: #{double_conv_forward.5} parent=0 // loop_header
    %s9 = sphi 0, %s13
    %p10 = scmp.ge.s32.totalorder %s9, 4
    %s16 = sphi 0, %s28
    %s17 = sphi 0, %s24
    %s18 = sphi 0, %s16
    %s19 = sphi 0, %s17
    %s20 = sphi 0, %s18
    %s21 = sphi 0, %s19
    %s33 = sphi 0, %s35
    %s36 = sphi 0, %s33
    %s37 = sphi 0, %s36
    %s53 = sphi 0, %s37
    %s57 = sphi 0, %s57
    %s59 = sphi 0, %s57
    %s60 = sphi 0, %s59
    %s74 = sphi 0, %s60
    %s78 = sphi 0, %s78
    %s80 = sphi 0, %s78
    %s81 = sphi 0, %s80
    %s95 = sphi 0, %s81
    %s103 = sphi 0, %s105
    %s106 = sphi 0, %s103
    %s107 = sphi 0, %s106
    %s123 = sphi 0, %s107
  $region4: #{double_conv_forward.5} parent=0 // loop_header_branch
    %12 = sbr.rel (%p10) target = $region8
  $region5: #{double_conv_forward.5} parent=0 // loop_body
    %s14 = ssub.s32 %s9, 1
    %s15 = ssub.s32 %s9, 2
    %s22 = sadd.s32 1, %s17
    %p23 = scmp.ge.s32.totalorder %s22, 1
    %s24 = scalar_select %p23, 0, %s22
    %s25 = sadd.s32 1, %s16
    %s26 = scalar_select %p23, %s25, %s16
    %p27 = scmp.ge.s32.totalorder %s26, 2
    %s28 = scalar_select %p27, 0, %s26
    %s29 = ssub.s32 %s16, %s28
    %s30 = ssub.s32 %s17, %s24
    %s31 = sor.u32 %s29, %s30
    %p32 = scmp.eq.s32.totalorder %s31, 0
    %s34 = sadd.s32 %s33, 1
    %s35 = scalar_select %p32, %s33, %s34
    %p38 = pneg %p32
    %p39 = scmp.eq.s32.totalorder %s9, 1
    %p40 = por %p38, %p39
    %p41 = scmp.ne.s32.totalorder %s33, %s36
    %p42 = scmp.eq.s32.totalorder %s9, 0
    %p43 = por %p41, %p42
    %p44 = scmp.ne.s32.totalorder %s33, %s36
    %p45 = scmp.eq.s32.totalorder %s14, 1
    %p46 = por %p44, %p45
    %p47 = scmp.ne.s32.totalorder %s36, %s37
    %p48 = scmp.eq.s32.totalorder %s14, 0
    %p49 = por %p47, %p48
    %p50 = scmp.ne.s32.totalorder %s36, %s37
    %p51 = scmp.eq.s32.totalorder %s15, 1
    %p52 = por %p50, %p51
    %p54 = scmp.ne.s32.totalorder %s37, %s53
    %p55 = scmp.eq.s32.totalorder %s15, 0
    %p56 = por %p54, %p55
    %s58 = sadd.s32 %s57, 1
    %p61 = scmp.eq.s32.totalorder %s9, 1
    %p62 = scmp.ne.s32.totalorder %s57, %s59
    %p63 = scmp.eq.s32.totalorder %s9, 0
    %p64 = por %p62, %p63
    %p65 = scmp.ne.s32.totalorder %s57, %s59
    %p66 = scmp.eq.s32.totalorder %s14, 1
    %p67 = por %p65, %p66
    %p68 = scmp.ne.s32.totalorder %s59, %s60
    %p69 = scmp.eq.s32.totalorder %s14, 0
    %p70 = por %p68, %p69
    %p71 = scmp.ne.s32.totalorder %s59, %s60
    %p72 = scmp.eq.s32.totalorder %s15, 1
    %p73 = por %p71, %p72
    %p75 = scmp.ne.s32.totalorder %s60, %s74
    %p76 = scmp.eq.s32.totalorder %s15, 0
    %p77 = por %p75, %p76
    %s79 = sadd.s32 %s78, 1
    %p82 = scmp.eq.s32.totalorder %s9, 1
    %p83 = scmp.ne.s32.totalorder %s78, %s80
    %p84 = scmp.eq.s32.totalorder %s9, 0
    %p85 = por %p83, %p84
    %p86 = scmp.ne.s32.totalorder %s78, %s80
    %p87 = scmp.eq.s32.totalorder %s14, 1
    %p88 = por %p86, %p87
    %p89 = scmp.ne.s32.totalorder %s80, %s81
    %p90 = scmp.eq.s32.totalorder %s14, 0
    %p91 = por %p89, %p90
    %p92 = scmp.ne.s32.totalorder %s80, %s81
    %p93 = scmp.eq.s32.totalorder %s15, 1
    %p94 = por %p92, %p93
    %p96 = scmp.ne.s32.totalorder %s81, %s95
    %p97 = scmp.eq.s32.totalorder %s15, 0
    %p98 = por %p96, %p97
    %s99 = ssub.s32 %s16, %s28
    %s100 = ssub.s32 %s17, %s24
    %s101 = sor.u32 %s99, %s100
    %p102 = scmp.eq.s32.totalorder %s101, 0
    %s104 = sadd.s32 %s103, 1
    %s105 = scalar_select %p102, %s103, %s104
    %p108 = pneg %p102
    %p109 = scmp.eq.s32.totalorder %s9, 1
    %p110 = por %p108, %p109
    %p111 = scmp.ne.s32.totalorder %s103, %s106
    %p112 = scmp.eq.s32.totalorder %s9, 0
    %p113 = por %p111, %p112
    %p114 = scmp.ne.s32.totalorder %s103, %s106
    %p115 = scmp.eq.s32.totalorder %s14, 1
    %p116 = por %p114, %p115
    %p117 = scmp.ne.s32.totalorder %s106, %s107
    %p118 = scmp.eq.s32.totalorder %s14, 0
    %p119 = por %p117, %p118
    %p120 = scmp.ne.s32.totalorder %s106, %s107
    %p121 = scmp.eq.s32.totalorder %s15, 1
    %p122 = por %p120, %p121
    %p124 = scmp.ne.s32.totalorder %s107, %s123
    %p125 = scmp.eq.s32.totalorder %s15, 0
    %p126 = por %p124, %p125
    %p127 = scmp.le.s32.totalorder 1, %s9
    %p128 = scmp.lt.s32.totalorder %s9, 3
    %p129 = pnand %p127, %p128
    %p130 = pneg %p129
    // Predicated region
    $region9: #{double_conv_forward.5} parent=5 // pred_check
      _
    $region10: #{double_conv_forward.5} parent=5 // pred_check_branch
      %132 = sbr.rel (%p129) target = $region12
    $region11: #{double_conv_forward.5} parent=5 // pred_region
      %s133 = ssub.s32 %s9, 1
      // Predicated region
      $region13: #{double_conv_forward.5} parent=11 // pred_check
        %p134 = pneg %p70
      $region14: #{double_conv_forward.5} parent=11 // pred_check_branch
        %136 = sbr.rel (%p134) target = $region16
      $region15: #{double_conv_forward.5} parent=11 // pred_region
        _
      $region16: #{double_conv_forward.5} parent=11 // pred_fallthru
        _
      // Predicated region
      $region17: #{double_conv_forward.5} parent=11 // pred_check
        %p137 = pneg %p91
      $region18: #{double_conv_forward.5} parent=11 // pred_check_branch
        %139 = sbr.rel (%p137) target = $region20
      $region19: #{double_conv_forward.5} parent=11 // pred_region
        _
      $region20: #{double_conv_forward.5} parent=11 // pred_fallthru
        _
    $region12: #{double_conv_forward.5} parent=5 // pred_fallthru
      _
    %p140 = scmp.lt.s32.totalorder %s9, 2
    // Predicated region
    $region21: #{double_conv_forward.5} parent=5 // pred_check
      %p141 = pneg %p140
    $region22: #{double_conv_forward.5} parent=5 // pred_check_branch
      %143 = sbr.rel (%p141) target = $region24
    $region23: #{double_conv_forward.5} parent=5 // pred_region
      // Predicated region
      $region25: #{double_conv_forward.5} parent=23 // pred_check
        %p144 = pneg %p43
      $region26: #{double_conv_forward.5} parent=23 // pred_check_branch
        %146 = sbr.rel (%p144) target = $region28
      $region27: #{double_conv_forward.5} parent=23 // pred_region
        %s147 = smul.u32 16, %s17
        %p148 = scmp.lt.s32.totalorder %s16, 1
        %s149 = scalar_select %p148, %s16, 1
        %p150 = scmp.lt.s32.totalorder %s147, 15
        %s151 = scalar_select %p150, %s147, 15
        %s152 = smul.addr %s151, 2
        %s153 = smul.addr %s149, 32
        %s154 = sadd.s32 %s152, %s153
        %s155 = smul.addr %s154, 4
        %s156 = scalar_lea.vmem %s0, %s155
        %s157 = smul.u32 16, %s17
      $region28: #{double_conv_forward.5} parent=23 // pred_fallthru
        _
    $region24: #{double_conv_forward.5} parent=5 // pred_fallthru
      _
    %p158 = scmp.le.s32.totalorder 1, %s9
    %p159 = scmp.lt.s32.totalorder %s9, 3
    %p160 = pnand %p158, %p159
    %p161 = pneg %p160
    // Predicated region
    $region29: #{double_conv_forward.5} parent=5 // pred_check
      _
    $region30: #{double_conv_forward.5} parent=5 // pred_check_branch
      %163 = sbr.rel (%p160) target = $region32
    $region31: #{double_conv_forward.5} parent=5 // pred_region
      %s164 = ssub.s32 %s9, 1
      %s165 = smul.u32 16, %s19
      %p166 = scmp.lt.s32.totalorder %s18, 1
      %s167 = scalar_select %p166, %s18, 1
      %p168 = scmp.lt.s32.totalorder %s165, 15
      %s169 = scalar_select %p168, %s165, 15
      %s170 = smul.addr %s169, 2
      %s171 = smul.addr %s167, 32
      %s172 = sadd.s32 %s170, %s171
      %s173 = smul.addr %s172, 4
      %s174 = scalar_lea.vmem %s0, %s173
      %p175 = pneg %p49
      %p176 = pneg %p46
      %p177 = pneg %p70
      %p178 = pneg %p67
      %p179 = pneg %p91
      %p180 = pneg %p88
      %p181 = pneg %p119
      %p182 = pneg %p116
      %s183 = smul.u32 16, %s19
      %p184 = scmp.lt.s32.totalorder %s18, 1
      %s185 = scalar_select %p184, %s18, 1
      %p186 = scmp.lt.s32.totalorder %s183, 15
      %s187 = scalar_select %p186, %s183, 15
      %s188 = smul.addr %s187, 2
      %s189 = smul.addr %s185, 32
      %s190 = sadd.s32 %s188, %s189
      %s191 = smul.addr %s190, 8
      %s192 = scalar_lea.vmem %s3, %s191
      %s193 = smul.u32 16, %s19
      %p194 = scmp.lt.s32.totalorder %s18, 1
      %s195 = scalar_select %p194, %s18, 1
      %p196 = scmp.lt.s32.totalorder %s193, 15
      %s197 = scalar_select %p196, %s193, 15
      %s198 = smul.addr %s197, 2
      %s199 = smul.addr %s195, 32
      %s200 = sadd.s32 %s198, %s199
      %s201 = smul.addr %s200, 4
      %s202 = scalar_lea.vmem %s0, %s201
      %s203 = smul.u32 16, %s19
      %s204 = smul.u32 16, %s19
      %p205 = scmp.lt.s32.totalorder %s18, 1
      %s206 = scalar_select %p205, %s18, 1
      %p207 = scmp.lt.s32.totalorder %s204, 15
      %s208 = scalar_select %p207, %s204, 15
      %s209 = smul.addr %s208, 2
      %s210 = smul.addr %s206, 32
      %s211 = sadd.s32 %s209, %s210
      %s212 = smul.addr %s211, 8
      %s213 = scalar_lea.vmem %s3, %s212
      %s214 = smul.u32 16, %s19
      %v215 = vld [vmem:[%s1] sm:$0x1]
      %v216 = vld [vmem:[%s2] sm:$0x1]
      %v217 = vld [vmem:[%s202] sm:$0xf]
      %v218 = vld [vmem:[%s202 + $0x4] sm:$0xf]
      %v219 = vld [vmem:[%s202 + $0x8] sm:$0xf]
      %v220 = vld [vmem:[%s202 + $0xc] sm:$0xf]
      %v221 = vld [vmem:[%s202 + $0x10] sm:$0xf]
      %v222 = vld [vmem:[%s202 + $0x14] sm:$0xf]
      %v223 = vld [vmem:[%s202 + $0x18] sm:$0xf]
      %v224 = vld [vmem:[%s202 + $0x1c] sm:$0xf]
      %v225 = vld [vmem:[%s202 + $0x20] sm:$0xf]
      %v226 = vld [vmem:[%s202 + $0x24] sm:$0xf]
      %v227 = vld [vmem:[%s202 + $0x28] sm:$0xf]
      %v228 = vld [vmem:[%s202 + $0x2c] sm:$0xf]
      %v229 = vld [vmem:[%s202 + $0x30] sm:$0xf]
      %v230 = vld [vmem:[%s202 + $0x34] sm:$0xf]
      %v231 = vld [vmem:[%s202 + $0x38] sm:$0xf]
      %v232 = vld [vmem:[%s202 + $0x3c] sm:$0xf]
      %v233 = vld [vmem:[%s202 + $0x40] sm:$0xf]
      %v234 = vld [vmem:[%s202 + $0x44] sm:$0xf]
      %v235 = vld [vmem:[%s202 + $0x48] sm:$0xf]
      %v236 = vld [vmem:[%s202 + $0x4c] sm:$0xf]
      %v237 = vld [vmem:[%s202 + $0x50] sm:$0xf]
      %v238 = vld [vmem:[%s202 + $0x54] sm:$0xf]
      %v239 = vld [vmem:[%s202 + $0x58] sm:$0xf]
      %v240 = vld [vmem:[%s202 + $0x5c] sm:$0xf]
      %v241 = vld [vmem:[%s202 + $0x60] sm:$0xf]
      %v242 = vld [vmem:[%s202 + $0x64] sm:$0xf]
      %v243 = vld [vmem:[%s202 + $0x68] sm:$0xf]
      %v244 = vld [vmem:[%s202 + $0x6c] sm:$0xf]
      %v245 = vld [vmem:[%s202 + $0x70] sm:$0xf]
      %v246 = vld [vmem:[%s202 + $0x74] sm:$0xf]
      %v247 = vld [vmem:[%s202 + $0x78] sm:$0xf]
      %v248 = vld [vmem:[%s202 + $0x7c] sm:$0xf]
      %v249 = vunpack.c.l.bf16 %v217
      %v250 = vunpack.c.l.bf16 %v218
      %v251 = vunpack.c.l.bf16 %v219
      %v252 = vunpack.c.l.bf16 %v220
      %v253 = vunpack.c.l.bf16 %v221
      %v254 = vunpack.c.l.bf16 %v222
      %v255 = vunpack.c.l.bf16 %v223
      %v256 = vunpack.c.l.bf16 %v224
      %v257 = vunpack.c.l.bf16 %v225
      %v258 = vunpack.c.l.bf16 %v226
      %v259 = vunpack.c.l.bf16 %v227
      %v260 = vunpack.c.l.bf16 %v228
      %v261 = vunpack.c.l.bf16 %v229
      %v262 = vunpack.c.l.bf16 %v230
      %v263 = vunpack.c.l.bf16 %v231
      %v264 = vunpack.c.l.bf16 %v232
      %v265 = vunpack.c.l.bf16 %v233
      %v266 = vunpack.c.l.bf16 %v234
      %v267 = vunpack.c.l.bf16 %v235
      %v268 = vunpack.c.l.bf16 %v236
      %v269 = vunpack.c.l.bf16 %v237
      %v270 = vunpack.c.l.bf16 %v238
      %v271 = vunpack.c.l.bf16 %v239
      %v272 = vunpack.c.l.bf16 %v240
      %v273 = vunpack.c.l.bf16 %v241
      %v274 = vunpack.c.l.bf16 %v242
      %v275 = vunpack.c.l.bf16 %v243
      %v276 = vunpack.c.l.bf16 %v244
      %v277 = vunpack.c.l.bf16 %v245
      %v278 = vunpack.c.l.bf16 %v246
      %v279 = vunpack.c.l.bf16 %v247
      %v280 = vunpack.c.l.bf16 %v248
      %v282 = vlaneseq
      %v283 = vshrl.u32 %v282, 7
      %v284 = vsub.s32 0, %v283
      %v285 = vrot.slane %v215, %v284
      %v287 = vmul.f32 %v249, %v285
      %v288 = vmul.f32 %v250, %v285
      %v289 = vmul.f32 %v251, %v285
      %v290 = vmul.f32 %v252, %v285
      %v291 = vmul.f32 %v253, %v285
      %v292 = vmul.f32 %v254, %v285
      %v293 = vmul.f32 %v255, %v285
      %v294 = vmul.f32 %v256, %v285
      %v295 = vmul.f32 %v257, %v285
      %v296 = vmul.f32 %v258, %v285
      %v297 = vmul.f32 %v259, %v285
      %v298 = vmul.f32 %v260, %v285
      %v299 = vmul.f32 %v261, %v285
      %v300 = vmul.f32 %v262, %v285
      %v301 = vmul.f32 %v263, %v285
      %v302 = vmul.f32 %v264, %v285
      %v303 = vmul.f32 %v265, %v285
      %v304 = vmul.f32 %v266, %v285
      %v305 = vmul.f32 %v267, %v285
      %v306 = vmul.f32 %v268, %v285
      %v307 = vmul.f32 %v269, %v285
      %v308 = vmul.f32 %v270, %v285
      %v309 = vmul.f32 %v271, %v285
      %v310 = vmul.f32 %v272, %v285
      %v311 = vmul.f32 %v273, %v285
      %v312 = vmul.f32 %v274, %v285
      %v313 = vmul.f32 %v275, %v285
      %v314 = vmul.f32 %v276, %v285
      %v315 = vmul.f32 %v277, %v285
      %v316 = vmul.f32 %v278, %v285
      %v317 = vmul.f32 %v279, %v285
      %v318 = vmul.f32 %v280, %v285
      %v320 = vlaneseq
      %v321 = vshrl.u32 %v320, 7
      %v322 = vsub.s32 0, %v321
      %v323 = vrot.slane %v216, %v322
      %v325 = vadd.f32 %v287, %v323
      %v326 = vadd.f32 %v288, %v323
      %v327 = vadd.f32 %v289, %v323
      %v328 = vadd.f32 %v290, %v323
      %v329 = vadd.f32 %v291, %v323
      %v330 = vadd.f32 %v292, %v323
      %v331 = vadd.f32 %v293, %v323
      %v332 = vadd.f32 %v294, %v323
      %v333 = vadd.f32 %v295, %v323
      %v334 = vadd.f32 %v296, %v323
      %v335 = vadd.f32 %v297, %v323
      %v336 = vadd.f32 %v298, %v323
      %v337 = vadd.f32 %v299, %v323
      %v338 = vadd.f32 %v300, %v323
      %v339 = vadd.f32 %v301, %v323
      %v340 = vadd.f32 %v302, %v323
      %v341 = vadd.f32 %v303, %v323
      %v342 = vadd.f32 %v304, %v323
      %v343 = vadd.f32 %v305, %v323
      %v344 = vadd.f32 %v306, %v323
      %v345 = vadd.f32 %v307, %v323
      %v346 = vadd.f32 %v308, %v323
      %v347 = vadd.f32 %v309, %v323
      %v348 = vadd.f32 %v310, %v323
      %v349 = vadd.f32 %v311, %v323
      %v350 = vadd.f32 %v312, %v323
      %v351 = vadd.f32 %v313, %v323
      %v352 = vadd.f32 %v314, %v323
      %v353 = vadd.f32 %v315, %v323
      %v354 = vadd.f32 %v316, %v323
      %v355 = vadd.f32 %v317, %v323
      %v356 = vadd.f32 %v318, %v323
      %v357 = vmax.f32 %v325, 0.0
      %v358 = vmax.f32 %v326, 0.0
      %v359 = vmax.f32 %v327, 0.0
      %v360 = vmax.f32 %v328, 0.0
      %v361 = vmax.f32 %v329, 0.0
      %v362 = vmax.f32 %v330, 0.0
      %v363 = vmax.f32 %v331, 0.0
      %v364 = vmax.f32 %v332, 0.0
      %v365 = vmax.f32 %v333, 0.0
      %v366 = vmax.f32 %v334, 0.0
      %v367 = vmax.f32 %v335, 0.0
      %v368 = vmax.f32 %v336, 0.0
      %v369 = vmax.f32 %v337, 0.0
      %v370 = vmax.f32 %v338, 0.0
      %v371 = vmax.f32 %v339, 0.0
      %v372 = vmax.f32 %v340, 0.0
      %v373 = vmax.f32 %v341, 0.0
      %v374 = vmax.f32 %v342, 0.0
      %v375 = vmax.f32 %v343, 0.0
      %v376 = vmax.f32 %v344, 0.0
      %v377 = vmax.f32 %v345, 0.0
      %v378 = vmax.f32 %v346, 0.0
      %v379 = vmax.f32 %v347, 0.0
      %v380 = vmax.f32 %v348, 0.0
      %v381 = vmax.f32 %v349, 0.0
      %v382 = vmax.f32 %v350, 0.0
      %v383 = vmax.f32 %v351, 0.0
      %v384 = vmax.f32 %v352, 0.0
      %v385 = vmax.f32 %v353, 0.0
      %v386 = vmax.f32 %v354, 0.0
      %v387 = vmax.f32 %v355, 0.0
      %v388 = vmax.f32 %v356, 0.0
      %vm389 = vcmask 31744
      %390 = vst.msk [vmem:[%s213] sm:$0xff] %vm389, %v357
      %391 = vst.msk [vmem:[%s213 + $0x8] sm:$0xff] %vm389, %v358
      %392 = vst.msk [vmem:[%s213 + $0x10] sm:$0xff] %vm389, %v359
      %393 = vst.msk [vmem:[%s213 + $0x18] sm:$0xff] %vm389, %v360
      %394 = vst.msk [vmem:[%s213 + $0x20] sm:$0xff] %vm389, %v361
      %395 = vst.msk [vmem:[%s213 + $0x28] sm:$0xff] %vm389, %v362
      %396 = vst.msk [vmem:[%s213 + $0x30] sm:$0xff] %vm389, %v363
      %397 = vst.msk [vmem:[%s213 + $0x38] sm:$0xff] %vm389, %v364
      %398 = vst.msk [vmem:[%s213 + $0x40] sm:$0xff] %vm389, %v365
      %399 = vst.msk [vmem:[%s213 + $0x48] sm:$0xff] %vm389, %v366
      %400 = vst.msk [vmem:[%s213 + $0x50] sm:$0xff] %vm389, %v367
      %401 = vst.msk [vmem:[%s213 + $0x58] sm:$0xff] %vm389, %v368
      %402 = vst.msk [vmem:[%s213 + $0x60] sm:$0xff] %vm389, %v369
      %403 = vst.msk [vmem:[%s213 + $0x68] sm:$0xff] %vm389, %v370
      %404 = vst.msk [vmem:[%s213 + $0x70] sm:$0xff] %vm389, %v371
      %405 = vst.msk [vmem:[%s213 + $0x78] sm:$0xff] %vm389, %v372
      %406 = vst.msk [vmem:[%s213 + $0x80] sm:$0xff] %vm389, %v373
      %407 = vst.msk [vmem:[%s213 + $0x88] sm:$0xff] %vm389, %v374
      %408 = vst.msk [vmem:[%s213 + $0x90] sm:$0xff] %vm389, %v375
      %409 = vst.msk [vmem:[%s213 + $0x98] sm:$0xff] %vm389, %v376
      %410 = vst.msk [vmem:[%s213 + $0xa0] sm:$0xff] %vm389, %v377
      %411 = vst.msk [vmem:[%s213 + $0xa8] sm:$0xff] %vm389, %v378
      %412 = vst.msk [vmem:[%s213 + $0xb0] sm:$0xff] %vm389, %v379
      %413 = vst.msk [vmem:[%s213 + $0xb8] sm:$0xff] %vm389, %v380
      %414 = vst.msk [vmem:[%s213 + $0xc0] sm:$0xff] %vm389, %v381
      %415 = vst.msk [vmem:[%s213 + $0xc8] sm:$0xff] %vm389, %v382
      %416 = vst.msk [vmem:[%s213 + $0xd0] sm:$0xff] %vm389, %v383
      %417 = vst.msk [vmem:[%s213 + $0xd8] sm:$0xff] %vm389, %v384
      %418 = vst.msk [vmem:[%s213 + $0xe0] sm:$0xff] %vm389, %v385
      %419 = vst.msk [vmem:[%s213 + $0xe8] sm:$0xff] %vm389, %v386
      %420 = vst.msk [vmem:[%s213 + $0xf0] sm:$0xff] %vm389, %v387
      %421 = vst.msk [vmem:[%s213 + $0xf8] sm:$0xff] %vm389, %v388
      %s422 = smul.u32 16, %s19
      %p423 = scmp.lt.s32.totalorder %s18, 1
      %s424 = scalar_select %p423, %s18, 1
      %p425 = scmp.lt.s32.totalorder %s422, 15
      %s426 = scalar_select %p425, %s422, 15
      %s427 = smul.addr %s426, 2
      %s428 = smul.addr %s424, 32
      %s429 = sadd.s32 %s427, %s428
      %s430 = smul.addr %s429, 8
      %s431 = scalar_lea.vmem %s3, %s430
      // Predicated region
      $region33: #{double_conv_forward.5} parent=31 // pred_check
        %p432 = pneg %p116
      $region34: #{double_conv_forward.5} parent=31 // pred_check_branch
        %434 = sbr.rel (%p432) target = $region36
      $region35: #{double_conv_forward.5} parent=31 // pred_region
        %s435 = smul.u32 16, %s19
      $region36: #{double_conv_forward.5} parent=31 // pred_fallthru
        _
    $region32: #{double_conv_forward.5} parent=5 // pred_fallthru
      _
    %p436 = scmp.le.s32.totalorder 2, %s9
    // Predicated region
    $region37: #{double_conv_forward.5} parent=5 // pred_check
      %p437 = pneg %p436
    $region38: #{double_conv_forward.5} parent=5 // pred_check_branch
      %439 = sbr.rel (%p437) target = $region40
    $region39: #{double_conv_forward.5} parent=5 // pred_region
      %s440 = ssub.s32 %s9, 2
      // Predicated region
      $region41: #{double_conv_forward.5} parent=39 // pred_check
        %p441 = pneg %p122
      $region42: #{double_conv_forward.5} parent=39 // pred_check_branch
        %443 = sbr.rel (%p441) target = $region44
      $region43: #{double_conv_forward.5} parent=39 // pred_region
        %s444 = smul.u32 16, %s21
        %p445 = scmp.lt.s32.totalorder %s20, 1
        %s446 = scalar_select %p445, %s20, 1
        %p447 = scmp.lt.s32.totalorder %s444, 15
        %s448 = scalar_select %p447, %s444, 15
        %s449 = smul.addr %s448, 2
        %s450 = smul.addr %s446, 32
        %s451 = sadd.s32 %s449, %s450
        %s452 = smul.addr %s451, 8
        %s453 = scalar_lea.vmem %s3, %s452
      $region44: #{double_conv_forward.5} parent=39 // pred_fallthru
        _
    $region40: #{double_conv_forward.5} parent=5 // pred_fallthru
      _
  $region6: #{double_conv_forward.5} parent=0 // loop_footer
    %s13 = sadd.s32 1, %s9
  $region7: #{double_conv_forward.5} parent=0 // loop_footer_branch
    %8 = sbr.rel target = $region3
  $region8: #{double_conv_forward.5} parent=0 // loop_exit
    _

// kernel: double_conv_forward.3
$region0: #{double_conv_forward.3}
  #allocation0 [shape = 'u32[]', space=smem, size = 0x4, offset = 0x4, fixed_abs, tag = 'smem constant byte address 0x4 - core index']
  #allocation1 [shape = 'u32[144,128]{1,0:T(1,128)}', space=vmem, size = 0x12000, scoped, tag = 'internal scratch']
  #allocation2 [shape = 'f32[18,18,4]{2,1,0:T(8,128)}', space=vmem, size = 0x36000, scoped, tag = 'scratch operand']
  %s0 = inlined_call_operand.vmem [shape: f32[2,16,16,4], index: 0, kind: input, shape index: {}, may-alias: {0,1,2}]
  %s1 = inlined_call_operand.vmem [shape: f32[2,16,16,4], index: 1, kind: input, shape index: {}, may-alias: {0,1,2}]
  %s2 = inlined_call_operand.vmem [shape: f32[2,16,16,4], index: 2, kind: input, shape index: {}, may-alias: {0,1,2}]
  %s3 = inlined_call_operand.vmem [shape: bf16[9,4,8], index: 3, kind: input, shape index: {}]
  %s4 = inlined_call_operand.vmem [shape: bf16[2,16,16,8], index: 4, kind: output, shape index: {0}]
  %s5 = inlined_call_operand.vmem [shape: f32[2,1,2,8], index: 5, kind: output, shape index: {1}]
  %6 = xla_tuple %s4, %s5
  %s7 = sld [smem:[#allocation0]]
  $region57: #{double_conv_forward.3} parent=0
    _
  %s9 = ssub.s32 1, %s7
  %s10 = scalar_select 0, %s9, %s7
  loop: start=0, step=1, limit=4
  $region2: #{double_conv_forward.3} parent=0 // loop_pre_header
    _
  $region3: #{double_conv_forward.3} parent=0 // loop_header
    %s12 = sphi 0, %s16
    %p13 = scmp.ge.s32.totalorder %s12, 4
    %s19 = sphi 0, %s31
    %s20 = sphi 0, %s27
    %s21 = sphi 0, %s19
    %s22 = sphi 0, %s20
    %s23 = sphi 0, %s21
    %s24 = sphi 0, %s22
    %s36 = sphi 0, %s38
    %s39 = sphi 0, %s36
    %s40 = sphi 0, %s39
    %s56 = sphi 0, %s40
    %s72 = sphi 0, %s74
    %s75 = sphi 0, %s72
    %s76 = sphi 0, %s75
    %s92 = sphi 0, %s76
    %s108 = sphi 0, %s110
    %s111 = sphi 0, %s108
    %s112 = sphi 0, %s111
    %s128 = sphi 0, %s112
    %s132 = sphi 0, %s132
    %s134 = sphi 0, %s132
    %s135 = sphi 0, %s134
    %s149 = sphi 0, %s135
    %s157 = sphi 0, %s159
    %s160 = sphi 0, %s157
    %s161 = sphi 0, %s160
    %s177 = sphi 0, %s161
    %s185 = sphi 0, %s187
    %s188 = sphi 0, %s185
    %s189 = sphi 0, %s188
    %s205 = sphi 0, %s189
  $region4: #{double_conv_forward.3} parent=0 // loop_header_branch
    %15 = sbr.rel (%p13) target = $region8
  $region5: #{double_conv_forward.3} parent=0 // loop_body
    %s17 = ssub.s32 %s12, 1
    %s18 = ssub.s32 %s12, 2
    %s25 = sadd.s32 1, %s20
    %p26 = scmp.ge.s32.totalorder %s25, 1
    %s27 = scalar_select %p26, 0, %s25
    %s28 = sadd.s32 1, %s19
    %s29 = scalar_select %p26, %s28, %s19
    %p30 = scmp.ge.s32.totalorder %s29, 2
    %s31 = scalar_select %p30, 0, %s29
    %s32 = ssub.s32 %s19, %s31
    %s33 = ssub.s32 %s20, %s27
    %s34 = sor.u32 %s32, %s33
    %p35 = scmp.eq.s32.totalorder %s34, 0
    %s37 = sadd.s32 %s36, 1
    %s38 = scalar_select %p35, %s36, %s37
    %p41 = pneg %p35
    %p42 = scmp.eq.s32.totalorder %s12, 1
    %p43 = por %p41, %p42
    %p44 = scmp.ne.s32.totalorder %s36, %s39
    %p45 = scmp.eq.s32.totalorder %s12, 0
    %p46 = por %p44, %p45
    %p47 = scmp.ne.s32.totalorder %s36, %s39
    %p48 = scmp.eq.s32.totalorder %s17, 1
    %p49 = por %p47, %p48
    %p50 = scmp.ne.s32.totalorder %s39, %s40
    %p51 = scmp.eq.s32.totalorder %s17, 0
    %p52 = por %p50, %p51
    %p53 = scmp.ne.s32.totalorder %s39, %s40
    %p54 = scmp.eq.s32.totalorder %s18, 1
    %p55 = por %p53, %p54
    %p57 = scmp.ne.s32.totalorder %s40, %s56
    %p58 = scmp.eq.s32.totalorder %s18, 0
    %p59 = por %p57, %p58
    %s60 = smul.u32 %s20, 16
    %s61 = ssub.s32 %s60, 1
    %p62 = scmp.gt.s32.totalorder %s61, 0
    %s63 = scalar_select %p62, %s61, 0
    %s64 = smul.u32 %s27, 16
    %s65 = ssub.s32 %s64, 1
    %p66 = scmp.gt.s32.totalorder %s65, 0
    %s67 = scalar_select %p66, %s65, 0
    %s68 = ssub.s32 %s19, %s31
    %s69 = ssub.s32 %s63, %s67
    %s70 = sor.u32 %s68, %s69
    %p71 = scmp.eq.s32.totalorder %s70, 0
    %s73 = sadd.s32 %s72, 1
    %s74 = scalar_select %p71, %s72, %s73
    %p77 = pneg %p71
    %p78 = scmp.eq.s32.totalorder %s12, 1
    %p79 = por %p77, %p78
    %p80 = scmp.ne.s32.totalorder %s72, %s75
    %p81 = scmp.eq.s32.totalorder %s12, 0
    %p82 = por %p80, %p81
    %p83 = scmp.ne.s32.totalorder %s72, %s75
    %p84 = scmp.eq.s32.totalorder %s17, 1
    %p85 = por %p83, %p84
    %p86 = scmp.ne.s32.totalorder %s75, %s76
    %p87 = scmp.eq.s32.totalorder %s17, 0
    %p88 = por %p86, %p87
    %p89 = scmp.ne.s32.totalorder %s75, %s76
    %p90 = scmp.eq.s32.totalorder %s18, 1
    %p91 = por %p89, %p90
    %p93 = scmp.ne.s32.totalorder %s76, %s92
    %p94 = scmp.eq.s32.totalorder %s18, 0
    %p95 = por %p93, %p94
    %s96 = smul.u32 %s20, 16
    %s97 = sadd.s32 %s96, 16
    %p98 = scmp.lt.s32.totalorder %s97, 15
    %s99 = scalar_select %p98, %s97, 15
    %s100 = smul.u32 %s27, 16
    %s101 = sadd.s32 %s100, 16
    %p102 = scmp.lt.s32.totalorder %s101, 15
    %s103 = scalar_select %p102, %s101, 15
    %s104 = ssub.s32 %s19, %s31
    %s105 = ssub.s32 %s99, %s103
    %s106 = sor.u32 %s104, %s105
    %p107 = scmp.eq.s32.totalorder %s106, 0
    %s109 = sadd.s32 %s108, 1
    %s110 = scalar_select %p107, %s108, %s109
    %p113 = pneg %p107
    %p114 = scmp.eq.s32.totalorder %s12, 1
    %p115 = por %p113, %p114
    %p116 = scmp.ne.s32.totalorder %s108, %s111
    %p117 = scmp.eq.s32.totalorder %s12, 0
    %p118 = por %p116, %p117
    %p119 = scmp.ne.s32.totalorder %s108, %s111
    %p120 = scmp.eq.s32.totalorder %s17, 1
    %p121 = por %p119, %p120
    %p122 = scmp.ne.s32.totalorder %s111, %s112
    %p123 = scmp.eq.s32.totalorder %s17, 0
    %p124 = por %p122, %p123
    %p125 = scmp.ne.s32.totalorder %s111, %s112
    %p126 = scmp.eq.s32.totalorder %s18, 1
    %p127 = por %p125, %p126
    %p129 = scmp.ne.s32.totalorder %s112, %s128
    %p130 = scmp.eq.s32.totalorder %s18, 0
    %p131 = por %p129, %p130
    %s133 = sadd.s32 %s132, 1
    %p136 = scmp.eq.s32.totalorder %s12, 1
    %p137 = scmp.ne.s32.totalorder %s132, %s134
    %p138 = scmp.eq.s32.totalorder %s12, 0
    %p139 = por %p137, %p138
    %p140 = scmp.ne.s32.totalorder %s132, %s134
    %p141 = scmp.eq.s32.totalorder %s17, 1
    %p142 = por %p140, %p141
    %p143 = scmp.ne.s32.totalorder %s134, %s135
    %p144 = scmp.eq.s32.totalorder %s17, 0
    %p145 = por %p143, %p144
    %p146 = scmp.ne.s32.totalorder %s134, %s135
    %p147 = scmp.eq.s32.totalorder %s18, 1
    %p148 = por %p146, %p147
    %p150 = scmp.ne.s32.totalorder %s135, %s149
    %p151 = scmp.eq.s32.totalorder %s18, 0
    %p152 = por %p150, %p151
    %s153 = ssub.s32 %s19, %s31
    %s154 = ssub.s32 %s20, %s27
    %s155 = sor.u32 %s153, %s154
    %p156 = scmp.eq.s32.totalorder %s155, 0
    %s158 = sadd.s32 %s157, 1
    %s159 = scalar_select %p156, %s157, %s158
    %p162 = pneg %p156
    %p163 = scmp.eq.s32.totalorder %s12, 1
    %p164 = por %p162, %p163
    %p165 = scmp.ne.s32.totalorder %s157, %s160
    %p166 = scmp.eq.s32.totalorder %s12, 0
    %p167 = por %p165, %p166
    %p168 = scmp.ne.s32.totalorder %s157, %s160
    %p169 = scmp.eq.s32.totalorder %s17, 1
    %p170 = por %p168, %p169
    %p171 = scmp.ne.s32.totalorder %s160, %s161
    %p172 = scmp.eq.s32.totalorder %s17, 0
    %p173 = por %p171, %p172
    %p174 = scmp.ne.s32.totalorder %s160, %s161
    %p175 = scmp.eq.s32.totalorder %s18, 1
    %p176 = por %p174, %p175
    %p178 = scmp.ne.s32.totalorder %s161, %s177
    %p179 = scmp.eq.s32.totalorder %s18, 0
    %p180 = por %p178, %p179
    %s181 = ssub.s32 %s19, %s31
    %s182 = ssub.s32 %s20, %s27
    %s183 = sor.u32 %s181, %s182
    %p184 = scmp.eq.s32.totalorder %s183, 0
    %s186 = sadd.s32 %s185, 1
    %s187 = scalar_select %p184, %s185, %s186
    %p190 = pneg %p184
    %p191 = scmp.eq.s32.totalorder %s12, 1
    %p192 = por %p190, %p191
    %p193 = scmp.ne.s32.totalorder %s185, %s188
    %p194 = scmp.eq.s32.totalorder %s12, 0
    %p195 = por %p193, %p194
    %p196 = scmp.ne.s32.totalorder %s185, %s188
    %p197 = scmp.eq.s32.totalorder %s17, 1
    %p198 = por %p196, %p197
    %p199 = scmp.ne.s32.totalorder %s188, %s189
    %p200 = scmp.eq.s32.totalorder %s17, 0
    %p201 = por %p199, %p200
    %p202 = scmp.ne.s32.totalorder %s188, %s189
    %p203 = scmp.eq.s32.totalorder %s18, 1
    %p204 = por %p202, %p203
    %p206 = scmp.ne.s32.totalorder %s189, %s205
    %p207 = scmp.eq.s32.totalorder %s18, 0
    %p208 = por %p206, %p207
    %p209 = scmp.le.s32.totalorder 1, %s12
    %p210 = scmp.lt.s32.totalorder %s12, 3
    %p211 = pnand %p209, %p210
    %p212 = pneg %p211
    // Predicated region
    $region9: #{double_conv_forward.3} parent=5 // pred_check
      _
    $region10: #{double_conv_forward.3} parent=5 // pred_check_branch
      %214 = sbr.rel (%p211) target = $region12
    $region11: #{double_conv_forward.3} parent=5 // pred_region
      %s215 = ssub.s32 %s12, 1
      // Predicated region
      $region13: #{double_conv_forward.3} parent=11 // pred_check
        %p216 = pneg %p145
      $region14: #{double_conv_forward.3} parent=11 // pred_check_branch
        %218 = sbr.rel (%p216) target = $region16
      $region15: #{double_conv_forward.3} parent=11 // pred_region
        _
      $region16: #{double_conv_forward.3} parent=11 // pred_fallthru
        _
    $region12: #{double_conv_forward.3} parent=5 // pred_fallthru
      _
    %p219 = scmp.lt.s32.totalorder %s12, 2
    // Predicated region
    $region17: #{double_conv_forward.3} parent=5 // pred_check
      %p220 = pneg %p219
    $region18: #{double_conv_forward.3} parent=5 // pred_check_branch
      %222 = sbr.rel (%p220) target = $region20
    $region19: #{double_conv_forward.3} parent=5 // pred_region
      // Predicated region
      $region21: #{double_conv_forward.3} parent=19 // pred_check
        %p223 = pneg %p46
      $region22: #{double_conv_forward.3} parent=19 // pred_check_branch
        %225 = sbr.rel (%p223) target = $region24
      $region23: #{double_conv_forward.3} parent=19 // pred_region
        %s226 = smul.u32 16, %s20
        %p227 = scmp.lt.s32.totalorder %s19, 1
        %s228 = scalar_select %p227, %s19, 1
        %p229 = scmp.lt.s32.totalorder %s226, 15
        %s230 = scalar_select %p229, %s226, 15
        %s231 = smul.addr %s230, 2
        %s232 = smul.addr %s228, 32
        %s233 = sadd.s32 %s231, %s232
        %s234 = smul.addr %s233, 8
        %s235 = scalar_lea.vmem %s0, %s234
        %s236 = smul.u32 16, %s20
      $region24: #{double_conv_forward.3} parent=19 // pred_fallthru
        _
      // Predicated region
      $region25: #{double_conv_forward.3} parent=19 // pred_check
        %p237 = pneg %p82
      $region26: #{double_conv_forward.3} parent=19 // pred_check_branch
        %239 = sbr.rel (%p237) target = $region28
      $region27: #{double_conv_forward.3} parent=19 // pred_region
        %s240 = smul.u32 %s20, 16
        %s241 = ssub.s32 %s240, 1
        %p242 = scmp.gt.s32.totalorder %s241, 0
        %s243 = scalar_select %p242, %s241, 0
        %p244 = scmp.lt.s32.totalorder %s19, 1
        %s245 = scalar_select %p244, %s19, 1
        %p246 = scmp.lt.s32.totalorder %s243, 15
        %s247 = scalar_select %p246, %s243, 15
        %s248 = smul.addr %s247, 2
        %s249 = smul.addr %s245, 32
        %s250 = sadd.s32 %s248, %s249
        %s251 = smul.addr %s250, 8
        %s252 = scalar_lea.vmem %s1, %s251
        %s253 = smul.u32 %s20, 16
        %s254 = ssub.s32 %s253, 1
        %p255 = scmp.gt.s32.totalorder %s254, 0
        %s256 = scalar_select %p255, %s254, 0
      $region28: #{double_conv_forward.3} parent=19 // pred_fallthru
        _
      // Predicated region
      $region29: #{double_conv_forward.3} parent=19 // pred_check
        %p257 = pneg %p118
      $region30: #{double_conv_forward.3} parent=19 // pred_check_branch
        %259 = sbr.rel (%p257) target = $region32
      $region31: #{double_conv_forward.3} parent=19 // pred_region
        %s260 = smul.u32 %s20, 16
        %s261 = sadd.s32 %s260, 16
        %p262 = scmp.lt.s32.totalorder %s261, 15
        %s263 = scalar_select %p262, %s261, 15
        %p264 = scmp.lt.s32.totalorder %s19, 1
        %s265 = scalar_select %p264, %s19, 1
        %p266 = scmp.lt.s32.totalorder %s263, 15
        %s267 = scalar_select %p266, %s263, 15
        %s268 = smul.addr %s267, 2
        %s269 = smul.addr %s265, 32
        %s270 = sadd.s32 %s268, %s269
        %s271 = smul.addr %s270, 8
        %s272 = scalar_lea.vmem %s2, %s271
        %s273 = smul.u32 %s20, 16
        %s274 = sadd.s32 %s273, 16
        %p275 = scmp.lt.s32.totalorder %s274, 15
        %s276 = scalar_select %p275, %s274, 15
      $region32: #{double_conv_forward.3} parent=19 // pred_fallthru
        _
    $region20: #{double_conv_forward.3} parent=5 // pred_fallthru
      _
    %p277 = scmp.le.s32.totalorder 1, %s12
    %p278 = scmp.lt.s32.totalorder %s12, 3
    %p279 = pnand %p277, %p278
    %p280 = pneg %p279
    // Predicated region
    $region33: #{double_conv_forward.3} parent=5 // pred_check
      _
    $region34: #{double_conv_forward.3} parent=5 // pred_check_branch
      %282 = sbr.rel (%p279) target = $region36
    $region35: #{double_conv_forward.3} parent=5 // pred_region
      %s283 = ssub.s32 %s12, 1
      %s284 = smul.u32 16, %s22
      %p285 = scmp.lt.s32.totalorder %s21, 1
      %s286 = scalar_select %p285, %s21, 1
      %p287 = scmp.lt.s32.totalorder %s284, 15
      %s288 = scalar_select %p287, %s284, 15
      %s289 = smul.addr %s288, 2
      %s290 = smul.addr %s286, 32
      %s291 = sadd.s32 %s289, %s290
      %s292 = smul.addr %s291, 8
      %s293 = scalar_lea.vmem %s0, %s292
      %p294 = pneg %p52
      %p295 = pneg %p49
      %s296 = smul.u32 %s22, 16
      %s297 = ssub.s32 %s296, 1
      %p298 = scmp.gt.s32.totalorder %s297, 0
      %s299 = scalar_select %p298, %s297, 0
      %p300 = scmp.lt.s32.totalorder %s21, 1
      %s301 = scalar_select %p300, %s21, 1
      %p302 = scmp.lt.s32.totalorder %s299, 15
      %s303 = scalar_select %p302, %s299, 15
      %s304 = smul.addr %s303, 2
      %s305 = smul.addr %s301, 32
      %s306 = sadd.s32 %s304, %s305
      %s307 = smul.addr %s306, 8
      %s308 = scalar_lea.vmem %s1, %s307
      %p309 = pneg %p88
      %p310 = pneg %p85
      %s311 = smul.u32 %s22, 16
      %s312 = sadd.s32 %s311, 16
      %p313 = scmp.lt.s32.totalorder %s312, 15
      %s314 = scalar_select %p313, %s312, 15
      %p315 = scmp.lt.s32.totalorder %s21, 1
      %s316 = scalar_select %p315, %s21, 1
      %p317 = scmp.lt.s32.totalorder %s314, 15
      %s318 = scalar_select %p317, %s314, 15
      %s319 = smul.addr %s318, 2
      %s320 = smul.addr %s316, 32
      %s321 = sadd.s32 %s319, %s320
      %s322 = smul.addr %s321, 8
      %s323 = scalar_lea.vmem %s2, %s322
      %p324 = pneg %p124
      %p325 = pneg %p121
      %p326 = pneg %p145
      %p327 = pneg %p142
      %p328 = pneg %p173
      %p329 = pneg %p170
      %s330 = smul.u32 16, %s22
      %p331 = scmp.lt.s32.totalorder %s21, 1
      %s332 = scalar_select %p331, %s21, 1
      %p333 = scmp.lt.s32.totalorder %s330, 15
      %s334 = scalar_select %p333, %s330, 15
      %s335 = smul.addr %s334, 2
      %s336 = smul.addr %s332, 32
      %s337 = sadd.s32 %s335, %s336
      %s338 = smul.addr %s337, 4
      %s339 = scalar_lea.vmem %s4, %s338
      %p340 = pneg %p201
      %p341 = pneg %p198
      %p342 = scmp.lt.s32.totalorder %s21, 1
      %s343 = scalar_select %p342, %s21, 1
      %p344 = scmp.lt.s32.totalorder %s22, 0
      %s345 = scalar_select %p344, %s22, 0
      %s346 = sadd.s32 %s345, %s343
      %s347 = smul.addr %s346, 2
      %s348 = scalar_lea.vmem %s5, %s347
      %s349 = smul.u32 16, %s22
      %p350 = scmp.lt.s32.totalorder %s21, 1
      %s351 = scalar_select %p350, %s21, 1
      %p352 = scmp.lt.s32.totalorder %s349, 15
      %s353 = scalar_select %p352, %s349, 15
      %s354 = smul.addr %s353, 2
      %s355 = smul.addr %s351, 32
      %s356 = sadd.s32 %s354, %s355
      %s357 = smul.addr %s356, 8
      %s358 = scalar_lea.vmem %s0, %s357
      %s359 = smul.u32 16, %s22
      %s360 = smul.u32 %s22, 16
      %s361 = ssub.s32 %s360, 1
      %p362 = scmp.gt.s32.totalorder %s361, 0
      %s363 = scalar_select %p362, %s361, 0
      %p364 = scmp.lt.s32.totalorder %s21, 1
      %s365 = scalar_select %p364, %s21, 1
      %p366 = scmp.lt.s32.totalorder %s363, 15
      %s367 = scalar_select %p366, %s363, 15
      %s368 = smul.addr %s367, 2
      %s369 = smul.addr %s365, 32
      %s370 = sadd.s32 %s368, %s369
      %s371 = smul.addr %s370, 8
      %s372 = scalar_lea.vmem %s1, %s371
      %s373 = smul.u32 %s22, 16
      %s374 = ssub.s32 %s373, 1
      %p375 = scmp.gt.s32.totalorder %s374, 0
      %s376 = scalar_select %p375, %s374, 0
      %s377 = smul.u32 %s22, 16
      %s378 = sadd.s32 %s377, 16
      %p379 = scmp.lt.s32.totalorder %s378, 15
      %s380 = scalar_select %p379, %s378, 15
      %p381 = scmp.lt.s32.totalorder %s21, 1
      %s382 = scalar_select %p381, %s21, 1
      %p383 = scmp.lt.s32.totalorder %s380, 15
      %s384 = scalar_select %p383, %s380, 15
      %s385 = smul.addr %s384, 2
      %s386 = smul.addr %s382, 32
      %s387 = sadd.s32 %s385, %s386
      %s388 = smul.addr %s387, 8
      %s389 = scalar_lea.vmem %s2, %s388
      %s390 = smul.u32 %s22, 16
      %s391 = sadd.s32 %s390, 16
      %p392 = scmp.lt.s32.totalorder %s391, 15
      %s393 = scalar_select %p392, %s391, 15
      %s394 = smul.u32 16, %s22
      %p395 = scmp.lt.s32.totalorder %s21, 1
      %s396 = scalar_select %p395, %s21, 1
      %p397 = scmp.lt.s32.totalorder %s394, 15
      %s398 = scalar_select %p397, %s394, 15
      %s399 = smul.addr %s398, 2
      %s400 = smul.addr %s396, 32
      %s401 = sadd.s32 %s399, %s400
      %s402 = smul.addr %s401, 4
      %s403 = scalar_lea.vmem %s4, %s402
      %s404 = smul.u32 16, %s22
      %p405 = scmp.lt.s32.totalorder %s21, 1
      %s406 = scalar_select %p405, %s21, 1
      %p407 = scmp.lt.s32.totalorder %s22, 0
      %s408 = scalar_select %p407, %s22, 0
      %s409 = sadd.s32 %s408, %s406
      %s410 = smul.addr %s409, 2
      %s411 = scalar_lea.vmem %s5, %s410
      %vm413 = vcmask 24576
      %414 = vst.msk [vmem:[#allocation2] sm:$0x1] %vm413, 0.0
      %415 = vst.msk [vmem:[#allocation2 + $0x18] sm:$0x1] %vm413, 0.0
      %416 = vst.msk [vmem:[#allocation2 + $0x30] sm:$0x1] %vm413, 0.0
      %417 = vst.msk [vmem:[#allocation2 + $0x48] sm:$0x1] %vm413, 0.0
      %418 = vst.msk [vmem:[#allocation2 + $0x60] sm:$0x1] %vm413, 0.0
      %419 = vst.msk [vmem:[#allocation2 + $0x78] sm:$0x1] %vm413, 0.0
      %420 = vst.msk [vmem:[#allocation2 + $0x90] sm:$0x1] %vm413, 0.0
      %421 = vst.msk [vmem:[#allocation2 + $0xa8] sm:$0x1] %vm413, 0.0
      %422 = vst.msk [vmem:[#allocation2 + $0xc0] sm:$0x1] %vm413, 0.0
      %423 = vst.msk [vmem:[#allocation2 + $0xd8] sm:$0x1] %vm413, 0.0
      %424 = vst.msk [vmem:[#allocation2 + $0xf0] sm:$0x1] %vm413, 0.0
      %425 = vst.msk [vmem:[#allocation2 + $0x108] sm:$0x1] %vm413, 0.0
      %426 = vst.msk [vmem:[#allocation2 + $0x120] sm:$0x1] %vm413, 0.0
      %427 = vst.msk [vmem:[#allocation2 + $0x138] sm:$0x1] %vm413, 0.0
      %428 = vst.msk [vmem:[#allocation2 + $0x150] sm:$0x1] %vm413, 0.0
      %429 = vst.msk [vmem:[#allocation2 + $0x168] sm:$0x1] %vm413, 0.0
      %430 = vst.msk [vmem:[#allocation2 + $0x180] sm:$0x1] %vm413, 0.0
      %431 = vst.msk [vmem:[#allocation2 + $0x198] sm:$0x1] %vm413, 0.0
      %432 = vst.msk [vmem:[#allocation2 + $0x11] sm:$0x1] %vm413, 0.0
      %433 = vst.msk [vmem:[#allocation2 + $0x29] sm:$0x1] %vm413, 0.0
      %434 = vst.msk [vmem:[#allocation2 + $0x41] sm:$0x1] %vm413, 0.0
      %435 = vst.msk [vmem:[#allocation2 + $0x59] sm:$0x1] %vm413, 0.0
      %436 = vst.msk [vmem:[#allocation2 + $0x71] sm:$0x1] %vm413, 0.0
      %437 = vst.msk [vmem:[#allocation2 + $0x89] sm:$0x1] %vm413, 0.0
      %438 = vst.msk [vmem:[#allocation2 + $0xa1] sm:$0x1] %vm413, 0.0
      %439 = vst.msk [vmem:[#allocation2 + $0xb9] sm:$0x1] %vm413, 0.0
      %440 = vst.msk [vmem:[#allocation2 + $0xd1] sm:$0x1] %vm413, 0.0
      %441 = vst.msk [vmem:[#allocation2 + $0xe9] sm:$0x1] %vm413, 0.0
      %442 = vst.msk [vmem:[#allocation2 + $0x101] sm:$0x1] %vm413, 0.0
      %443 = vst.msk [vmem:[#allocation2 + $0x119] sm:$0x1] %vm413, 0.0
      %444 = vst.msk [vmem:[#allocation2 + $0x131] sm:$0x1] %vm413, 0.0
      %445 = vst.msk [vmem:[#allocation2 + $0x149] sm:$0x1] %vm413, 0.0
      %446 = vst.msk [vmem:[#allocation2 + $0x161] sm:$0x1] %vm413, 0.0
      %447 = vst.msk [vmem:[#allocation2 + $0x179] sm:$0x1] %vm413, 0.0
      %448 = vst.msk [vmem:[#allocation2 + $0x191] sm:$0x1] %vm413, 0.0
      %449 = vst.msk [vmem:[#allocation2 + $0x1a9] sm:$0x1] %vm413, 0.0
      %v450 = vld [vmem:[%s358] sm:$0xff]
      %v451 = vld [vmem:[%s358 + $0x8] sm:$0xff]
      %v452 = vld [vmem:[%s358 + $0x10] sm:$0xff]
      %v453 = vld [vmem:[%s358 + $0x18] sm:$0xff]
      %v454 = vld [vmem:[%s358 + $0x20] sm:$0xff]
      %v455 = vld [vmem:[%s358 + $0x28] sm:$0xff]
      %v456 = vld [vmem:[%s358 + $0x30] sm:$0xff]
      %v457 = vld [vmem:[%s358 + $0x38] sm:$0xff]
      %v458 = vld [vmem:[%s358 + $0x40] sm:$0xff]
      %v459 = vld [vmem:[%s358 + $0x48] sm:$0xff]
      %v460 = vld [vmem:[%s358 + $0x50] sm:$0xff]
      %v461 = vld [vmem:[%s358 + $0x58] sm:$0xff]
      %v462 = vld [vmem:[%s358 + $0x60] sm:$0xff]
      %v463 = vld [vmem:[%s358 + $0x68] sm:$0xff]
      %v464 = vld [vmem:[%s358 + $0x70] sm:$0xff]
      %v465 = vld [vmem:[%s358 + $0x78] sm:$0xff]
      %v466 = vld [vmem:[%s358 + $0x80] sm:$0xff]
      %v467 = vld [vmem:[%s358 + $0x88] sm:$0xff]
      %v468 = vld [vmem:[%s358 + $0x90] sm:$0xff]
      %v469 = vld [vmem:[%s358 + $0x98] sm:$0xff]
      %v470 = vld [vmem:[%s358 + $0xa0] sm:$0xff]
      %v471 = vld [vmem:[%s358 + $0xa8] sm:$0xff]
      %v472 = vld [vmem:[%s358 + $0xb0] sm:$0xff]
      %v473 = vld [vmem:[%s358 + $0xb8] sm:$0xff]
      %v474 = vld [vmem:[%s358 + $0xc0] sm:$0xff]
      %v475 = vld [vmem:[%s358 + $0xc8] sm:$0xff]
      %v476 = vld [vmem:[%s358 + $0xd0] sm:$0xff]
      %v477 = vld [vmem:[%s358 + $0xd8] sm:$0xff]
      %v478 = vld [vmem:[%s358 + $0xe0] sm:$0xff]
      %v479 = vld [vmem:[%s358 + $0xe8] sm:$0xff]
      %v480 = vld [vmem:[%s358 + $0xf0] sm:$0xff]
      %v481 = vld [vmem:[%s358 + $0xf8] sm:$0xff]
      %s482 = scalar_lea.vmem [#allocation2], 24
      %vm483 = vcmask 31744
      %484 = vst.msk [vmem:[%s482 + $0x1] sm:$0xff] %vm483, %v450
      %485 = vst.msk [vmem:[%s482 + $0x9] sm:$0xff] %vm483, %v451
      %486 = vst.msk [vmem:[%s482 + $0x19] sm:$0xff] %vm483, %v452
      %487 = vst.msk [vmem:[%s482 + $0x21] sm:$0xff] %vm483, %v453
      %488 = vst.msk [vmem:[%s482 + $0x31] sm:$0xff] %vm483, %v454
      %489 = vst.msk [vmem:[%s482 + $0x39] sm:$0xff] %vm483, %v455
      %490 = vst.msk [vmem:[%s482 + $0x49] sm:$0xff] %vm483, %v456
      %491 = vst.msk [vmem:[%s482 + $0x51] sm:$0xff] %vm483, %v457
      %492 = vst.msk [vmem:[%s482 + $0x61] sm:$0xff] %vm483, %v458
      %493 = vst.msk [vmem:[%s482 + $0x69] sm:$0xff] %vm483, %v459
      %494 = vst.msk [vmem:[%s482 + $0x79] sm:$0xff] %vm483, %v460
      %495 = vst.msk [vmem:[%s482 + $0x81] sm:$0xff] %vm483, %v461
      %496 = vst.msk [vmem:[%s482 + $0x91] sm:$0xff] %vm483, %v462
      %497 = vst.msk [vmem:[%s482 + $0x99] sm:$0xff] %vm483, %v463
      %498 = vst.msk [vmem:[%s482 + $0xa9] sm:$0xff] %vm483, %v464
      %499 = vst.msk [vmem:[%s482 + $0xb1] sm:$0xff] %vm483, %v465
      %500 = vst.msk [vmem:[%s482 + $0xc1] sm:$0xff] %vm483, %v466
      %501 = vst.msk [vmem:[%s482 + $0xc9] sm:$0xff] %vm483, %v467
      %502 = vst.msk [vmem:[%s482 + $0xd9] sm:$0xff] %vm483, %v468
      %503 = vst.msk [vmem:[%s482 + $0xe1] sm:$0xff] %vm483, %v469
      %504 = vst.msk [vmem:[%s482 + $0xf1] sm:$0xff] %vm483, %v470
      %505 = vst.msk [vmem:[%s482 + $0xf9] sm:$0xff] %vm483, %v471
      %506 = vst.msk [vmem:[%s482 + $0x109] sm:$0xff] %vm483, %v472
      %507 = vst.msk [vmem:[%s482 + $0x111] sm:$0xff] %vm483, %v473
      %508 = vst.msk [vmem:[%s482 + $0x121] sm:$0xff] %vm483, %v474
      %509 = vst.msk [vmem:[%s482 + $0x129] sm:$0xff] %vm483, %v475
      %510 = vst.msk [vmem:[%s482 + $0x139] sm:$0xff] %vm483, %v476
      %511 = vst.msk [vmem:[%s482 + $0x141] sm:$0xff] %vm483, %v477
      %512 = vst.msk [vmem:[%s482 + $0x151] sm:$0xff] %vm483, %v478
      %513 = vst.msk [vmem:[%s482 + $0x159] sm:$0xff] %vm483, %v479
      %514 = vst.msk [vmem:[%s482 + $0x169] sm:$0xff] %vm483, %v480
      %515 = vst.msk [vmem:[%s482 + $0x171] sm:$0xff] %vm483, %v481
      %v516 = vld [vmem:[%s372] sm:$0xff]
      %v517 = vld [vmem:[%s372 + $0x8] sm:$0xff]
      %v518 = vld [vmem:[%s389] sm:$0xff]
      %v519 = vld [vmem:[%s389 + $0x8] sm:$0xff]
      %p520 = scmp.gt.s32.totalorder %s22, 0
      %s521 = scalar_select %p520, 1, 0
      %v522 = vstv %s521
      %vm523 = vcmp.eq.s32.totalorder %v522, 1
      %v524 = vsel %vm523, %v516, 0.0
      %v525 = vsel %vm523, %v517, 0.0
      %526 = vst.msk [vmem:[#allocation2 + $0x1] sm:$0xff] %vm483, %v524
      %527 = vst.msk [vmem:[#allocation2 + $0x9] sm:$0xff] %vm483, %v525
      %p528 = scmp.lt.s32.totalorder %s22, 0
      %s529 = scalar_select %p528, 1, 0
      %v530 = vstv %s529
      %vm531 = vcmp.eq.s32.totalorder %v530, 1
      %v532 = vsel %vm531, %v518, 0.0
      %v533 = vsel %vm531, %v519, 0.0
      %s534 = scalar_lea.vmem [#allocation2], 408
      %535 = vst.msk [vmem:[%s534 + $0x1] sm:$0xff] %vm483, %v532
      %536 = vst.msk [vmem:[%s534 + $0x9] sm:$0xff] %vm483, %v533
      %v537 = vld [vmem:[#allocation2] sm:$0xff]
      %v538 = vld [vmem:[#allocation2 + $0x8] sm:$0xff]
      %v539 = vld [vmem:[#allocation2 + $0x18] sm:$0xff]
      %v540 = vld [vmem:[#allocation2 + $0x20] sm:$0xff]
      %v541 = vld [vmem:[#allocation2 + $0x30] sm:$0xff]
      %v542 = vld [vmem:[#allocation2 + $0x38] sm:$0xff]
      %v543 = vld [vmem:[#allocation2 + $0x48] sm:$0xff]
      %v544 = vld [vmem:[#allocation2 + $0x50] sm:$0xff]
      %v545 = vld [vmem:[#allocation2 + $0x60] sm:$0xff]
      %v546 = vld [vmem:[#allocation2 + $0x68] sm:$0xff]
      %v547 = vld [vmem:[#allocation2 + $0x78] sm:$0xff]
      %v548 = vld [vmem:[#allocation2 + $0x80] sm:$0xff]
      %v549 = vld [vmem:[#allocation2 + $0x90] sm:$0xff]
      %v550 = vld [vmem:[#allocation2 + $0x98] sm:$0xff]
      %v551 = vld [vmem:[#allocation2 + $0xa8] sm:$0xff]
      %v552 = vld [vmem:[#allocation2 + $0xb0] sm:$0xff]
      %v553 = vld [vmem:[#allocation2 + $0xc0] sm:$0xff]
      %v554 = vld [vmem:[#allocation2 + $0xc8] sm:$0xff]
      %v555 = vld [vmem:[#allocation2 + $0xd8] sm:$0xff]
      %v556 = vld [vmem:[#allocation2 + $0xe0] sm:$0xff]
      %v557 = vld [vmem:[#allocation2 + $0xf0] sm:$0xff]
      %v558 = vld [vmem:[#allocation2 + $0xf8] sm:$0xff]
      %v559 = vld [vmem:[#allocation2 + $0x108] sm:$0xff]
      %v560 = vld [vmem:[#allocation2 + $0x110] sm:$0xff]
      %v561 = vld [vmem:[#allocation2 + $0x120] sm:$0xff]
      %v562 = vld [vmem:[#allocation2 + $0x128] sm:$0xff]
      %v563 = vld [vmem:[#allocation2 + $0x138] sm:$0xff]
      %v564 = vld [vmem:[#allocation2 + $0x140] sm:$0xff]
      %v565 = vld [vmem:[#allocation2 + $0x150] sm:$0xff]
      %v566 = vld [vmem:[#allocation2 + $0x158] sm:$0xff]
      %v567 = vld [vmem:[#allocation2 + $0x168] sm:$0xff]
      %v568 = vld [vmem:[#allocation2 + $0x170] sm:$0xff]
      %v569 = vpack.c.bf16 %v538, %v537
      %v570 = vpack.c.bf16 %v540, %v539
      %v571 = vpack.c.bf16 %v542, %v541
      %v572 = vpack.c.bf16 %v544, %v543
      %v573 = vpack.c.bf16 %v546, %v545
      %v574 = vpack.c.bf16 %v548, %v547
      %v575 = vpack.c.bf16 %v550, %v549
      %v576 = vpack.c.bf16 %v552, %v551
      %v577 = vpack.c.bf16 %v554, %v553
      %v578 = vpack.c.bf16 %v556, %v555
      %v579 = vpack.c.bf16 %v558, %v557
      %v580 = vpack.c.bf16 %v560, %v559
      %v581 = vpack.c.bf16 %v562, %v561
      %v582 = vpack.c.bf16 %v564, %v563
      %v583 = vpack.c.bf16 %v566, %v565
      %v584 = vpack.c.bf16 %v568, %v567
      %v585 = vld [vmem:[%s3] sm:$0x3]
      %v586 = vld [vmem:[#allocation2 + $0x1] sm:$0xff]
      %v587 = vld [vmem:[#allocation2 + $0x9] sm:$0xff]
      %v588 = vld [vmem:[#allocation2 + $0x19] sm:$0xff]
      %v589 = vld [vmem:[#allocation2 + $0x21] sm:$0xff]
      %v590 = vld [vmem:[#allocation2 + $0x31] sm:$0xff]
      %v591 = vld [vmem:[#allocation2 + $0x39] sm:$0xff]
      %v592 = vld [vmem:[#allocation2 + $0x49] sm:$0xff]
      %v593 = vld [vmem:[#allocation2 + $0x51] sm:$0xff]
      %v594 = vld [vmem:[#allocation2 + $0x61] sm:$0xff]
      %v595 = vld [vmem:[#allocation2 + $0x69] sm:$0xff]
      %v596 = vld [vmem:[#allocation2 + $0x79] sm:$0xff]
      %v597 = vld [vmem:[#allocation2 + $0x81] sm:$0xff]
      %v598 = vld [vmem:[#allocation2 + $0x91] sm:$0xff]
      %v599 = vld [vmem:[#allocation2 + $0x99] sm:$0xff]
      %v600 = vld [vmem:[#allocation2 + $0xa9] sm:$0xff]
      %v601 = vld [vmem:[#allocation2 + $0xb1] sm:$0xff]
      %v602 = vld [vmem:[#allocation2 + $0xc1] sm:$0xff]
      %v603 = vld [vmem:[#allocation2 + $0xc9] sm:$0xff]
      %v604 = vld [vmem:[#allocation2 + $0xd9] sm:$0xff]
      %v605 = vld [vmem:[#allocation2 + $0xe1] sm:$0xff]
      %v606 = vld [vmem:[#allocation2 + $0xf1] sm:$0xff]
      %v607 = vld [vmem:[#allocation2 + $0xf9] sm:$0xff]
      %v608 = vld [vmem:[#allocation2 + $0x109] sm:$0xff]
      %v609 = vld [vmem:[#allocation2 + $0x111] sm:$0xff]
      %v610 = vld [vmem:[#allocation2 + $0x121] sm:$0xff]
      %v611 = vld [vmem:[#allocation2 + $0x129] sm:$0xff]
      %v612 = vld [vmem:[#allocation2 + $0x139] sm:$0xff]
      %v613 = vld [vmem:[#allocation2 + $0x141] sm:$0xff]
      %v614 = vld [vmem:[#allocation2 + $0x151] sm:$0xff]
      %v615 = vld [vmem:[#allocation2 + $0x159] sm:$0xff]
      %v616 = vld [vmem:[#allocation2 + $0x169] sm:$0xff]
      %v617 = vld [vmem:[#allocation2 + $0x171] sm:$0xff]
      %v618 = vpack.c.bf16 %v587, %v586
      %v619 = vpack.c.bf16 %v589, %v588
      %v620 = vpack.c.bf16 %v591, %v590
      %v621 = vpack.c.bf16 %v593, %v592
      %v622 = vpack.c.bf16 %v595, %v594
      %v623 = vpack.c.bf16 %v597, %v596
      %v624 = vpack.c.bf16 %v599, %v598
      %v625 = vpack.c.bf16 %v601, %v600
      %v626 = vpack.c.bf16 %v603, %v602
      %v627 = vpack.c.bf16 %v605, %v604
      %v628 = vpack.c.bf16 %v607, %v606
      %v629 = vpack.c.bf16 %v609, %v608
      %v630 = vpack.c.bf16 %v611, %v610
      %v631 = vpack.c.bf16 %v613, %v612
      %v632 = vpack.c.bf16 %v615, %v614
      %v633 = vpack.c.bf16 %v617, %v616
      %s634 = scalar_lea.vmem %s3, 2
      %v635 = vld [vmem:[%s634] sm:$0x3]
      %v637 = vsel %vm483, %v618, 0
      %v640 = vsel %vm483, %v619, 0
      %v643 = vsel %vm483, %v620, 0
      %v646 = vsel %vm483, %v621, 0
      %v649 = vsel %vm483, %v622, 0
      %v652 = vsel %vm483, %v623, 0
      %v655 = vsel %vm483, %v624, 0
      %v658 = vsel %vm483, %v625, 0
      %v661 = vsel %vm483, %v626, 0
      %v664 = vsel %vm483, %v627, 0
      %v667 = vsel %vm483, %v628, 0
      %v670 = vsel %vm483, %v629, 0
      %v673 = vsel %vm483, %v630, 0
      %v676 = vsel %vm483, %v631, 0
      %v679 = vsel %vm483, %v632, 0
      %v682 = vsel %vm483, %v633, 0
      %vm684 = vcmask 1041408
      %v686 = vsel %vm684, %v635, 0
      %688 = vmatprep.subr.bf16.mxu0 0
      %689 = vmatpush1.bf16.msra.mxu0 %v686
      %690 = vmatprep.subr.bf16.mxu0 0
      %691 = vmatpush1.bf16.msra.mxu0 0
      %692 = vmatprep.subr.bf16.mxu0 0
      %693 = vmatpush1.bf16.msra.mxu0 0
      %694 = vmatprep.subr.bf16.mxu0 0
      %695 = vmatpush1.bf16.msra.mxu0 0
      %696 = vmatprep.subr.bf16.mxu0 0
      %697 = vmatpush1.bf16.msra.mxu0 0
      %698 = vmatprep.subr.bf16.mxu0 0
      %699 = vmatpush1.bf16.msra.mxu0 0
      %700 = vmatprep.subr.bf16.mxu0 0
      %701 = vmatpush1.bf16.msra.mxu0 0
      %702 = vmatprep.subr.bf16.mxu0 0
      %703 = vmatpush1.bf16.msra.mxu0 0
      %704 = vmatprep.subr.bf16.mxu0 0
      %705 = vmatpush1.bf16.msra.mxu0 0
      %706 = vmatprep.subr.bf16.mxu0 0
      %707 = vmatpush1.bf16.msra.mxu0 0
      %708 = vmatprep.subr.bf16.mxu0 0
      %709 = vmatpush1.bf16.msra.mxu0 0
      %710 = vmatprep.subr.bf16.mxu0 0
      %711 = vmatpush1.bf16.msra.mxu0 0
      %712 = vmatprep.subr.bf16.mxu0 0
      %713 = vmatpush1.bf16.msra.mxu0 0
      %714 = vmatprep.subr.bf16.mxu0 0
      %715 = vmatpush1.bf16.msra.mxu0 0
      %716 = vmatprep.subr.bf16.mxu0 0
      %717 = vmatpush1.bf16.msra.mxu0 0
      %718 = vmatprep.subr.bf16.mxu0 0
      %719 = vmatpush1.bf16.msra.mxu0 0
      %720 = vmatprep.mubr.bf16.mxu0 0
      %721 = vmatmul.mubr.bf16.gmra.mrb[0].mxu0 %v637
      %v722 = vpop.f32.mrb[0].mxu0
      %v723 = vadd.f32 0.0, %v722
      %v724 = vpop.f32.mrb[0].mxu0
      %v725 = vpop.f32.mrb[0].mxu0
      %v726 = vadd.f32 0.0, %v725
      %v727 = vpop.f32.mrb[0].mxu0
      %728 = vmatprep.mubr.bf16.mxu0 0
      %729 = vmatmul.mubr.bf16.gmra.mrb[0].mxu0 %v640
      %v730 = vpop.f32.mrb[0].mxu0
      %v731 = vadd.f32 0.0, %v730
      %v732 = vpop.f32.mrb[0].mxu0
      %v733 = vpop.f32.mrb[0].mxu0
      %v734 = vadd.f32 0.0, %v733
      %v735 = vpop.f32.mrb[0].mxu0
      %736 = vmatprep.mubr.bf16.mxu0 0
      %737 = vmatmul.mubr.bf16.gmra.mrb[0].mxu0 %v643
      %v738 = vpop.f32.mrb[0].mxu0
      %v739 = vadd.f32 0.0, %v738
      %v740 = vpop.f32.mrb[0].mxu0
      %v741 = vpop.f32.mrb[0].mxu0
      %v742 = vadd.f32 0.0, %v741
      %v743 = vpop.f32.mrb[0].mxu0
      %744 = vmatprep.mubr.bf16.mxu0 0
      %745 = vmatmul.mubr.bf16.gmra.mrb[0].mxu0 %v646
      %v746 = vpop.f32.mrb[0].mxu0
      %v747 = vadd.f32 0.0, %v746
      %v748 = vpop.f32.mrb[0].mxu0
      %v749 = vpop.f32.mrb[0].mxu0
      %v750 = vadd.f32 0.0, %v749
      %v751 = vpop.f32.mrb[0].mxu0
      %752 = vmatprep.mubr.bf16.mxu0 0
      %753 = vmatmul.mubr.bf16.gmra.mrb[0].mxu0 %v649
      %v754 = vpop.f32.mrb[0].mxu0
      %v755 = vadd.f32 0.0, %v754
      %v756 = vpop.f32.mrb[0].mxu0
      %v757 = vpop.f32.mrb[0].mxu0
      %v758 = vadd.f32 0.0, %v757
      %v759 = vpop.f32.mrb[0].mxu0
      %760 = vmatprep.mubr.bf16.mxu0 0
      %761 = vmatmul.mubr.bf16.gmra.mrb[0].mxu0 %v652
      %v762 = vpop.f32.mrb[0].mxu0
      %v763 = vadd.f32 0.0, %v762
      %v764 = vpop.f32.mrb[0].mxu0
      %v765 = vpop.f32.mrb[0].mxu0
      %v766 = vadd.f32 0.0, %v765
      %v767 = vpop.f32.mrb[0].mxu0
      %768 = vmatprep.mubr.bf16.mxu0 0
      %769 = vmatmul.mubr.bf16.gmra.mrb[0].mxu0 %v655
      %v770 = vpop.f32.mrb[0].mxu0
      %v771 = vadd.f32 0.0, %v770
      %v772 = vpop.f32.mrb[0].mxu0
      %v773 = vpop.f32.mrb[0].mxu0
      %v774 = vadd.f32 0.0, %v773
      %v775 = vpop.f32.mrb[0].mxu0
      %776 = vmatprep.mubr.bf16.mxu0 0
      %777 = vmatmul.mubr.bf16.gmra.mrb[0].mxu0 %v658
      %v778 = vpop.f32.mrb[0].mxu0
      %v779 = vadd.f32 0.0, %v778
      %v780 = vpop.f32.mrb[0].mxu0
      %v781 = vpop.f32.mrb[0].mxu0
      %v782 = vadd.f32 0.0, %v781
      %v783 = vpop.f32.mrb[0].mxu0
      %784 = vmatprep.mubr.bf16.mxu0 0
      %785 = vmatmul.mubr.bf16.gmra.mrb[0].mxu0 %v661
      %v786 = vpop.f32.mrb[0].mxu0
      %v787 = vadd.f32 0.0, %v786
      %v788 = vpop.f32.mrb[0].mxu0
      %v789 = vpop.f32.mrb[0].mxu0
      %v790 = vadd.f32 0.0, %v789
      %v791 = vpop.f32.mrb[0].mxu0
      %792 = vmatprep.mubr.bf16.mxu0 0
      %793 = vmatmul.mubr.bf16.gmra.mrb[0].mxu0 %v664
      %v794 = vpop.f32.mrb[0].mxu0
      %v795 = vadd.f32 0.0, %v794
      %v796 = vpop.f32.mrb[0].mxu0
      %v797 = vpop.f32.mrb[0].mxu0
      %v798 = vadd.f32 0.0, %v797
      %v799 = vpop.f32.mrb[0].mxu0
      %800 = vmatprep.mubr.bf16.mxu0 0
      %801 = vmatmul.mubr.bf16.gmra.mrb[0].mxu0 %v667
      %v802 = vpop.f32.mrb[0].mxu0
      %v803 = vadd.f32 0.0, %v802
      %v804 = vpop.f32.mrb[0].mxu0
      %v805 = vpop.f32.mrb[0].mxu0
      %v806 = vadd.f32 0.0, %v805
      %v807 = vpop.f32.mrb[0].mxu0
      %808 = vmatprep.mubr.bf16.mxu0 0
      %809 = vmatmul.mubr.bf16.gmra.mrb[0].mxu0 %v670
      %v810 = vpop.f32.mrb[0].mxu0
      %v811 = vadd.f32 0.0, %v810
      %v812 = vpop.f32.mrb[0].mxu0
      %v813 = vpop.f32.mrb[0].mxu0
      %v814 = vadd.f32 0.0, %v813
      %v815 = vpop.f32.mrb[0].mxu0
      %816 = vmatprep.mubr.bf16.mxu0 0
      %817 = vmatmul.mubr.bf16.gmra.mrb[0].mxu0 %v673
      %v818 = vpop.f32.mrb[0].mxu0
      %v819 = vadd.f32 0.0, %v818
      %v820 = vpop.f32.mrb[0].mxu0
      %v821 = vpop.f32.mrb[0].mxu0
      %v822 = vadd.f32 0.0, %v821
      %v823 = vpop.f32.mrb[0].mxu0
      %824 = vmatprep.mubr.bf16.mxu0 0
      %825 = vmatmul.mubr.bf16.gmra.mrb[0].mxu0 %v676
      %v826 = vpop.f32.mrb[0].mxu0
      %v827 = vadd.f32 0.0, %v826
      %v828 = vpop.f32.mrb[0].mxu0
      %v829 = vpop.f32.mrb[0].mxu0
      %v830 = vadd.f32 0.0, %v829
      %v831 = vpop.f32.mrb[0].mxu0
      %832 = vmatprep.mubr.bf16.mxu0 0
      %833 = vmatmul.mubr.bf16.gmra.mrb[0].mxu0 %v679
      %v834 = vpop.f32.mrb[0].mxu0
      %v835 = vadd.f32 0.0, %v834
      %v836 = vpop.f32.mrb[0].mxu0
      %v837 = vpop.f32.mrb[0].mxu0
      %v838 = vadd.f32 0.0, %v837
      %v839 = vpop.f32.mrb[0].mxu0
      %840 = vmatprep.mubr.bf16.mxu0 0
      %841 = vmatmul.mubr.bf16.gmra.mrb[0].mxu0 %v682
      %v842 = vpop.f32.mrb[0].mxu0
      %v843 = vadd.f32 0.0, %v842
      %v844 = vpop.f32.mrb[0].mxu0
      %v845 = vpop.f32.mrb[0].mxu0
      %v846 = vadd.f32 0.0, %v845
      %v847 = vpop.f32.mrb[0].mxu0
      %848 = vdwg.mxu0
      %v850 = vsel %vm483, %v569, 0
      %v853 = vsel %vm483, %v570, 0
      %v856 = vsel %vm483, %v571, 0
      %v859 = vsel %vm483, %v572, 0
      %v862 = vsel %vm483, %v573, 0
      %v865 = vsel %vm483, %v574, 0
      %v868 = vsel %vm483, %v575, 0
      %v871 = vsel %vm483, %v576, 0
      %v874 = vsel %vm483, %v577, 0
      %v877 = vsel %vm483, %v578, 0
      %v880 = vsel %vm483, %v579, 0
      %v883 = vsel %vm483, %v580, 0
      %v886 = vsel %vm483, %v581, 0
      %v889 = vsel %vm483, %v582, 0
      %v892 = vsel %vm483, %v583, 0
      %v895 = vsel %vm483, %v584, 0
      %v898 = vsel %vm684, %v585, 0
      %900 = vmatprep.subr.bf16.mxu0 0
      %901 = vmatpush1.bf16.msra.mxu0 %v898
      %902 = vmatprep.subr.bf16.mxu0 0
      %903 = vmatpush1.bf16.msra.mxu0 0
      %904 = vmatprep.subr.bf16.mxu0 0
      %905 = vmatpush1.bf16.msra.mxu0 0
      %906 = vmatprep.subr.bf16.mxu0 0
      %907 = vmatpush1.bf16.msra.mxu0 0
      %908 = vmatprep.subr.bf16.mxu0 0
      %909 = vmatpush1.bf16.msra.mxu0 0
      %910 = vmatprep.subr.bf16.mxu0 0
      %911 = vmatpush1.bf16.msra.mxu0 0
      %912 = vmatprep.subr.bf16.mxu0 0
      %913 = vmatpush1.bf16.msra.mxu0 0
      %914 = vmatprep.subr.bf16.mxu0 0
      %915 = vmatpush1.bf16.msra.mxu0 0
      %916 = vmatprep.subr.bf16.mxu0 0
      %917 = vmatpush1.bf16.msra.mxu0 0
      %918 = vmatprep.subr.bf16.mxu0 0
      %919 = vmatpush1.bf16.msra.mxu0 0
      %920 = vmatprep.subr.bf16.mxu0 0
      %921 = vmatpush1.bf16.msra.mxu0 0
      %922 = vmatprep.subr.bf16.mxu0 0
      %923 = vmatpush1.bf16.msra.mxu0 0
      %924 = vmatprep.subr.bf16.mxu0 0
      %925 = vmatpush1.bf16.msra.mxu0 0
      %926 = vmatprep.subr.bf16.mxu0 0
      %927 = vmatpush1.bf16.msra.mxu0 0
      %928 = vmatprep.subr.bf16.mxu0 0
      %929 = vmatpush1.bf16.msra.mxu0 0
      %930 = vmatprep.subr.bf16.mxu0 0
      %931 = vmatpush1.bf16.msra.mxu0 0
      %932 = vmatprep.mubr.bf16.mxu0 0
      %933 = vmatmul.mubr.bf16.gmra.mrb[0].mxu0 %v850
      %v934 = vpop.f32.mrb[0].mxu0
      %v935 = vadd.f32 %v723, %v934
      %v936 = vpop.f32.mrb[0].mxu0
      %v937 = vpop.f32.mrb[0].mxu0
      %v938 = vadd.f32 %v726, %v937
      %v939 = vpop.f32.mrb[0].mxu0
      %940 = vmatprep.mubr.bf16.mxu0 0
      %941 = vmatmul.mubr.bf16.gmra.mrb[0].mxu0 %v853
      %v942 = vpop.f32.mrb[0].mxu0
      %v943 = vadd.f32 %v731, %v942
      %v944 = vpop.f32.mrb[0].mxu0
      %v945 = vpop.f32.mrb[0].mxu0
      %v946 = vadd.f32 %v734, %v945
      %v947 = vpop.f32.mrb[0].mxu0
      %948 = vmatprep.mubr.bf16.mxu0 0
      %949 = vmatmul.mubr.bf16.gmra.mrb[0].mxu0 %v856
      %v950 = vpop.f32.mrb[0].mxu0
      %v951 = vadd.f32 %v739, %v950
      %v952 = vpop.f32.mrb[0].mxu0
      %v953 = vpop.f32.mrb[0].mxu0
      %v954 = vadd.f32 %v742, %v953
      %v955 = vpop.f32.mrb[0].mxu0
      %956 = vmatprep.mubr.bf16.mxu0 0
      %957 = vmatmul.mubr.bf16.gmra.mrb[0].mxu0 %v859
      %v958 = vpop.f32.mrb[0].mxu0
      %v959 = vadd.f32 %v747, %v958
      %v960 = vpop.f32.mrb[0].mxu0
      %v961 = vpop.f32.mrb[0].mxu0
      %v962 = vadd.f32 %v750, %v961
      %v963 = vpop.f32.mrb[0].mxu0
      %964 = vmatprep.mubr.bf16.mxu0 0
      %965 = vmatmul.mubr.bf16.gmra.mrb[0].mxu0 %v862
      %v966 = vpop.f32.mrb[0].mxu0
      %v967 = vadd.f32 %v755, %v966
      %v968 = vpop.f32.mrb[0].mxu0
      %v969 = vpop.f32.mrb[0].mxu0
      %v970 = vadd.f32 %v758, %v969
      %v971 = vpop.f32.mrb[0].mxu0
      %972 = vmatprep.mubr.bf16.mxu0 0
      %973 = vmatmul.mubr.bf16.gmra.mrb[0].mxu0 %v865
      %v974 = vpop.f32.mrb[0].mxu0
      %v975 = vadd.f32 %v763, %v974
      %v976 = vpop.f32.mrb[0].mxu0
      %v977 = vpop.f32.mrb[0].mxu0
      %v978 = vadd.f32 %v766, %v977
      %v979 = vpop.f32.mrb[0].mxu0
      %980 = vmatprep.mubr.bf16.mxu0 0
      %981 = vmatmul.mubr.bf16.gmra.mrb[0].mxu0 %v868
      %v982 = vpop.f32.mrb[0].mxu0
      %v983 = vadd.f32 %v771, %v982
      %v984 = vpop.f32.mrb[0].mxu0
      %v985 = vpop.f32.mrb[0].mxu0
      %v986 = vadd.f32 %v774, %v985
      %v987 = vpop.f32.mrb[0].mxu0
      %988 = vmatprep.mubr.bf16.mxu0 0
      %989 = vmatmul.mubr.bf16.gmra.mrb[0].mxu0 %v871
      %v990 = vpop.f32.mrb[0].mxu0
      %v991 = vadd.f32 %v779, %v990
      %v992 = vpop.f32.mrb[0].mxu0
      %v993 = vpop.f32.mrb[0].mxu0
      %v994 = vadd.f32 %v782, %v993
      %v995 = vpop.f32.mrb[0].mxu0
      %996 = vmatprep.mubr.bf16.mxu0 0
      %997 = vmatmul.mubr.bf16.gmra.mrb[0].mxu0 %v874
      %v998 = vpop.f32.mrb[0].mxu0
      %v999 = vadd.f32 %v787, %v998
      %v1000 = vpop.f32.mrb[0].mxu0
      %v1001 = vpop.f32.mrb[0].mxu0
      %v1002 = vadd.f32 %v790, %v1001
      %v1003 = vpop.f32.mrb[0].mxu0
      %1004 = vmatprep.mubr.bf16.mxu0 0
      %1005 = vmatmul.mubr.bf16.gmra.mrb[0].mxu0 %v877
      %v1006 = vpop.f32.mrb[0].mxu0
      %v1007 = vadd.f32 %v795, %v1006
      %v1008 = vpop.f32.mrb[0].mxu0
      %v1009 = vpop.f32.mrb[0].mxu0
      %v1010 = vadd.f32 %v798, %v1009
      %v1011 = vpop.f32.mrb[0].mxu0
      %1012 = vmatprep.mubr.bf16.mxu0 0
      %1013 = vmatmul.mubr.bf16.gmra.mrb[0].mxu0 %v880
      %v1014 = vpop.f32.mrb[0].mxu0
      %v1015 = vadd.f32 %v803, %v1014
      %v1016 = vpop.f32.mrb[0].mxu0
      %v1017 = vpop.f32.mrb[0].mxu0
      %v1018 = vadd.f32 %v806, %v1017
      %v1019 = vpop.f32.mrb[0].mxu0
      %1020 = vmatprep.mubr.bf16.mxu0 0
      %1021 = vmatmul.mubr.bf16.gmra.mrb[0].mxu0 %v883
      %v1022 = vpop.f32.mrb[0].mxu0
      %v1023 = vadd.f32 %v811, %v1022
      %v1024 = vpop.f32.mrb[0].mxu0
      %v1025 = vpop.f32.mrb[0].mxu0
      %v1026 = vadd.f32 %v814, %v1025
      %v1027 = vpop.f32.mrb[0].mxu0
      %1028 = vmatprep.mubr.bf16.mxu0 0
      %1029 = vmatmul.mubr.bf16.gmra.mrb[0].mxu0 %v886
      %v1030 = vpop.f32.mrb[0].mxu0
      %v1031 = vadd.f32 %v819, %v1030
      %v1032 = vpop.f32.mrb[0].mxu0
      %v1033 = vpop.f32.mrb[0].mxu0
      %v1034 = vadd.f32 %v822, %v1033
      %v1035 = vpop.f32.mrb[0].mxu0
      %1036 = vmatprep.mubr.bf16.mxu0 0
      %1037 = vmatmul.mubr.bf16.gmra.mrb[0].mxu0 %v889
      %v1038 = vpop.f32.mrb[0].mxu0
      %v1039 = vadd.f32 %v827, %v1038
      %v1040 = vpop.f32.mrb[0].mxu0
      %v1041 = vpop.f32.mrb[0].mxu0
      %v1042 = vadd.f32 %v830, %v1041
      %v1043 = vpop.f32.mrb[0].mxu0
      %1044 = vmatprep.mubr.bf16.mxu0 0
      %1045 = vmatmul.mubr.bf16.gmra.mrb[0].mxu0 %v892
      %v1046 = vpop.f32.mrb[0].mxu0
      %v1047 = vadd.f32 %v835, %v1046
      %v1048 = vpop.f32.mrb[0].mxu0
      %v1049 = vpop.f32.mrb[0].mxu0
      %v1050 = vadd.f32 %v838, %v1049
      %v1051 = vpop.f32.mrb[0].mxu0
      %1052 = vmatprep.mubr.bf16.mxu0 0
      %1053 = vmatmul.mubr.bf16.gmra.mrb[0].mxu0 %v895
      %v1054 = vpop.f32.mrb[0].mxu0
      %v1055 = vadd.f32 %v843, %v1054
      %v1056 = vpop.f32.mrb[0].mxu0
      %v1057 = vpop.f32.mrb[0].mxu0
      %v1058 = vadd.f32 %v846, %v1057
      %v1059 = vpop.f32.mrb[0].mxu0
      %1060 = vdwg.mxu0
      %v1061 = vld [vmem:[#allocation2 + $0x2] sm:$0xff]
      %v1062 = vld [vmem:[#allocation2 + $0xa] sm:$0xff]
      %v1063 = vld [vmem:[#allocation2 + $0x1a] sm:$0xff]
      %v1064 = vld [vmem:[#allocation2 + $0x22] sm:$0xff]
      %v1065 = vld [vmem:[#allocation2 + $0x32] sm:$0xff]
      %v1066 = vld [vmem:[#allocation2 + $0x3a] sm:$0xff]
      %v1067 = vld [vmem:[#allocation2 + $0x4a] sm:$0xff]
      %v1068 = vld [vmem:[#allocation2 + $0x52] sm:$0xff]
      %v1069 = vld [vmem:[#allocation2 + $0x62] sm:$0xff]
      %v1070 = vld [vmem:[#allocation2 + $0x6a] sm:$0xff]
      %v1071 = vld [vmem:[#allocation2 + $0x7a] sm:$0xff]
      %v1072 = vld [vmem:[#allocation2 + $0x82] sm:$0xff]
      %v1073 = vld [vmem:[#allocation2 + $0x92] sm:$0xff]
      %v1074 = vld [vmem:[#allocation2 + $0x9a] sm:$0xff]
      %v1075 = vld [vmem:[#allocation2 + $0xaa] sm:$0xff]
      %v1076 = vld [vmem:[#allocation2 + $0xb2] sm:$0xff]
      %v1077 = vld [vmem:[#allocation2 + $0xc2] sm:$0xff]
      %v1078 = vld [vmem:[#allocation2 + $0xca] sm:$0xff]
      %v1079 = vld [vmem:[#allocation2 + $0xda] sm:$0xff]
      %v1080 = vld [vmem:[#allocation2 + $0xe2] sm:$0xff]
      %v1081 = vld [vmem:[#allocation2 + $0xf2] sm:$0xff]
      %v1082 = vld [vmem:[#allocation2 + $0xfa] sm:$0xff]
      %v1083 = vld [vmem:[#allocation2 + $0x10a] sm:$0xff]
      %v1084 = vld [vmem:[#allocation2 + $0x112] sm:$0xff]
      %v1085 = vld [vmem:[#allocation2 + $0x122] sm:$0xff]
      %v1086 = vld [vmem:[#allocation2 + $0x12a] sm:$0xff]
      %v1087 = vld [vmem:[#allocation2 + $0x13a] sm:$0xff]
      %v1088 = vld [vmem:[#allocation2 + $0x142] sm:$0xff]
      %v1089 = vld [vmem:[#allocation2 + $0x152] sm:$0xff]
      %v1090 = vld [vmem:[#allocation2 + $0x15a] sm:$0xff]
      %v1091 = vld [vmem:[#allocation2 + $0x16a] sm:$0xff]
      %v1092 = vld [vmem:[#allocation2 + $0x172] sm:$0xff]
      %v1093 = vpack.c.bf16 %v1062, %v1061
      %v1094 = vpack.c.bf16 %v1064, %v1063
      %v1095 = vpack.c.bf16 %v1066, %v1065
      %v1096 = vpack.c.bf16 %v1068, %v1067
      %v1097 = vpack.c.bf16 %v1070, %v1069
      %v1098 = vpack.c.bf16 %v1072, %v1071
      %v1099 = vpack.c.bf16 %v1074, %v1073
      %v1100 = vpack.c.bf16 %v1076, %v1075
      %v1101 = vpack.c.bf16 %v1078, %v1077
      %v1102 = vpack.c.bf16 %v1080, %v1079
      %v1103 = vpack.c.bf16 %v1082, %v1081
      %v1104 = vpack.c.bf16 %v1084, %v1083
      %v1105 = vpack.c.bf16 %v1086, %v1085
      %v1106 = vpack.c.bf16 %v1088, %v1087
      %v1107 = vpack.c.bf16 %v1090, %v1089
      %v1108 = vpack.c.bf16 %v1092, %v1091
      %s1109 = scalar_lea.vmem %s3, 4
      %v1110 = vld [vmem:[%s1109] sm:$0x3]
      %v1112 = vsel %vm483, %v1093, 0
      %v1115 = vsel %vm483, %v1094, 0
      %v1118 = vsel %vm483, %v1095, 0
      %v1121 = vsel %vm483, %v1096, 0
      %v1124 = vsel %vm483, %v1097, 0
      %v1127 = vsel %vm483, %v1098, 0
      %v1130 = vsel %vm483, %v1099, 0
      %v1133 = vsel %vm483, %v1100, 0
      %v1136 = vsel %vm483, %v1101, 0
      %v1139 = vsel %vm483, %v1102, 0
      %v1142 = vsel %vm483, %v1103, 0
      %v1145 = vsel %vm483, %v1104, 0
      %v1148 = vsel %vm483, %v1105, 0
      %v1151 = vsel %vm483, %v1106, 0
      %v1154 = vsel %vm483, %v1107, 0
      %v1157 = vsel %vm483, %v1108, 0
      %v1160 = vsel %vm684, %v1110, 0
      %1162 = vmatprep.subr.bf16.mxu0 0
      %1163 = vmatpush1.bf16.msra.mxu0 %v1160
      %1164 = vmatprep.subr.bf16.mxu0 0
      %1165 = vmatpush1.bf16.msra.mxu0 0
      %1166 = vmatprep.subr.bf16.mxu0 0
      %1167 = vmatpush1.bf16.msra.mxu0 0
      %1168 = vmatprep.subr.bf16.mxu0 0
      %1169 = vmatpush1.bf16.msra.mxu0 0
      %1170 = vmatprep.subr.bf16.mxu0 0
      %1171 = vmatpush1.bf16.msra.mxu0 0
      %1172 = vmatprep.subr.bf16.mxu0 0
      %1173 = vmatpush1.bf16.msra.mxu0 0
      %1174 = vmatprep.subr.bf16.mxu0 0
      %1175 = vmatpush1.bf16.msra.mxu0 0
      %1176 = vmatprep.subr.bf16.mxu0 0
      %1177 = vmatpush1.bf16.msra.mxu0 0
      %1178 = vmatprep.subr.bf16.mxu0 0
      %1179 = vmatpush1.bf16.msra.mxu0 0
      %1180 = vmatprep.subr.bf16.mxu0 0
      %1181 = vmatpush1.bf16.msra.mxu0 0
      %1182 = vmatprep.subr.bf16.mxu0 0
      %1183 = vmatpush1.bf16.msra.mxu0 0
      %1184 = vmatprep.subr.bf16.mxu0 0
      %1185 = vmatpush1.bf16.msra.mxu0 0
      %1186 = vmatprep.subr.bf16.mxu0 0
      %1187 = vmatpush1.bf16.msra.mxu0 0
      %1188 = vmatprep.subr.bf16.mxu0 0
      %1189 = vmatpush1.bf16.msra.mxu0 0
      %1190 = vmatprep.subr.bf16.mxu0 0
      %1191 = vmatpush1.bf16.msra.mxu0 0
      %1192 = vmatprep.subr.bf16.mxu0 0
      %1193 = vmatpush1.bf16.msra.mxu0 0
      %1194 = vmatprep.mubr.bf16.mxu0 0
      %1195 = vmatmul.mubr.bf16.gmra.mrb[0].mxu0 %v1112
      %v1196 = vpop.f32.mrb[0].mxu0
      %v1197 = vadd.f32 0.0, %v1196
      %v1198 = vpop.f32.mrb[0].mxu0
      %v1199 = vpop.f32.mrb[0].mxu0
      %v1200 = vadd.f32 0.0, %v1199
      %v1201 = vpop.f32.mrb[0].mxu0
      %1202 = vmatprep.mubr.bf16.mxu0 0
      %1203 = vmatmul.mubr.bf16.gmra.mrb[0].mxu0 %v1115
      %v1204 = vpop.f32.mrb[0].mxu0
      %v1205 = vadd.f32 0.0, %v1204
      %v1206 = vpop.f32.mrb[0].mxu0
      %v1207 = vpop.f32.mrb[0].mxu0
      %v1208 = vadd.f32 0.0, %v1207
      %v1209 = vpop.f32.mrb[0].mxu0
      %1210 = vmatprep.mubr.bf16.mxu0 0
      %1211 = vmatmul.mubr.bf16.gmra.mrb[0].mxu0 %v1118
      %v1212 = vpop.f32.mrb[0].mxu0
      %v1213 = vadd.f32 0.0, %v1212
      %v1214 = vpop.f32.mrb[0].mxu0
      %v1215 = vpop.f32.mrb[0].mxu0
      %v1216 = vadd.f32 0.0, %v1215
      %v1217 = vpop.f32.mrb[0].mxu0
      %1218 = vmatprep.mubr.bf16.mxu0 0
      %1219 = vmatmul.mubr.bf16.gmra.mrb[0].mxu0 %v1121
      %v1220 = vpop.f32.mrb[0].mxu0
      %v1221 = vadd.f32 0.0, %v1220
      %v1222 = vpop.f32.mrb[0].mxu0
      %v1223 = vpop.f32.mrb[0].mxu0
      %v1224 = vadd.f32 0.0, %v1223
      %v1225 = vpop.f32.mrb[0].mxu0
      %1226 = vmatprep.mubr.bf16.mxu0 0
      %1227 = vmatmul.mubr.bf16.gmra.mrb[0].mxu0 %v1124
      %v1228 = vpop.f32.mrb[0].mxu0
      %v1229 = vadd.f32 0.0, %v1228
      %v1230 = vpop.f32.mrb[0].mxu0
      %v1231 = vpop.f32.mrb[0].mxu0
      %v1232 = vadd.f32 0.0, %v1231
      %v1233 = vpop.f32.mrb[0].mxu0
      %1234 = vmatprep.mubr.bf16.mxu0 0
      %1235 = vmatmul.mubr.bf16.gmra.mrb[0].mxu0 %v1127
      %v1236 = vpop.f32.mrb[0].mxu0
      %v1237 = vadd.f32 0.0, %v1236
      %v1238 = vpop.f32.mrb[0].mxu0
      %v1239 = vpop.f32.mrb[0].mxu0
      %v1240 = vadd.f32 0.0, %v1239
      %v1241 = vpop.f32.mrb[0].mxu0
      %1242 = vmatprep.mubr.bf16.mxu0 0
      %1243 = vmatmul.mubr.bf16.gmra.mrb[0].mxu0 %v1130
      %v1244 = vpop.f32.mrb[0].mxu0
      %v1245 = vadd.f32 0.0, %v1244
      %v1246 = vpop.f32.mrb[0].mxu0
      %v1247 = vpop.f32.mrb[0].mxu0
      %v1248 = vadd.f32 0.0, %v1247
      %v1249 = vpop.f32.mrb[0].mxu0
      %1250 = vmatprep.mubr.bf16.mxu0 0
      %1251 = vmatmul.mubr.bf16.gmra.mrb[0].mxu0 %v1133
      %v1252 = vpop.f32.mrb[0].mxu0
      %v1253 = vadd.f32 0.0, %v1252
      %v1254 = vpop.f32.mrb[0].mxu0
      %v1255 = vpop.f32.mrb[0].mxu0
      %v1256 = vadd.f32 0.0, %v1255
      %v1257 = vpop.f32.mrb[0].mxu0
      %1258 = vmatprep.mubr.bf16.mxu0 0
      %1259 = vmatmul.mubr.bf16.gmra.mrb[0].mxu0 %v1136
      %v1260 = vpop.f32.mrb[0].mxu0
      %v1261 = vadd.f32 0.0, %v1260
      %v1262 = vpop.f32.mrb[0].mxu0
      %v1263 = vpop.f32.mrb[0].mxu0
      %v1264 = vadd.f32 0.0, %v1263
      %v1265 = vpop.f32.mrb[0].mxu0
      %1266 = vmatprep.mubr.bf16.mxu0 0
      %1267 = vmatmul.mubr.bf16.gmra.mrb[0].mxu0 %v1139
      %v1268 = vpop.f32.mrb[0].mxu0
      %v1269 = vadd.f32 0.0, %v1268
      %v1270 = vpop.f32.mrb[0].mxu0
      %v1271 = vpop.f32.mrb[0].mxu0
      %v1272 = vadd.f32 0.0, %v1271
      %v1273 = vpop.f32.mrb[0].mxu0
      %1274 = vmatprep.mubr.bf16.mxu0 0
      %1275 = vmatmul.mubr.bf16.gmra.mrb[0].mxu0 %v1142
      %v1276 = vpop.f32.mrb[0].mxu0
      %v1277 = vadd.f32 0.0, %v1276
      %v1278 = vpop.f32.mrb[0].mxu0
      %v1279 = vpop.f32.mrb[0].mxu0
      %v1280 = vadd.f32 0.0, %v1279
      %v1281 = vpop.f32.mrb[0].mxu0
      %1282 = vmatprep.mubr.bf16.mxu0 0
      %1283 = vmatmul.mubr.bf16.gmra.mrb[0].mxu0 %v1145
      %v1284 = vpop.f32.mrb[0].mxu0
      %v1285 = vadd.f32 0.0, %v1284
      %v1286 = vpop.f32.mrb[0].mxu0
      %v1287 = vpop.f32.mrb[0].mxu0
      %v1288 = vadd.f32 0.0, %v1287
      %v1289 = vpop.f32.mrb[0].mxu0
      %1290 = vmatprep.mubr.bf16.mxu0 0
      %1291 = vmatmul.mubr.bf16.gmra.mrb[0].mxu0 %v1148
      %v1292 = vpop.f32.mrb[0].mxu0
      %v1293 = vadd.f32 0.0, %v1292
      %v1294 = vpop.f32.mrb[0].mxu0
      %v1295 = vpop.f32.mrb[0].mxu0
      %v1296 = vadd.f32 0.0, %v1295
      %v1297 = vpop.f32.mrb[0].mxu0
      %1298 = vmatprep.mubr.bf16.mxu0 0
      %1299 = vmatmul.mubr.bf16.gmra.mrb[0].mxu0 %v1151
      %v1300 = vpop.f32.mrb[0].mxu0
      %v1301 = vadd.f32 0.0, %v1300
      %v1302 = vpop.f32.mrb[0].mxu0
      %v1303 = vpop.f32.mrb[0].mxu0
      %v1304 = vadd.f32 0.0, %v1303
      %v1305 = vpop.f32.mrb[0].mxu0
      %1306 = vmatprep.mubr.bf16.mxu0 0
      %1307 = vmatmul.mubr.bf16.gmra.mrb[0].mxu0 %v1154
      %v1308 = vpop.f32.mrb[0].mxu0
      %v1309 = vadd.f32 0.0, %v1308
      %v1310 = vpop.f32.mrb[0].mxu0
      %v1311 = vpop.f32.mrb[0].mxu0
      %v1312 = vadd.f32 0.0, %v1311
      %v1313 = vpop.f32.mrb[0].mxu0
      %1314 = vmatprep.mubr.bf16.mxu0 0
      %1315 = vmatmul.mubr.bf16.gmra.mrb[0].mxu0 %v1157
      %v1316 = vpop.f32.mrb[0].mxu0
      %v1317 = vadd.f32 0.0, %v1316
      %v1318 = vpop.f32.mrb[0].mxu0
      %v1319 = vpop.f32.mrb[0].mxu0
      %v1320 = vadd.f32 0.0, %v1319
      %v1321 = vpop.f32.mrb[0].mxu0
      %1322 = vdwg.mxu0
      %v1323 = vadd.f32 %v935, %v1197
      %v1324 = vadd.f32 %v938, %v1200
      %v1325 = vadd.f32 %v943, %v1205
      %v1326 = vadd.f32 %v946, %v1208
      %v1327 = vadd.f32 %v951, %v1213
      %v1328 = vadd.f32 %v954, %v1216
      %v1329 = vadd.f32 %v959, %v1221
      %v1330 = vadd.f32 %v962, %v1224
      %v1331 = vadd.f32 %v967, %v1229
      %v1332 = vadd.f32 %v970, %v1232
      %v1333 = vadd.f32 %v975, %v1237
      %v1334 = vadd.f32 %v978, %v1240
      %v1335 = vadd.f32 %v983, %v1245
      %v1336 = vadd.f32 %v986, %v1248
      %v1337 = vadd.f32 %v991, %v1253
      %v1338 = vadd.f32 %v994, %v1256
      %v1339 = vadd.f32 %v999, %v1261
      %v1340 = vadd.f32 %v1002, %v1264
      %v1341 = vadd.f32 %v1007, %v1269
      %v1342 = vadd.f32 %v1010, %v1272
      %v1343 = vadd.f32 %v1015, %v1277
      %v1344 = vadd.f32 %v1018, %v1280
      %v1345 = vadd.f32 %v1023, %v1285
      %v1346 = vadd.f32 %v1026, %v1288
      %v1347 = vadd.f32 %v1031, %v1293
      %v1348 = vadd.f32 %v1034, %v1296
      %v1349 = vadd.f32 %v1039, %v1301
      %v1350 = vadd.f32 %v1042, %v1304
      %v1351 = vadd.f32 %v1047, %v1309
      %v1352 = vadd.f32 %v1050, %v1312
      %v1353 = vadd.f32 %v1055, %v1317
      %v1354 = vadd.f32 %v1058, %v1320
      %v1355 = vld [vmem:[%s482] sm:$0xff]
      %v1356 = vld [vmem:[%s482 + $0x8] sm:$0xff]
      %v1357 = vld [vmem:[%s482 + $0x18] sm:$0xff]
      %v1358 = vld [vmem:[%s482 + $0x20] sm:$0xff]
      %v1359 = vld [vmem:[%s482 + $0x30] sm:$0xff]
      %v1360 = vld [vmem:[%s482 + $0x38] sm:$0xff]
      %v1361 = vld [vmem:[%s482 + $0x48] sm:$0xff]
      %v1362 = vld [vmem:[%s482 + $0x50] sm:$0xff]
      %v1363 = vld [vmem:[%s482 + $0x60] sm:$0xff]
      %v1364 = vld [vmem:[%s482 + $0x68] sm:$0xff]
      %v1365 = vld [vmem:[%s482 + $0x78] sm:$0xff]
      %v1366 = vld [vmem:[%s482 + $0x80] sm:$0xff]
      %v1367 = vld [vmem:[%s482 + $0x90] sm:$0xff]
      %v1368 = vld [vmem:[%s482 + $0x98] sm:$0xff]
      %v1369 = vld [vmem:[%s482 + $0xa8] sm:$0xff]
      %v1370 = vld [vmem:[%s482 + $0xb0] sm:$0xff]
      %v1371 = vld [vmem:[%s482 + $0xc0] sm:$0xff]
      %v1372 = vld [vmem:[%s482 + $0xc8] sm:$0xff]
      %v1373 = vld [vmem:[%s482 + $0xd8] sm:$0xff]
      %v1374 = vld [vmem:[%s482 + $0xe0] sm:$0xff]
      %v1375 = vld [vmem:[%s482 + $0xf0] sm:$0xff]
      %v1376 = vld [vmem:[%s482 + $0xf8] sm:$0xff]
      %v1377 = vld [vmem:[%s482 + $0x108] sm:$0xff]
      %v1378 = vld [vmem:[%s482 + $0x110] sm:$0xff]
      %v1379 = vld [vmem:[%s482 + $0x120] sm:$0xff]
      %v1380 = vld [vmem:[%s482 + $0x128] sm:$0xff]
      %v1381 = vld [vmem:[%s482 + $0x138] sm:$0xff]
      %v1382 = vld [vmem:[%s482 + $0x140] sm:$0xff]
      %v1383 = vld [vmem:[%s482 + $0x150] sm:$0xff]
      %v1384 = vld [vmem:[%s482 + $0x158] sm:$0xff]
      %v1385 = vld [vmem:[%s482 + $0x168] sm:$0xff]
      %v1386 = vld [vmem:[%s482 + $0x170] sm:$0xff]
      %v1387 = vpack.c.bf16 %v1356, %v1355
      %v1388 = vpack.c.bf16 %v1358, %v1357
      %v1389 = vpack.c.bf16 %v1360, %v1359
      %v1390 = vpack.c.bf16 %v1362, %v1361
      %v1391 = vpack.c.bf16 %v1364, %v1363
      %v1392 = vpack.c.bf16 %v1366, %v1365
      %v1393 = vpack.c.bf16 %v1368, %v1367
      %v1394 = vpack.c.bf16 %v1370, %v1369
      %v1395 = vpack.c.bf16 %v1372, %v1371
      %v1396 = vpack.c.bf16 %v1374, %v1373
      %v1397 = vpack.c.bf16 %v1376, %v1375
      %v1398 = vpack.c.bf16 %v1378, %v1377
      %v1399 = vpack.c.bf16 %v1380, %v1379
      %v1400 = vpack.c.bf16 %v1382, %v1381
      %v1401 = vpack.c.bf16 %v1384, %v1383
      %v1402 = vpack.c.bf16 %v1386, %v1385
      %s1403 = scalar_lea.vmem %s3, 6
      %v1404 = vld [vmem:[%s1403] sm:$0x3]
      %v1406 = vsel %vm483, %v1387, 0
      %v1409 = vsel %vm483, %v1388, 0
      %v1412 = vsel %vm483, %v1389, 0
      %v1415 = vsel %vm483, %v1390, 0
      %v1418 = vsel %vm483, %v1391, 0
      %v1421 = vsel %vm483, %v1392, 0
      %v1424 = vsel %vm483, %v1393, 0
      %v1427 = vsel %vm483, %v1394, 0
      %v1430 = vsel %vm483, %v1395, 0
      %v1433 = vsel %vm483, %v1396, 0
      %v1436 = vsel %vm483, %v1397, 0
      %v1439 = vsel %vm483, %v1398, 0
      %v1442 = vsel %vm483, %v1399, 0
      %v1445 = vsel %vm483, %v1400, 0
      %v1448 = vsel %vm483, %v1401, 0
      %v1451 = vsel %vm483, %v1402, 0
      %v1454 = vsel %vm684, %v1404, 0
      %1456 = vmatprep.subr.bf16.mxu0 0
      %1457 = vmatpush1.bf16.msra.mxu0 %v1454
      %1458 = vmatprep.subr.bf16.mxu0 0
      %1459 = vmatpush1.bf16.msra.mxu0 0
      %1460 = vmatprep.subr.bf16.mxu0 0
      %1461 = vmatpush1.bf16.msra.mxu0 0
      %1462 = vmatprep.subr.bf16.mxu0 0
      %1463 = vmatpush1.bf16.msra.mxu0 0
      %1464 = vmatprep.subr.bf16.mxu0 0
      %1465 = vmatpush1.bf16.msra.mxu0 0
      %1466 = vmatprep.subr.bf16.mxu0 0
      %1467 = vmatpush1.bf16.msra.mxu0 0
      %1468 = vmatprep.subr.bf16.mxu0 0
      %1469 = vmatpush1.bf16.msra.mxu0 0
      %1470 = vmatprep.subr.bf16.mxu0 0
      %1471 = vmatpush1.bf16.msra.mxu0 0
      %1472 = vmatprep.subr.bf16.mxu0 0
      %1473 = vmatpush1.bf16.msra.mxu0 0
      %1474 = vmatprep.subr.bf16.mxu0 0
      %1475 = vmatpush1.bf16.msra.mxu0 0
      %1476 = vmatprep.subr.bf16.mxu0 0
      %1477 = vmatpush1.bf16.msra.mxu0 0
      %1478 = vmatprep.subr.bf16.mxu0 0
      %1479 = vmatpush1.bf16.msra.mxu0 0
      %1480 = vmatprep.subr.bf16.mxu0 0
      %1481 = vmatpush1.bf16.msra.mxu0 0
      %1482 = vmatprep.subr.bf16.mxu0 0
      %1483 = vmatpush1.bf16.msra.mxu0 0
      %1484 = vmatprep.subr.bf16.mxu0 0
      %1485 = vmatpush1.bf16.msra.mxu0 0
      %1486 = vmatprep.subr.bf16.mxu0 0
      %1487 = vmatpush1.bf16.msra.mxu0 0
      %1488 = vmatprep.mubr.bf16.mxu0 0
      %1489 = vmatmul.mubr.bf16.gmra.mrb[0].mxu0 %v1406
      %v1490 = vpop.f32.mrb[0].mxu0
      %v1491 = vadd.f32 0.0, %v1490
      %v1492 = vpop.f32.mrb[0].mxu0
      %v1493 = vpop.f32.mrb[0].mxu0
      %v1494 = vadd.f32 0.0, %v1493
      %v1495 = vpop.f32.mrb[0].mxu0
      %1496 = vmatprep.mubr.bf16.mxu0 0
      %1497 = vmatmul.mubr.bf16.gmra.mrb[0].mxu0 %v1409
      %v1498 = vpop.f32.mrb[0].mxu0
      %v1499 = vadd.f32 0.0, %v1498
      %v1500 = vpop.f32.mrb[0].mxu0
      %v1501 = vpop.f32.mrb[0].mxu0
      %v1502 = vadd.f32 0.0, %v1501
      %v1503 = vpop.f32.mrb[0].mxu0
      %1504 = vmatprep.mubr.bf16.mxu0 0
      %1505 = vmatmul.mubr.bf16.gmra.mrb[0].mxu0 %v1412
      %v1506 = vpop.f32.mrb[0].mxu0
      %v1507 = vadd.f32 0.0, %v1506
      %v1508 = vpop.f32.mrb[0].mxu0
      %v1509 = vpop.f32.mrb[0].mxu0
      %v1510 = vadd.f32 0.0, %v1509
      %v1511 = vpop.f32.mrb[0].mxu0
      %1512 = vmatprep.mubr.bf16.mxu0 0
      %1513 = vmatmul.mubr.bf16.gmra.mrb[0].mxu0 %v1415
      %v1514 = vpop.f32.mrb[0].mxu0
      %v1515 = vadd.f32 0.0, %v1514
      %v1516 = vpop.f32.mrb[0].mxu0
      %v1517 = vpop.f32.mrb[0].mxu0
      %v1518 = vadd.f32 0.0, %v1517
      %v1519 = vpop.f32.mrb[0].mxu0
      %1520 = vmatprep.mubr.bf16.mxu0 0
      %1521 = vmatmul.mubr.bf16.gmra.mrb[0].mxu0 %v1418
      %v1522 = vpop.f32.mrb[0].mxu0
      %v1523 = vadd.f32 0.0, %v1522
      %v1524 = vpop.f32.mrb[0].mxu0
      %v1525 = vpop.f32.mrb[0].mxu0
      %v1526 = vadd.f32 0.0, %v1525
      %v1527 = vpop.f32.mrb[0].mxu0
      %1528 = vmatprep.mubr.bf16.mxu0 0
      %1529 = vmatmul.mubr.bf16.gmra.mrb[0].mxu0 %v1421
      %v1530 = vpop.f32.mrb[0].mxu0
      %v1531 = vadd.f32 0.0, %v1530
      %v1532 = vpop.f32.mrb[0].mxu0
      %v1533 = vpop.f32.mrb[0].mxu0
      %v1534 = vadd.f32 0.0, %v1533
      %v1535 = vpop.f32.mrb[0].mxu0
      %1536 = vmatprep.mubr.bf16.mxu0 0
      %1537 = vmatmul.mubr.bf16.gmra.mrb[0].mxu0 %v1424
      %v1538 = vpop.f32.mrb[0].mxu0
      %v1539 = vadd.f32 0.0, %v1538
      %v1540 = vpop.f32.mrb[0].mxu0
      %v1541 = vpop.f32.mrb[0].mxu0
      %v1542 = vadd.f32 0.0, %v1541
      %v1543 = vpop.f32.mrb[0].mxu0
      %1544 = vmatprep.mubr.bf16.mxu0 0
      %1545 = vmatmul.mubr.bf16.gmra.mrb[0].mxu0 %v1427
      %v1546 = vpop.f32.mrb[0].mxu0
      %v1547 = vadd.f32 0.0, %v1546
      %v1548 = vpop.f32.mrb[0].mxu0
      %v1549 = vpop.f32.mrb[0].mxu0
      %v1550 = vadd.f32 0.0, %v1549
      %v1551 = vpop.f32.mrb[0].mxu0
      %1552 = vmatprep.mubr.bf16.mxu0 0
      %1553 = vmatmul.mubr.bf16.gmra.mrb[0].mxu0 %v1430
      %v1554 = vpop.f32.mrb[0].mxu0
      %v1555 = vadd.f32 0.0, %v1554
      %v1556 = vpop.f32.mrb[0].mxu0
      %v1557 = vpop.f32.mrb[0].mxu0
      %v1558 = vadd.f32 0.0, %v1557
      %v1559 = vpop.f32.mrb[0].mxu0
      %1560 = vmatprep.mubr.bf16.mxu0 0
      %1561 = vmatmul.mubr.bf16.gmra.mrb[0].mxu0 %v1433
      %v1562 = vpop.f32.mrb[0].mxu0
      %v1563 = vadd.f32 0.0, %v1562
      %v1564 = vpop.f32.mrb[0].mxu0
      %v1565 = vpop.f32.mrb[0].mxu0
      %v1566 = vadd.f32 0.0, %v1565
      %v1567 = vpop.f32.mrb[0].mxu0
      %1568 = vmatprep.mubr.bf16.mxu0 0
      %1569 = vmatmul.mubr.bf16.gmra.mrb[0].mxu0 %v1436
      %v1570 = vpop.f32.mrb[0].mxu0
      %v1571 = vadd.f32 0.0, %v1570
      %v1572 = vpop.f32.mrb[0].mxu0
      %v1573 = vpop.f32.mrb[0].mxu0
      %v1574 = vadd.f32 0.0, %v1573
      %v1575 = vpop.f32.mrb[0].mxu0
      %1576 = vmatprep.mubr.bf16.mxu0 0
      %1577 = vmatmul.mubr.bf16.gmra.mrb[0].mxu0 %v1439
      %v1578 = vpop.f32.mrb[0].mxu0
      %v1579 = vadd.f32 0.0, %v1578
      %v1580 = vpop.f32.mrb[0].mxu0
      %v1581 = vpop.f32.mrb[0].mxu0
      %v1582 = vadd.f32 0.0, %v1581
      %v1583 = vpop.f32.mrb[0].mxu0
      %1584 = vmatprep.mubr.bf16.mxu0 0
      %1585 = vmatmul.mubr.bf16.gmra.mrb[0].mxu0 %v1442
      %v1586 = vpop.f32.mrb[0].mxu0
      %v1587 = vadd.f32 0.0, %v1586
      %v1588 = vpop.f32.mrb[0].mxu0
      %v1589 = vpop.f32.mrb[0].mxu0
      %v1590 = vadd.f32 0.0, %v1589
      %v1591 = vpop.f32.mrb[0].mxu0
      %1592 = vmatprep.mubr.bf16.mxu0 0
      %1593 = vmatmul.mubr.bf16.gmra.mrb[0].mxu0 %v1445
      %v1594 = vpop.f32.mrb[0].mxu0
      %v1595 = vadd.f32 0.0, %v1594
      %v1596 = vpop.f32.mrb[0].mxu0
      %v1597 = vpop.f32.mrb[0].mxu0
      %v1598 = vadd.f32 0.0, %v1597
      %v1599 = vpop.f32.mrb[0].mxu0
      %1600 = vmatprep.mubr.bf16.mxu0 0
      %1601 = vmatmul.mubr.bf16.gmra.mrb[0].mxu0 %v1448
      %v1602 = vpop.f32.mrb[0].mxu0
      %v1603 = vadd.f32 0.0, %v1602
      %v1604 = vpop.f32.mrb[0].mxu0
      %v1605 = vpop.f32.mrb[0].mxu0
      %v1606 = vadd.f32 0.0, %v1605
      %v1607 = vpop.f32.mrb[0].mxu0
      %1608 = vmatprep.mubr.bf16.mxu0 0
      %1609 = vmatmul.mubr.bf16.gmra.mrb[0].mxu0 %v1451
      %v1610 = vpop.f32.mrb[0].mxu0
      %v1611 = vadd.f32 0.0, %v1610
      %v1612 = vpop.f32.mrb[0].mxu0
      %v1613 = vpop.f32.mrb[0].mxu0
      %v1614 = vadd.f32 0.0, %v1613
      %v1615 = vpop.f32.mrb[0].mxu0
      %1616 = vdwg.mxu0
      %v1617 = vadd.f32 %v1323, %v1491
      %v1618 = vadd.f32 %v1324, %v1494
      %v1619 = vadd.f32 %v1325, %v1499
      %v1620 = vadd.f32 %v1326, %v1502
      %v1621 = vadd.f32 %v1327, %v1507
      %v1622 = vadd.f32 %v1328, %v1510
      %v1623 = vadd.f32 %v1329, %v1515
      %v1624 = vadd.f32 %v1330, %v1518
      %v1625 = vadd.f32 %v1331, %v1523
      %v1626 = vadd.f32 %v1332, %v1526
      %v1627 = vadd.f32 %v1333, %v1531
      %v1628 = vadd.f32 %v1334, %v1534
      %v1629 = vadd.f32 %v1335, %v1539
      %v1630 = vadd.f32 %v1336, %v1542
      %v1631 = vadd.f32 %v1337, %v1547
      %v1632 = vadd.f32 %v1338, %v1550
      %v1633 = vadd.f32 %v1339, %v1555
      %v1634 = vadd.f32 %v1340, %v1558
      %v1635 = vadd.f32 %v1341, %v1563
      %v1636 = vadd.f32 %v1342, %v1566
      %v1637 = vadd.f32 %v1343, %v1571
      %v1638 = vadd.f32 %v1344, %v1574
      %v1639 = vadd.f32 %v1345, %v1579
      %v1640 = vadd.f32 %v1346, %v1582
      %v1641 = vadd.f32 %v1347, %v1587
      %v1642 = vadd.f32 %v1348, %v1590
      %v1643 = vadd.f32 %v1349, %v1595
      %v1644 = vadd.f32 %v1350, %v1598
      %v1645 = vadd.f32 %v1351, %v1603
      %v1646 = vadd.f32 %v1352, %v1606
      %v1647 = vadd.f32 %v1353, %v1611
      %v1648 = vadd.f32 %v1354, %v1614
      %v1649 = vld [vmem:[%s482 + $0x1] sm:$0xff]
      %v1650 = vld [vmem:[%s482 + $0x9] sm:$0xff]
      %v1651 = vld [vmem:[%s482 + $0x19] sm:$0xff]
      %v1652 = vld [vmem:[%s482 + $0x21] sm:$0xff]
      %v1653 = vld [vmem:[%s482 + $0x31] sm:$0xff]
      %v1654 = vld [vmem:[%s482 + $0x39] sm:$0xff]
      %v1655 = vld [vmem:[%s482 + $0x49] sm:$0xff]
      %v1656 = vld [vmem:[%s482 + $0x51] sm:$0xff]
      %v1657 = vld [vmem:[%s482 + $0x61] sm:$0xff]
      %v1658 = vld [vmem:[%s482 + $0x69] sm:$0xff]
      %v1659 = vld [vmem:[%s482 + $0x79] sm:$0xff]
      %v1660 = vld [vmem:[%s482 + $0x81] sm:$0xff]
      %v1661 = vld [vmem:[%s482 + $0x91] sm:$0xff]
      %v1662 = vld [vmem:[%s482 + $0x99] sm:$0xff]
      %v1663 = vld [vmem:[%s482 + $0xa9] sm:$0xff]
      %v1664 = vld [vmem:[%s482 + $0xb1] sm:$0xff]
      %v1665 = vld [vmem:[%s482 + $0xc1] sm:$0xff]
      %v1666 = vld [vmem:[%s482 + $0xc9] sm:$0xff]
      %v1667 = vld [vmem:[%s482 + $0xd9] sm:$0xff]
      %v1668 = vld [vmem:[%s482 + $0xe1] sm:$0xff]
      %v1669 = vld [vmem:[%s482 + $0xf1] sm:$0xff]
      %v1670 = vld [vmem:[%s482 + $0xf9] sm:$0xff]
      %v1671 = vld [vmem:[%s482 + $0x109] sm:$0xff]
      %v1672 = vld [vmem:[%s482 + $0x111] sm:$0xff]
      %v1673 = vld [vmem:[%s482 + $0x121] sm:$0xff]
      %v1674 = vld [vmem:[%s482 + $0x129] sm:$0xff]
      %v1675 = vld [vmem:[%s482 + $0x139] sm:$0xff]
      %v1676 = vld [vmem:[%s482 + $0x141] sm:$0xff]
      %v1677 = vld [vmem:[%s482 + $0x151] sm:$0xff]
      %v1678 = vld [vmem:[%s482 + $0x159] sm:$0xff]
      %v1679 = vld [vmem:[%s482 + $0x169] sm:$0xff]
      %v1680 = vld [vmem:[%s482 + $0x171] sm:$0xff]
      %v1681 = vpack.c.bf16 %v1650, %v1649
      %v1682 = vpack.c.bf16 %v1652, %v1651
      %v1683 = vpack.c.bf16 %v1654, %v1653
      %v1684 = vpack.c.bf16 %v1656, %v1655
      %v1685 = vpack.c.bf16 %v1658, %v1657
      %v1686 = vpack.c.bf16 %v1660, %v1659
      %v1687 = vpack.c.bf16 %v1662, %v1661
      %v1688 = vpack.c.bf16 %v1664, %v1663
      %v1689 = vpack.c.bf16 %v1666, %v1665
      %v1690 = vpack.c.bf16 %v1668, %v1667
      %v1691 = vpack.c.bf16 %v1670, %v1669
      %v1692 = vpack.c.bf16 %v1672, %v1671
      %v1693 = vpack.c.bf16 %v1674, %v1673
      %v1694 = vpack.c.bf16 %v1676, %v1675
      %v1695 = vpack.c.bf16 %v1678, %v1677
      %v1696 = vpack.c.bf16 %v1680, %v1679
      %s1697 = scalar_lea.vmem %s3, 8
      %v1698 = vld [vmem:[%s1697] sm:$0x3]
      %v1700 = vsel %vm483, %v1681, 0
      %v1703 = vsel %vm483, %v1682, 0
      %v1706 = vsel %vm483, %v1683, 0
      %v1709 = vsel %vm483, %v1684, 0
      %v1712 = vsel %vm483, %v1685, 0
      %v1715 = vsel %vm483, %v1686, 0
      %v1718 = vsel %vm483, %v1687, 0
      %v1721 = vsel %vm483, %v1688, 0
      %v1724 = vsel %vm483, %v1689, 0
      %v1727 = vsel %vm483, %v1690, 0
      %v1730 = vsel %vm483, %v1691, 0
      %v1733 = vsel %vm483, %v1692, 0
      %v1736 = vsel %vm483, %v1693, 0
      %v1739 = vsel %vm483, %v1694, 0
      %v1742 = vsel %vm483, %v1695, 0
      %v1745 = vsel %vm483, %v1696, 0
      %v1748 = vsel %vm684, %v1698, 0
      %1750 = vmatprep.subr.bf16.mxu0 0
      %1751 = vmatpush1.bf16.msra.mxu0 %v1748
      %1752 = vmatprep.subr.bf16.mxu0 0
      %1753 = vmatpush1.bf16.msra.mxu0 0
      %1754 = vmatprep.subr.bf16.mxu0 0
      %1755 = vmatpush1.bf16.msra.mxu0 0
      %1756 = vmatprep.subr.bf16.mxu0 0
      %1757 = vmatpush1.bf16.msra.mxu0 0
      %1758 = vmatprep.subr.bf16.mxu0 0
      %1759 = vmatpush1.bf16.msra.mxu0 0
      %1760 = vmatprep.subr.bf16.mxu0 0
      %1761 = vmatpush1.bf16.msra.mxu0 0
      %1762 = vmatprep.subr.bf16.mxu0 0
      %1763 = vmatpush1.bf16.msra.mxu0 0
      %1764 = vmatprep.subr.bf16.mxu0 0
      %1765 = vmatpush1.bf16.msra.mxu0 0
      %1766 = vmatprep.subr.bf16.mxu0 0
      %1767 = vmatpush1.bf16.msra.mxu0 0
      %1768 = vmatprep.subr.bf16.mxu0 0
      %1769 = vmatpush1.bf16.msra.mxu0 0
      %1770 = vmatprep.subr.bf16.mxu0 0
      %1771 = vmatpush1.bf16.msra.mxu0 0
      %1772 = vmatprep.subr.bf16.mxu0 0
      %1773 = vmatpush1.bf16.msra.mxu0 0
      %1774 = vmatprep.subr.bf16.mxu0 0
      %1775 = vmatpush1.bf16.msra.mxu0 0
      %1776 = vmatprep.subr.bf16.mxu0 0
      %1777 = vmatpush1.bf16.msra.mxu0 0
      %1778 = vmatprep.subr.bf16.mxu0 0
      %1779 = vmatpush1.bf16.msra.mxu0 0
      %1780 = vmatprep.subr.bf16.mxu0 0
      %1781 = vmatpush1.bf16.msra.mxu0 0
      %1782 = vmatprep.mubr.bf16.mxu0 0
      %1783 = vmatmul.mubr.bf16.gmra.mrb[0].mxu0 %v1700
      %v1784 = vpop.f32.mrb[0].mxu0
      %v1785 = vadd.f32 0.0, %v1784
      %v1786 = vpop.f32.mrb[0].mxu0
      %v1787 = vpop.f32.mrb[0].mxu0
      %v1788 = vadd.f32 0.0, %v1787
      %v1789 = vpop.f32.mrb[0].mxu0
      %1790 = vmatprep.mubr.bf16.mxu0 0
      %1791 = vmatmul.mubr.bf16.gmra.mrb[0].mxu0 %v1703
      %v1792 = vpop.f32.mrb[0].mxu0
      %v1793 = vadd.f32 0.0, %v1792
      %v1794 = vpop.f32.mrb[0].mxu0
      %v1795 = vpop.f32.mrb[0].mxu0
      %v1796 = vadd.f32 0.0, %v1795
      %v1797 = vpop.f32.mrb[0].mxu0
      %1798 = vmatprep.mubr.bf16.mxu0 0
      %1799 = vmatmul.mubr.bf16.gmra.mrb[0].mxu0 %v1706
      %v1800 = vpop.f32.mrb[0].mxu0
      %v1801 = vadd.f32 0.0, %v1800
      %v1802 = vpop.f32.mrb[0].mxu0
      %v1803 = vpop.f32.mrb[0].mxu0
      %v1804 = vadd.f32 0.0, %v1803
      %v1805 = vpop.f32.mrb[0].mxu0
      %1806 = vmatprep.mubr.bf16.mxu0 0
      %1807 = vmatmul.mubr.bf16.gmra.mrb[0].mxu0 %v1709
      %v1808 = vpop.f32.mrb[0].mxu0
      %v1809 = vadd.f32 0.0, %v1808
      %v1810 = vpop.f32.mrb[0].mxu0
      %v1811 = vpop.f32.mrb[0].mxu0
      %v1812 = vadd.f32 0.0, %v1811
      %v1813 = vpop.f32.mrb[0].mxu0
      %1814 = vmatprep.mubr.bf16.mxu0 0
      %1815 = vmatmul.mubr.bf16.gmra.mrb[0].mxu0 %v1712
      %v1816 = vpop.f32.mrb[0].mxu0
      %v1817 = vadd.f32 0.0, %v1816
      %v1818 = vpop.f32.mrb[0].mxu0
      %v1819 = vpop.f32.mrb[0].mxu0
      %v1820 = vadd.f32 0.0, %v1819
      %v1821 = vpop.f32.mrb[0].mxu0
      %1822 = vmatprep.mubr.bf16.mxu0 0
      %1823 = vmatmul.mubr.bf16.gmra.mrb[0].mxu0 %v1715
      %v1824 = vpop.f32.mrb[0].mxu0
      %v1825 = vadd.f32 0.0, %v1824
      %v1826 = vpop.f32.mrb[0].mxu0
      %v1827 = vpop.f32.mrb[0].mxu0
      %v1828 = vadd.f32 0.0, %v1827
      %v1829 = vpop.f32.mrb[0].mxu0
      %1830 = vmatprep.mubr.bf16.mxu0 0
      %1831 = vmatmul.mubr.bf16.gmra.mrb[0].mxu0 %v1718
      %v1832 = vpop.f32.mrb[0].mxu0
      %v1833 = vadd.f32 0.0, %v1832
      %v1834 = vpop.f32.mrb[0].mxu0
      %v1835 = vpop.f32.mrb[0].mxu0
      %v1836 = vadd.f32 0.0, %v1835
      %v1837 = vpop.f32.mrb[0].mxu0
      %1838 = vmatprep.mubr.bf16.mxu0 0
      %1839 = vmatmul.mubr.bf16.gmra.mrb[0].mxu0 %v1721
      %v1840 = vpop.f32.mrb[0].mxu0
      %v1841 = vadd.f32 0.0, %v1840
      %v1842 = vpop.f32.mrb[0].mxu0
      %v1843 = vpop.f32.mrb[0].mxu0
      %v1844 = vadd.f32 0.0, %v1843
      %v1845 = vpop.f32.mrb[0].mxu0
      %1846 = vmatprep.mubr.bf16.mxu0 0
      %1847 = vmatmul.mubr.bf16.gmra.mrb[0].mxu0 %v1724
      %v1848 = vpop.f32.mrb[0].mxu0
      %v1849 = vadd.f32 0.0, %v1848
      %v1850 = vpop.f32.mrb[0].mxu0
      %v1851 = vpop.f32.mrb[0].mxu0
      %v1852 = vadd.f32 0.0, %v1851
      %v1853 = vpop.f32.mrb[0].mxu0
      %1854 = vmatprep.mubr.bf16.mxu0 0
      %1855 = vmatmul.mubr.bf16.gmra.mrb[0].mxu0 %v1727
      %v1856 = vpop.f32.mrb[0].mxu0
      %v1857 = vadd.f32 0.0, %v1856
      %v1858 = vpop.f32.mrb[0].mxu0
      %v1859 = vpop.f32.mrb[0].mxu0
      %v1860 = vadd.f32 0.0, %v1859
      %v1861 = vpop.f32.mrb[0].mxu0
      %1862 = vmatprep.mubr.bf16.mxu0 0
      %1863 = vmatmul.mubr.bf16.gmra.mrb[0].mxu0 %v1730
      %v1864 = vpop.f32.mrb[0].mxu0
      %v1865 = vadd.f32 0.0, %v1864
      %v1866 = vpop.f32.mrb[0].mxu0
      %v1867 = vpop.f32.mrb[0].mxu0
      %v1868 = vadd.f32 0.0, %v1867
      %v1869 = vpop.f32.mrb[0].mxu0
      %1870 = vmatprep.mubr.bf16.mxu0 0
      %1871 = vmatmul.mubr.bf16.gmra.mrb[0].mxu0 %v1733
      %v1872 = vpop.f32.mrb[0].mxu0
      %v1873 = vadd.f32 0.0, %v1872
      %v1874 = vpop.f32.mrb[0].mxu0
      %v1875 = vpop.f32.mrb[0].mxu0
      %v1876 = vadd.f32 0.0, %v1875
      %v1877 = vpop.f32.mrb[0].mxu0
      %1878 = vmatprep.mubr.bf16.mxu0 0
      %1879 = vmatmul.mubr.bf16.gmra.mrb[0].mxu0 %v1736
      %v1880 = vpop.f32.mrb[0].mxu0
      %v1881 = vadd.f32 0.0, %v1880
      %v1882 = vpop.f32.mrb[0].mxu0
      %v1883 = vpop.f32.mrb[0].mxu0
      %v1884 = vadd.f32 0.0, %v1883
      %v1885 = vpop.f32.mrb[0].mxu0
      %1886 = vmatprep.mubr.bf16.mxu0 0
      %1887 = vmatmul.mubr.bf16.gmra.mrb[0].mxu0 %v1739
      %v1888 = vpop.f32.mrb[0].mxu0
      %v1889 = vadd.f32 0.0, %v1888
      %v1890 = vpop.f32.mrb[0].mxu0
      %v1891 = vpop.f32.mrb[0].mxu0
      %v1892 = vadd.f32 0.0, %v1891
      %v1893 = vpop.f32.mrb[0].mxu0
      %1894 = vmatprep.mubr.bf16.mxu0 0
      %1895 = vmatmul.mubr.bf16.gmra.mrb[0].mxu0 %v1742
      %v1896 = vpop.f32.mrb[0].mxu0
      %v1897 = vadd.f32 0.0, %v1896
      %v1898 = vpop.f32.mrb[0].mxu0
      %v1899 = vpop.f32.mrb[0].mxu0
      %v1900 = vadd.f32 0.0, %v1899
      %v1901 = vpop.f32.mrb[0].mxu0
      %1902 = vmatprep.mubr.bf16.mxu0 0
      %1903 = vmatmul.mubr.bf16.gmra.mrb[0].mxu0 %v1745
      %v1904 = vpop.f32.mrb[0].mxu0
      %v1905 = vadd.f32 0.0, %v1904
      %v1906 = vpop.f32.mrb[0].mxu0
      %v1907 = vpop.f32.mrb[0].mxu0
      %v1908 = vadd.f32 0.0, %v1907
      %v1909 = vpop.f32.mrb[0].mxu0
      %1910 = vdwg.mxu0
      %v1911 = vadd.f32 %v1617, %v1785
      %v1912 = vadd.f32 %v1618, %v1788
      %v1913 = vadd.f32 %v1619, %v1793
      %v1914 = vadd.f32 %v1620, %v1796
      %v1915 = vadd.f32 %v1621, %v1801
      %v1916 = vadd.f32 %v1622, %v1804
      %v1917 = vadd.f32 %v1623, %v1809
      %v1918 = vadd.f32 %v1624, %v1812
      %v1919 = vadd.f32 %v1625, %v1817
      %v1920 = vadd.f32 %v1626, %v1820
      %v1921 = vadd.f32 %v1627, %v1825
      %v1922 = vadd.f32 %v1628, %v1828
      %v1923 = vadd.f32 %v1629, %v1833
      %v1924 = vadd.f32 %v1630, %v1836
      %v1925 = vadd.f32 %v1631, %v1841
      %v1926 = vadd.f32 %v1632, %v1844
      %v1927 = vadd.f32 %v1633, %v1849
      %v1928 = vadd.f32 %v1634, %v1852
      %v1929 = vadd.f32 %v1635, %v1857
      %v1930 = vadd.f32 %v1636, %v1860
      %v1931 = vadd.f32 %v1637, %v1865
      %v1932 = vadd.f32 %v1638, %v1868
      %v1933 = vadd.f32 %v1639, %v1873
      %v1934 = vadd.f32 %v1640, %v1876
      %v1935 = vadd.f32 %v1641, %v1881
      %v1936 = vadd.f32 %v1642, %v1884
      %v1937 = vadd.f32 %v1643, %v1889
      %v1938 = vadd.f32 %v1644, %v1892
      %v1939 = vadd.f32 %v1645, %v1897
      %v1940 = vadd.f32 %v1646, %v1900
      %v1941 = vadd.f32 %v1647, %v1905
      %v1942 = vadd.f32 %v1648, %v1908
      %v1943 = vld [vmem:[%s482 + $0x2] sm:$0xff]
      %v1944 = vld [vmem:[%s482 + $0xa] sm:$0xff]
      %v1945 = vld [vmem:[%s482 + $0x1a] sm:$0xff]
      %v1946 = vld [vmem:[%s482 + $0x22] sm:$0xff]
      %v1947 = vld [vmem:[%s482 + $0x32] sm:$0xff]
      %v1948 = vld [vmem:[%s482 + $0x3a] sm:$0xff]
      %v1949 = vld [vmem:[%s482 + $0x4a] sm:$0xff]
      %v1950 = vld [vmem:[%s482 + $0x52] sm:$0xff]
      %v1951 = vld [vmem:[%s482 + $0x62] sm:$0xff]
      %v1952 = vld [vmem:[%s482 + $0x6a] sm:$0xff]
      %v1953 = vld [vmem:[%s482 + $0x7a] sm:$0xff]
      %v1954 = vld [vmem:[%s482 + $0x82] sm:$0xff]
      %v1955 = vld [vmem:[%s482 + $0x92] sm:$0xff]
      %v1956 = vld [vmem:[%s482 + $0x9a] sm:$0xff]
      %v1957 = vld [vmem:[%s482 + $0xaa] sm:$0xff]
      %v1958 = vld [vmem:[%s482 + $0xb2] sm:$0xff]
      %v1959 = vld [vmem:[%s482 + $0xc2] sm:$0xff]
      %v1960 = vld [vmem:[%s482 + $0xca] sm:$0xff]
      %v1961 = vld [vmem:[%s482 + $0xda] sm:$0xff]
      %v1962 = vld [vmem:[%s482 + $0xe2] sm:$0xff]
      %v1963 = vld [vmem:[%s482 + $0xf2] sm:$0xff]
      %v1964 = vld [vmem:[%s482 + $0xfa] sm:$0xff]
      %v1965 = vld [vmem:[%s482 + $0x10a] sm:$0xff]
      %v1966 = vld [vmem:[%s482 + $0x112] sm:$0xff]
      %v1967 = vld [vmem:[%s482 + $0x122] sm:$0xff]
      %v1968 = vld [vmem:[%s482 + $0x12a] sm:$0xff]
      %v1969 = vld [vmem:[%s482 + $0x13a] sm:$0xff]
      %v1970 = vld [vmem:[%s482 + $0x142] sm:$0xff]
      %v1971 = vld [vmem:[%s482 + $0x152] sm:$0xff]
      %v1972 = vld [vmem:[%s482 + $0x15a] sm:$0xff]
      %v1973 = vld [vmem:[%s482 + $0x16a] sm:$0xff]
      %v1974 = vld [vmem:[%s482 + $0x172] sm:$0xff]
      %v1975 = vpack.c.bf16 %v1944, %v1943
      %v1976 = vpack.c.bf16 %v1946, %v1945
      %v1977 = vpack.c.bf16 %v1948, %v1947
      %v1978 = vpack.c.bf16 %v1950, %v1949
      %v1979 = vpack.c.bf16 %v1952, %v1951
      %v1980 = vpack.c.bf16 %v1954, %v1953
      %v1981 = vpack.c.bf16 %v1956, %v1955
      %v1982 = vpack.c.bf16 %v1958, %v1957
      %v1983 = vpack.c.bf16 %v1960, %v1959
      %v1984 = vpack.c.bf16 %v1962, %v1961
      %v1985 = vpack.c.bf16 %v1964, %v1963
      %v1986 = vpack.c.bf16 %v1966, %v1965
      %v1987 = vpack.c.bf16 %v1968, %v1967
      %v1988 = vpack.c.bf16 %v1970, %v1969
      %v1989 = vpack.c.bf16 %v1972, %v1971
      %v1990 = vpack.c.bf16 %v1974, %v1973
      %s1991 = scalar_lea.vmem %s3, 10
      %v1992 = vld [vmem:[%s1991] sm:$0x3]
      %v1994 = vsel %vm483, %v1975, 0
      %v1997 = vsel %vm483, %v1976, 0
      %v2000 = vsel %vm483, %v1977, 0
      %v2003 = vsel %vm483, %v1978, 0
      %v2006 = vsel %vm483, %v1979, 0
      %v2009 = vsel %vm483, %v1980, 0
      %v2012 = vsel %vm483, %v1981, 0
      %v2015 = vsel %vm483, %v1982, 0
      %v2018 = vsel %vm483, %v1983, 0
      %v2021 = vsel %vm483, %v1984, 0
      %v2024 = vsel %vm483, %v1985, 0
      %v2027 = vsel %vm483, %v1986, 0
      %v2030 = vsel %vm483, %v1987, 0
      %v2033 = vsel %vm483, %v1988, 0
      %v2036 = vsel %vm483, %v1989, 0
      %v2039 = vsel %vm483, %v1990, 0
      %v2042 = vsel %vm684, %v1992, 0
      %2044 = vmatprep.subr.bf16.mxu0 0
      %2045 = vmatpush1.bf16.msra.mxu0 %v2042
      %2046 = vmatprep.subr.bf16.mxu0 0
      %2047 = vmatpush1.bf16.msra.mxu0 0
      %2048 = vmatprep.subr.bf16.mxu0 0
      %2049 = vmatpush1.bf16.msra.mxu0 0
      %2050 = vmatprep.subr.bf16.mxu0 0
      %2051 = vmatpush1.bf16.msra.mxu0 0
      %2052 = vmatprep.subr.bf16.mxu0 0
      %2053 = vmatpush1.bf16.msra.mxu0 0
      %2054 = vmatprep.subr.bf16.mxu0 0
      %2055 = vmatpush1.bf16.msra.mxu0 0
      %2056 = vmatprep.subr.bf16.mxu0 0
      %2057 = vmatpush1.bf16.msra.mxu0 0
      %2058 = vmatprep.subr.bf16.mxu0 0
      %2059 = vmatpush1.bf16.msra.mxu0 0
      %2060 = vmatprep.subr.bf16.mxu0 0
      %2061 = vmatpush1.bf16.msra.mxu0 0
      %2062 = vmatprep.subr.bf16.mxu0 0
      %2063 = vmatpush1.bf16.msra.mxu0 0
      %2064 = vmatprep.subr.bf16.mxu0 0
      %2065 = vmatpush1.bf16.msra.mxu0 0
      %2066 = vmatprep.subr.bf16.mxu0 0
      %2067 = vmatpush1.bf16.msra.mxu0 0
      %2068 = vmatprep.subr.bf16.mxu0 0
      %2069 = vmatpush1.bf16.msra.mxu0 0
      %2070 = vmatprep.subr.bf16.mxu0 0
      %2071 = vmatpush1.bf16.msra.mxu0 0
      %2072 = vmatprep.subr.bf16.mxu0 0
      %2073 = vmatpush1.bf16.msra.mxu0 0
      %2074 = vmatprep.subr.bf16.mxu0 0
      %2075 = vmatpush1.bf16.msra.mxu0 0
      %2076 = vmatprep.mubr.bf16.mxu0 0
      %2077 = vmatmul.mubr.bf16.gmra.mrb[0].mxu0 %v1994
      %v2078 = vpop.f32.mrb[0].mxu0
      %v2079 = vadd.f32 0.0, %v2078
      %v2080 = vpop.f32.mrb[0].mxu0
      %v2081 = vpop.f32.mrb[0].mxu0
      %v2082 = vadd.f32 0.0, %v2081
      %v2083 = vpop.f32.mrb[0].mxu0
      %2084 = vmatprep.mubr.bf16.mxu0 0
      %2085 = vmatmul.mubr.bf16.gmra.mrb[0].mxu0 %v1997
      %v2086 = vpop.f32.mrb[0].mxu0
      %v2087 = vadd.f32 0.0, %v2086
      %v2088 = vpop.f32.mrb[0].mxu0
      %v2089 = vpop.f32.mrb[0].mxu0
      %v2090 = vadd.f32 0.0, %v2089
      %v2091 = vpop.f32.mrb[0].mxu0
      %2092 = vmatprep.mubr.bf16.mxu0 0
      %2093 = vmatmul.mubr.bf16.gmra.mrb[0].mxu0 %v2000
      %v2094 = vpop.f32.mrb[0].mxu0
      %v2095 = vadd.f32 0.0, %v2094
      %v2096 = vpop.f32.mrb[0].mxu0
      %v2097 = vpop.f32.mrb[0].mxu0
      %v2098 = vadd.f32 0.0, %v2097
      %v2099 = vpop.f32.mrb[0].mxu0
      %2100 = vmatprep.mubr.bf16.mxu0 0
      %2101 = vmatmul.mubr.bf16.gmra.mrb[0].mxu0 %v2003
      %v2102 = vpop.f32.mrb[0].mxu0
      %v2103 = vadd.f32 0.0, %v2102
      %v2104 = vpop.f32.mrb[0].mxu0
      %v2105 = vpop.f32.mrb[0].mxu0
      %v2106 = vadd.f32 0.0, %v2105
      %v2107 = vpop.f32.mrb[0].mxu0
      %2108 = vmatprep.mubr.bf16.mxu0 0
      %2109 = vmatmul.mubr.bf16.gmra.mrb[0].mxu0 %v2006
      %v2110 = vpop.f32.mrb[0].mxu0
      %v2111 = vadd.f32 0.0, %v2110
      %v2112 = vpop.f32.mrb[0].mxu0
      %v2113 = vpop.f32.mrb[0].mxu0
      %v2114 = vadd.f32 0.0, %v2113
      %v2115 = vpop.f32.mrb[0].mxu0
      %2116 = vmatprep.mubr.bf16.mxu0 0
      %2117 = vmatmul.mubr.bf16.gmra.mrb[0].mxu0 %v2009
      %v2118 = vpop.f32.mrb[0].mxu0
      %v2119 = vadd.f32 0.0, %v2118
      %v2120 = vpop.f32.mrb[0].mxu0
      %v2121 = vpop.f32.mrb[0].mxu0
      %v2122 = vadd.f32 0.0, %v2121
      %v2123 = vpop.f32.mrb[0].mxu0
      %2124 = vmatprep.mubr.bf16.mxu0 0
      %2125 = vmatmul.mubr.bf16.gmra.mrb[0].mxu0 %v2012
      %v2126 = vpop.f32.mrb[0].mxu0
      %v2127 = vadd.f32 0.0, %v2126
      %v2128 = vpop.f32.mrb[0].mxu0
      %v2129 = vpop.f32.mrb[0].mxu0
      %v2130 = vadd.f32 0.0, %v2129
      %v2131 = vpop.f32.mrb[0].mxu0
      %2132 = vmatprep.mubr.bf16.mxu0 0
      %2133 = vmatmul.mubr.bf16.gmra.mrb[0].mxu0 %v2015
      %v2134 = vpop.f32.mrb[0].mxu0
      %v2135 = vadd.f32 0.0, %v2134
      %v2136 = vpop.f32.mrb[0].mxu0
      %v2137 = vpop.f32.mrb[0].mxu0
      %v2138 = vadd.f32 0.0, %v2137
      %v2139 = vpop.f32.mrb[0].mxu0
      %2140 = vmatprep.mubr.bf16.mxu0 0
      %2141 = vmatmul.mubr.bf16.gmra.mrb[0].mxu0 %v2018
      %v2142 = vpop.f32.mrb[0].mxu0
      %v2143 = vadd.f32 0.0, %v2142
      %v2144 = vpop.f32.mrb[0].mxu0
      %v2145 = vpop.f32.mrb[0].mxu0
      %v2146 = vadd.f32 0.0, %v2145
      %v2147 = vpop.f32.mrb[0].mxu0
      %2148 = vmatprep.mubr.bf16.mxu0 0
      %2149 = vmatmul.mubr.bf16.gmra.mrb[0].mxu0 %v2021
      %v2150 = vpop.f32.mrb[0].mxu0
      %v2151 = vadd.f32 0.0, %v2150
      %v2152 = vpop.f32.mrb[0].mxu0
      %v2153 = vpop.f32.mrb[0].mxu0
      %v2154 = vadd.f32 0.0, %v2153
      %v2155 = vpop.f32.mrb[0].mxu0
      %2156 = vmatprep.mubr.bf16.mxu0 0
      %2157 = vmatmul.mubr.bf16.gmra.mrb[0].mxu0 %v2024
      %v2158 = vpop.f32.mrb[0].mxu0
      %v2159 = vadd.f32 0.0, %v2158
      %v2160 = vpop.f32.mrb[0].mxu0
      %v2161 = vpop.f32.mrb[0].mxu0
      %v2162 = vadd.f32 0.0, %v2161
      %v2163 = vpop.f32.mrb[0].mxu0
      %2164 = vmatprep.mubr.bf16.mxu0 0
      %2165 = vmatmul.mubr.bf16.gmra.mrb[0].mxu0 %v2027
      %v2166 = vpop.f32.mrb[0].mxu0
      %v2167 = vadd.f32 0.0, %v2166
      %v2168 = vpop.f32.mrb[0].mxu0
      %v2169 = vpop.f32.mrb[0].mxu0
      %v2170 = vadd.f32 0.0, %v2169
      %v2171 = vpop.f32.mrb[0].mxu0
      %2172 = vmatprep.mubr.bf16.mxu0 0
      %2173 = vmatmul.mubr.bf16.gmra.mrb[0].mxu0 %v2030
      %v2174 = vpop.f32.mrb[0].mxu0
      %v2175 = vadd.f32 0.0, %v2174
      %v2176 = vpop.f32.mrb[0].mxu0
      %v2177 = vpop.f32.mrb[0].mxu0
      %v2178 = vadd.f32 0.0, %v2177
      %v2179 = vpop.f32.mrb[0].mxu0
      %2180 = vmatprep.mubr.bf16.mxu0 0
      %2181 = vmatmul.mubr.bf16.gmra.mrb[0].mxu0 %v2033
      %v2182 = vpop.f32.mrb[0].mxu0
      %v2183 = vadd.f32 0.0, %v2182
      %v2184 = vpop.f32.mrb[0].mxu0
      %v2185 = vpop.f32.mrb[0].mxu0
      %v2186 = vadd.f32 0.0, %v2185
      %v2187 = vpop.f32.mrb[0].mxu0
      %2188 = vmatprep.mubr.bf16.mxu0 0
      %2189 = vmatmul.mubr.bf16.gmra.mrb[0].mxu0 %v2036
      %v2190 = vpop.f32.mrb[0].mxu0
      %v2191 = vadd.f32 0.0, %v2190
      %v2192 = vpop.f32.mrb[0].mxu0
      %v2193 = vpop.f32.mrb[0].mxu0
      %v2194 = vadd.f32 0.0, %v2193
      %v2195 = vpop.f32.mrb[0].mxu0
      %2196 = vmatprep.mubr.bf16.mxu0 0
      %2197 = vmatmul.mubr.bf16.gmra.mrb[0].mxu0 %v2039
      %v2198 = vpop.f32.mrb[0].mxu0
      %v2199 = vadd.f32 0.0, %v2198
      %v2200 = vpop.f32.mrb[0].mxu0
      %v2201 = vpop.f32.mrb[0].mxu0
      %v2202 = vadd.f32 0.0, %v2201
      %v2203 = vpop.f32.mrb[0].mxu0
      %2204 = vdwg.mxu0
      %v2205 = vadd.f32 %v1911, %v2079
      %v2206 = vadd.f32 %v1912, %v2082
      %v2207 = vadd.f32 %v1913, %v2087
      %v2208 = vadd.f32 %v1914, %v2090
      %v2209 = vadd.f32 %v1915, %v2095
      %v2210 = vadd.f32 %v1916, %v2098
      %v2211 = vadd.f32 %v1917, %v2103
      %v2212 = vadd.f32 %v1918, %v2106
      %v2213 = vadd.f32 %v1919, %v2111
      %v2214 = vadd.f32 %v1920, %v2114
      %v2215 = vadd.f32 %v1921, %v2119
      %v2216 = vadd.f32 %v1922, %v2122
      %v2217 = vadd.f32 %v1923, %v2127
      %v2218 = vadd.f32 %v1924, %v2130
      %v2219 = vadd.f32 %v1925, %v2135
      %v2220 = vadd.f32 %v1926, %v2138
      %v2221 = vadd.f32 %v1927, %v2143
      %v2222 = vadd.f32 %v1928, %v2146
      %v2223 = vadd.f32 %v1929, %v2151
      %v2224 = vadd.f32 %v1930, %v2154
      %v2225 = vadd.f32 %v1931, %v2159
      %v2226 = vadd.f32 %v1932, %v2162
      %v2227 = vadd.f32 %v1933, %v2167
      %v2228 = vadd.f32 %v1934, %v2170
      %v2229 = vadd.f32 %v1935, %v2175
      %v2230 = vadd.f32 %v1936, %v2178
      %v2231 = vadd.f32 %v1937, %v2183
      %v2232 = vadd.f32 %v1938, %v2186
      %v2233 = vadd.f32 %v1939, %v2191
      %v2234 = vadd.f32 %v1940, %v2194
      %v2235 = vadd.f32 %v1941, %v2199
      %v2236 = vadd.f32 %v1942, %v2202
      %s2237 = scalar_lea.vmem [#allocation2], 48
      %v2238 = vld [vmem:[%s2237] sm:$0xff]
      %v2239 = vld [vmem:[%s2237 + $0x8] sm:$0xff]
      %v2240 = vld [vmem:[%s2237 + $0x18] sm:$0xff]
      %v2241 = vld [vmem:[%s2237 + $0x20] sm:$0xff]
      %v2242 = vld [vmem:[%s2237 + $0x30] sm:$0xff]
      %v2243 = vld [vmem:[%s2237 + $0x38] sm:$0xff]
      %v2244 = vld [vmem:[%s2237 + $0x48] sm:$0xff]
      %v2245 = vld [vmem:[%s2237 + $0x50] sm:$0xff]
      %v2246 = vld [vmem:[%s2237 + $0x60] sm:$0xff]
      %v2247 = vld [vmem:[%s2237 + $0x68] sm:$0xff]
      %v2248 = vld [vmem:[%s2237 + $0x78] sm:$0xff]
      %v2249 = vld [vmem:[%s2237 + $0x80] sm:$0xff]
      %v2250 = vld [vmem:[%s2237 + $0x90] sm:$0xff]
      %v2251 = vld [vmem:[%s2237 + $0x98] sm:$0xff]
      %v2252 = vld [vmem:[%s2237 + $0xa8] sm:$0xff]
      %v2253 = vld [vmem:[%s2237 + $0xb0] sm:$0xff]
      %v2254 = vld [vmem:[%s2237 + $0xc0] sm:$0xff]
      %v2255 = vld [vmem:[%s2237 + $0xc8] sm:$0xff]
      %v2256 = vld [vmem:[%s2237 + $0xd8] sm:$0xff]
      %v2257 = vld [vmem:[%s2237 + $0xe0] sm:$0xff]
      %v2258 = vld [vmem:[%s2237 + $0xf0] sm:$0xff]
      %v2259 = vld [vmem:[%s2237 + $0xf8] sm:$0xff]
      %v2260 = vld [vmem:[%s2237 + $0x108] sm:$0xff]
      %v2261 = vld [vmem:[%s2237 + $0x110] sm:$0xff]
      %v2262 = vld [vmem:[%s2237 + $0x120] sm:$0xff]
      %v2263 = vld [vmem:[%s2237 + $0x128] sm:$0xff]
      %v2264 = vld [vmem:[%s2237 + $0x138] sm:$0xff]
      %v2265 = vld [vmem:[%s2237 + $0x140] sm:$0xff]
      %v2266 = vld [vmem:[%s2237 + $0x150] sm:$0xff]
      %v2267 = vld [vmem:[%s2237 + $0x158] sm:$0xff]
      %v2268 = vld [vmem:[%s2237 + $0x168] sm:$0xff]
      %v2269 = vld [vmem:[%s2237 + $0x170] sm:$0xff]
      %v2270 = vpack.c.bf16 %v2239, %v2238
      %v2271 = vpack.c.bf16 %v2241, %v2240
      %v2272 = vpack.c.bf16 %v2243, %v2242
      %v2273 = vpack.c.bf16 %v2245, %v2244
      %v2274 = vpack.c.bf16 %v2247, %v2246
      %v2275 = vpack.c.bf16 %v2249, %v2248
      %v2276 = vpack.c.bf16 %v2251, %v2250
      %v2277 = vpack.c.bf16 %v2253, %v2252
      %v2278 = vpack.c.bf16 %v2255, %v2254
      %v2279 = vpack.c.bf16 %v2257, %v2256
      %v2280 = vpack.c.bf16 %v2259, %v2258
      %v2281 = vpack.c.bf16 %v2261, %v2260
      %v2282 = vpack.c.bf16 %v2263, %v2262
      %v2283 = vpack.c.bf16 %v2265, %v2264
      %v2284 = vpack.c.bf16 %v2267, %v2266
      %v2285 = vpack.c.bf16 %v2269, %v2268
      %s2286 = scalar_lea.vmem %s3, 12
      %v2287 = vld [vmem:[%s2286] sm:$0x3]
      %v2289 = vsel %vm483, %v2270, 0
      %v2292 = vsel %vm483, %v2271, 0
      %v2295 = vsel %vm483, %v2272, 0
      %v2298 = vsel %vm483, %v2273, 0
      %v2301 = vsel %vm483, %v2274, 0
      %v2304 = vsel %vm483, %v2275, 0
      %v2307 = vsel %vm483, %v2276, 0
      %v2310 = vsel %vm483, %v2277, 0
      %v2313 = vsel %vm483, %v2278, 0
      %v2316 = vsel %vm483, %v2279, 0
      %v2319 = vsel %vm483, %v2280, 0
      %v2322 = vsel %vm483, %v2281, 0
      %v2325 = vsel %vm483, %v2282, 0
      %v2328 = vsel %vm483, %v2283, 0
      %v2331 = vsel %vm483, %v2284, 0
      %v2334 = vsel %vm483, %v2285, 0
      %v2337 = vsel %vm684, %v2287, 0
      %2339 = vmatprep.subr.bf16.mxu0 0
      %2340 = vmatpush1.bf16.msra.mxu0 %v2337
      %2341 = vmatprep.subr.bf16.mxu0 0
      %2342 = vmatpush1.bf16.msra.mxu0 0
      %2343 = vmatprep.subr.bf16.mxu0 0
      %2344 = vmatpush1.bf16.msra.mxu0 0
      %2345 = vmatprep.subr.bf16.mxu0 0
      %2346 = vmatpush1.bf16.msra.mxu0 0
      %2347 = vmatprep.subr.bf16.mxu0 0
      %2348 = vmatpush1.bf16.msra.mxu0 0
      %2349 = vmatprep.subr.bf16.mxu0 0
      %2350 = vmatpush1.bf16.msra.mxu0 0
      %2351 = vmatprep.subr.bf16.mxu0 0
      %2352 = vmatpush1.bf16.msra.mxu0 0
      %2353 = vmatprep.subr.bf16.mxu0 0
      %2354 = vmatpush1.bf16.msra.mxu0 0
      %2355 = vmatprep.subr.bf16.mxu0 0
      %2356 = vmatpush1.bf16.msra.mxu0 0
      %2357 = vmatprep.subr.bf16.mxu0 0
      %2358 = vmatpush1.bf16.msra.mxu0 0
      %2359 = vmatprep.subr.bf16.mxu0 0
      %2360 = vmatpush1.bf16.msra.mxu0 0
      %2361 = vmatprep.subr.bf16.mxu0 0
      %2362 = vmatpush1.bf16.msra.mxu0 0
      %2363 = vmatprep.subr.bf16.mxu0 0
      %2364 = vmatpush1.bf16.msra.mxu0 0
      %2365 = vmatprep.subr.bf16.mxu0 0
      %2366 = vmatpush1.bf16.msra.mxu0 0
      %2367 = vmatprep.subr.bf16.mxu0 0
      %2368 = vmatpush1.bf16.msra.mxu0 0
      %2369 = vmatprep.subr.bf16.mxu0 0
      %2370 = vmatpush1.bf16.msra.mxu0 0
      %2371 = vmatprep.mubr.bf16.mxu0 0
      %2372 = vmatmul.mubr.bf16.gmra.mrb[0].mxu0 %v2289
      %v2373 = vpop.f32.mrb[0].mxu0
      %v2374 = vadd.f32 0.0, %v2373
      %v2375 = vpop.f32.mrb[0].mxu0
      %v2376 = vpop.f32.mrb[0].mxu0
      %v2377 = vadd.f32 0.0, %v2376
      %v2378 = vpop.f32.mrb[0].mxu0
      %2379 = vmatprep.mubr.bf16.mxu0 0
      %2380 = vmatmul.mubr.bf16.gmra.mrb[0].mxu0 %v2292
      %v2381 = vpop.f32.mrb[0].mxu0
      %v2382 = vadd.f32 0.0, %v2381
      %v2383 = vpop.f32.mrb[0].mxu0
      %v2384 = vpop.f32.mrb[0].mxu0
      %v2385 = vadd.f32 0.0, %v2384
      %v2386 = vpop.f32.mrb[0].mxu0
      %2387 = vmatprep.mubr.bf16.mxu0 0
      %2388 = vmatmul.mubr.bf16.gmra.mrb[0].mxu0 %v2295
      %v2389 = vpop.f32.mrb[0].mxu0
      %v2390 = vadd.f32 0.0, %v2389
      %v2391 = vpop.f32.mrb[0].mxu0
      %v2392 = vpop.f32.mrb[0].mxu0
      %v2393 = vadd.f32 0.0, %v2392
      %v2394 = vpop.f32.mrb[0].mxu0
      %2395 = vmatprep.mubr.bf16.mxu0 0
      %2396 = vmatmul.mubr.bf16.gmra.mrb[0].mxu0 %v2298
      %v2397 = vpop.f32.mrb[0].mxu0
      %v2398 = vadd.f32 0.0, %v2397
      %v2399 = vpop.f32.mrb[0].mxu0
      %v2400 = vpop.f32.mrb[0].mxu0
      %v2401 = vadd.f32 0.0, %v2400
      %v2402 = vpop.f32.mrb[0].mxu0
      %2403 = vmatprep.mubr.bf16.mxu0 0
      %2404 = vmatmul.mubr.bf16.gmra.mrb[0].mxu0 %v2301
      %v2405 = vpop.f32.mrb[0].mxu0
      %v2406 = vadd.f32 0.0, %v2405
      %v2407 = vpop.f32.mrb[0].mxu0
      %v2408 = vpop.f32.mrb[0].mxu0
      %v2409 = vadd.f32 0.0, %v2408
      %v2410 = vpop.f32.mrb[0].mxu0
      %2411 = vmatprep.mubr.bf16.mxu0 0
      %2412 = vmatmul.mubr.bf16.gmra.mrb[0].mxu0 %v2304
      %v2413 = vpop.f32.mrb[0].mxu0
      %v2414 = vadd.f32 0.0, %v2413
      %v2415 = vpop.f32.mrb[0].mxu0
      %v2416 = vpop.f32.mrb[0].mxu0
      %v2417 = vadd.f32 0.0, %v2416
      %v2418 = vpop.f32.mrb[0].mxu0
      %2419 = vmatprep.mubr.bf16.mxu0 0
      %2420 = vmatmul.mubr.bf16.gmra.mrb[0].mxu0 %v2307
      %v2421 = vpop.f32.mrb[0].mxu0
      %v2422 = vadd.f32 0.0, %v2421
      %v2423 = vpop.f32.mrb[0].mxu0
      %v2424 = vpop.f32.mrb[0].mxu0
      %v2425 = vadd.f32 0.0, %v2424
      %v2426 = vpop.f32.mrb[0].mxu0
      %2427 = vmatprep.mubr.bf16.mxu0 0
      %2428 = vmatmul.mubr.bf16.gmra.mrb[0].mxu0 %v2310
      %v2429 = vpop.f32.mrb[0].mxu0
      %v2430 = vadd.f32 0.0, %v2429
      %v2431 = vpop.f32.mrb[0].mxu0
      %v2432 = vpop.f32.mrb[0].mxu0
      %v2433 = vadd.f32 0.0, %v2432
      %v2434 = vpop.f32.mrb[0].mxu0
      %2435 = vmatprep.mubr.bf16.mxu0 0
      %2436 = vmatmul.mubr.bf16.gmra.mrb[0].mxu0 %v2313
      %v2437 = vpop.f32.mrb[0].mxu0
      %v2438 = vadd.f32 0.0, %v2437
      %v2439 = vpop.f32.mrb[0].mxu0
      %v2440 = vpop.f32.mrb[0].mxu0
      %v2441 = vadd.f32 0.0, %v2440
      %v2442 = vpop.f32.mrb[0].mxu0
      %2443 = vmatprep.mubr.bf16.mxu0 0
      %2444 = vmatmul.mubr.bf16.gmra.mrb[0].mxu0 %v2316
      %v2445 = vpop.f32.mrb[0].mxu0
      %v2446 = vadd.f32 0.0, %v2445
      %v2447 = vpop.f32.mrb[0].mxu0
      %v2448 = vpop.f32.mrb[0].mxu0
      %v2449 = vadd.f32 0.0, %v2448
      %v2450 = vpop.f32.mrb[0].mxu0
      %2451 = vmatprep.mubr.bf16.mxu0 0
      %2452 = vmatmul.mubr.bf16.gmra.mrb[0].mxu0 %v2319
      %v2453 = vpop.f32.mrb[0].mxu0
      %v2454 = vadd.f32 0.0, %v2453
      %v2455 = vpop.f32.mrb[0].mxu0
      %v2456 = vpop.f32.mrb[0].mxu0
      %v2457 = vadd.f32 0.0, %v2456
      %v2458 = vpop.f32.mrb[0].mxu0
      %2459 = vmatprep.mubr.bf16.mxu0 0
      %2460 = vmatmul.mubr.bf16.gmra.mrb[0].mxu0 %v2322
      %v2461 = vpop.f32.mrb[0].mxu0
      %v2462 = vadd.f32 0.0, %v2461
      %v2463 = vpop.f32.mrb[0].mxu0
      %v2464 = vpop.f32.mrb[0].mxu0
      %v2465 = vadd.f32 0.0, %v2464
      %v2466 = vpop.f32.mrb[0].mxu0
      %2467 = vmatprep.mubr.bf16.mxu0 0
      %2468 = vmatmul.mubr.bf16.gmra.mrb[0].mxu0 %v2325
      %v2469 = vpop.f32.mrb[0].mxu0
      %v2470 = vadd.f32 0.0, %v2469
      %v2471 = vpop.f32.mrb[0].mxu0
      %v2472 = vpop.f32.mrb[0].mxu0
      %v2473 = vadd.f32 0.0, %v2472
      %v2474 = vpop.f32.mrb[0].mxu0
      %2475 = vmatprep.mubr.bf16.mxu0 0
      %2476 = vmatmul.mubr.bf16.gmra.mrb[0].mxu0 %v2328
      %v2477 = vpop.f32.mrb[0].mxu0
      %v2478 = vadd.f32 0.0, %v2477
      %v2479 = vpop.f32.mrb[0].mxu0
      %v2480 = vpop.f32.mrb[0].mxu0
      %v2481 = vadd.f32 0.0, %v2480
      %v2482 = vpop.f32.mrb[0].mxu0
      %2483 = vmatprep.mubr.bf16.mxu0 0
      %2484 = vmatmul.mubr.bf16.gmra.mrb[0].mxu0 %v2331
      %v2485 = vpop.f32.mrb[0].mxu0
      %v2486 = vadd.f32 0.0, %v2485
      %v2487 = vpop.f32.mrb[0].mxu0
      %v2488 = vpop.f32.mrb[0].mxu0
      %v2489 = vadd.f32 0.0, %v2488
      %v2490 = vpop.f32.mrb[0].mxu0
      %2491 = vmatprep.mubr.bf16.mxu0 0
      %2492 = vmatmul.mubr.bf16.gmra.mrb[0].mxu0 %v2334
      %v2493 = vpop.f32.mrb[0].mxu0
      %v2494 = vadd.f32 0.0, %v2493
      %v2495 = vpop.f32.mrb[0].mxu0
      %v2496 = vpop.f32.mrb[0].mxu0
      %v2497 = vadd.f32 0.0, %v2496
      %v2498 = vpop.f32.mrb[0].mxu0
      %2499 = vdwg.mxu0
      %v2500 = vadd.f32 %v2205, %v2374
      %v2501 = vadd.f32 %v2206, %v2377
      %v2502 = vadd.f32 %v2207, %v2382
      %v2503 = vadd.f32 %v2208, %v2385
      %v2504 = vadd.f32 %v2209, %v2390
      %v2505 = vadd.f32 %v2210, %v2393
      %v2506 = vadd.f32 %v2211, %v2398
      %v2507 = vadd.f32 %v2212, %v2401
      %v2508 = vadd.f32 %v2213, %v2406
      %v2509 = vadd.f32 %v2214, %v2409
      %v2510 = vadd.f32 %v2215, %v2414
      %v2511 = vadd.f32 %v2216, %v2417
      %v2512 = vadd.f32 %v2217, %v2422
      %v2513 = vadd.f32 %v2218, %v2425
      %v2514 = vadd.f32 %v2219, %v2430
      %v2515 = vadd.f32 %v2220, %v2433
      %v2516 = vadd.f32 %v2221, %v2438
      %v2517 = vadd.f32 %v2222, %v2441
      %v2518 = vadd.f32 %v2223, %v2446
      %v2519 = vadd.f32 %v2224, %v2449
      %v2520 = vadd.f32 %v2225, %v2454
      %v2521 = vadd.f32 %v2226, %v2457
      %v2522 = vadd.f32 %v2227, %v2462
      %v2523 = vadd.f32 %v2228, %v2465
      %v2524 = vadd.f32 %v2229, %v2470
      %v2525 = vadd.f32 %v2230, %v2473
      %v2526 = vadd.f32 %v2231, %v2478
      %v2527 = vadd.f32 %v2232, %v2481
      %v2528 = vadd.f32 %v2233, %v2486
      %v2529 = vadd.f32 %v2234, %v2489
      %v2530 = vadd.f32 %v2235, %v2494
      %v2531 = vadd.f32 %v2236, %v2497
      %v2532 = vld [vmem:[%s2237 + $0x1] sm:$0xff]
      %v2533 = vld [vmem:[%s2237 + $0x9] sm:$0xff]
      %v2534 = vld [vmem:[%s2237 + $0x19] sm:$0xff]
      %v2535 = vld [vmem:[%s2237 + $0x21] sm:$0xff]
      %v2536 = vld [vmem:[%s2237 + $0x31] sm:$0xff]
      %v2537 = vld [vmem:[%s2237 + $0x39] sm:$0xff]
      %v2538 = vld [vmem:[%s2237 + $0x49] sm:$0xff]
      %v2539 = vld [vmem:[%s2237 + $0x51] sm:$0xff]
      %v2540 = vld [vmem:[%s2237 + $0x61] sm:$0xff]
      %v2541 = vld [vmem:[%s2237 + $0x69] sm:$0xff]
      %v2542 = vld [vmem:[%s2237 + $0x79] sm:$0xff]
      %v2543 = vld [vmem:[%s2237 + $0x81] sm:$0xff]
      %v2544 = vld [vmem:[%s2237 + $0x91] sm:$0xff]
      %v2545 = vld [vmem:[%s2237 + $0x99] sm:$0xff]
      %v2546 = vld [vmem:[%s2237 + $0xa9] sm:$0xff]
      %v2547 = vld [vmem:[%s2237 + $0xb1] sm:$0xff]
      %v2548 = vld [vmem:[%s2237 + $0xc1] sm:$0xff]
      %v2549 = vld [vmem:[%s2237 + $0xc9] sm:$0xff]
      %v2550 = vld [vmem:[%s2237 + $0xd9] sm:$0xff]
      %v2551 = vld [vmem:[%s2237 + $0xe1] sm:$0xff]
      %v2552 = vld [vmem:[%s2237 + $0xf1] sm:$0xff]
      %v2553 = vld [vmem:[%s2237 + $0xf9] sm:$0xff]
      %v2554 = vld [vmem:[%s2237 + $0x109] sm:$0xff]
      %v2555 = vld [vmem:[%s2237 + $0x111] sm:$0xff]
      %v2556 = vld [vmem:[%s2237 + $0x121] sm:$0xff]
      %v2557 = vld [vmem:[%s2237 + $0x129] sm:$0xff]
      %v2558 = vld [vmem:[%s2237 + $0x139] sm:$0xff]
      %v2559 = vld [vmem:[%s2237 + $0x141] sm:$0xff]
      %v2560 = vld [vmem:[%s2237 + $0x151] sm:$0xff]
      %v2561 = vld [vmem:[%s2237 + $0x159] sm:$0xff]
      %v2562 = vld [vmem:[%s2237 + $0x169] sm:$0xff]
      %v2563 = vld [vmem:[%s2237 + $0x171] sm:$0xff]
      %v2564 = vpack.c.bf16 %v2533, %v2532
      %v2565 = vpack.c.bf16 %v2535, %v2534
      %v2566 = vpack.c.bf16 %v2537, %v2536
      %v2567 = vpack.c.bf16 %v2539, %v2538
      %v2568 = vpack.c.bf16 %v2541, %v2540
      %v2569 = vpack.c.bf16 %v2543, %v2542
      %v2570 = vpack.c.bf16 %v2545, %v2544
      %v2571 = vpack.c.bf16 %v2547, %v2546
      %v2572 = vpack.c.bf16 %v2549, %v2548
      %v2573 = vpack.c.bf16 %v2551, %v2550
      %v2574 = vpack.c.bf16 %v2553, %v2552
      %v2575 = vpack.c.bf16 %v2555, %v2554
      %v2576 = vpack.c.bf16 %v2557, %v2556
      %v2577 = vpack.c.bf16 %v2559, %v2558
      %v2578 = vpack.c.bf16 %v2561, %v2560
      %v2579 = vpack.c.bf16 %v2563, %v2562
      %s2580 = scalar_lea.vmem %s3, 14
      %v2581 = vld [vmem:[%s2580] sm:$0x3]
      %v2583 = vsel %vm483, %v2564, 0
      %v2586 = vsel %vm483, %v2565, 0
      %v2589 = vsel %vm483, %v2566, 0
      %v2592 = vsel %vm483, %v2567, 0
      %v2595 = vsel %vm483, %v2568, 0
      %v2598 = vsel %vm483, %v2569, 0
      %v2601 = vsel %vm483, %v2570, 0
      %v2604 = vsel %vm483, %v2571, 0
      %v2607 = vsel %vm483, %v2572, 0
      %v2610 = vsel %vm483, %v2573, 0
      %v2613 = vsel %vm483, %v2574, 0
      %v2616 = vsel %vm483, %v2575, 0
      %v2619 = vsel %vm483, %v2576, 0
      %v2622 = vsel %vm483, %v2577, 0
      %v2625 = vsel %vm483, %v2578, 0
      %v2628 = vsel %vm483, %v2579, 0
      %v2631 = vsel %vm684, %v2581, 0
      %2633 = vmatprep.subr.bf16.mxu0 0
      %2634 = vmatpush1.bf16.msra.mxu0 %v2631
      %2635 = vmatprep.subr.bf16.mxu0 0
      %2636 = vmatpush1.bf16.msra.mxu0 0
      %2637 = vmatprep.subr.bf16.mxu0 0
      %2638 = vmatpush1.bf16.msra.mxu0 0
      %2639 = vmatprep.subr.bf16.mxu0 0
      %2640 = vmatpush1.bf16.msra.mxu0 0
      %2641 = vmatprep.subr.bf16.mxu0 0
      %2642 = vmatpush1.bf16.msra.mxu0 0
      %2643 = vmatprep.subr.bf16.mxu0 0
      %2644 = vmatpush1.bf16.msra.mxu0 0
      %2645 = vmatprep.subr.bf16.mxu0 0
      %2646 = vmatpush1.bf16.msra.mxu0 0
      %2647 = vmatprep.subr.bf16.mxu0 0
      %2648 = vmatpush1.bf16.msra.mxu0 0
      %2649 = vmatprep.subr.bf16.mxu0 0
      %2650 = vmatpush1.bf16.msra.mxu0 0
      %2651 = vmatprep.subr.bf16.mxu0 0
      %2652 = vmatpush1.bf16.msra.mxu0 0
      %2653 = vmatprep.subr.bf16.mxu0 0
      %2654 = vmatpush1.bf16.msra.mxu0 0
      %2655 = vmatprep.subr.bf16.mxu0 0
      %2656 = vmatpush1.bf16.msra.mxu0 0
      %2657 = vmatprep.subr.bf16.mxu0 0
      %2658 = vmatpush1.bf16.msra.mxu0 0
      %2659 = vmatprep.subr.bf16.mxu0 0
      %2660 = vmatpush1.bf16.msra.mxu0 0
      %2661 = vmatprep.subr.bf16.mxu0 0
      %2662 = vmatpush1.bf16.msra.mxu0 0
      %2663 = vmatprep.subr.bf16.mxu0 0
      %2664 = vmatpush1.bf16.msra.mxu0 0
      %2665 = vmatprep.mubr.bf16.mxu0 0
      %2666 = vmatmul.mubr.bf16.gmra.mrb[0].mxu0 %v2583
      %v2667 = vpop.f32.mrb[0].mxu0
      %v2668 = vadd.f32 0.0, %v2667
      %v2669 = vpop.f32.mrb[0].mxu0
      %v2670 = vpop.f32.mrb[0].mxu0
      %v2671 = vadd.f32 0.0, %v2670
      %v2672 = vpop.f32.mrb[0].mxu0
      %2673 = vmatprep.mubr.bf16.mxu0 0
      %2674 = vmatmul.mubr.bf16.gmra.mrb[0].mxu0 %v2586
      %v2675 = vpop.f32.mrb[0].mxu0
      %v2676 = vadd.f32 0.0, %v2675
      %v2677 = vpop.f32.mrb[0].mxu0
      %v2678 = vpop.f32.mrb[0].mxu0
      %v2679 = vadd.f32 0.0, %v2678
      %v2680 = vpop.f32.mrb[0].mxu0
      %2681 = vmatprep.mubr.bf16.mxu0 0
      %2682 = vmatmul.mubr.bf16.gmra.mrb[0].mxu0 %v2589
      %v2683 = vpop.f32.mrb[0].mxu0
      %v2684 = vadd.f32 0.0, %v2683
      %v2685 = vpop.f32.mrb[0].mxu0
      %v2686 = vpop.f32.mrb[0].mxu0
      %v2687 = vadd.f32 0.0, %v2686
      %v2688 = vpop.f32.mrb[0].mxu0
      %2689 = vmatprep.mubr.bf16.mxu0 0
      %2690 = vmatmul.mubr.bf16.gmra.mrb[0].mxu0 %v2592
      %v2691 = vpop.f32.mrb[0].mxu0
      %v2692 = vadd.f32 0.0, %v2691
      %v2693 = vpop.f32.mrb[0].mxu0
      %v2694 = vpop.f32.mrb[0].mxu0
      %v2695 = vadd.f32 0.0, %v2694
      %v2696 = vpop.f32.mrb[0].mxu0
      %2697 = vmatprep.mubr.bf16.mxu0 0
      %2698 = vmatmul.mubr.bf16.gmra.mrb[0].mxu0 %v2595
      %v2699 = vpop.f32.mrb[0].mxu0
      %v2700 = vadd.f32 0.0, %v2699
      %v2701 = vpop.f32.mrb[0].mxu0
      %v2702 = vpop.f32.mrb[0].mxu0
      %v2703 = vadd.f32 0.0, %v2702
      %v2704 = vpop.f32.mrb[0].mxu0
      %2705 = vmatprep.mubr.bf16.mxu0 0
      %2706 = vmatmul.mubr.bf16.gmra.mrb[0].mxu0 %v2598
      %v2707 = vpop.f32.mrb[0].mxu0
      %v2708 = vadd.f32 0.0, %v2707
      %v2709 = vpop.f32.mrb[0].mxu0
      %v2710 = vpop.f32.mrb[0].mxu0
      %v2711 = vadd.f32 0.0, %v2710
      %v2712 = vpop.f32.mrb[0].mxu0
      %2713 = vmatprep.mubr.bf16.mxu0 0
      %2714 = vmatmul.mubr.bf16.gmra.mrb[0].mxu0 %v2601
      %v2715 = vpop.f32.mrb[0].mxu0
      %v2716 = vadd.f32 0.0, %v2715
      %v2717 = vpop.f32.mrb[0].mxu0
      %v2718 = vpop.f32.mrb[0].mxu0
      %v2719 = vadd.f32 0.0, %v2718
      %v2720 = vpop.f32.mrb[0].mxu0
      %2721 = vmatprep.mubr.bf16.mxu0 0
      %2722 = vmatmul.mubr.bf16.gmra.mrb[0].mxu0 %v2604
      %v2723 = vpop.f32.mrb[0].mxu0
      %v2724 = vadd.f32 0.0, %v2723
      %v2725 = vpop.f32.mrb[0].mxu0
      %v2726 = vpop.f32.mrb[0].mxu0
      %v2727 = vadd.f32 0.0, %v2726
      %v2728 = vpop.f32.mrb[0].mxu0
      %2729 = vmatprep.mubr.bf16.mxu0 0
      %2730 = vmatmul.mubr.bf16.gmra.mrb[0].mxu0 %v2607
      %v2731 = vpop.f32.mrb[0].mxu0
      %v2732 = vadd.f32 0.0, %v2731
      %v2733 = vpop.f32.mrb[0].mxu0
      %v2734 = vpop.f32.mrb[0].mxu0
      %v2735 = vadd.f32 0.0, %v2734
      %v2736 = vpop.f32.mrb[0].mxu0
      %2737 = vmatprep.mubr.bf16.mxu0 0
      %2738 = vmatmul.mubr.bf16.gmra.mrb[0].mxu0 %v2610
      %v2739 = vpop.f32.mrb[0].mxu0
      %v2740 = vadd.f32 0.0, %v2739
      %v2741 = vpop.f32.mrb[0].mxu0
      %v2742 = vpop.f32.mrb[0].mxu0
      %v2743 = vadd.f32 0.0, %v2742
      %v2744 = vpop.f32.mrb[0].mxu0
      %2745 = vmatprep.mubr.bf16.mxu0 0
      %2746 = vmatmul.mubr.bf16.gmra.mrb[0].mxu0 %v2613
      %v2747 = vpop.f32.mrb[0].mxu0
      %v2748 = vadd.f32 0.0, %v2747
      %v2749 = vpop.f32.mrb[0].mxu0
      %v2750 = vpop.f32.mrb[0].mxu0
      %v2751 = vadd.f32 0.0, %v2750
      %v2752 = vpop.f32.mrb[0].mxu0
      %2753 = vmatprep.mubr.bf16.mxu0 0
      %2754 = vmatmul.mubr.bf16.gmra.mrb[0].mxu0 %v2616
      %v2755 = vpop.f32.mrb[0].mxu0
      %v2756 = vadd.f32 0.0, %v2755
      %v2757 = vpop.f32.mrb[0].mxu0
      %v2758 = vpop.f32.mrb[0].mxu0
      %v2759 = vadd.f32 0.0, %v2758
      %v2760 = vpop.f32.mrb[0].mxu0
      %2761 = vmatprep.mubr.bf16.mxu0 0
      %2762 = vmatmul.mubr.bf16.gmra.mrb[0].mxu0 %v2619
      %v2763 = vpop.f32.mrb[0].mxu0
      %v2764 = vadd.f32 0.0, %v2763
      %v2765 = vpop.f32.mrb[0].mxu0
      %v2766 = vpop.f32.mrb[0].mxu0
      %v2767 = vadd.f32 0.0, %v2766
      %v2768 = vpop.f32.mrb[0].mxu0
      %2769 = vmatprep.mubr.bf16.mxu0 0
      %2770 = vmatmul.mubr.bf16.gmra.mrb[0].mxu0 %v2622
      %v2771 = vpop.f32.mrb[0].mxu0
      %v2772 = vadd.f32 0.0, %v2771
      %v2773 = vpop.f32.mrb[0].mxu0
      %v2774 = vpop.f32.mrb[0].mxu0
      %v2775 = vadd.f32 0.0, %v2774
      %v2776 = vpop.f32.mrb[0].mxu0
      %2777 = vmatprep.mubr.bf16.mxu0 0
      %2778 = vmatmul.mubr.bf16.gmra.mrb[0].mxu0 %v2625
      %v2779 = vpop.f32.mrb[0].mxu0
      %v2780 = vadd.f32 0.0, %v2779
      %v2781 = vpop.f32.mrb[0].mxu0
      %v2782 = vpop.f32.mrb[0].mxu0
      %v2783 = vadd.f32 0.0, %v2782
      %v2784 = vpop.f32.mrb[0].mxu0
      %2785 = vmatprep.mubr.bf16.mxu0 0
      %2786 = vmatmul.mubr.bf16.gmra.mrb[0].mxu0 %v2628
      %v2787 = vpop.f32.mrb[0].mxu0
      %v2788 = vadd.f32 0.0, %v2787
      %v2789 = vpop.f32.mrb[0].mxu0
      %v2790 = vpop.f32.mrb[0].mxu0
      %v2791 = vadd.f32 0.0, %v2790
      %v2792 = vpop.f32.mrb[0].mxu0
      %2793 = vdwg.mxu0
      %v2794 = vadd.f32 %v2500, %v2668
      %v2795 = vadd.f32 %v2501, %v2671
      %v2796 = vadd.f32 %v2502, %v2676
      %v2797 = vadd.f32 %v2503, %v2679
      %v2798 = vadd.f32 %v2504, %v2684
      %v2799 = vadd.f32 %v2505, %v2687
      %v2800 = vadd.f32 %v2506, %v2692
      %v2801 = vadd.f32 %v2507, %v2695
      %v2802 = vadd.f32 %v2508, %v2700
      %v2803 = vadd.f32 %v2509, %v2703
      %v2804 = vadd.f32 %v2510, %v2708
      %v2805 = vadd.f32 %v2511, %v2711
      %v2806 = vadd.f32 %v2512, %v2716
      %v2807 = vadd.f32 %v2513, %v2719
      %v2808 = vadd.f32 %v2514, %v2724
      %v2809 = vadd.f32 %v2515, %v2727
      %v2810 = vadd.f32 %v2516, %v2732
      %v2811 = vadd.f32 %v2517, %v2735
      %v2812 = vadd.f32 %v2518, %v2740
      %v2813 = vadd.f32 %v2519, %v2743
      %v2814 = vadd.f32 %v2520, %v2748
      %v2815 = vadd.f32 %v2521, %v2751
      %v2816 = vadd.f32 %v2522, %v2756
      %v2817 = vadd.f32 %v2523, %v2759
      %v2818 = vadd.f32 %v2524, %v2764
      %v2819 = vadd.f32 %v2525, %v2767
      %v2820 = vadd.f32 %v2526, %v2772
      %v2821 = vadd.f32 %v2527, %v2775
      %v2822 = vadd.f32 %v2528, %v2780
      %v2823 = vadd.f32 %v2529, %v2783
      %v2824 = vadd.f32 %v2530, %v2788
      %v2825 = vadd.f32 %v2531, %v2791
      %v2826 = vld [vmem:[%s2237 + $0x2] sm:$0xff]
      %v2827 = vld [vmem:[%s2237 + $0xa] sm:$0xff]
      %v2828 = vld [vmem:[%s2237 + $0x1a] sm:$0xff]
      %v2829 = vld [vmem:[%s2237 + $0x22] sm:$0xff]
      %v2830 = vld [vmem:[%s2237 + $0x32] sm:$0xff]
      %v2831 = vld [vmem:[%s2237 + $0x3a] sm:$0xff]
      %v2832 = vld [vmem:[%s2237 + $0x4a] sm:$0xff]
      %v2833 = vld [vmem:[%s2237 + $0x52] sm:$0xff]
      %v2834 = vld [vmem:[%s2237 + $0x62] sm:$0xff]
      %v2835 = vld [vmem:[%s2237 + $0x6a] sm:$0xff]
      %v2836 = vld [vmem:[%s2237 + $0x7a] sm:$0xff]
      %v2837 = vld [vmem:[%s2237 + $0x82] sm:$0xff]
      %v2838 = vld [vmem:[%s2237 + $0x92] sm:$0xff]
      %v2839 = vld [vmem:[%s2237 + $0x9a] sm:$0xff]
      %v2840 = vld [vmem:[%s2237 + $0xaa] sm:$0xff]
      %v2841 = vld [vmem:[%s2237 + $0xb2] sm:$0xff]
      %v2842 = vld [vmem:[%s2237 + $0xc2] sm:$0xff]
      %v2843 = vld [vmem:[%s2237 + $0xca] sm:$0xff]
      %v2844 = vld [vmem:[%s2237 + $0xda] sm:$0xff]
      %v2845 = vld [vmem:[%s2237 + $0xe2] sm:$0xff]
      %v2846 = vld [vmem:[%s2237 + $0xf2] sm:$0xff]
      %v2847 = vld [vmem:[%s2237 + $0xfa] sm:$0xff]
      %v2848 = vld [vmem:[%s2237 + $0x10a] sm:$0xff]
      %v2849 = vld [vmem:[%s2237 + $0x112] sm:$0xff]
      %v2850 = vld [vmem:[%s2237 + $0x122] sm:$0xff]
      %v2851 = vld [vmem:[%s2237 + $0x12a] sm:$0xff]
      %v2852 = vld [vmem:[%s2237 + $0x13a] sm:$0xff]
      %v2853 = vld [vmem:[%s2237 + $0x142] sm:$0xff]
      %v2854 = vld [vmem:[%s2237 + $0x152] sm:$0xff]
      %v2855 = vld [vmem:[%s2237 + $0x15a] sm:$0xff]
      %v2856 = vld [vmem:[%s2237 + $0x16a] sm:$0xff]
      %v2857 = vld [vmem:[%s2237 + $0x172] sm:$0xff]
      %v2858 = vpack.c.bf16 %v2827, %v2826
      %v2859 = vpack.c.bf16 %v2829, %v2828
      %v2860 = vpack.c.bf16 %v2831, %v2830
      %v2861 = vpack.c.bf16 %v2833, %v2832
      %v2862 = vpack.c.bf16 %v2835, %v2834
      %v2863 = vpack.c.bf16 %v2837, %v2836
      %v2864 = vpack.c.bf16 %v2839, %v2838
      %v2865 = vpack.c.bf16 %v2841, %v2840
      %v2866 = vpack.c.bf16 %v2843, %v2842
      %v2867 = vpack.c.bf16 %v2845, %v2844
      %v2868 = vpack.c.bf16 %v2847, %v2846
      %v2869 = vpack.c.bf16 %v2849, %v2848
      %v2870 = vpack.c.bf16 %v2851, %v2850
      %v2871 = vpack.c.bf16 %v2853, %v2852
      %v2872 = vpack.c.bf16 %v2855, %v2854
      %v2873 = vpack.c.bf16 %v2857, %v2856
      %s2874 = scalar_lea.vmem %s3, 16
      %v2875 = vld [vmem:[%s2874] sm:$0x3]
      %v2877 = vsel %vm483, %v2858, 0
      %v2880 = vsel %vm483, %v2859, 0
      %v2883 = vsel %vm483, %v2860, 0
      %v2886 = vsel %vm483, %v2861, 0
      %v2889 = vsel %vm483, %v2862, 0
      %v2892 = vsel %vm483, %v2863, 0
      %v2895 = vsel %vm483, %v2864, 0
      %v2898 = vsel %vm483, %v2865, 0
      %v2901 = vsel %vm483, %v2866, 0
      %v2904 = vsel %vm483, %v2867, 0
      %v2907 = vsel %vm483, %v2868, 0
      %v2910 = vsel %vm483, %v2869, 0
      %v2913 = vsel %vm483, %v2870, 0
      %v2916 = vsel %vm483, %v2871, 0
      %v2919 = vsel %vm483, %v2872, 0
      %v2922 = vsel %vm483, %v2873, 0
      %v2925 = vsel %vm684, %v2875, 0
      %2927 = vmatprep.subr.bf16.mxu0 0
      %2928 = vmatpush1.bf16.msra.mxu0 %v2925
      %2929 = vmatprep.subr.bf16.mxu0 0
      %2930 = vmatpush1.bf16.msra.mxu0 0
      %2931 = vmatprep.subr.bf16.mxu0 0
      %2932 = vmatpush1.bf16.msra.mxu0 0
      %2933 = vmatprep.subr.bf16.mxu0 0
      %2934 = vmatpush1.bf16.msra.mxu0 0
      %2935 = vmatprep.subr.bf16.mxu0 0
      %2936 = vmatpush1.bf16.msra.mxu0 0
      %2937 = vmatprep.subr.bf16.mxu0 0
      %2938 = vmatpush1.bf16.msra.mxu0 0
      %2939 = vmatprep.subr.bf16.mxu0 0
      %2940 = vmatpush1.bf16.msra.mxu0 0
      %2941 = vmatprep.subr.bf16.mxu0 0
      %2942 = vmatpush1.bf16.msra.mxu0 0
      %2943 = vmatprep.subr.bf16.mxu0 0
      %2944 = vmatpush1.bf16.msra.mxu0 0
      %2945 = vmatprep.subr.bf16.mxu0 0
      %2946 = vmatpush1.bf16.msra.mxu0 0
      %2947 = vmatprep.subr.bf16.mxu0 0
      %2948 = vmatpush1.bf16.msra.mxu0 0
      %2949 = vmatprep.subr.bf16.mxu0 0
      %2950 = vmatpush1.bf16.msra.mxu0 0
      %2951 = vmatprep.subr.bf16.mxu0 0
      %2952 = vmatpush1.bf16.msra.mxu0 0
      %2953 = vmatprep.subr.bf16.mxu0 0
      %2954 = vmatpush1.bf16.msra.mxu0 0
      %2955 = vmatprep.subr.bf16.mxu0 0
      %2956 = vmatpush1.bf16.msra.mxu0 0
      %2957 = vmatprep.subr.bf16.mxu0 0
      %2958 = vmatpush1.bf16.msra.mxu0 0
      %2959 = vmatprep.mubr.bf16.mxu0 0
      %2960 = vmatmul.mubr.bf16.gmra.mrb[0].mxu0 %v2877
      %v2961 = vpop.f32.mrb[0].mxu0
      %v2962 = vadd.f32 0.0, %v2961
      %v2963 = vpop.f32.mrb[0].mxu0
      %v2964 = vpop.f32.mrb[0].mxu0
      %v2965 = vadd.f32 0.0, %v2964
      %v2966 = vpop.f32.mrb[0].mxu0
      %2967 = vmatprep.mubr.bf16.mxu0 0
      %2968 = vmatmul.mubr.bf16.gmra.mrb[0].mxu0 %v2880
      %v2969 = vpop.f32.mrb[0].mxu0
      %v2970 = vadd.f32 0.0, %v2969
      %v2971 = vpop.f32.mrb[0].mxu0
      %v2972 = vpop.f32.mrb[0].mxu0
      %v2973 = vadd.f32 0.0, %v2972
      %v2974 = vpop.f32.mrb[0].mxu0
      %2975 = vmatprep.mubr.bf16.mxu0 0
      %2976 = vmatmul.mubr.bf16.gmra.mrb[0].mxu0 %v2883
      %v2977 = vpop.f32.mrb[0].mxu0
      %v2978 = vadd.f32 0.0, %v2977
      %v2979 = vpop.f32.mrb[0].mxu0
      %v2980 = vpop.f32.mrb[0].mxu0
      %v2981 = vadd.f32 0.0, %v2980
      %v2982 = vpop.f32.mrb[0].mxu0
      %2983 = vmatprep.mubr.bf16.mxu0 0
      %2984 = vmatmul.mubr.bf16.gmra.mrb[0].mxu0 %v2886
      %v2985 = vpop.f32.mrb[0].mxu0
      %v2986 = vadd.f32 0.0, %v2985
      %v2987 = vpop.f32.mrb[0].mxu0
      %v2988 = vpop.f32.mrb[0].mxu0
      %v2989 = vadd.f32 0.0, %v2988
      %v2990 = vpop.f32.mrb[0].mxu0
      %2991 = vmatprep.mubr.bf16.mxu0 0
      %2992 = vmatmul.mubr.bf16.gmra.mrb[0].mxu0 %v2889
      %v2993 = vpop.f32.mrb[0].mxu0
      %v2994 = vadd.f32 0.0, %v2993
      %v2995 = vpop.f32.mrb[0].mxu0
      %v2996 = vpop.f32.mrb[0].mxu0
      %v2997 = vadd.f32 0.0, %v2996
      %v2998 = vpop.f32.mrb[0].mxu0
      %2999 = vmatprep.mubr.bf16.mxu0 0
      %3000 = vmatmul.mubr.bf16.gmra.mrb[0].mxu0 %v2892
      %v3001 = vpop.f32.mrb[0].mxu0
      %v3002 = vadd.f32 0.0, %v3001
      %v3003 = vpop.f32.mrb[0].mxu0
      %v3004 = vpop.f32.mrb[0].mxu0
      %v3005 = vadd.f32 0.0, %v3004
      %v3006 = vpop.f32.mrb[0].mxu0
      %3007 = vmatprep.mubr.bf16.mxu0 0
      %3008 = vmatmul.mubr.bf16.gmra.mrb[0].mxu0 %v2895
      %v3009 = vpop.f32.mrb[0].mxu0
      %v3010 = vadd.f32 0.0, %v3009
      %v3011 = vpop.f32.mrb[0].mxu0
      %v3012 = vpop.f32.mrb[0].mxu0
      %v3013 = vadd.f32 0.0, %v3012
      %v3014 = vpop.f32.mrb[0].mxu0
      %3015 = vmatprep.mubr.bf16.mxu0 0
      %3016 = vmatmul.mubr.bf16.gmra.mrb[0].mxu0 %v2898
      %v3017 = vpop.f32.mrb[0].mxu0
      %v3018 = vadd.f32 0.0, %v3017
      %v3019 = vpop.f32.mrb[0].mxu0
      %v3020 = vpop.f32.mrb[0].mxu0
      %v3021 = vadd.f32 0.0, %v3020
      %v3022 = vpop.f32.mrb[0].mxu0
      %3023 = vmatprep.mubr.bf16.mxu0 0
      %3024 = vmatmul.mubr.bf16.gmra.mrb[0].mxu0 %v2901
      %v3025 = vpop.f32.mrb[0].mxu0
      %v3026 = vadd.f32 0.0, %v3025
      %v3027 = vpop.f32.mrb[0].mxu0
      %v3028 = vpop.f32.mrb[0].mxu0
      %v3029 = vadd.f32 0.0, %v3028
      %v3030 = vpop.f32.mrb[0].mxu0
      %3031 = vmatprep.mubr.bf16.mxu0 0
      %3032 = vmatmul.mubr.bf16.gmra.mrb[0].mxu0 %v2904
      %v3033 = vpop.f32.mrb[0].mxu0
      %v3034 = vadd.f32 0.0, %v3033
      %v3035 = vpop.f32.mrb[0].mxu0
      %v3036 = vpop.f32.mrb[0].mxu0
      %v3037 = vadd.f32 0.0, %v3036
      %v3038 = vpop.f32.mrb[0].mxu0
      %3039 = vmatprep.mubr.bf16.mxu0 0
      %3040 = vmatmul.mubr.bf16.gmra.mrb[0].mxu0 %v2907
      %v3041 = vpop.f32.mrb[0].mxu0
      %v3042 = vadd.f32 0.0, %v3041
      %v3043 = vpop.f32.mrb[0].mxu0
      %v3044 = vpop.f32.mrb[0].mxu0
      %v3045 = vadd.f32 0.0, %v3044
      %v3046 = vpop.f32.mrb[0].mxu0
      %3047 = vmatprep.mubr.bf16.mxu0 0
      %3048 = vmatmul.mubr.bf16.gmra.mrb[0].mxu0 %v2910
      %v3049 = vpop.f32.mrb[0].mxu0
      %v3050 = vadd.f32 0.0, %v3049
      %v3051 = vpop.f32.mrb[0].mxu0
      %v3052 = vpop.f32.mrb[0].mxu0
      %v3053 = vadd.f32 0.0, %v3052
      %v3054 = vpop.f32.mrb[0].mxu0
      %3055 = vmatprep.mubr.bf16.mxu0 0
      %3056 = vmatmul.mubr.bf16.gmra.mrb[0].mxu0 %v2913
      %v3057 = vpop.f32.mrb[0].mxu0
      %v3058 = vadd.f32 0.0, %v3057
      %v3059 = vpop.f32.mrb[0].mxu0
      %v3060 = vpop.f32.mrb[0].mxu0
      %v3061 = vadd.f32 0.0, %v3060
      %v3062 = vpop.f32.mrb[0].mxu0
      %3063 = vmatprep.mubr.bf16.mxu0 0
      %3064 = vmatmul.mubr.bf16.gmra.mrb[0].mxu0 %v2916
      %v3065 = vpop.f32.mrb[0].mxu0
      %v3066 = vadd.f32 0.0, %v3065
      %v3067 = vpop.f32.mrb[0].mxu0
      %v3068 = vpop.f32.mrb[0].mxu0
      %v3069 = vadd.f32 0.0, %v3068
      %v3070 = vpop.f32.mrb[0].mxu0
      %3071 = vmatprep.mubr.bf16.mxu0 0
      %3072 = vmatmul.mubr.bf16.gmra.mrb[0].mxu0 %v2919
      %v3073 = vpop.f32.mrb[0].mxu0
      %v3074 = vadd.f32 0.0, %v3073
      %v3075 = vpop.f32.mrb[0].mxu0
      %v3076 = vpop.f32.mrb[0].mxu0
      %v3077 = vadd.f32 0.0, %v3076
      %v3078 = vpop.f32.mrb[0].mxu0
      %3079 = vmatprep.mubr.bf16.mxu0 0
      %3080 = vmatmul.mubr.bf16.gmra.mrb[0].mxu0 %v2922
      %v3081 = vpop.f32.mrb[0].mxu0
      %v3082 = vadd.f32 0.0, %v3081
      %v3083 = vpop.f32.mrb[0].mxu0
      %v3084 = vpop.f32.mrb[0].mxu0
      %v3085 = vadd.f32 0.0, %v3084
      %v3086 = vpop.f32.mrb[0].mxu0
      %3087 = vdwg.mxu0
      %v3088 = vadd.f32 %v2794, %v2962
      %v3089 = vadd.f32 %v2795, %v2965
      %v3090 = vadd.f32 %v2796, %v2970
      %v3091 = vadd.f32 %v2797, %v2973
      %v3092 = vadd.f32 %v2798, %v2978
      %v3093 = vadd.f32 %v2799, %v2981
      %v3094 = vadd.f32 %v2800, %v2986
      %v3095 = vadd.f32 %v2801, %v2989
      %v3096 = vadd.f32 %v2802, %v2994
      %v3097 = vadd.f32 %v2803, %v2997
      %v3098 = vadd.f32 %v2804, %v3002
      %v3099 = vadd.f32 %v2805, %v3005
      %v3100 = vadd.f32 %v2806, %v3010
      %v3101 = vadd.f32 %v2807, %v3013
      %v3102 = vadd.f32 %v2808, %v3018
      %v3103 = vadd.f32 %v2809, %v3021
      %v3104 = vadd.f32 %v2810, %v3026
      %v3105 = vadd.f32 %v2811, %v3029
      %v3106 = vadd.f32 %v2812, %v3034
      %v3107 = vadd.f32 %v2813, %v3037
      %v3108 = vadd.f32 %v2814, %v3042
      %v3109 = vadd.f32 %v2815, %v3045
      %v3110 = vadd.f32 %v2816, %v3050
      %v3111 = vadd.f32 %v2817, %v3053
      %v3112 = vadd.f32 %v2818, %v3058
      %v3113 = vadd.f32 %v2819, %v3061
      %v3114 = vadd.f32 %v2820, %v3066
      %v3115 = vadd.f32 %v2821, %v3069
      %v3116 = vadd.f32 %v2822, %v3074
      %v3117 = vadd.f32 %v2823, %v3077
      %v3118 = vadd.f32 %v2824, %v3082
      %v3119 = vadd.f32 %v2825, %v3085
      %v3120 = vpack.c.bf16 %v3089, %v3088
      %v3121 = vpack.c.bf16 %v3091, %v3090
      %v3122 = vpack.c.bf16 %v3093, %v3092
      %v3123 = vpack.c.bf16 %v3095, %v3094
      %v3124 = vpack.c.bf16 %v3097, %v3096
      %v3125 = vpack.c.bf16 %v3099, %v3098
      %v3126 = vpack.c.bf16 %v3101, %v3100
      %v3127 = vpack.c.bf16 %v3103, %v3102
      %v3128 = vpack.c.bf16 %v3105, %v3104
      %v3129 = vpack.c.bf16 %v3107, %v3106
      %v3130 = vpack.c.bf16 %v3109, %v3108
      %v3131 = vpack.c.bf16 %v3111, %v3110
      %v3132 = vpack.c.bf16 %v3113, %v3112
      %v3133 = vpack.c.bf16 %v3115, %v3114
      %v3134 = vpack.c.bf16 %v3117, %v3116
      %v3135 = vpack.c.bf16 %v3119, %v3118
      %v3152 = vunpack.c.l.b16 %v3120
      %v3153 = vunpack.c.h.b16 %v3120
      %v3154 = vunpack.c.l.b16 %v3121
      %v3155 = vunpack.c.h.b16 %v3121
      %v3156 = vunpack.c.l.b16 %v3122
      %v3157 = vunpack.c.h.b16 %v3122
      %v3158 = vunpack.c.l.b16 %v3123
      %v3159 = vunpack.c.h.b16 %v3123
      %v3160 = vunpack.c.l.b16 %v3124
      %v3161 = vunpack.c.h.b16 %v3124
      %v3162 = vunpack.c.l.b16 %v3125
      %v3163 = vunpack.c.h.b16 %v3125
      %v3164 = vunpack.c.l.b16 %v3126
      %v3165 = vunpack.c.h.b16 %v3126
      %v3166 = vunpack.c.l.b16 %v3127
      %v3167 = vunpack.c.h.b16 %v3127
      %v3168 = vunpack.c.l.b16 %v3128
      %v3169 = vunpack.c.h.b16 %v3128
      %v3170 = vunpack.c.l.b16 %v3129
      %v3171 = vunpack.c.h.b16 %v3129
      %v3172 = vunpack.c.l.b16 %v3130
      %v3173 = vunpack.c.h.b16 %v3130
      %v3174 = vunpack.c.l.b16 %v3131
      %v3175 = vunpack.c.h.b16 %v3131
      %v3176 = vunpack.c.l.b16 %v3132
      %v3177 = vunpack.c.h.b16 %v3132
      %v3178 = vunpack.c.l.b16 %v3133
      %v3179 = vunpack.c.h.b16 %v3133
      %v3180 = vunpack.c.l.b16 %v3134
      %v3181 = vunpack.c.h.b16 %v3134
      %v3182 = vunpack.c.l.b16 %v3135
      %v3183 = vunpack.c.h.b16 %v3135
      %v3184 = vpack.c.b16 %v3152, %v3152
      %v3185 = vpack.c.b16 %v3153, %v3153
      %v3186 = vpack.c.b16 %v3154, %v3154
      %v3187 = vpack.c.b16 %v3155, %v3155
      %v3188 = vpack.c.b16 %v3156, %v3156
      %v3189 = vpack.c.b16 %v3157, %v3157
      %v3190 = vpack.c.b16 %v3158, %v3158
      %v3191 = vpack.c.b16 %v3159, %v3159
      %v3192 = vpack.c.b16 %v3160, %v3160
      %v3193 = vpack.c.b16 %v3161, %v3161
      %v3194 = vpack.c.b16 %v3162, %v3162
      %v3195 = vpack.c.b16 %v3163, %v3163
      %v3196 = vpack.c.b16 %v3164, %v3164
      %v3197 = vpack.c.b16 %v3165, %v3165
      %v3198 = vpack.c.b16 %v3166, %v3166
      %v3199 = vpack.c.b16 %v3167, %v3167
      %v3200 = vpack.c.b16 %v3168, %v3168
      %v3201 = vpack.c.b16 %v3169, %v3169
      %v3202 = vpack.c.b16 %v3170, %v3170
      %v3203 = vpack.c.b16 %v3171, %v3171
      %v3204 = vpack.c.b16 %v3172, %v3172
      %v3205 = vpack.c.b16 %v3173, %v3173
      %v3206 = vpack.c.b16 %v3174, %v3174
      %v3207 = vpack.c.b16 %v3175, %v3175
      %v3208 = vpack.c.b16 %v3176, %v3176
      %v3209 = vpack.c.b16 %v3177, %v3177
      %v3210 = vpack.c.b16 %v3178, %v3178
      %v3211 = vpack.c.b16 %v3179, %v3179
      %v3212 = vpack.c.b16 %v3180, %v3180
      %v3213 = vpack.c.b16 %v3181, %v3181
      %v3214 = vpack.c.b16 %v3182, %v3182
      %v3215 = vpack.c.b16 %v3183, %v3183
      %vm3248 = vcmask 60416
      %3249 = vst.msk [vmem:[%s403] sm:$0xf] %vm3248, %v3184
      %3250 = vst.msk [vmem:[%s403 + $0x4] sm:$0xf] %vm3248, %v3185
      %3251 = vst.msk [vmem:[%s403 + $0x8] sm:$0xf] %vm3248, %v3186
      %3252 = vst.msk [vmem:[%s403 + $0xc] sm:$0xf] %vm3248, %v3187
      %3253 = vst.msk [vmem:[%s403 + $0x10] sm:$0xf] %vm3248, %v3188
      %3254 = vst.msk [vmem:[%s403 + $0x14] sm:$0xf] %vm3248, %v3189
      %3255 = vst.msk [vmem:[%s403 + $0x18] sm:$0xf] %vm3248, %v3190
      %3256 = vst.msk [vmem:[%s403 + $0x1c] sm:$0xf] %vm3248, %v3191
      %3257 = vst.msk [vmem:[%s403 + $0x20] sm:$0xf] %vm3248, %v3192
      %3258 = vst.msk [vmem:[%s403 + $0x24] sm:$0xf] %vm3248, %v3193
      %3259 = vst.msk [vmem:[%s403 + $0x28] sm:$0xf] %vm3248, %v3194
      %3260 = vst.msk [vmem:[%s403 + $0x2c] sm:$0xf] %vm3248, %v3195
      %3261 = vst.msk [vmem:[%s403 + $0x30] sm:$0xf] %vm3248, %v3196
      %3262 = vst.msk [vmem:[%s403 + $0x34] sm:$0xf] %vm3248, %v3197
      %3263 = vst.msk [vmem:[%s403 + $0x38] sm:$0xf] %vm3248, %v3198
      %3264 = vst.msk [vmem:[%s403 + $0x3c] sm:$0xf] %vm3248, %v3199
      %3265 = vst.msk [vmem:[%s403 + $0x40] sm:$0xf] %vm3248, %v3200
      %3266 = vst.msk [vmem:[%s403 + $0x44] sm:$0xf] %vm3248, %v3201
      %3267 = vst.msk [vmem:[%s403 + $0x48] sm:$0xf] %vm3248, %v3202
      %3268 = vst.msk [vmem:[%s403 + $0x4c] sm:$0xf] %vm3248, %v3203
      %3269 = vst.msk [vmem:[%s403 + $0x50] sm:$0xf] %vm3248, %v3204
      %3270 = vst.msk [vmem:[%s403 + $0x54] sm:$0xf] %vm3248, %v3205
      %3271 = vst.msk [vmem:[%s403 + $0x58] sm:$0xf] %vm3248, %v3206
      %3272 = vst.msk [vmem:[%s403 + $0x5c] sm:$0xf] %vm3248, %v3207
      %3273 = vst.msk [vmem:[%s403 + $0x60] sm:$0xf] %vm3248, %v3208
      %3274 = vst.msk [vmem:[%s403 + $0x64] sm:$0xf] %vm3248, %v3209
      %3275 = vst.msk [vmem:[%s403 + $0x68] sm:$0xf] %vm3248, %v3210
      %3276 = vst.msk [vmem:[%s403 + $0x6c] sm:$0xf] %vm3248, %v3211
      %3277 = vst.msk [vmem:[%s403 + $0x70] sm:$0xf] %vm3248, %v3212
      %3278 = vst.msk [vmem:[%s403 + $0x74] sm:$0xf] %vm3248, %v3213
      %3279 = vst.msk [vmem:[%s403 + $0x78] sm:$0xf] %vm3248, %v3214
      %3280 = vst.msk [vmem:[%s403 + $0x7c] sm:$0xf] %vm3248, %v3215
      %vm3281 = vcmask 64512
      %v3282 = vsel %vm3281, %v3088, 0.0
      %v3283 = vsel %vm3281, %v3089, 0.0
      %v3284 = vadd.f32 %v3282, %v3283
      %v3285 = vsel %vm3281, %v3090, 0.0
      %v3286 = vadd.f32 %v3284, %v3285
      %v3287 = vsel %vm3281, %v3091, 0.0
      %v3288 = vadd.f32 %v3286, %v3287
      %v3289 = vsel %vm3281, %v3092, 0.0
      %v3290 = vadd.f32 %v3288, %v3289
      %v3291 = vsel %vm3281, %v3093, 0.0
      %v3292 = vadd.f32 %v3290, %v3291
      %v3293 = vsel %vm3281, %v3094, 0.0
      %v3294 = vadd.f32 %v3292, %v3293
      %v3295 = vsel %vm3281, %v3095, 0.0
      %v3296 = vadd.f32 %v3294, %v3295
      %v3297 = vsel %vm3281, %v3096, 0.0
      %v3298 = vadd.f32 %v3296, %v3297
      %v3299 = vsel %vm3281, %v3097, 0.0
      %v3300 = vadd.f32 %v3298, %v3299
      %v3301 = vsel %vm3281, %v3098, 0.0
      %v3302 = vadd.f32 %v3300, %v3301
      %v3303 = vsel %vm3281, %v3099, 0.0
      %v3304 = vadd.f32 %v3302, %v3303
      %v3305 = vsel %vm3281, %v3100, 0.0
      %v3306 = vadd.f32 %v3304, %v3305
      %v3307 = vsel %vm3281, %v3101, 0.0
      %v3308 = vadd.f32 %v3306, %v3307
      %v3309 = vsel %vm3281, %v3102, 0.0
      %v3310 = vadd.f32 %v3308, %v3309
      %v3311 = vsel %vm3281, %v3103, 0.0
      %v3312 = vadd.f32 %v3310, %v3311
      %v3313 = vsel %vm3281, %v3104, 0.0
      %v3314 = vadd.f32 %v3312, %v3313
      %v3315 = vsel %vm3281, %v3105, 0.0
      %v3316 = vadd.f32 %v3314, %v3315
      %v3317 = vsel %vm3281, %v3106, 0.0
      %v3318 = vadd.f32 %v3316, %v3317
      %v3319 = vsel %vm3281, %v3107, 0.0
      %v3320 = vadd.f32 %v3318, %v3319
      %v3321 = vsel %vm3281, %v3108, 0.0
      %v3322 = vadd.f32 %v3320, %v3321
      %v3323 = vsel %vm3281, %v3109, 0.0
      %v3324 = vadd.f32 %v3322, %v3323
      %v3325 = vsel %vm3281, %v3110, 0.0
      %v3326 = vadd.f32 %v3324, %v3325
      %v3327 = vsel %vm3281, %v3111, 0.0
      %v3328 = vadd.f32 %v3326, %v3327
      %v3329 = vsel %vm3281, %v3112, 0.0
      %v3330 = vadd.f32 %v3328, %v3329
      %v3331 = vsel %vm3281, %v3113, 0.0
      %v3332 = vadd.f32 %v3330, %v3331
      %v3333 = vsel %vm3281, %v3114, 0.0
      %v3334 = vadd.f32 %v3332, %v3333
      %v3335 = vsel %vm3281, %v3115, 0.0
      %v3336 = vadd.f32 %v3334, %v3335
      %v3337 = vsel %vm3281, %v3116, 0.0
      %v3338 = vadd.f32 %v3336, %v3337
      %v3339 = vsel %vm3281, %v3117, 0.0
      %v3340 = vadd.f32 %v3338, %v3339
      %v3341 = vsel %vm3281, %v3118, 0.0
      %v3342 = vadd.f32 %v3340, %v3341
      %v3343 = vsel %vm3281, %v3119, 0.0
      %v3344 = vadd.f32 %v3342, %v3343
      %v3345 = vrot.slane %v3344, 4
      %v3346 = vadd.f32 %v3344, %v3345
      %v3347 = vrot.slane %v3346, 2
      %v3348 = vadd.f32 %v3346, %v3347
      %v3349 = vrot.slane %v3348, 1
      %v3350 = vadd.f32 %v3348, %v3349
      %vm3351 = vcmask 57344
      %3352 = vst.msk [vmem:[%s411] sm:$0x1] %vm3351, %v3350
      %v3353 = vmul.f32 %v3088, %v3088
      %v3354 = vmul.f32 %v3089, %v3089
      %v3355 = vmul.f32 %v3090, %v3090
      %v3356 = vmul.f32 %v3091, %v3091
      %v3357 = vmul.f32 %v3092, %v3092
      %v3358 = vmul.f32 %v3093, %v3093
      %v3359 = vmul.f32 %v3094, %v3094
      %v3360 = vmul.f32 %v3095, %v3095
      %v3361 = vmul.f32 %v3096, %v3096
      %v3362 = vmul.f32 %v3097, %v3097
      %v3363 = vmul.f32 %v3098, %v3098
      %v3364 = vmul.f32 %v3099, %v3099
      %v3365 = vmul.f32 %v3100, %v3100
      %v3366 = vmul.f32 %v3101, %v3101
      %v3367 = vmul.f32 %v3102, %v3102
      %v3368 = vmul.f32 %v3103, %v3103
      %v3369 = vmul.f32 %v3104, %v3104
      %v3370 = vmul.f32 %v3105, %v3105
      %v3371 = vmul.f32 %v3106, %v3106
      %v3372 = vmul.f32 %v3107, %v3107
      %v3373 = vmul.f32 %v3108, %v3108
      %v3374 = vmul.f32 %v3109, %v3109
      %v3375 = vmul.f32 %v3110, %v3110
      %v3376 = vmul.f32 %v3111, %v3111
      %v3377 = vmul.f32 %v3112, %v3112
      %v3378 = vmul.f32 %v3113, %v3113
      %v3379 = vmul.f32 %v3114, %v3114
      %v3380 = vmul.f32 %v3115, %v3115
      %v3381 = vmul.f32 %v3116, %v3116
      %v3382 = vmul.f32 %v3117, %v3117
      %v3383 = vmul.f32 %v3118, %v3118
      %v3384 = vmul.f32 %v3119, %v3119
      %v3385 = vsel %vm3281, %v3353, 0.0
      %v3386 = vsel %vm3281, %v3354, 0.0
      %v3387 = vadd.f32 %v3385, %v3386
      %v3388 = vsel %vm3281, %v3355, 0.0
      %v3389 = vadd.f32 %v3387, %v3388
      %v3390 = vsel %vm3281, %v3356, 0.0
      %v3391 = vadd.f32 %v3389, %v3390
      %v3392 = vsel %vm3281, %v3357, 0.0
      %v3393 = vadd.f32 %v3391, %v3392
      %v3394 = vsel %vm3281, %v3358, 0.0
      %v3395 = vadd.f32 %v3393, %v3394
      %v3396 = vsel %vm3281, %v3359, 0.0
      %v3397 = vadd.f32 %v3395, %v3396
      %v3398 = vsel %vm3281, %v3360, 0.0
      %v3399 = vadd.f32 %v3397, %v3398
      %v3400 = vsel %vm3281, %v3361, 0.0
      %v3401 = vadd.f32 %v3399, %v3400
      %v3402 = vsel %vm3281, %v3362, 0.0
      %v3403 = vadd.f32 %v3401, %v3402
      %v3404 = vsel %vm3281, %v3363, 0.0
      %v3405 = vadd.f32 %v3403, %v3404
      %v3406 = vsel %vm3281, %v3364, 0.0
      %v3407 = vadd.f32 %v3405, %v3406
      %v3408 = vsel %vm3281, %v3365, 0.0
      %v3409 = vadd.f32 %v3407, %v3408
      %v3410 = vsel %vm3281, %v3366, 0.0
      %v3411 = vadd.f32 %v3409, %v3410
      %v3412 = vsel %vm3281, %v3367, 0.0
      %v3413 = vadd.f32 %v3411, %v3412
      %v3414 = vsel %vm3281, %v3368, 0.0
      %v3415 = vadd.f32 %v3413, %v3414
      %v3416 = vsel %vm3281, %v3369, 0.0
      %v3417 = vadd.f32 %v3415, %v3416
      %v3418 = vsel %vm3281, %v3370, 0.0
      %v3419 = vadd.f32 %v3417, %v3418
      %v3420 = vsel %vm3281, %v3371, 0.0
      %v3421 = vadd.f32 %v3419, %v3420
      %v3422 = vsel %vm3281, %v3372, 0.0
      %v3423 = vadd.f32 %v3421, %v3422
      %v3424 = vsel %vm3281, %v3373, 0.0
      %v3425 = vadd.f32 %v3423, %v3424
      %v3426 = vsel %vm3281, %v3374, 0.0
      %v3427 = vadd.f32 %v3425, %v3426
      %v3428 = vsel %vm3281, %v3375, 0.0
      %v3429 = vadd.f32 %v3427, %v3428
      %v3430 = vsel %vm3281, %v3376, 0.0
      %v3431 = vadd.f32 %v3429, %v3430
      %v3432 = vsel %vm3281, %v3377, 0.0
      %v3433 = vadd.f32 %v3431, %v3432
      %v3434 = vsel %vm3281, %v3378, 0.0
      %v3435 = vadd.f32 %v3433, %v3434
      %v3436 = vsel %vm3281, %v3379, 0.0
      %v3437 = vadd.f32 %v3435, %v3436
      %v3438 = vsel %vm3281, %v3380, 0.0
      %v3439 = vadd.f32 %v3437, %v3438
      %v3440 = vsel %vm3281, %v3381, 0.0
      %v3441 = vadd.f32 %v3439, %v3440
      %v3442 = vsel %vm3281, %v3382, 0.0
      %v3443 = vadd.f32 %v3441, %v3442
      %v3444 = vsel %vm3281, %v3383, 0.0
      %v3445 = vadd.f32 %v3443, %v3444
      %v3446 = vsel %vm3281, %v3384, 0.0
      %v3447 = vadd.f32 %v3445, %v3446
      %v3448 = vrot.slane %v3447, 4
      %v3449 = vadd.f32 %v3447, %v3448
      %v3450 = vrot.slane %v3449, 2
      %v3451 = vadd.f32 %v3449, %v3450
      %v3452 = vrot.slane %v3451, 1
      %v3453 = vadd.f32 %v3451, %v3452
      %3454 = vst.msk [vmem:[%s411 + $0x1] sm:$0x1] %vm3351, %v3453
      %s3455 = smul.u32 16, %s22
      %p3456 = scmp.lt.s32.totalorder %s21, 1
      %s3457 = scalar_select %p3456, %s21, 1
      %p3458 = scmp.lt.s32.totalorder %s3455, 15
      %s3459 = scalar_select %p3458, %s3455, 15
      %s3460 = smul.addr %s3459, 2
      %s3461 = smul.addr %s3457, 32
      %s3462 = sadd.s32 %s3460, %s3461
      %s3463 = smul.addr %s3462, 4
      %s3464 = scalar_lea.vmem %s4, %s3463
      %p3465 = scmp.lt.s32.totalorder %s21, 1
      %s3466 = scalar_select %p3465, %s21, 1
      %p3467 = scmp.lt.s32.totalorder %s22, 0
      %s3468 = scalar_select %p3467, %s22, 0
      %s3469 = sadd.s32 %s3468, %s3466
      %s3470 = smul.addr %s3469, 2
      %s3471 = scalar_lea.vmem %s5, %s3470
      // Predicated region
      $region37: #{double_conv_forward.3} parent=35 // pred_check
        %p3472 = pneg %p170
      $region38: #{double_conv_forward.3} parent=35 // pred_check_branch
        %3474 = sbr.rel (%p3472) target = $region40
      $region39: #{double_conv_forward.3} parent=35 // pred_region
        %s3475 = smul.u32 16, %s22
      $region40: #{double_conv_forward.3} parent=35 // pred_fallthru
        _
      // Predicated region
      $region41: #{double_conv_forward.3} parent=35 // pred_check
        %p3476 = pneg %p198
      $region42: #{double_conv_forward.3} parent=35 // pred_check_branch
        %3478 = sbr.rel (%p3476) target = $region44
      $region43: #{double_conv_forward.3} parent=35 // pred_region
        _
      $region44: #{double_conv_forward.3} parent=35 // pred_fallthru
        _
    $region36: #{double_conv_forward.3} parent=5 // pred_fallthru
      _
    %p3479 = scmp.le.s32.totalorder 2, %s12
    // Predicated region
    $region45: #{double_conv_forward.3} parent=5 // pred_check
      %p3480 = pneg %p3479
    $region46: #{double_conv_forward.3} parent=5 // pred_check_branch
      %3482 = sbr.rel (%p3480) target = $region48
    $region47: #{double_conv_forward.3} parent=5 // pred_region
      %s3483 = ssub.s32 %s12, 2
      // Predicated region
      $region49: #{double_conv_forward.3} parent=47 // pred_check
        %p3484 = pneg %p176
      $region50: #{double_conv_forward.3} parent=47 // pred_check_branch
        %3486 = sbr.rel (%p3484) target = $region52
      $region51: #{double_conv_forward.3} parent=47 // pred_region
        %s3487 = smul.u32 16, %s24
        %p3488 = scmp.lt.s32.totalorder %s23, 1
        %s3489 = scalar_select %p3488, %s23, 1
        %p3490 = scmp.lt.s32.totalorder %s3487, 15
        %s3491 = scalar_select %p3490, %s3487, 15
        %s3492 = smul.addr %s3491, 2
        %s3493 = smul.addr %s3489, 32
        %s3494 = sadd.s32 %s3492, %s3493
        %s3495 = smul.addr %s3494, 4
        %s3496 = scalar_lea.vmem %s4, %s3495
      $region52: #{double_conv_forward.3} parent=47 // pred_fallthru
        _
      // Predicated region
      $region53: #{double_conv_forward.3} parent=47 // pred_check
        %p3497 = pneg %p204
      $region54: #{double_conv_forward.3} parent=47 // pred_check_branch
        %3499 = sbr.rel (%p3497) target = $region56
      $region55: #{double_conv_forward.3} parent=47 // pred_region
        %p3500 = scmp.lt.s32.totalorder %s23, 1
        %s3501 = scalar_select %p3500, %s23, 1
        %p3502 = scmp.lt.s32.totalorder %s24, 0
        %s3503 = scalar_select %p3502, %s24, 0
        %s3504 = sadd.s32 %s3503, %s3501
        %s3505 = smul.addr %s3504, 2
        %s3506 = scalar_lea.vmem %s5, %s3505
      $region56: #{double_conv_forward.3} parent=47 // pred_fallthru
        _
    $region48: #{double_conv_forward.3} parent=5 // pred_fallthru
      _
  $region6: #{double_conv_forward.3} parent=0 // loop_footer
    %s16 = sadd.s32 1, %s12
  $region7: #{double_conv_forward.3} parent=0 // loop_footer_branch
    %11 = sbr.rel target = $region3
  $region8: #{double_conv_forward.3} parent=0 // loop_exit
    _

// kernel: double_conv_forward.4
$region0: #{double_conv_forward.4}
  #allocation0 [shape = 'u32[]', space=smem, size = 0x4, offset = 0x4, fixed_abs, tag = 'smem constant byte address 0x4 - core index']
  #allocation1 [shape = 'u32[144,128]{1,0:T(1,128)}', space=vmem, size = 0x12000, scoped, tag = 'internal scratch']
  #allocation2 [shape = 'f32[18,18,8]{2,1,0:T(8,128)}', space=vmem, size = 0x36000, scoped, tag = 'scratch operand']
  %s0 = inlined_call_operand.vmem [shape: bf16[2,16,16,8], index: 0, kind: input, shape index: {}, may-alias: {0,1,2}]
  %s1 = inlined_call_operand.vmem [shape: bf16[2,16,16,8], index: 1, kind: input, shape index: {}, may-alias: {0,1,2}]
  %s2 = inlined_call_operand.vmem [shape: bf16[2,16,16,8], index: 2, kind: input, shape index: {}, may-alias: {0,1,2}]
  %s3 = inlined_call_operand.vmem [shape: bf16[9,8,4], index: 3, kind: input, shape index: {}]
  %s4 = inlined_call_operand.vmem [shape: f32[1,8], index: 4, kind: input, shape index: {}]
  %s5 = inlined_call_operand.vmem [shape: f32[1,8], index: 5, kind: input, shape index: {}]
  %s6 = inlined_call_operand.vmem [shape: bf16[2,16,16,4], index: 6, kind: output, shape index: {0}]
  %s7 = inlined_call_operand.vmem [shape: f32[2,1,2,4], index: 7, kind: output, shape index: {1}]
  %8 = xla_tuple %s6, %s7
  %s9 = sld [smem:[#allocation0]]
  $region65: #{double_conv_forward.4} parent=0
    _
  %s11 = ssub.s32 1, %s9
  %s12 = scalar_select 0, %s11, %s9
  loop: start=0, step=1, limit=4
  $region2: #{double_conv_forward.4} parent=0 // loop_pre_header
    _
  $region3: #{double_conv_forward.4} parent=0 // loop_header
    %s14 = sphi 0, %s18
    %p15 = scmp.ge.s32.totalorder %s14, 4
    %s21 = sphi 0, %s33
    %s22 = sphi 0, %s29
    %s23 = sphi 0, %s21
    %s24 = sphi 0, %s22
    %s25 = sphi 0, %s23
    %s26 = sphi 0, %s24
    %s38 = sphi 0, %s40
    %s41 = sphi 0, %s38
    %s42 = sphi 0, %s41
    %s58 = sphi 0, %s42
    %s74 = sphi 0, %s76
    %s77 = sphi 0, %s74
    %s78 = sphi 0, %s77
    %s94 = sphi 0, %s78
    %s110 = sphi 0, %s112
    %s113 = sphi 0, %s110
    %s114 = sphi 0, %s113
    %s130 = sphi 0, %s114
    %s134 = sphi 0, %s134
    %s136 = sphi 0, %s134
    %s137 = sphi 0, %s136
    %s151 = sphi 0, %s137
    %s155 = sphi 0, %s155
    %s157 = sphi 0, %s155
    %s158 = sphi 0, %s157
    %s172 = sphi 0, %s158
    %s176 = sphi 0, %s176
    %s178 = sphi 0, %s176
    %s179 = sphi 0, %s178
    %s193 = sphi 0, %s179
    %s201 = sphi 0, %s203
    %s204 = sphi 0, %s201
    %s205 = sphi 0, %s204
    %s221 = sphi 0, %s205
    %s229 = sphi 0, %s231
    %s232 = sphi 0, %s229
    %s233 = sphi 0, %s232
    %s249 = sphi 0, %s233
  $region4: #{double_conv_forward.4} parent=0 // loop_header_branch
    %17 = sbr.rel (%p15) target = $region8
  $region5: #{double_conv_forward.4} parent=0 // loop_body
    %s19 = ssub.s32 %s14, 1
    %s20 = ssub.s32 %s14, 2
    %s27 = sadd.s32 1, %s22
    %p28 = scmp.ge.s32.totalorder %s27, 1
    %s29 = scalar_select %p28, 0, %s27
    %s30 = sadd.s32 1, %s21
    %s31 = scalar_select %p28, %s30, %s21
    %p32 = scmp.ge.s32.totalorder %s31, 2
    %s33 = scalar_select %p32, 0, %s31
    %s34 = ssub.s32 %s21, %s33
    %s35 = ssub.s32 %s22, %s29
    %s36 = sor.u32 %s34, %s35
    %p37 = scmp.eq.s32.totalorder %s36, 0
    %s39 = sadd.s32 %s38, 1
    %s40 = scalar_select %p37, %s38, %s39
    %p43 = pneg %p37
    %p44 = scmp.eq.s32.totalorder %s14, 1
    %p45 = por %p43, %p44
    %p46 = scmp.ne.s32.totalorder %s38, %s41
    %p47 = scmp.eq.s32.totalorder %s14, 0
    %p48 = por %p46, %p47
    %p49 = scmp.ne.s32.totalorder %s38, %s41
    %p50 = scmp.eq.s32.totalorder %s19, 1
    %p51 = por %p49, %p50
    %p52 = scmp.ne.s32.totalorder %s41, %s42
    %p53 = scmp.eq.s32.totalorder %s19, 0
    %p54 = por %p52, %p53
    %p55 = scmp.ne.s32.totalorder %s41, %s42
    %p56 = scmp.eq.s32.totalorder %s20, 1
    %p57 = por %p55, %p56
    %p59 = scmp.ne.s32.totalorder %s42, %s58
    %p60 = scmp.eq.s32.totalorder %s20, 0
    %p61 = por %p59, %p60
    %s62 = smul.u32 %s22, 16
    %s63 = ssub.s32 %s62, 1
    %p64 = scmp.gt.s32.totalorder %s63, 0
    %s65 = scalar_select %p64, %s63, 0
    %s66 = smul.u32 %s29, 16
    %s67 = ssub.s32 %s66, 1
    %p68 = scmp.gt.s32.totalorder %s67, 0
    %s69 = scalar_select %p68, %s67, 0
    %s70 = ssub.s32 %s21, %s33
    %s71 = ssub.s32 %s65, %s69
    %s72 = sor.u32 %s70, %s71
    %p73 = scmp.eq.s32.totalorder %s72, 0
    %s75 = sadd.s32 %s74, 1
    %s76 = scalar_select %p73, %s74, %s75
    %p79 = pneg %p73
    %p80 = scmp.eq.s32.totalorder %s14, 1
    %p81 = por %p79, %p80
    %p82 = scmp.ne.s32.totalorder %s74, %s77
    %p83 = scmp.eq.s32.totalorder %s14, 0
    %p84 = por %p82, %p83
    %p85 = scmp.ne.s32.totalorder %s74, %s77
    %p86 = scmp.eq.s32.totalorder %s19, 1
    %p87 = por %p85, %p86
    %p88 = scmp.ne.s32.totalorder %s77, %s78
    %p89 = scmp.eq.s32.totalorder %s19, 0
    %p90 = por %p88, %p89
    %p91 = scmp.ne.s32.totalorder %s77, %s78
    %p92 = scmp.eq.s32.totalorder %s20, 1
    %p93 = por %p91, %p92
    %p95 = scmp.ne.s32.totalorder %s78, %s94
    %p96 = scmp.eq.s32.totalorder %s20, 0
    %p97 = por %p95, %p96
    %s98 = smul.u32 %s22, 16
    %s99 = sadd.s32 %s98, 16
    %p100 = scmp.lt.s32.totalorder %s99, 15
    %s101 = scalar_select %p100, %s99, 15
    %s102 = smul.u32 %s29, 16
    %s103 = sadd.s32 %s102, 16
    %p104 = scmp.lt.s32.totalorder %s103, 15
    %s105 = scalar_select %p104, %s103, 15
    %s106 = ssub.s32 %s21, %s33
    %s107 = ssub.s32 %s101, %s105
    %s108 = sor.u32 %s106, %s107
    %p109 = scmp.eq.s32.totalorder %s108, 0
    %s111 = sadd.s32 %s110, 1
    %s112 = scalar_select %p109, %s110, %s111
    %p115 = pneg %p109
    %p116 = scmp.eq.s32.totalorder %s14, 1
    %p117 = por %p115, %p116
    %p118 = scmp.ne.s32.totalorder %s110, %s113
    %p119 = scmp.eq.s32.totalorder %s14, 0
    %p120 = por %p118, %p119
    %p121 = scmp.ne.s32.totalorder %s110, %s113
    %p122 = scmp.eq.s32.totalorder %s19, 1
    %p123 = por %p121, %p122
    %p124 = scmp.ne.s32.totalorder %s113, %s114
    %p125 = scmp.eq.s32.totalorder %s19, 0
    %p126 = por %p124, %p125
    %p127 = scmp.ne.s32.totalorder %s113, %s114
    %p128 = scmp.eq.s32.totalorder %s20, 1
    %p129 = por %p127, %p128
    %p131 = scmp.ne.s32.totalorder %s114, %s130
    %p132 = scmp.eq.s32.totalorder %s20, 0
    %p133 = por %p131, %p132
    %s135 = sadd.s32 %s134, 1
    %p138 = scmp.eq.s32.totalorder %s14, 1
    %p139 = scmp.ne.s32.totalorder %s134, %s136
    %p140 = scmp.eq.s32.totalorder %s14, 0
    %p141 = por %p139, %p140
    %p142 = scmp.ne.s32.totalorder %s134, %s136
    %p143 = scmp.eq.s32.totalorder %s19, 1
    %p144 = por %p142, %p143
    %p145 = scmp.ne.s32.totalorder %s136, %s137
    %p146 = scmp.eq.s32.totalorder %s19, 0
    %p147 = por %p145, %p146
    %p148 = scmp.ne.s32.totalorder %s136, %s137
    %p149 = scmp.eq.s32.totalorder %s20, 1
    %p150 = por %p148, %p149
    %p152 = scmp.ne.s32.totalorder %s137, %s151
    %p153 = scmp.eq.s32.totalorder %s20, 0
    %p154 = por %p152, %p153
    %s156 = sadd.s32 %s155, 1
    %p159 = scmp.eq.s32.totalorder %s14, 1
    %p160 = scmp.ne.s32.totalorder %s155, %s157
    %p161 = scmp.eq.s32.totalorder %s14, 0
    %p162 = por %p160, %p161
    %p163 = scmp.ne.s32.totalorder %s155, %s157
    %p164 = scmp.eq.s32.totalorder %s19, 1
    %p165 = por %p163, %p164
    %p166 = scmp.ne.s32.totalorder %s157, %s158
    %p167 = scmp.eq.s32.totalorder %s19, 0
    %p168 = por %p166, %p167
    %p169 = scmp.ne.s32.totalorder %s157, %s158
    %p170 = scmp.eq.s32.totalorder %s20, 1
    %p171 = por %p169, %p170
    %p173 = scmp.ne.s32.totalorder %s158, %s172
    %p174 = scmp.eq.s32.totalorder %s20, 0
    %p175 = por %p173, %p174
    %s177 = sadd.s32 %s176, 1
    %p180 = scmp.eq.s32.totalorder %s14, 1
    %p181 = scmp.ne.s32.totalorder %s176, %s178
    %p182 = scmp.eq.s32.totalorder %s14, 0
    %p183 = por %p181, %p182
    %p184 = scmp.ne.s32.totalorder %s176, %s178
    %p185 = scmp.eq.s32.totalorder %s19, 1
    %p186 = por %p184, %p185
    %p187 = scmp.ne.s32.totalorder %s178, %s179
    %p188 = scmp.eq.s32.totalorder %s19, 0
    %p189 = por %p187, %p188
    %p190 = scmp.ne.s32.totalorder %s178, %s179
    %p191 = scmp.eq.s32.totalorder %s20, 1
    %p192 = por %p190, %p191
    %p194 = scmp.ne.s32.totalorder %s179, %s193
    %p195 = scmp.eq.s32.totalorder %s20, 0
    %p196 = por %p194, %p195
    %s197 = ssub.s32 %s21, %s33
    %s198 = ssub.s32 %s22, %s29
    %s199 = sor.u32 %s197, %s198
    %p200 = scmp.eq.s32.totalorder %s199, 0
    %s202 = sadd.s32 %s201, 1
    %s203 = scalar_select %p200, %s201, %s202
    %p206 = pneg %p200
    %p207 = scmp.eq.s32.totalorder %s14, 1
    %p208 = por %p206, %p207
    %p209 = scmp.ne.s32.totalorder %s201, %s204
    %p210 = scmp.eq.s32.totalorder %s14, 0
    %p211 = por %p209, %p210
    %p212 = scmp.ne.s32.totalorder %s201, %s204
    %p213 = scmp.eq.s32.totalorder %s19, 1
    %p214 = por %p212, %p213
    %p215 = scmp.ne.s32.totalorder %s204, %s205
    %p216 = scmp.eq.s32.totalorder %s19, 0
    %p217 = por %p215, %p216
    %p218 = scmp.ne.s32.totalorder %s204, %s205
    %p219 = scmp.eq.s32.totalorder %s20, 1
    %p220 = por %p218, %p219
    %p222 = scmp.ne.s32.totalorder %s205, %s221
    %p223 = scmp.eq.s32.totalorder %s20, 0
    %p224 = por %p222, %p223
    %s225 = ssub.s32 %s21, %s33
    %s226 = ssub.s32 %s22, %s29
    %s227 = sor.u32 %s225, %s226
    %p228 = scmp.eq.s32.totalorder %s227, 0
    %s230 = sadd.s32 %s229, 1
    %s231 = scalar_select %p228, %s229, %s230
    %p234 = pneg %p228
    %p235 = scmp.eq.s32.totalorder %s14, 1
    %p236 = por %p234, %p235
    %p237 = scmp.ne.s32.totalorder %s229, %s232
    %p238 = scmp.eq.s32.totalorder %s14, 0
    %p239 = por %p237, %p238
    %p240 = scmp.ne.s32.totalorder %s229, %s232
    %p241 = scmp.eq.s32.totalorder %s19, 1
    %p242 = por %p240, %p241
    %p243 = scmp.ne.s32.totalorder %s232, %s233
    %p244 = scmp.eq.s32.totalorder %s19, 0
    %p245 = por %p243, %p244
    %p246 = scmp.ne.s32.totalorder %s232, %s233
    %p247 = scmp.eq.s32.totalorder %s20, 1
    %p248 = por %p246, %p247
    %p250 = scmp.ne.s32.totalorder %s233, %s249
    %p251 = scmp.eq.s32.totalorder %s20, 0
    %p252 = por %p250, %p251
    %p253 = scmp.le.s32.totalorder 1, %s14
    %p254 = scmp.lt.s32.totalorder %s14, 3
    %p255 = pnand %p253, %p254
    %p256 = pneg %p255
    // Predicated region
    $region9: #{double_conv_forward.4} parent=5 // pred_check
      _
    $region10: #{double_conv_forward.4} parent=5 // pred_check_branch
      %258 = sbr.rel (%p255) target = $region12
    $region11: #{double_conv_forward.4} parent=5 // pred_region
      %s259 = ssub.s32 %s14, 1
      // Predicated region
      $region13: #{double_conv_forward.4} parent=11 // pred_check
        %p260 = pneg %p147
      $region14: #{double_conv_forward.4} parent=11 // pred_check_branch
        %262 = sbr.rel (%p260) target = $region16
      $region15: #{double_conv_forward.4} parent=11 // pred_region
        _
      $region16: #{double_conv_forward.4} parent=11 // pred_fallthru
        _
      // Predicated region
      $region17: #{double_conv_forward.4} parent=11 // pred_check
        %p263 = pneg %p168
      $region18: #{double_conv_forward.4} parent=11 // pred_check_branch
        %265 = sbr.rel (%p263) target = $region20
      $region19: #{double_conv_forward.4} parent=11 // pred_region
        _
      $region20: #{double_conv_forward.4} parent=11 // pred_fallthru
        _
      // Predicated region
      $region21: #{double_conv_forward.4} parent=11 // pred_check
        %p266 = pneg %p189
      $region22: #{double_conv_forward.4} parent=11 // pred_check_branch
        %268 = sbr.rel (%p266) target = $region24
      $region23: #{double_conv_forward.4} parent=11 // pred_region
        _
      $region24: #{double_conv_forward.4} parent=11 // pred_fallthru
        _
    $region12: #{double_conv_forward.4} parent=5 // pred_fallthru
      _
    %p269 = scmp.lt.s32.totalorder %s14, 2
    // Predicated region
    $region25: #{double_conv_forward.4} parent=5 // pred_check
      %p270 = pneg %p269
    $region26: #{double_conv_forward.4} parent=5 // pred_check_branch
      %272 = sbr.rel (%p270) target = $region28
    $region27: #{double_conv_forward.4} parent=5 // pred_region
      // Predicated region
      $region29: #{double_conv_forward.4} parent=27 // pred_check
        %p273 = pneg %p48
      $region30: #{double_conv_forward.4} parent=27 // pred_check_branch
        %275 = sbr.rel (%p273) target = $region32
      $region31: #{double_conv_forward.4} parent=27 // pred_region
        %s276 = smul.u32 16, %s22
        %p277 = scmp.lt.s32.totalorder %s21, 1
        %s278 = scalar_select %p277, %s21, 1
        %p279 = scmp.lt.s32.totalorder %s276, 15
        %s280 = scalar_select %p279, %s276, 15
        %s281 = smul.addr %s280, 2
        %s282 = smul.addr %s278, 32
        %s283 = sadd.s32 %s281, %s282
        %s284 = smul.addr %s283, 4
        %s285 = scalar_lea.vmem %s0, %s284
        %s286 = smul.u32 16, %s22
      $region32: #{double_conv_forward.4} parent=27 // pred_fallthru
        _
      // Predicated region
      $region33: #{double_conv_forward.4} parent=27 // pred_check
        %p287 = pneg %p84
      $region34: #{double_conv_forward.4} parent=27 // pred_check_branch
        %289 = sbr.rel (%p287) target = $region36
      $region35: #{double_conv_forward.4} parent=27 // pred_region
        %s290 = smul.u32 %s22, 16
        %s291 = ssub.s32 %s290, 1
        %p292 = scmp.gt.s32.totalorder %s291, 0
        %s293 = scalar_select %p292, %s291, 0
        %p294 = scmp.lt.s32.totalorder %s21, 1
        %s295 = scalar_select %p294, %s21, 1
        %p296 = scmp.lt.s32.totalorder %s293, 15
        %s297 = scalar_select %p296, %s293, 15
        %s298 = smul.addr %s297, 2
        %s299 = smul.addr %s295, 32
        %s300 = sadd.s32 %s298, %s299
        %s301 = smul.addr %s300, 4
        %s302 = scalar_lea.vmem %s1, %s301
        %s303 = smul.u32 %s22, 16
        %s304 = ssub.s32 %s303, 1
        %p305 = scmp.gt.s32.totalorder %s304, 0
        %s306 = scalar_select %p305, %s304, 0
      $region36: #{double_conv_forward.4} parent=27 // pred_fallthru
        _
      // Predicated region
      $region37: #{double_conv_forward.4} parent=27 // pred_check
        %p307 = pneg %p120
      $region38: #{double_conv_forward.4} parent=27 // pred_check_branch
        %309 = sbr.rel (%p307) target = $region40
      $region39: #{double_conv_forward.4} parent=27 // pred_region
        %s310 = smul.u32 %s22, 16
        %s311 = sadd.s32 %s310, 16
        %p312 = scmp.lt.s32.totalorder %s311, 15
        %s313 = scalar_select %p312, %s311, 15
        %p314 = scmp.lt.s32.totalorder %s21, 1
        %s315 = scalar_select %p314, %s21, 1
        %p316 = scmp.lt.s32.totalorder %s313, 15
        %s317 = scalar_select %p316, %s313, 15
        %s318 = smul.addr %s317, 2
        %s319 = smul.addr %s315, 32
        %s320 = sadd.s32 %s318, %s319
        %s321 = smul.addr %s320, 4
        %s322 = scalar_lea.vmem %s2, %s321
        %s323 = smul.u32 %s22, 16
        %s324 = sadd.s32 %s323, 16
        %p325 = scmp.lt.s32.totalorder %s324, 15
        %s326 = scalar_select %p325, %s324, 15
      $region40: #{double_conv_forward.4} parent=27 // pred_fallthru
        _
    $region28: #{double_conv_forward.4} parent=5 // pred_fallthru
      _
    %p327 = scmp.le.s32.totalorder 1, %s14
    %p328 = scmp.lt.s32.totalorder %s14, 3
    %p329 = pnand %p327, %p328
    %p330 = pneg %p329
    // Predicated region
    $region41: #{double_conv_forward.4} parent=5 // pred_check
      _
    $region42: #{double_conv_forward.4} parent=5 // pred_check_branch
      %332 = sbr.rel (%p329) target = $region44
    $region43: #{double_conv_forward.4} parent=5 // pred_region
      %s333 = ssub.s32 %s14, 1
      %s334 = smul.u32 16, %s24
      %p335 = scmp.lt.s32.totalorder %s23, 1
      %s336 = scalar_select %p335, %s23, 1
      %p337 = scmp.lt.s32.totalorder %s334, 15
      %s338 = scalar_select %p337, %s334, 15
      %s339 = smul.addr %s338, 2
      %s340 = smul.addr %s336, 32
      %s341 = sadd.s32 %s339, %s340
      %s342 = smul.addr %s341, 4
      %s343 = scalar_lea.vmem %s0, %s342
      %p344 = pneg %p54
      %p345 = pneg %p51
      %s346 = smul.u32 %s24, 16
      %s347 = ssub.s32 %s346, 1
      %p348 = scmp.gt.s32.totalorder %s347, 0
      %s349 = scalar_select %p348, %s347, 0
      %p350 = scmp.lt.s32.totalorder %s23, 1
      %s351 = scalar_select %p350, %s23, 1
      %p352 = scmp.lt.s32.totalorder %s349, 15
      %s353 = scalar_select %p352, %s349, 15
      %s354 = smul.addr %s353, 2
      %s355 = smul.addr %s351, 32
      %s356 = sadd.s32 %s354, %s355
      %s357 = smul.addr %s356, 4
      %s358 = scalar_lea.vmem %s1, %s357
      %p359 = pneg %p90
      %p360 = pneg %p87
      %s361 = smul.u32 %s24, 16
      %s362 = sadd.s32 %s361, 16
      %p363 = scmp.lt.s32.totalorder %s362, 15
      %s364 = scalar_select %p363, %s362, 15
      %p365 = scmp.lt.s32.totalorder %s23, 1
      %s366 = scalar_select %p365, %s23, 1
      %p367 = scmp.lt.s32.totalorder %s364, 15
      %s368 = scalar_select %p367, %s364, 15
      %s369 = smul.addr %s368, 2
      %s370 = smul.addr %s366, 32
      %s371 = sadd.s32 %s369, %s370
      %s372 = smul.addr %s371, 4
      %s373 = scalar_lea.vmem %s2, %s372
      %p374 = pneg %p126
      %p375 = pneg %p123
      %p376 = pneg %p147
      %p377 = pneg %p144
      %p378 = pneg %p168
      %p379 = pneg %p165
      %p380 = pneg %p189
      %p381 = pneg %p186
      %p382 = pneg %p217
      %p383 = pneg %p214
      %s384 = smul.u32 16, %s24
      %p385 = scmp.lt.s32.totalorder %s23, 1
      %s386 = scalar_select %p385, %s23, 1
      %p387 = scmp.lt.s32.totalorder %s384, 15
      %s388 = scalar_select %p387, %s384, 15
      %s389 = smul.addr %s388, 2
      %s390 = smul.addr %s386, 32
      %s391 = sadd.s32 %s389, %s390
      %s392 = smul.addr %s391, 4
      %s393 = scalar_lea.vmem %s6, %s392
      %p394 = pneg %p245
      %p395 = pneg %p242
      %p396 = scmp.lt.s32.totalorder %s23, 1
      %s397 = scalar_select %p396, %s23, 1
      %p398 = scmp.lt.s32.totalorder %s24, 0
      %s399 = scalar_select %p398, %s24, 0
      %s400 = sadd.s32 %s399, %s397
      %s401 = smul.addr %s400, 2
      %s402 = scalar_lea.vmem %s7, %s401
      %s403 = smul.u32 16, %s24
      %p404 = scmp.lt.s32.totalorder %s23, 1
      %s405 = scalar_select %p404, %s23, 1
      %p406 = scmp.lt.s32.totalorder %s403, 15
      %s407 = scalar_select %p406, %s403, 15
      %s408 = smul.addr %s407, 2
      %s409 = smul.addr %s405, 32
      %s410 = sadd.s32 %s408, %s409
      %s411 = smul.addr %s410, 4
      %s412 = scalar_lea.vmem %s0, %s411
      %s413 = smul.u32 16, %s24
      %s414 = smul.u32 %s24, 16
      %s415 = ssub.s32 %s414, 1
      %p416 = scmp.gt.s32.totalorder %s415, 0
      %s417 = scalar_select %p416, %s415, 0
      %p418 = scmp.lt.s32.totalorder %s23, 1
      %s419 = scalar_select %p418, %s23, 1
      %p420 = scmp.lt.s32.totalorder %s417, 15
      %s421 = scalar_select %p420, %s417, 15
      %s422 = smul.addr %s421, 2
      %s423 = smul.addr %s419, 32
      %s424 = sadd.s32 %s422, %s423
      %s425 = smul.addr %s424, 4
      %s426 = scalar_lea.vmem %s1, %s425
      %s427 = smul.u32 %s24, 16
      %s428 = ssub.s32 %s427, 1
      %p429 = scmp.gt.s32.totalorder %s428, 0
      %s430 = scalar_select %p429, %s428, 0
      %s431 = smul.u32 %s24, 16
      %s432 = sadd.s32 %s431, 16
      %p433 = scmp.lt.s32.totalorder %s432, 15
      %s434 = scalar_select %p433, %s432, 15
      %p435 = scmp.lt.s32.totalorder %s23, 1
      %s436 = scalar_select %p435, %s23, 1
      %p437 = scmp.lt.s32.totalorder %s434, 15
      %s438 = scalar_select %p437, %s434, 15
      %s439 = smul.addr %s438, 2
      %s440 = smul.addr %s436, 32
      %s441 = sadd.s32 %s439, %s440
      %s442 = smul.addr %s441, 4
      %s443 = scalar_lea.vmem %s2, %s442
      %s444 = smul.u32 %s24, 16
      %s445 = sadd.s32 %s444, 16
      %p446 = scmp.lt.s32.totalorder %s445, 15
      %s447 = scalar_select %p446, %s445, 15
      %s448 = smul.u32 16, %s24
      %p449 = scmp.lt.s32.totalorder %s23, 1
      %s450 = scalar_select %p449, %s23, 1
      %p451 = scmp.lt.s32.totalorder %s448, 15
      %s452 = scalar_select %p451, %s448, 15
      %s453 = smul.addr %s452, 2
      %s454 = smul.addr %s450, 32
      %s455 = sadd.s32 %s453, %s454
      %s456 = smul.addr %s455, 4
      %s457 = scalar_lea.vmem %s6, %s456
      %s458 = smul.u32 16, %s24
      %p459 = scmp.lt.s32.totalorder %s23, 1
      %s460 = scalar_select %p459, %s23, 1
      %p461 = scmp.lt.s32.totalorder %s24, 0
      %s462 = scalar_select %p461, %s24, 0
      %s463 = sadd.s32 %s462, %s460
      %s464 = smul.addr %s463, 2
      %s465 = scalar_lea.vmem %s7, %s464
      %v467 = vld [vmem:[%s4] sm:$0x1]
      %v468 = vld [vmem:[%s5] sm:$0x1]
      %vm469 = vcmask 57344
      %470 = vst.msk [vmem:[#allocation2] sm:$0x1] %vm469, 0.0
      %471 = vst.msk [vmem:[#allocation2 + $0x18] sm:$0x1] %vm469, 0.0
      %472 = vst.msk [vmem:[#allocation2 + $0x30] sm:$0x1] %vm469, 0.0
      %473 = vst.msk [vmem:[#allocation2 + $0x48] sm:$0x1] %vm469, 0.0
      %474 = vst.msk [vmem:[#allocation2 + $0x60] sm:$0x1] %vm469, 0.0
      %475 = vst.msk [vmem:[#allocation2 + $0x78] sm:$0x1] %vm469, 0.0
      %476 = vst.msk [vmem:[#allocation2 + $0x90] sm:$0x1] %vm469, 0.0
      %477 = vst.msk [vmem:[#allocation2 + $0xa8] sm:$0x1] %vm469, 0.0
      %478 = vst.msk [vmem:[#allocation2 + $0xc0] sm:$0x1] %vm469, 0.0
      %479 = vst.msk [vmem:[#allocation2 + $0xd8] sm:$0x1] %vm469, 0.0
      %480 = vst.msk [vmem:[#allocation2 + $0xf0] sm:$0x1] %vm469, 0.0
      %481 = vst.msk [vmem:[#allocation2 + $0x108] sm:$0x1] %vm469, 0.0
      %482 = vst.msk [vmem:[#allocation2 + $0x120] sm:$0x1] %vm469, 0.0
      %483 = vst.msk [vmem:[#allocation2 + $0x138] sm:$0x1] %vm469, 0.0
      %484 = vst.msk [vmem:[#allocation2 + $0x150] sm:$0x1] %vm469, 0.0
      %485 = vst.msk [vmem:[#allocation2 + $0x168] sm:$0x1] %vm469, 0.0
      %486 = vst.msk [vmem:[#allocation2 + $0x180] sm:$0x1] %vm469, 0.0
      %487 = vst.msk [vmem:[#allocation2 + $0x198] sm:$0x1] %vm469, 0.0
      %488 = vst.msk [vmem:[#allocation2 + $0x11] sm:$0x1] %vm469, 0.0
      %489 = vst.msk [vmem:[#allocation2 + $0x29] sm:$0x1] %vm469, 0.0
      %490 = vst.msk [vmem:[#allocation2 + $0x41] sm:$0x1] %vm469, 0.0
      %491 = vst.msk [vmem:[#allocation2 + $0x59] sm:$0x1] %vm469, 0.0
      %492 = vst.msk [vmem:[#allocation2 + $0x71] sm:$0x1] %vm469, 0.0
      %493 = vst.msk [vmem:[#allocation2 + $0x89] sm:$0x1] %vm469, 0.0
      %494 = vst.msk [vmem:[#allocation2 + $0xa1] sm:$0x1] %vm469, 0.0
      %495 = vst.msk [vmem:[#allocation2 + $0xb9] sm:$0x1] %vm469, 0.0
      %496 = vst.msk [vmem:[#allocation2 + $0xd1] sm:$0x1] %vm469, 0.0
      %497 = vst.msk [vmem:[#allocation2 + $0xe9] sm:$0x1] %vm469, 0.0
      %498 = vst.msk [vmem:[#allocation2 + $0x101] sm:$0x1] %vm469, 0.0
      %499 = vst.msk [vmem:[#allocation2 + $0x119] sm:$0x1] %vm469, 0.0
      %500 = vst.msk [vmem:[#allocation2 + $0x131] sm:$0x1] %vm469, 0.0
      %501 = vst.msk [vmem:[#allocation2 + $0x149] sm:$0x1] %vm469, 0.0
      %502 = vst.msk [vmem:[#allocation2 + $0x161] sm:$0x1] %vm469, 0.0
      %503 = vst.msk [vmem:[#allocation2 + $0x179] sm:$0x1] %vm469, 0.0
      %504 = vst.msk [vmem:[#allocation2 + $0x191] sm:$0x1] %vm469, 0.0
      %505 = vst.msk [vmem:[#allocation2 + $0x1a9] sm:$0x1] %vm469, 0.0
      %v506 = vld [vmem:[%s412] sm:$0xf]
      %v507 = vld [vmem:[%s412 + $0x4] sm:$0xf]
      %v508 = vld [vmem:[%s412 + $0x8] sm:$0xf]
      %v509 = vld [vmem:[%s412 + $0xc] sm:$0xf]
      %v510 = vld [vmem:[%s412 + $0x10] sm:$0xf]
      %v511 = vld [vmem:[%s412 + $0x14] sm:$0xf]
      %v512 = vld [vmem:[%s412 + $0x18] sm:$0xf]
      %v513 = vld [vmem:[%s412 + $0x1c] sm:$0xf]
      %v514 = vld [vmem:[%s412 + $0x20] sm:$0xf]
      %v515 = vld [vmem:[%s412 + $0x24] sm:$0xf]
      %v516 = vld [vmem:[%s412 + $0x28] sm:$0xf]
      %v517 = vld [vmem:[%s412 + $0x2c] sm:$0xf]
      %v518 = vld [vmem:[%s412 + $0x30] sm:$0xf]
      %v519 = vld [vmem:[%s412 + $0x34] sm:$0xf]
      %v520 = vld [vmem:[%s412 + $0x38] sm:$0xf]
      %v521 = vld [vmem:[%s412 + $0x3c] sm:$0xf]
      %v522 = vld [vmem:[%s412 + $0x40] sm:$0xf]
      %v523 = vld [vmem:[%s412 + $0x44] sm:$0xf]
      %v524 = vld [vmem:[%s412 + $0x48] sm:$0xf]
      %v525 = vld [vmem:[%s412 + $0x4c] sm:$0xf]
      %v526 = vld [vmem:[%s412 + $0x50] sm:$0xf]
      %v527 = vld [vmem:[%s412 + $0x54] sm:$0xf]
      %v528 = vld [vmem:[%s412 + $0x58] sm:$0xf]
      %v529 = vld [vmem:[%s412 + $0x5c] sm:$0xf]
      %v530 = vld [vmem:[%s412 + $0x60] sm:$0xf]
      %v531 = vld [vmem:[%s412 + $0x64] sm:$0xf]
      %v532 = vld [vmem:[%s412 + $0x68] sm:$0xf]
      %v533 = vld [vmem:[%s412 + $0x6c] sm:$0xf]
      %v534 = vld [vmem:[%s412 + $0x70] sm:$0xf]
      %v535 = vld [vmem:[%s412 + $0x74] sm:$0xf]
      %v536 = vld [vmem:[%s412 + $0x78] sm:$0xf]
      %v537 = vld [vmem:[%s412 + $0x7c] sm:$0xf]
      %v538 = vunpack.c.l.bf16 %v506
      %v539 = vunpack.c.l.bf16 %v507
      %v540 = vunpack.c.l.bf16 %v508
      %v541 = vunpack.c.l.bf16 %v509
      %v542 = vunpack.c.l.bf16 %v510
      %v543 = vunpack.c.l.bf16 %v511
      %v544 = vunpack.c.l.bf16 %v512
      %v545 = vunpack.c.l.bf16 %v513
      %v546 = vunpack.c.l.bf16 %v514
      %v547 = vunpack.c.l.bf16 %v515
      %v548 = vunpack.c.l.bf16 %v516
      %v549 = vunpack.c.l.bf16 %v517
      %v550 = vunpack.c.l.bf16 %v518
      %v551 = vunpack.c.l.bf16 %v519
      %v552 = vunpack.c.l.bf16 %v520
      %v553 = vunpack.c.l.bf16 %v521
      %v554 = vunpack.c.l.bf16 %v522
      %v555 = vunpack.c.l.bf16 %v523
      %v556 = vunpack.c.l.bf16 %v524
      %v557 = vunpack.c.l.bf16 %v525
      %v558 = vunpack.c.l.bf16 %v526
      %v559 = vunpack.c.l.bf16 %v527
      %v560 = vunpack.c.l.bf16 %v528
      %v561 = vunpack.c.l.bf16 %v529
      %v562 = vunpack.c.l.bf16 %v530
      %v563 = vunpack.c.l.bf16 %v531
      %v564 = vunpack.c.l.bf16 %v532
      %v565 = vunpack.c.l.bf16 %v533
      %v566 = vunpack.c.l.bf16 %v534
      %v567 = vunpack.c.l.bf16 %v535
      %v568 = vunpack.c.l.bf16 %v536
      %v569 = vunpack.c.l.bf16 %v537
      %v571 = vlaneseq
      %v572 = vshrl.u32 %v571, 7
      %v573 = vsub.s32 0, %v572
      %v574 = vrot.slane %v467, %v573
      %v576 = vmul.f32 %v538, %v574
      %v577 = vmul.f32 %v539, %v574
      %v578 = vmul.f32 %v540, %v574
      %v579 = vmul.f32 %v541, %v574
      %v580 = vmul.f32 %v542, %v574
      %v581 = vmul.f32 %v543, %v574
      %v582 = vmul.f32 %v544, %v574
      %v583 = vmul.f32 %v545, %v574
      %v584 = vmul.f32 %v546, %v574
      %v585 = vmul.f32 %v547, %v574
      %v586 = vmul.f32 %v548, %v574
      %v587 = vmul.f32 %v549, %v574
      %v588 = vmul.f32 %v550, %v574
      %v589 = vmul.f32 %v551, %v574
      %v590 = vmul.f32 %v552, %v574
      %v591 = vmul.f32 %v553, %v574
      %v592 = vmul.f32 %v554, %v574
      %v593 = vmul.f32 %v555, %v574
      %v594 = vmul.f32 %v556, %v574
      %v595 = vmul.f32 %v557, %v574
      %v596 = vmul.f32 %v558, %v574
      %v597 = vmul.f32 %v559, %v574
      %v598 = vmul.f32 %v560, %v574
      %v599 = vmul.f32 %v561, %v574
      %v600 = vmul.f32 %v562, %v574
      %v601 = vmul.f32 %v563, %v574
      %v602 = vmul.f32 %v564, %v574
      %v603 = vmul.f32 %v565, %v574
      %v604 = vmul.f32 %v566, %v574
      %v605 = vmul.f32 %v567, %v574
      %v606 = vmul.f32 %v568, %v574
      %v607 = vmul.f32 %v569, %v574
      %v609 = vlaneseq
      %v610 = vshrl.u32 %v609, 7
      %v611 = vsub.s32 0, %v610
      %v612 = vrot.slane %v468, %v611
      %v614 = vadd.f32 %v576, %v612
      %v615 = vadd.f32 %v577, %v612
      %v616 = vadd.f32 %v578, %v612
      %v617 = vadd.f32 %v579, %v612
      %v618 = vadd.f32 %v580, %v612
      %v619 = vadd.f32 %v581, %v612
      %v620 = vadd.f32 %v582, %v612
      %v621 = vadd.f32 %v583, %v612
      %v622 = vadd.f32 %v584, %v612
      %v623 = vadd.f32 %v585, %v612
      %v624 = vadd.f32 %v586, %v612
      %v625 = vadd.f32 %v587, %v612
      %v626 = vadd.f32 %v588, %v612
      %v627 = vadd.f32 %v589, %v612
      %v628 = vadd.f32 %v590, %v612
      %v629 = vadd.f32 %v591, %v612
      %v630 = vadd.f32 %v592, %v612
      %v631 = vadd.f32 %v593, %v612
      %v632 = vadd.f32 %v594, %v612
      %v633 = vadd.f32 %v595, %v612
      %v634 = vadd.f32 %v596, %v612
      %v635 = vadd.f32 %v597, %v612
      %v636 = vadd.f32 %v598, %v612
      %v637 = vadd.f32 %v599, %v612
      %v638 = vadd.f32 %v600, %v612
      %v639 = vadd.f32 %v601, %v612
      %v640 = vadd.f32 %v602, %v612
      %v641 = vadd.f32 %v603, %v612
      %v642 = vadd.f32 %v604, %v612
      %v643 = vadd.f32 %v605, %v612
      %v644 = vadd.f32 %v606, %v612
      %v645 = vadd.f32 %v607, %v612
      %v646 = vmax.f32 %v614, 0.0
      %v647 = vmax.f32 %v615, 0.0
      %v648 = vmax.f32 %v616, 0.0
      %v649 = vmax.f32 %v617, 0.0
      %v650 = vmax.f32 %v618, 0.0
      %v651 = vmax.f32 %v619, 0.0
      %v652 = vmax.f32 %v620, 0.0
      %v653 = vmax.f32 %v621, 0.0
      %v654 = vmax.f32 %v622, 0.0
      %v655 = vmax.f32 %v623, 0.0
      %v656 = vmax.f32 %v624, 0.0
      %v657 = vmax.f32 %v625, 0.0
      %v658 = vmax.f32 %v626, 0.0
      %v659 = vmax.f32 %v627, 0.0
      %v660 = vmax.f32 %v628, 0.0
      %v661 = vmax.f32 %v629, 0.0
      %v662 = vmax.f32 %v630, 0.0
      %v663 = vmax.f32 %v631, 0.0
      %v664 = vmax.f32 %v632, 0.0
      %v665 = vmax.f32 %v633, 0.0
      %v666 = vmax.f32 %v634, 0.0
      %v667 = vmax.f32 %v635, 0.0
      %v668 = vmax.f32 %v636, 0.0
      %v669 = vmax.f32 %v637, 0.0
      %v670 = vmax.f32 %v638, 0.0
      %v671 = vmax.f32 %v639, 0.0
      %v672 = vmax.f32 %v640, 0.0
      %v673 = vmax.f32 %v641, 0.0
      %v674 = vmax.f32 %v642, 0.0
      %v675 = vmax.f32 %v643, 0.0
      %v676 = vmax.f32 %v644, 0.0
      %v677 = vmax.f32 %v645, 0.0
      %s678 = scalar_lea.vmem [#allocation2], 24
      %vm679 = vcmask 64512
      %680 = vst.msk [vmem:[%s678 + $0x1] sm:$0xff] %vm679, %v646
      %681 = vst.msk [vmem:[%s678 + $0x9] sm:$0xff] %vm679, %v647
      %682 = vst.msk [vmem:[%s678 + $0x19] sm:$0xff] %vm679, %v648
      %683 = vst.msk [vmem:[%s678 + $0x21] sm:$0xff] %vm679, %v649
      %684 = vst.msk [vmem:[%s678 + $0x31] sm:$0xff] %vm679, %v650
      %685 = vst.msk [vmem:[%s678 + $0x39] sm:$0xff] %vm679, %v651
      %686 = vst.msk [vmem:[%s678 + $0x49] sm:$0xff] %vm679, %v652
      %687 = vst.msk [vmem:[%s678 + $0x51] sm:$0xff] %vm679, %v653
      %688 = vst.msk [vmem:[%s678 + $0x61] sm:$0xff] %vm679, %v654
      %689 = vst.msk [vmem:[%s678 + $0x69] sm:$0xff] %vm679, %v655
      %690 = vst.msk [vmem:[%s678 + $0x79] sm:$0xff] %vm679, %v656
      %691 = vst.msk [vmem:[%s678 + $0x81] sm:$0xff] %vm679, %v657
      %692 = vst.msk [vmem:[%s678 + $0x91] sm:$0xff] %vm679, %v658
      %693 = vst.msk [vmem:[%s678 + $0x99] sm:$0xff] %vm679, %v659
      %694 = vst.msk [vmem:[%s678 + $0xa9] sm:$0xff] %vm679, %v660
      %695 = vst.msk [vmem:[%s678 + $0xb1] sm:$0xff] %vm679, %v661
      %696 = vst.msk [vmem:[%s678 + $0xc1] sm:$0xff] %vm679, %v662
      %697 = vst.msk [vmem:[%s678 + $0xc9] sm:$0xff] %vm679, %v663
      %698 = vst.msk [vmem:[%s678 + $0xd9] sm:$0xff] %vm679, %v664
      %699 = vst.msk [vmem:[%s678 + $0xe1] sm:$0xff] %vm679, %v665
      %700 = vst.msk [vmem:[%s678 + $0xf1] sm:$0xff] %vm679, %v666
      %701 = vst.msk [vmem:[%s678 + $0xf9] sm:$0xff] %vm679, %v667
      %702 = vst.msk [vmem:[%s678 + $0x109] sm:$0xff] %vm679, %v668
      %703 = vst.msk [vmem:[%s678 + $0x111] sm:$0xff] %vm679, %v669
      %704 = vst.msk [vmem:[%s678 + $0x121] sm:$0xff] %vm679, %v670
      %705 = vst.msk [vmem:[%s678 + $0x129] sm:$0xff] %vm679, %v671
      %706 = vst.msk [vmem:[%s678 + $0x139] sm:$0xff] %vm679, %v672
      %707 = vst.msk [vmem:[%s678 + $0x141] sm:$0xff] %vm679, %v673
      %708 = vst.msk [vmem:[%s678 + $0x151] sm:$0xff] %vm679, %v674
      %709 = vst.msk [vmem:[%s678 + $0x159] sm:$0xff] %vm679, %v675
      %710 = vst.msk [vmem:[%s678 + $0x169] sm:$0xff] %vm679, %v676
      %711 = vst.msk [vmem:[%s678 + $0x171] sm:$0xff] %vm679, %v677
      %v712 = vld [vmem:[%s426] sm:$0xf]
      %v713 = vld [vmem:[%s426 + $0x4] sm:$0xf]
      %v714 = vunpack.c.l.bf16 %v712
      %v715 = vunpack.c.l.bf16 %v713
      %v716 = vmul.f32 %v714, %v574
      %v717 = vmul.f32 %v715, %v574
      %v718 = vadd.f32 %v716, %v612
      %v719 = vadd.f32 %v717, %v612
      %v720 = vmax.f32 %v718, 0.0
      %v721 = vmax.f32 %v719, 0.0
      %v722 = vld [vmem:[%s443] sm:$0xf]
      %v723 = vld [vmem:[%s443 + $0x4] sm:$0xf]
      %v724 = vunpack.c.l.bf16 %v722
      %v725 = vunpack.c.l.bf16 %v723
      %v726 = vmul.f32 %v724, %v574
      %v727 = vmul.f32 %v725, %v574
      %v728 = vadd.f32 %v726, %v612
      %v729 = vadd.f32 %v727, %v612
      %v730 = vmax.f32 %v728, 0.0
      %v731 = vmax.f32 %v729, 0.0
      %p732 = scmp.gt.s32.totalorder %s24, 0
      %s733 = scalar_select %p732, 1, 0
      %v734 = vstv %s733
      %vm735 = vcmp.eq.s32.totalorder %v734, 1
      %v736 = vsel %vm735, %v720, 0.0
      %v737 = vsel %vm735, %v721, 0.0
      %738 = vst.msk [vmem:[#allocation2 + $0x1] sm:$0xff] %vm679, %v736
      %739 = vst.msk [vmem:[#allocation2 + $0x9] sm:$0xff] %vm679, %v737
      %p740 = scmp.lt.s32.totalorder %s24, 0
      %s741 = scalar_select %p740, 1, 0
      %v742 = vstv %s741
      %vm743 = vcmp.eq.s32.totalorder %v742, 1
      %v744 = vsel %vm743, %v730, 0.0
      %v745 = vsel %vm743, %v731, 0.0
      %s746 = scalar_lea.vmem [#allocation2], 408
      %747 = vst.msk [vmem:[%s746 + $0x1] sm:$0xff] %vm679, %v744
      %748 = vst.msk [vmem:[%s746 + $0x9] sm:$0xff] %vm679, %v745
      %v749 = vld [vmem:[#allocation2] sm:$0xff]
      %v750 = vld [vmem:[#allocation2 + $0x8] sm:$0xff]
      %v751 = vld [vmem:[#allocation2 + $0x18] sm:$0xff]
      %v752 = vld [vmem:[#allocation2 + $0x20] sm:$0xff]
      %v753 = vld [vmem:[#allocation2 + $0x30] sm:$0xff]
      %v754 = vld [vmem:[#allocation2 + $0x38] sm:$0xff]
      %v755 = vld [vmem:[#allocation2 + $0x48] sm:$0xff]
      %v756 = vld [vmem:[#allocation2 + $0x50] sm:$0xff]
      %v757 = vld [vmem:[#allocation2 + $0x60] sm:$0xff]
      %v758 = vld [vmem:[#allocation2 + $0x68] sm:$0xff]
      %v759 = vld [vmem:[#allocation2 + $0x78] sm:$0xff]
      %v760 = vld [vmem:[#allocation2 + $0x80] sm:$0xff]
      %v761 = vld [vmem:[#allocation2 + $0x90] sm:$0xff]
      %v762 = vld [vmem:[#allocation2 + $0x98] sm:$0xff]
      %v763 = vld [vmem:[#allocation2 + $0xa8] sm:$0xff]
      %v764 = vld [vmem:[#allocation2 + $0xb0] sm:$0xff]
      %v765 = vld [vmem:[#allocation2 + $0xc0] sm:$0xff]
      %v766 = vld [vmem:[#allocation2 + $0xc8] sm:$0xff]
      %v767 = vld [vmem:[#allocation2 + $0xd8] sm:$0xff]
      %v768 = vld [vmem:[#allocation2 + $0xe0] sm:$0xff]
      %v769 = vld [vmem:[#allocation2 + $0xf0] sm:$0xff]
      %v770 = vld [vmem:[#allocation2 + $0xf8] sm:$0xff]
      %v771 = vld [vmem:[#allocation2 + $0x108] sm:$0xff]
      %v772 = vld [vmem:[#allocation2 + $0x110] sm:$0xff]
      %v773 = vld [vmem:[#allocation2 + $0x120] sm:$0xff]
      %v774 = vld [vmem:[#allocation2 + $0x128] sm:$0xff]
      %v775 = vld [vmem:[#allocation2 + $0x138] sm:$0xff]
      %v776 = vld [vmem:[#allocation2 + $0x140] sm:$0xff]
      %v777 = vld [vmem:[#allocation2 + $0x150] sm:$0xff]
      %v778 = vld [vmem:[#allocation2 + $0x158] sm:$0xff]
      %v779 = vld [vmem:[#allocation2 + $0x168] sm:$0xff]
      %v780 = vld [vmem:[#allocation2 + $0x170] sm:$0xff]
      %v781 = vpack.c.bf16 %v750, %v749
      %v782 = vpack.c.bf16 %v752, %v751
      %v783 = vpack.c.bf16 %v754, %v753
      %v784 = vpack.c.bf16 %v756, %v755
      %v785 = vpack.c.bf16 %v758, %v757
      %v786 = vpack.c.bf16 %v760, %v759
      %v787 = vpack.c.bf16 %v762, %v761
      %v788 = vpack.c.bf16 %v764, %v763
      %v789 = vpack.c.bf16 %v766, %v765
      %v790 = vpack.c.bf16 %v768, %v767
      %v791 = vpack.c.bf16 %v770, %v769
      %v792 = vpack.c.bf16 %v772, %v771
      %v793 = vpack.c.bf16 %v774, %v773
      %v794 = vpack.c.bf16 %v776, %v775
      %v795 = vpack.c.bf16 %v778, %v777
      %v796 = vpack.c.bf16 %v780, %v779
      %v797 = vld [vmem:[%s3] sm:$0xf]
      %v798 = vld [vmem:[#allocation2 + $0x1] sm:$0xff]
      %v799 = vld [vmem:[#allocation2 + $0x9] sm:$0xff]
      %v800 = vld [vmem:[#allocation2 + $0x19] sm:$0xff]
      %v801 = vld [vmem:[#allocation2 + $0x21] sm:$0xff]
      %v802 = vld [vmem:[#allocation2 + $0x31] sm:$0xff]
      %v803 = vld [vmem:[#allocation2 + $0x39] sm:$0xff]
      %v804 = vld [vmem:[#allocation2 + $0x49] sm:$0xff]
      %v805 = vld [vmem:[#allocation2 + $0x51] sm:$0xff]
      %v806 = vld [vmem:[#allocation2 + $0x61] sm:$0xff]
      %v807 = vld [vmem:[#allocation2 + $0x69] sm:$0xff]
      %v808 = vld [vmem:[#allocation2 + $0x79] sm:$0xff]
      %v809 = vld [vmem:[#allocation2 + $0x81] sm:$0xff]
      %v810 = vld [vmem:[#allocation2 + $0x91] sm:$0xff]
      %v811 = vld [vmem:[#allocation2 + $0x99] sm:$0xff]
      %v812 = vld [vmem:[#allocation2 + $0xa9] sm:$0xff]
      %v813 = vld [vmem:[#allocation2 + $0xb1] sm:$0xff]
      %v814 = vld [vmem:[#allocation2 + $0xc1] sm:$0xff]
      %v815 = vld [vmem:[#allocation2 + $0xc9] sm:$0xff]
      %v816 = vld [vmem:[#allocation2 + $0xd9] sm:$0xff]
      %v817 = vld [vmem:[#allocation2 + $0xe1] sm:$0xff]
      %v818 = vld [vmem:[#allocation2 + $0xf1] sm:$0xff]
      %v819 = vld [vmem:[#allocation2 + $0xf9] sm:$0xff]
      %v820 = vld [vmem:[#allocation2 + $0x109] sm:$0xff]
      %v821 = vld [vmem:[#allocation2 + $0x111] sm:$0xff]
      %v822 = vld [vmem:[#allocation2 + $0x121] sm:$0xff]
      %v823 = vld [vmem:[#allocation2 + $0x129] sm:$0xff]
      %v824 = vld [vmem:[#allocation2 + $0x139] sm:$0xff]
      %v825 = vld [vmem:[#allocation2 + $0x141] sm:$0xff]
      %v826 = vld [vmem:[#allocation2 + $0x151] sm:$0xff]
      %v827 = vld [vmem:[#allocation2 + $0x159] sm:$0xff]
      %v828 = vld [vmem:[#allocation2 + $0x169] sm:$0xff]
      %v829 = vld [vmem:[#allocation2 + $0x171] sm:$0xff]
      %v830 = vpack.c.bf16 %v799, %v798
      %v831 = vpack.c.bf16 %v801, %v800
      %v832 = vpack.c.bf16 %v803, %v802
      %v833 = vpack.c.bf16 %v805, %v804
      %v834 = vpack.c.bf16 %v807, %v806
      %v835 = vpack.c.bf16 %v809, %v808
      %v836 = vpack.c.bf16 %v811, %v810
      %v837 = vpack.c.bf16 %v813, %v812
      %v838 = vpack.c.bf16 %v815, %v814
      %v839 = vpack.c.bf16 %v817, %v816
      %v840 = vpack.c.bf16 %v819, %v818
      %v841 = vpack.c.bf16 %v821, %v820
      %v842 = vpack.c.bf16 %v823, %v822
      %v843 = vpack.c.bf16 %v825, %v824
      %v844 = vpack.c.bf16 %v827, %v826
      %v845 = vpack.c.bf16 %v829, %v828
      %s846 = scalar_lea.vmem %s3, 4
      %v847 = vld [vmem:[%s846] sm:$0xf]
      %v849 = vsel %vm679, %v830, 0
      %v852 = vsel %vm679, %v831, 0
      %v855 = vsel %vm679, %v832, 0
      %v858 = vsel %vm679, %v833, 0
      %v861 = vsel %vm679, %v834, 0
      %v864 = vsel %vm679, %v835, 0
      %v867 = vsel %vm679, %v836, 0
      %v870 = vsel %vm679, %v837, 0
      %v873 = vsel %vm679, %v838, 0
      %v876 = vsel %vm679, %v839, 0
      %v879 = vsel %vm679, %v840, 0
      %v882 = vsel %vm679, %v841, 0
      %v885 = vsel %vm679, %v842, 0
      %v888 = vsel %vm679, %v843, 0
      %v891 = vsel %vm679, %v844, 0
      %v894 = vsel %vm679, %v845, 0
      %vm896 = vcmask 1043456
      %v898 = vsel %vm896, %v847, 0
      %900 = vmatprep.subr.bf16.mxu0 0
      %901 = vmatpush1.bf16.msra.mxu0 %v898
      %902 = vmatprep.subr.bf16.mxu0 0
      %903 = vmatpush1.bf16.msra.mxu0 0
      %904 = vmatprep.subr.bf16.mxu0 0
      %905 = vmatpush1.bf16.msra.mxu0 0
      %906 = vmatprep.subr.bf16.mxu0 0
      %907 = vmatpush1.bf16.msra.mxu0 0
      %908 = vmatprep.subr.bf16.mxu0 0
      %909 = vmatpush1.bf16.msra.mxu0 0
      %910 = vmatprep.subr.bf16.mxu0 0
      %911 = vmatpush1.bf16.msra.mxu0 0
      %912 = vmatprep.subr.bf16.mxu0 0
      %913 = vmatpush1.bf16.msra.mxu0 0
      %914 = vmatprep.subr.bf16.mxu0 0
      %915 = vmatpush1.bf16.msra.mxu0 0
      %916 = vmatprep.subr.bf16.mxu0 0
      %917 = vmatpush1.bf16.msra.mxu0 0
      %918 = vmatprep.subr.bf16.mxu0 0
      %919 = vmatpush1.bf16.msra.mxu0 0
      %920 = vmatprep.subr.bf16.mxu0 0
      %921 = vmatpush1.bf16.msra.mxu0 0
      %922 = vmatprep.subr.bf16.mxu0 0
      %923 = vmatpush1.bf16.msra.mxu0 0
      %924 = vmatprep.subr.bf16.mxu0 0
      %925 = vmatpush1.bf16.msra.mxu0 0
      %926 = vmatprep.subr.bf16.mxu0 0
      %927 = vmatpush1.bf16.msra.mxu0 0
      %928 = vmatprep.subr.bf16.mxu0 0
      %929 = vmatpush1.bf16.msra.mxu0 0
      %930 = vmatprep.subr.bf16.mxu0 0
      %931 = vmatpush1.bf16.msra.mxu0 0
      %932 = vmatprep.mubr.bf16.mxu0 0
      %933 = vmatmul.mubr.bf16.gmra.mrb[0].mxu0 %v849
      %v934 = vpop.f32.mrb[0].mxu0
      %v935 = vadd.f32 0.0, %v934
      %v936 = vpop.f32.mrb[0].mxu0
      %v937 = vpop.f32.mrb[0].mxu0
      %v938 = vadd.f32 0.0, %v937
      %v939 = vpop.f32.mrb[0].mxu0
      %940 = vmatprep.mubr.bf16.mxu0 0
      %941 = vmatmul.mubr.bf16.gmra.mrb[0].mxu0 %v852
      %v942 = vpop.f32.mrb[0].mxu0
      %v943 = vadd.f32 0.0, %v942
      %v944 = vpop.f32.mrb[0].mxu0
      %v945 = vpop.f32.mrb[0].mxu0
      %v946 = vadd.f32 0.0, %v945
      %v947 = vpop.f32.mrb[0].mxu0
      %948 = vmatprep.mubr.bf16.mxu0 0
      %949 = vmatmul.mubr.bf16.gmra.mrb[0].mxu0 %v855
      %v950 = vpop.f32.mrb[0].mxu0
      %v951 = vadd.f32 0.0, %v950
      %v952 = vpop.f32.mrb[0].mxu0
      %v953 = vpop.f32.mrb[0].mxu0
      %v954 = vadd.f32 0.0, %v953
      %v955 = vpop.f32.mrb[0].mxu0
      %956 = vmatprep.mubr.bf16.mxu0 0
      %957 = vmatmul.mubr.bf16.gmra.mrb[0].mxu0 %v858
      %v958 = vpop.f32.mrb[0].mxu0
      %v959 = vadd.f32 0.0, %v958
      %v960 = vpop.f32.mrb[0].mxu0
      %v961 = vpop.f32.mrb[0].mxu0
      %v962 = vadd.f32 0.0, %v961
      %v963 = vpop.f32.mrb[0].mxu0
      %964 = vmatprep.mubr.bf16.mxu0 0
      %965 = vmatmul.mubr.bf16.gmra.mrb[0].mxu0 %v861
      %v966 = vpop.f32.mrb[0].mxu0
      %v967 = vadd.f32 0.0, %v966
      %v968 = vpop.f32.mrb[0].mxu0
      %v969 = vpop.f32.mrb[0].mxu0
      %v970 = vadd.f32 0.0, %v969
      %v971 = vpop.f32.mrb[0].mxu0
      %972 = vmatprep.mubr.bf16.mxu0 0
      %973 = vmatmul.mubr.bf16.gmra.mrb[0].mxu0 %v864
      %v974 = vpop.f32.mrb[0].mxu0
      %v975 = vadd.f32 0.0, %v974
      %v976 = vpop.f32.mrb[0].mxu0
      %v977 = vpop.f32.mrb[0].mxu0
      %v978 = vadd.f32 0.0, %v977
      %v979 = vpop.f32.mrb[0].mxu0
      %980 = vmatprep.mubr.bf16.mxu0 0
      %981 = vmatmul.mubr.bf16.gmra.mrb[0].mxu0 %v867
      %v982 = vpop.f32.mrb[0].mxu0
      %v983 = vadd.f32 0.0, %v982
      %v984 = vpop.f32.mrb[0].mxu0
      %v985 = vpop.f32.mrb[0].mxu0
      %v986 = vadd.f32 0.0, %v985
      %v987 = vpop.f32.mrb[0].mxu0
      %988 = vmatprep.mubr.bf16.mxu0 0
      %989 = vmatmul.mubr.bf16.gmra.mrb[0].mxu0 %v870
      %v990 = vpop.f32.mrb[0].mxu0
      %v991 = vadd.f32 0.0, %v990
      %v992 = vpop.f32.mrb[0].mxu0
      %v993 = vpop.f32.mrb[0].mxu0
      %v994 = vadd.f32 0.0, %v993
      %v995 = vpop.f32.mrb[0].mxu0
      %996 = vmatprep.mubr.bf16.mxu0 0
      %997 = vmatmul.mubr.bf16.gmra.mrb[0].mxu0 %v873
      %v998 = vpop.f32.mrb[0].mxu0
      %v999 = vadd.f32 0.0, %v998
      %v1000 = vpop.f32.mrb[0].mxu0
      %v1001 = vpop.f32.mrb[0].mxu0
      %v1002 = vadd.f32 0.0, %v1001
      %v1003 = vpop.f32.mrb[0].mxu0
      %1004 = vmatprep.mubr.bf16.mxu0 0
      %1005 = vmatmul.mubr.bf16.gmra.mrb[0].mxu0 %v876
      %v1006 = vpop.f32.mrb[0].mxu0
      %v1007 = vadd.f32 0.0, %v1006
      %v1008 = vpop.f32.mrb[0].mxu0
      %v1009 = vpop.f32.mrb[0].mxu0
      %v1010 = vadd.f32 0.0, %v1009
      %v1011 = vpop.f32.mrb[0].mxu0
      %1012 = vmatprep.mubr.bf16.mxu0 0
      %1013 = vmatmul.mubr.bf16.gmra.mrb[0].mxu0 %v879
      %v1014 = vpop.f32.mrb[0].mxu0
      %v1015 = vadd.f32 0.0, %v1014
      %v1016 = vpop.f32.mrb[0].mxu0
      %v1017 = vpop.f32.mrb[0].mxu0
      %v1018 = vadd.f32 0.0, %v1017
      %v1019 = vpop.f32.mrb[0].mxu0
      %1020 = vmatprep.mubr.bf16.mxu0 0
      %1021 = vmatmul.mubr.bf16.gmra.mrb[0].mxu0 %v882
      %v1022 = vpop.f32.mrb[0].mxu0
      %v1023 = vadd.f32 0.0, %v1022
      %v1024 = vpop.f32.mrb[0].mxu0
      %v1025 = vpop.f32.mrb[0].mxu0
      %v1026 = vadd.f32 0.0, %v1025
      %v1027 = vpop.f32.mrb[0].mxu0
      %1028 = vmatprep.mubr.bf16.mxu0 0
      %1029 = vmatmul.mubr.bf16.gmra.mrb[0].mxu0 %v885
      %v1030 = vpop.f32.mrb[0].mxu0
      %v1031 = vadd.f32 0.0, %v1030
      %v1032 = vpop.f32.mrb[0].mxu0
      %v1033 = vpop.f32.mrb[0].mxu0
      %v1034 = vadd.f32 0.0, %v1033
      %v1035 = vpop.f32.mrb[0].mxu0
      %1036 = vmatprep.mubr.bf16.mxu0 0
      %1037 = vmatmul.mubr.bf16.gmra.mrb[0].mxu0 %v888
      %v1038 = vpop.f32.mrb[0].mxu0
      %v1039 = vadd.f32 0.0, %v1038
      %v1040 = vpop.f32.mrb[0].mxu0
      %v1041 = vpop.f32.mrb[0].mxu0
      %v1042 = vadd.f32 0.0, %v1041
      %v1043 = vpop.f32.mrb[0].mxu0
      %1044 = vmatprep.mubr.bf16.mxu0 0
      %1045 = vmatmul.mubr.bf16.gmra.mrb[0].mxu0 %v891
      %v1046 = vpop.f32.mrb[0].mxu0
      %v1047 = vadd.f32 0.0, %v1046
      %v1048 = vpop.f32.mrb[0].mxu0
      %v1049 = vpop.f32.mrb[0].mxu0
      %v1050 = vadd.f32 0.0, %v1049
      %v1051 = vpop.f32.mrb[0].mxu0
      %1052 = vmatprep.mubr.bf16.mxu0 0
      %1053 = vmatmul.mubr.bf16.gmra.mrb[0].mxu0 %v894
      %v1054 = vpop.f32.mrb[0].mxu0
      %v1055 = vadd.f32 0.0, %v1054
      %v1056 = vpop.f32.mrb[0].mxu0
      %v1057 = vpop.f32.mrb[0].mxu0
      %v1058 = vadd.f32 0.0, %v1057
      %v1059 = vpop.f32.mrb[0].mxu0
      %1060 = vdwg.mxu0
      %v1062 = vsel %vm679, %v781, 0
      %v1065 = vsel %vm679, %v782, 0
      %v1068 = vsel %vm679, %v783, 0
      %v1071 = vsel %vm679, %v784, 0
      %v1074 = vsel %vm679, %v785, 0
      %v1077 = vsel %vm679, %v786, 0
      %v1080 = vsel %vm679, %v787, 0
      %v1083 = vsel %vm679, %v788, 0
      %v1086 = vsel %vm679, %v789, 0
      %v1089 = vsel %vm679, %v790, 0
      %v1092 = vsel %vm679, %v791, 0
      %v1095 = vsel %vm679, %v792, 0
      %v1098 = vsel %vm679, %v793, 0
      %v1101 = vsel %vm679, %v794, 0
      %v1104 = vsel %vm679, %v795, 0
      %v1107 = vsel %vm679, %v796, 0
      %v1110 = vsel %vm896, %v797, 0
      %1112 = vmatprep.subr.bf16.mxu0 0
      %1113 = vmatpush1.bf16.msra.mxu0 %v1110
      %1114 = vmatprep.subr.bf16.mxu0 0
      %1115 = vmatpush1.bf16.msra.mxu0 0
      %1116 = vmatprep.subr.bf16.mxu0 0
      %1117 = vmatpush1.bf16.msra.mxu0 0
      %1118 = vmatprep.subr.bf16.mxu0 0
      %1119 = vmatpush1.bf16.msra.mxu0 0
      %1120 = vmatprep.subr.bf16.mxu0 0
      %1121 = vmatpush1.bf16.msra.mxu0 0
      %1122 = vmatprep.subr.bf16.mxu0 0
      %1123 = vmatpush1.bf16.msra.mxu0 0
      %1124 = vmatprep.subr.bf16.mxu0 0
      %1125 = vmatpush1.bf16.msra.mxu0 0
      %1126 = vmatprep.subr.bf16.mxu0 0
      %1127 = vmatpush1.bf16.msra.mxu0 0
      %1128 = vmatprep.subr.bf16.mxu0 0
      %1129 = vmatpush1.bf16.msra.mxu0 0
      %1130 = vmatprep.subr.bf16.mxu0 0
      %1131 = vmatpush1.bf16.msra.mxu0 0
      %1132 = vmatprep.subr.bf16.mxu0 0
      %1133 = vmatpush1.bf16.msra.mxu0 0
      %1134 = vmatprep.subr.bf16.mxu0 0
      %1135 = vmatpush1.bf16.msra.mxu0 0
      %1136 = vmatprep.subr.bf16.mxu0 0
      %1137 = vmatpush1.bf16.msra.mxu0 0
      %1138 = vmatprep.subr.bf16.mxu0 0
      %1139 = vmatpush1.bf16.msra.mxu0 0
      %1140 = vmatprep.subr.bf16.mxu0 0
      %1141 = vmatpush1.bf16.msra.mxu0 0
      %1142 = vmatprep.subr.bf16.mxu0 0
      %1143 = vmatpush1.bf16.msra.mxu0 0
      %1144 = vmatprep.mubr.bf16.mxu0 0
      %1145 = vmatmul.mubr.bf16.gmra.mrb[0].mxu0 %v1062
      %v1146 = vpop.f32.mrb[0].mxu0
      %v1147 = vadd.f32 %v935, %v1146
      %v1148 = vpop.f32.mrb[0].mxu0
      %v1149 = vpop.f32.mrb[0].mxu0
      %v1150 = vadd.f32 %v938, %v1149
      %v1151 = vpop.f32.mrb[0].mxu0
      %1152 = vmatprep.mubr.bf16.mxu0 0
      %1153 = vmatmul.mubr.bf16.gmra.mrb[0].mxu0 %v1065
      %v1154 = vpop.f32.mrb[0].mxu0
      %v1155 = vadd.f32 %v943, %v1154
      %v1156 = vpop.f32.mrb[0].mxu0
      %v1157 = vpop.f32.mrb[0].mxu0
      %v1158 = vadd.f32 %v946, %v1157
      %v1159 = vpop.f32.mrb[0].mxu0
      %1160 = vmatprep.mubr.bf16.mxu0 0
      %1161 = vmatmul.mubr.bf16.gmra.mrb[0].mxu0 %v1068
      %v1162 = vpop.f32.mrb[0].mxu0
      %v1163 = vadd.f32 %v951, %v1162
      %v1164 = vpop.f32.mrb[0].mxu0
      %v1165 = vpop.f32.mrb[0].mxu0
      %v1166 = vadd.f32 %v954, %v1165
      %v1167 = vpop.f32.mrb[0].mxu0
      %1168 = vmatprep.mubr.bf16.mxu0 0
      %1169 = vmatmul.mubr.bf16.gmra.mrb[0].mxu0 %v1071
      %v1170 = vpop.f32.mrb[0].mxu0
      %v1171 = vadd.f32 %v959, %v1170
      %v1172 = vpop.f32.mrb[0].mxu0
      %v1173 = vpop.f32.mrb[0].mxu0
      %v1174 = vadd.f32 %v962, %v1173
      %v1175 = vpop.f32.mrb[0].mxu0
      %1176 = vmatprep.mubr.bf16.mxu0 0
      %1177 = vmatmul.mubr.bf16.gmra.mrb[0].mxu0 %v1074
      %v1178 = vpop.f32.mrb[0].mxu0
      %v1179 = vadd.f32 %v967, %v1178
      %v1180 = vpop.f32.mrb[0].mxu0
      %v1181 = vpop.f32.mrb[0].mxu0
      %v1182 = vadd.f32 %v970, %v1181
      %v1183 = vpop.f32.mrb[0].mxu0
      %1184 = vmatprep.mubr.bf16.mxu0 0
      %1185 = vmatmul.mubr.bf16.gmra.mrb[0].mxu0 %v1077
      %v1186 = vpop.f32.mrb[0].mxu0
      %v1187 = vadd.f32 %v975, %v1186
      %v1188 = vpop.f32.mrb[0].mxu0
      %v1189 = vpop.f32.mrb[0].mxu0
      %v1190 = vadd.f32 %v978, %v1189
      %v1191 = vpop.f32.mrb[0].mxu0
      %1192 = vmatprep.mubr.bf16.mxu0 0
      %1193 = vmatmul.mubr.bf16.gmra.mrb[0].mxu0 %v1080
      %v1194 = vpop.f32.mrb[0].mxu0
      %v1195 = vadd.f32 %v983, %v1194
      %v1196 = vpop.f32.mrb[0].mxu0
      %v1197 = vpop.f32.mrb[0].mxu0
      %v1198 = vadd.f32 %v986, %v1197
      %v1199 = vpop.f32.mrb[0].mxu0
      %1200 = vmatprep.mubr.bf16.mxu0 0
      %1201 = vmatmul.mubr.bf16.gmra.mrb[0].mxu0 %v1083
      %v1202 = vpop.f32.mrb[0].mxu0
      %v1203 = vadd.f32 %v991, %v1202
      %v1204 = vpop.f32.mrb[0].mxu0
      %v1205 = vpop.f32.mrb[0].mxu0
      %v1206 = vadd.f32 %v994, %v1205
      %v1207 = vpop.f32.mrb[0].mxu0
      %1208 = vmatprep.mubr.bf16.mxu0 0
      %1209 = vmatmul.mubr.bf16.gmra.mrb[0].mxu0 %v1086
      %v1210 = vpop.f32.mrb[0].mxu0
      %v1211 = vadd.f32 %v999, %v1210
      %v1212 = vpop.f32.mrb[0].mxu0
      %v1213 = vpop.f32.mrb[0].mxu0
      %v1214 = vadd.f32 %v1002, %v1213
      %v1215 = vpop.f32.mrb[0].mxu0
      %1216 = vmatprep.mubr.bf16.mxu0 0
      %1217 = vmatmul.mubr.bf16.gmra.mrb[0].mxu0 %v1089
      %v1218 = vpop.f32.mrb[0].mxu0
      %v1219 = vadd.f32 %v1007, %v1218
      %v1220 = vpop.f32.mrb[0].mxu0
      %v1221 = vpop.f32.mrb[0].mxu0
      %v1222 = vadd.f32 %v1010, %v1221
      %v1223 = vpop.f32.mrb[0].mxu0
      %1224 = vmatprep.mubr.bf16.mxu0 0
      %1225 = vmatmul.mubr.bf16.gmra.mrb[0].mxu0 %v1092
      %v1226 = vpop.f32.mrb[0].mxu0
      %v1227 = vadd.f32 %v1015, %v1226
      %v1228 = vpop.f32.mrb[0].mxu0
      %v1229 = vpop.f32.mrb[0].mxu0
      %v1230 = vadd.f32 %v1018, %v1229
      %v1231 = vpop.f32.mrb[0].mxu0
      %1232 = vmatprep.mubr.bf16.mxu0 0
      %1233 = vmatmul.mubr.bf16.gmra.mrb[0].mxu0 %v1095
      %v1234 = vpop.f32.mrb[0].mxu0
      %v1235 = vadd.f32 %v1023, %v1234
      %v1236 = vpop.f32.mrb[0].mxu0
      %v1237 = vpop.f32.mrb[0].mxu0
      %v1238 = vadd.f32 %v1026, %v1237
      %v1239 = vpop.f32.mrb[0].mxu0
      %1240 = vmatprep.mubr.bf16.mxu0 0
      %1241 = vmatmul.mubr.bf16.gmra.mrb[0].mxu0 %v1098
      %v1242 = vpop.f32.mrb[0].mxu0
      %v1243 = vadd.f32 %v1031, %v1242
      %v1244 = vpop.f32.mrb[0].mxu0
      %v1245 = vpop.f32.mrb[0].mxu0
      %v1246 = vadd.f32 %v1034, %v1245
      %v1247 = vpop.f32.mrb[0].mxu0
      %1248 = vmatprep.mubr.bf16.mxu0 0
      %1249 = vmatmul.mubr.bf16.gmra.mrb[0].mxu0 %v1101
      %v1250 = vpop.f32.mrb[0].mxu0
      %v1251 = vadd.f32 %v1039, %v1250
      %v1252 = vpop.f32.mrb[0].mxu0
      %v1253 = vpop.f32.mrb[0].mxu0
      %v1254 = vadd.f32 %v1042, %v1253
      %v1255 = vpop.f32.mrb[0].mxu0
      %1256 = vmatprep.mubr.bf16.mxu0 0
      %1257 = vmatmul.mubr.bf16.gmra.mrb[0].mxu0 %v1104
      %v1258 = vpop.f32.mrb[0].mxu0
      %v1259 = vadd.f32 %v1047, %v1258
      %v1260 = vpop.f32.mrb[0].mxu0
      %v1261 = vpop.f32.mrb[0].mxu0
      %v1262 = vadd.f32 %v1050, %v1261
      %v1263 = vpop.f32.mrb[0].mxu0
      %1264 = vmatprep.mubr.bf16.mxu0 0
      %1265 = vmatmul.mubr.bf16.gmra.mrb[0].mxu0 %v1107
      %v1266 = vpop.f32.mrb[0].mxu0
      %v1267 = vadd.f32 %v1055, %v1266
      %v1268 = vpop.f32.mrb[0].mxu0
      %v1269 = vpop.f32.mrb[0].mxu0
      %v1270 = vadd.f32 %v1058, %v1269
      %v1271 = vpop.f32.mrb[0].mxu0
      %1272 = vdwg.mxu0
      %v1273 = vld [vmem:[#allocation2 + $0x2] sm:$0xff]
      %v1274 = vld [vmem:[#allocation2 + $0xa] sm:$0xff]
      %v1275 = vld [vmem:[#allocation2 + $0x1a] sm:$0xff]
      %v1276 = vld [vmem:[#allocation2 + $0x22] sm:$0xff]
      %v1277 = vld [vmem:[#allocation2 + $0x32] sm:$0xff]
      %v1278 = vld [vmem:[#allocation2 + $0x3a] sm:$0xff]
      %v1279 = vld [vmem:[#allocation2 + $0x4a] sm:$0xff]
      %v1280 = vld [vmem:[#allocation2 + $0x52] sm:$0xff]
      %v1281 = vld [vmem:[#allocation2 + $0x62] sm:$0xff]
      %v1282 = vld [vmem:[#allocation2 + $0x6a] sm:$0xff]
      %v1283 = vld [vmem:[#allocation2 + $0x7a] sm:$0xff]
      %v1284 = vld [vmem:[#allocation2 + $0x82] sm:$0xff]
      %v1285 = vld [vmem:[#allocation2 + $0x92] sm:$0xff]
      %v1286 = vld [vmem:[#allocation2 + $0x9a] sm:$0xff]
      %v1287 = vld [vmem:[#allocation2 + $0xaa] sm:$0xff]
      %v1288 = vld [vmem:[#allocation2 + $0xb2] sm:$0xff]
      %v1289 = vld [vmem:[#allocation2 + $0xc2] sm:$0xff]
      %v1290 = vld [vmem:[#allocation2 + $0xca] sm:$0xff]
      %v1291 = vld [vmem:[#allocation2 + $0xda] sm:$0xff]
      %v1292 = vld [vmem:[#allocation2 + $0xe2] sm:$0xff]
      %v1293 = vld [vmem:[#allocation2 + $0xf2] sm:$0xff]
      %v1294 = vld [vmem:[#allocation2 + $0xfa] sm:$0xff]
      %v1295 = vld [vmem:[#allocation2 + $0x10a] sm:$0xff]
      %v1296 = vld [vmem:[#allocation2 + $0x112] sm:$0xff]
      %v1297 = vld [vmem:[#allocation2 + $0x122] sm:$0xff]
      %v1298 = vld [vmem:[#allocation2 + $0x12a] sm:$0xff]
      %v1299 = vld [vmem:[#allocation2 + $0x13a] sm:$0xff]
      %v1300 = vld [vmem:[#allocation2 + $0x142] sm:$0xff]
      %v1301 = vld [vmem:[#allocation2 + $0x152] sm:$0xff]
      %v1302 = vld [vmem:[#allocation2 + $0x15a] sm:$0xff]
      %v1303 = vld [vmem:[#allocation2 + $0x16a] sm:$0xff]
      %v1304 = vld [vmem:[#allocation2 + $0x172] sm:$0xff]
      %v1305 = vpack.c.bf16 %v1274, %v1273
      %v1306 = vpack.c.bf16 %v1276, %v1275
      %v1307 = vpack.c.bf16 %v1278, %v1277
      %v1308 = vpack.c.bf16 %v1280, %v1279
      %v1309 = vpack.c.bf16 %v1282, %v1281
      %v1310 = vpack.c.bf16 %v1284, %v1283
      %v1311 = vpack.c.bf16 %v1286, %v1285
      %v1312 = vpack.c.bf16 %v1288, %v1287
      %v1313 = vpack.c.bf16 %v1290, %v1289
      %v1314 = vpack.c.bf16 %v1292, %v1291
      %v1315 = vpack.c.bf16 %v1294, %v1293
      %v1316 = vpack.c.bf16 %v1296, %v1295
      %v1317 = vpack.c.bf16 %v1298, %v1297
      %v1318 = vpack.c.bf16 %v1300, %v1299
      %v1319 = vpack.c.bf16 %v1302, %v1301
      %v1320 = vpack.c.bf16 %v1304, %v1303
      %s1321 = scalar_lea.vmem %s3, 8
      %v1322 = vld [vmem:[%s1321] sm:$0xf]
      %v1324 = vsel %vm679, %v1305, 0
      %v1327 = vsel %vm679, %v1306, 0
      %v1330 = vsel %vm679, %v1307, 0
      %v1333 = vsel %vm679, %v1308, 0
      %v1336 = vsel %vm679, %v1309, 0
      %v1339 = vsel %vm679, %v1310, 0
      %v1342 = vsel %vm679, %v1311, 0
      %v1345 = vsel %vm679, %v1312, 0
      %v1348 = vsel %vm679, %v1313, 0
      %v1351 = vsel %vm679, %v1314, 0
      %v1354 = vsel %vm679, %v1315, 0
      %v1357 = vsel %vm679, %v1316, 0
      %v1360 = vsel %vm679, %v1317, 0
      %v1363 = vsel %vm679, %v1318, 0
      %v1366 = vsel %vm679, %v1319, 0
      %v1369 = vsel %vm679, %v1320, 0
      %v1372 = vsel %vm896, %v1322, 0
      %1374 = vmatprep.subr.bf16.mxu0 0
      %1375 = vmatpush1.bf16.msra.mxu0 %v1372
      %1376 = vmatprep.subr.bf16.mxu0 0
      %1377 = vmatpush1.bf16.msra.mxu0 0
      %1378 = vmatprep.subr.bf16.mxu0 0
      %1379 = vmatpush1.bf16.msra.mxu0 0
      %1380 = vmatprep.subr.bf16.mxu0 0
      %1381 = vmatpush1.bf16.msra.mxu0 0
      %1382 = vmatprep.subr.bf16.mxu0 0
      %1383 = vmatpush1.bf16.msra.mxu0 0
      %1384 = vmatprep.subr.bf16.mxu0 0
      %1385 = vmatpush1.bf16.msra.mxu0 0
      %1386 = vmatprep.subr.bf16.mxu0 0
      %1387 = vmatpush1.bf16.msra.mxu0 0
      %1388 = vmatprep.subr.bf16.mxu0 0
      %1389 = vmatpush1.bf16.msra.mxu0 0
      %1390 = vmatprep.subr.bf16.mxu0 0
      %1391 = vmatpush1.bf16.msra.mxu0 0
      %1392 = vmatprep.subr.bf16.mxu0 0
      %1393 = vmatpush1.bf16.msra.mxu0 0
      %1394 = vmatprep.subr.bf16.mxu0 0
      %1395 = vmatpush1.bf16.msra.mxu0 0
      %1396 = vmatprep.subr.bf16.mxu0 0
      %1397 = vmatpush1.bf16.msra.mxu0 0
      %1398 = vmatprep.subr.bf16.mxu0 0
      %1399 = vmatpush1.bf16.msra.mxu0 0
      %1400 = vmatprep.subr.bf16.mxu0 0
      %1401 = vmatpush1.bf16.msra.mxu0 0
      %1402 = vmatprep.subr.bf16.mxu0 0
      %1403 = vmatpush1.bf16.msra.mxu0 0
      %1404 = vmatprep.subr.bf16.mxu0 0
      %1405 = vmatpush1.bf16.msra.mxu0 0
      %1406 = vmatprep.mubr.bf16.mxu0 0
      %1407 = vmatmul.mubr.bf16.gmra.mrb[0].mxu0 %v1324
      %v1408 = vpop.f32.mrb[0].mxu0
      %v1409 = vadd.f32 0.0, %v1408
      %v1410 = vpop.f32.mrb[0].mxu0
      %v1411 = vpop.f32.mrb[0].mxu0
      %v1412 = vadd.f32 0.0, %v1411
      %v1413 = vpop.f32.mrb[0].mxu0
      %1414 = vmatprep.mubr.bf16.mxu0 0
      %1415 = vmatmul.mubr.bf16.gmra.mrb[0].mxu0 %v1327
      %v1416 = vpop.f32.mrb[0].mxu0
      %v1417 = vadd.f32 0.0, %v1416
      %v1418 = vpop.f32.mrb[0].mxu0
      %v1419 = vpop.f32.mrb[0].mxu0
      %v1420 = vadd.f32 0.0, %v1419
      %v1421 = vpop.f32.mrb[0].mxu0
      %1422 = vmatprep.mubr.bf16.mxu0 0
      %1423 = vmatmul.mubr.bf16.gmra.mrb[0].mxu0 %v1330
      %v1424 = vpop.f32.mrb[0].mxu0
      %v1425 = vadd.f32 0.0, %v1424
      %v1426 = vpop.f32.mrb[0].mxu0
      %v1427 = vpop.f32.mrb[0].mxu0
      %v1428 = vadd.f32 0.0, %v1427
      %v1429 = vpop.f32.mrb[0].mxu0
      %1430 = vmatprep.mubr.bf16.mxu0 0
      %1431 = vmatmul.mubr.bf16.gmra.mrb[0].mxu0 %v1333
      %v1432 = vpop.f32.mrb[0].mxu0
      %v1433 = vadd.f32 0.0, %v1432
      %v1434 = vpop.f32.mrb[0].mxu0
      %v1435 = vpop.f32.mrb[0].mxu0
      %v1436 = vadd.f32 0.0, %v1435
      %v1437 = vpop.f32.mrb[0].mxu0
      %1438 = vmatprep.mubr.bf16.mxu0 0
      %1439 = vmatmul.mubr.bf16.gmra.mrb[0].mxu0 %v1336
      %v1440 = vpop.f32.mrb[0].mxu0
      %v1441 = vadd.f32 0.0, %v1440
      %v1442 = vpop.f32.mrb[0].mxu0
      %v1443 = vpop.f32.mrb[0].mxu0
      %v1444 = vadd.f32 0.0, %v1443
      %v1445 = vpop.f32.mrb[0].mxu0
      %1446 = vmatprep.mubr.bf16.mxu0 0
      %1447 = vmatmul.mubr.bf16.gmra.mrb[0].mxu0 %v1339
      %v1448 = vpop.f32.mrb[0].mxu0
      %v1449 = vadd.f32 0.0, %v1448
      %v1450 = vpop.f32.mrb[0].mxu0
      %v1451 = vpop.f32.mrb[0].mxu0
      %v1452 = vadd.f32 0.0, %v1451
      %v1453 = vpop.f32.mrb[0].mxu0
      %1454 = vmatprep.mubr.bf16.mxu0 0
      %1455 = vmatmul.mubr.bf16.gmra.mrb[0].mxu0 %v1342
      %v1456 = vpop.f32.mrb[0].mxu0
      %v1457 = vadd.f32 0.0, %v1456
      %v1458 = vpop.f32.mrb[0].mxu0
      %v1459 = vpop.f32.mrb[0].mxu0
      %v1460 = vadd.f32 0.0, %v1459
      %v1461 = vpop.f32.mrb[0].mxu0
      %1462 = vmatprep.mubr.bf16.mxu0 0
      %1463 = vmatmul.mubr.bf16.gmra.mrb[0].mxu0 %v1345
      %v1464 = vpop.f32.mrb[0].mxu0
      %v1465 = vadd.f32 0.0, %v1464
      %v1466 = vpop.f32.mrb[0].mxu0
      %v1467 = vpop.f32.mrb[0].mxu0
      %v1468 = vadd.f32 0.0, %v1467
      %v1469 = vpop.f32.mrb[0].mxu0
      %1470 = vmatprep.mubr.bf16.mxu0 0
      %1471 = vmatmul.mubr.bf16.gmra.mrb[0].mxu0 %v1348
      %v1472 = vpop.f32.mrb[0].mxu0
      %v1473 = vadd.f32 0.0, %v1472
      %v1474 = vpop.f32.mrb[0].mxu0
      %v1475 = vpop.f32.mrb[0].mxu0
      %v1476 = vadd.f32 0.0, %v1475
      %v1477 = vpop.f32.mrb[0].mxu0
      %1478 = vmatprep.mubr.bf16.mxu0 0
      %1479 = vmatmul.mubr.bf16.gmra.mrb[0].mxu0 %v1351
      %v1480 = vpop.f32.mrb[0].mxu0
      %v1481 = vadd.f32 0.0, %v1480
      %v1482 = vpop.f32.mrb[0].mxu0
      %v1483 = vpop.f32.mrb[0].mxu0
      %v1484 = vadd.f32 0.0, %v1483
      %v1485 = vpop.f32.mrb[0].mxu0
      %1486 = vmatprep.mubr.bf16.mxu0 0
      %1487 = vmatmul.mubr.bf16.gmra.mrb[0].mxu0 %v1354
      %v1488 = vpop.f32.mrb[0].mxu0
      %v1489 = vadd.f32 0.0, %v1488
      %v1490 = vpop.f32.mrb[0].mxu0
      %v1491 = vpop.f32.mrb[0].mxu0
      %v1492 = vadd.f32 0.0, %v1491
      %v1493 = vpop.f32.mrb[0].mxu0
      %1494 = vmatprep.mubr.bf16.mxu0 0
      %1495 = vmatmul.mubr.bf16.gmra.mrb[0].mxu0 %v1357
      %v1496 = vpop.f32.mrb[0].mxu0
      %v1497 = vadd.f32 0.0, %v1496
      %v1498 = vpop.f32.mrb[0].mxu0
      %v1499 = vpop.f32.mrb[0].mxu0
      %v1500 = vadd.f32 0.0, %v1499
      %v1501 = vpop.f32.mrb[0].mxu0
      %1502 = vmatprep.mubr.bf16.mxu0 0
      %1503 = vmatmul.mubr.bf16.gmra.mrb[0].mxu0 %v1360
      %v1504 = vpop.f32.mrb[0].mxu0
      %v1505 = vadd.f32 0.0, %v1504
      %v1506 = vpop.f32.mrb[0].mxu0
      %v1507 = vpop.f32.mrb[0].mxu0
      %v1508 = vadd.f32 0.0, %v1507
      %v1509 = vpop.f32.mrb[0].mxu0
      %1510 = vmatprep.mubr.bf16.mxu0 0
      %1511 = vmatmul.mubr.bf16.gmra.mrb[0].mxu0 %v1363
      %v1512 = vpop.f32.mrb[0].mxu0
      %v1513 = vadd.f32 0.0, %v1512
      %v1514 = vpop.f32.mrb[0].mxu0
      %v1515 = vpop.f32.mrb[0].mxu0
      %v1516 = vadd.f32 0.0, %v1515
      %v1517 = vpop.f32.mrb[0].mxu0
      %1518 = vmatprep.mubr.bf16.mxu0 0
      %1519 = vmatmul.mubr.bf16.gmra.mrb[0].mxu0 %v1366
      %v1520 = vpop.f32.mrb[0].mxu0
      %v1521 = vadd.f32 0.0, %v1520
      %v1522 = vpop.f32.mrb[0].mxu0
      %v1523 = vpop.f32.mrb[0].mxu0
      %v1524 = vadd.f32 0.0, %v1523
      %v1525 = vpop.f32.mrb[0].mxu0
      %1526 = vmatprep.mubr.bf16.mxu0 0
      %1527 = vmatmul.mubr.bf16.gmra.mrb[0].mxu0 %v1369
      %v1528 = vpop.f32.mrb[0].mxu0
      %v1529 = vadd.f32 0.0, %v1528
      %v1530 = vpop.f32.mrb[0].mxu0
      %v1531 = vpop.f32.mrb[0].mxu0
      %v1532 = vadd.f32 0.0, %v1531
      %v1533 = vpop.f32.mrb[0].mxu0
      %1534 = vdwg.mxu0
      %v1535 = vadd.f32 %v1147, %v1409
      %v1536 = vadd.f32 %v1150, %v1412
      %v1537 = vadd.f32 %v1155, %v1417
      %v1538 = vadd.f32 %v1158, %v1420
      %v1539 = vadd.f32 %v1163, %v1425
      %v1540 = vadd.f32 %v1166, %v1428
      %v1541 = vadd.f32 %v1171, %v1433
      %v1542 = vadd.f32 %v1174, %v1436
      %v1543 = vadd.f32 %v1179, %v1441
      %v1544 = vadd.f32 %v1182, %v1444
      %v1545 = vadd.f32 %v1187, %v1449
      %v1546 = vadd.f32 %v1190, %v1452
      %v1547 = vadd.f32 %v1195, %v1457
      %v1548 = vadd.f32 %v1198, %v1460
      %v1549 = vadd.f32 %v1203, %v1465
      %v1550 = vadd.f32 %v1206, %v1468
      %v1551 = vadd.f32 %v1211, %v1473
      %v1552 = vadd.f32 %v1214, %v1476
      %v1553 = vadd.f32 %v1219, %v1481
      %v1554 = vadd.f32 %v1222, %v1484
      %v1555 = vadd.f32 %v1227, %v1489
      %v1556 = vadd.f32 %v1230, %v1492
      %v1557 = vadd.f32 %v1235, %v1497
      %v1558 = vadd.f32 %v1238, %v1500
      %v1559 = vadd.f32 %v1243, %v1505
      %v1560 = vadd.f32 %v1246, %v1508
      %v1561 = vadd.f32 %v1251, %v1513
      %v1562 = vadd.f32 %v1254, %v1516
      %v1563 = vadd.f32 %v1259, %v1521
      %v1564 = vadd.f32 %v1262, %v1524
      %v1565 = vadd.f32 %v1267, %v1529
      %v1566 = vadd.f32 %v1270, %v1532
      %v1567 = vld [vmem:[%s678] sm:$0xff]
      %v1568 = vld [vmem:[%s678 + $0x8] sm:$0xff]
      %v1569 = vld [vmem:[%s678 + $0x18] sm:$0xff]
      %v1570 = vld [vmem:[%s678 + $0x20] sm:$0xff]
      %v1571 = vld [vmem:[%s678 + $0x30] sm:$0xff]
      %v1572 = vld [vmem:[%s678 + $0x38] sm:$0xff]
      %v1573 = vld [vmem:[%s678 + $0x48] sm:$0xff]
      %v1574 = vld [vmem:[%s678 + $0x50] sm:$0xff]
      %v1575 = vld [vmem:[%s678 + $0x60] sm:$0xff]
      %v1576 = vld [vmem:[%s678 + $0x68] sm:$0xff]
      %v1577 = vld [vmem:[%s678 + $0x78] sm:$0xff]
      %v1578 = vld [vmem:[%s678 + $0x80] sm:$0xff]
      %v1579 = vld [vmem:[%s678 + $0x90] sm:$0xff]
      %v1580 = vld [vmem:[%s678 + $0x98] sm:$0xff]
      %v1581 = vld [vmem:[%s678 + $0xa8] sm:$0xff]
      %v1582 = vld [vmem:[%s678 + $0xb0] sm:$0xff]
      %v1583 = vld [vmem:[%s678 + $0xc0] sm:$0xff]
      %v1584 = vld [vmem:[%s678 + $0xc8] sm:$0xff]
      %v1585 = vld [vmem:[%s678 + $0xd8] sm:$0xff]
      %v1586 = vld [vmem:[%s678 + $0xe0] sm:$0xff]
      %v1587 = vld [vmem:[%s678 + $0xf0] sm:$0xff]
      %v1588 = vld [vmem:[%s678 + $0xf8] sm:$0xff]
      %v1589 = vld [vmem:[%s678 + $0x108] sm:$0xff]
      %v1590 = vld [vmem:[%s678 + $0x110] sm:$0xff]
      %v1591 = vld [vmem:[%s678 + $0x120] sm:$0xff]
      %v1592 = vld [vmem:[%s678 + $0x128] sm:$0xff]
      %v1593 = vld [vmem:[%s678 + $0x138] sm:$0xff]
      %v1594 = vld [vmem:[%s678 + $0x140] sm:$0xff]
      %v1595 = vld [vmem:[%s678 + $0x150] sm:$0xff]
      %v1596 = vld [vmem:[%s678 + $0x158] sm:$0xff]
      %v1597 = vld [vmem:[%s678 + $0x168] sm:$0xff]
      %v1598 = vld [vmem:[%s678 + $0x170] sm:$0xff]
      %v1599 = vpack.c.bf16 %v1568, %v1567
      %v1600 = vpack.c.bf16 %v1570, %v1569
      %v1601 = vpack.c.bf16 %v1572, %v1571
      %v1602 = vpack.c.bf16 %v1574, %v1573
      %v1603 = vpack.c.bf16 %v1576, %v1575
      %v1604 = vpack.c.bf16 %v1578, %v1577
      %v1605 = vpack.c.bf16 %v1580, %v1579
      %v1606 = vpack.c.bf16 %v1582, %v1581
      %v1607 = vpack.c.bf16 %v1584, %v1583
      %v1608 = vpack.c.bf16 %v1586, %v1585
      %v1609 = vpack.c.bf16 %v1588, %v1587
      %v1610 = vpack.c.bf16 %v1590, %v1589
      %v1611 = vpack.c.bf16 %v1592, %v1591
      %v1612 = vpack.c.bf16 %v1594, %v1593
      %v1613 = vpack.c.bf16 %v1596, %v1595
      %v1614 = vpack.c.bf16 %v1598, %v1597
      %s1615 = scalar_lea.vmem %s3, 12
      %v1616 = vld [vmem:[%s1615] sm:$0xf]
      %v1618 = vsel %vm679, %v1599, 0
      %v1621 = vsel %vm679, %v1600, 0
      %v1624 = vsel %vm679, %v1601, 0
      %v1627 = vsel %vm679, %v1602, 0
      %v1630 = vsel %vm679, %v1603, 0
      %v1633 = vsel %vm679, %v1604, 0
      %v1636 = vsel %vm679, %v1605, 0
      %v1639 = vsel %vm679, %v1606, 0
      %v1642 = vsel %vm679, %v1607, 0
      %v1645 = vsel %vm679, %v1608, 0
      %v1648 = vsel %vm679, %v1609, 0
      %v1651 = vsel %vm679, %v1610, 0
      %v1654 = vsel %vm679, %v1611, 0
      %v1657 = vsel %vm679, %v1612, 0
      %v1660 = vsel %vm679, %v1613, 0
      %v1663 = vsel %vm679, %v1614, 0
      %v1666 = vsel %vm896, %v1616, 0
      %1668 = vmatprep.subr.bf16.mxu0 0
      %1669 = vmatpush1.bf16.msra.mxu0 %v1666
      %1670 = vmatprep.subr.bf16.mxu0 0
      %1671 = vmatpush1.bf16.msra.mxu0 0
      %1672 = vmatprep.subr.bf16.mxu0 0
      %1673 = vmatpush1.bf16.msra.mxu0 0
      %1674 = vmatprep.subr.bf16.mxu0 0
      %1675 = vmatpush1.bf16.msra.mxu0 0
      %1676 = vmatprep.subr.bf16.mxu0 0
      %1677 = vmatpush1.bf16.msra.mxu0 0
      %1678 = vmatprep.subr.bf16.mxu0 0
      %1679 = vmatpush1.bf16.msra.mxu0 0
      %1680 = vmatprep.subr.bf16.mxu0 0
      %1681 = vmatpush1.bf16.msra.mxu0 0
      %1682 = vmatprep.subr.bf16.mxu0 0
      %1683 = vmatpush1.bf16.msra.mxu0 0
      %1684 = vmatprep.subr.bf16.mxu0 0
      %1685 = vmatpush1.bf16.msra.mxu0 0
      %1686 = vmatprep.subr.bf16.mxu0 0
      %1687 = vmatpush1.bf16.msra.mxu0 0
      %1688 = vmatprep.subr.bf16.mxu0 0
      %1689 = vmatpush1.bf16.msra.mxu0 0
      %1690 = vmatprep.subr.bf16.mxu0 0
      %1691 = vmatpush1.bf16.msra.mxu0 0
      %1692 = vmatprep.subr.bf16.mxu0 0
      %1693 = vmatpush1.bf16.msra.mxu0 0
      %1694 = vmatprep.subr.bf16.mxu0 0
      %1695 = vmatpush1.bf16.msra.mxu0 0
      %1696 = vmatprep.subr.bf16.mxu0 0
      %1697 = vmatpush1.bf16.msra.mxu0 0
      %1698 = vmatprep.subr.bf16.mxu0 0
      %1699 = vmatpush1.bf16.msra.mxu0 0
      %1700 = vmatprep.mubr.bf16.mxu0 0
      %1701 = vmatmul.mubr.bf16.gmra.mrb[0].mxu0 %v1618
      %v1702 = vpop.f32.mrb[0].mxu0
      %v1703 = vadd.f32 0.0, %v1702
      %v1704 = vpop.f32.mrb[0].mxu0
      %v1705 = vpop.f32.mrb[0].mxu0
      %v1706 = vadd.f32 0.0, %v1705
      %v1707 = vpop.f32.mrb[0].mxu0
      %1708 = vmatprep.mubr.bf16.mxu0 0
      %1709 = vmatmul.mubr.bf16.gmra.mrb[0].mxu0 %v1621
      %v1710 = vpop.f32.mrb[0].mxu0
      %v1711 = vadd.f32 0.0, %v1710
      %v1712 = vpop.f32.mrb[0].mxu0
      %v1713 = vpop.f32.mrb[0].mxu0
      %v1714 = vadd.f32 0.0, %v1713
      %v1715 = vpop.f32.mrb[0].mxu0
      %1716 = vmatprep.mubr.bf16.mxu0 0
      %1717 = vmatmul.mubr.bf16.gmra.mrb[0].mxu0 %v1624
      %v1718 = vpop.f32.mrb[0].mxu0
      %v1719 = vadd.f32 0.0, %v1718
      %v1720 = vpop.f32.mrb[0].mxu0
      %v1721 = vpop.f32.mrb[0].mxu0
      %v1722 = vadd.f32 0.0, %v1721
      %v1723 = vpop.f32.mrb[0].mxu0
      %1724 = vmatprep.mubr.bf16.mxu0 0
      %1725 = vmatmul.mubr.bf16.gmra.mrb[0].mxu0 %v1627
      %v1726 = vpop.f32.mrb[0].mxu0
      %v1727 = vadd.f32 0.0, %v1726
      %v1728 = vpop.f32.mrb[0].mxu0
      %v1729 = vpop.f32.mrb[0].mxu0
      %v1730 = vadd.f32 0.0, %v1729
      %v1731 = vpop.f32.mrb[0].mxu0
      %1732 = vmatprep.mubr.bf16.mxu0 0
      %1733 = vmatmul.mubr.bf16.gmra.mrb[0].mxu0 %v1630
      %v1734 = vpop.f32.mrb[0].mxu0
      %v1735 = vadd.f32 0.0, %v1734
      %v1736 = vpop.f32.mrb[0].mxu0
      %v1737 = vpop.f32.mrb[0].mxu0
      %v1738 = vadd.f32 0.0, %v1737
      %v1739 = vpop.f32.mrb[0].mxu0
      %1740 = vmatprep.mubr.bf16.mxu0 0
      %1741 = vmatmul.mubr.bf16.gmra.mrb[0].mxu0 %v1633
      %v1742 = vpop.f32.mrb[0].mxu0
      %v1743 = vadd.f32 0.0, %v1742
      %v1744 = vpop.f32.mrb[0].mxu0
      %v1745 = vpop.f32.mrb[0].mxu0
      %v1746 = vadd.f32 0.0, %v1745
      %v1747 = vpop.f32.mrb[0].mxu0
      %1748 = vmatprep.mubr.bf16.mxu0 0
      %1749 = vmatmul.mubr.bf16.gmra.mrb[0].mxu0 %v1636
      %v1750 = vpop.f32.mrb[0].mxu0
      %v1751 = vadd.f32 0.0, %v1750
      %v1752 = vpop.f32.mrb[0].mxu0
      %v1753 = vpop.f32.mrb[0].mxu0
      %v1754 = vadd.f32 0.0, %v1753
      %v1755 = vpop.f32.mrb[0].mxu0
      %1756 = vmatprep.mubr.bf16.mxu0 0
      %1757 = vmatmul.mubr.bf16.gmra.mrb[0].mxu0 %v1639
      %v1758 = vpop.f32.mrb[0].mxu0
      %v1759 = vadd.f32 0.0, %v1758
      %v1760 = vpop.f32.mrb[0].mxu0
      %v1761 = vpop.f32.mrb[0].mxu0
      %v1762 = vadd.f32 0.0, %v1761
      %v1763 = vpop.f32.mrb[0].mxu0
      %1764 = vmatprep.mubr.bf16.mxu0 0
      %1765 = vmatmul.mubr.bf16.gmra.mrb[0].mxu0 %v1642
      %v1766 = vpop.f32.mrb[0].mxu0
      %v1767 = vadd.f32 0.0, %v1766
      %v1768 = vpop.f32.mrb[0].mxu0
      %v1769 = vpop.f32.mrb[0].mxu0
      %v1770 = vadd.f32 0.0, %v1769
      %v1771 = vpop.f32.mrb[0].mxu0
      %1772 = vmatprep.mubr.bf16.mxu0 0
      %1773 = vmatmul.mubr.bf16.gmra.mrb[0].mxu0 %v1645
      %v1774 = vpop.f32.mrb[0].mxu0
      %v1775 = vadd.f32 0.0, %v1774
      %v1776 = vpop.f32.mrb[0].mxu0
      %v1777 = vpop.f32.mrb[0].mxu0
      %v1778 = vadd.f32 0.0, %v1777
      %v1779 = vpop.f32.mrb[0].mxu0
      %1780 = vmatprep.mubr.bf16.mxu0 0
      %1781 = vmatmul.mubr.bf16.gmra.mrb[0].mxu0 %v1648
      %v1782 = vpop.f32.mrb[0].mxu0
      %v1783 = vadd.f32 0.0, %v1782
      %v1784 = vpop.f32.mrb[0].mxu0
      %v1785 = vpop.f32.mrb[0].mxu0
      %v1786 = vadd.f32 0.0, %v1785
      %v1787 = vpop.f32.mrb[0].mxu0
      %1788 = vmatprep.mubr.bf16.mxu0 0
      %1789 = vmatmul.mubr.bf16.gmra.mrb[0].mxu0 %v1651
      %v1790 = vpop.f32.mrb[0].mxu0
      %v1791 = vadd.f32 0.0, %v1790
      %v1792 = vpop.f32.mrb[0].mxu0
      %v1793 = vpop.f32.mrb[0].mxu0
      %v1794 = vadd.f32 0.0, %v1793
      %v1795 = vpop.f32.mrb[0].mxu0
      %1796 = vmatprep.mubr.bf16.mxu0 0
      %1797 = vmatmul.mubr.bf16.gmra.mrb[0].mxu0 %v1654
      %v1798 = vpop.f32.mrb[0].mxu0
      %v1799 = vadd.f32 0.0, %v1798
      %v1800 = vpop.f32.mrb[0].mxu0
      %v1801 = vpop.f32.mrb[0].mxu0
      %v1802 = vadd.f32 0.0, %v1801
      %v1803 = vpop.f32.mrb[0].mxu0
      %1804 = vmatprep.mubr.bf16.mxu0 0
      %1805 = vmatmul.mubr.bf16.gmra.mrb[0].mxu0 %v1657
      %v1806 = vpop.f32.mrb[0].mxu0
      %v1807 = vadd.f32 0.0, %v1806
      %v1808 = vpop.f32.mrb[0].mxu0
      %v1809 = vpop.f32.mrb[0].mxu0
      %v1810 = vadd.f32 0.0, %v1809
      %v1811 = vpop.f32.mrb[0].mxu0
      %1812 = vmatprep.mubr.bf16.mxu0 0
      %1813 = vmatmul.mubr.bf16.gmra.mrb[0].mxu0 %v1660
      %v1814 = vpop.f32.mrb[0].mxu0
      %v1815 = vadd.f32 0.0, %v1814
      %v1816 = vpop.f32.mrb[0].mxu0
      %v1817 = vpop.f32.mrb[0].mxu0
      %v1818 = vadd.f32 0.0, %v1817
      %v1819 = vpop.f32.mrb[0].mxu0
      %1820 = vmatprep.mubr.bf16.mxu0 0
      %1821 = vmatmul.mubr.bf16.gmra.mrb[0].mxu0 %v1663
      %v1822 = vpop.f32.mrb[0].mxu0
      %v1823 = vadd.f32 0.0, %v1822
      %v1824 = vpop.f32.mrb[0].mxu0
      %v1825 = vpop.f32.mrb[0].mxu0
      %v1826 = vadd.f32 0.0, %v1825
      %v1827 = vpop.f32.mrb[0].mxu0
      %1828 = vdwg.mxu0
      %v1829 = vadd.f32 %v1535, %v1703
      %v1830 = vadd.f32 %v1536, %v1706
      %v1831 = vadd.f32 %v1537, %v1711
      %v1832 = vadd.f32 %v1538, %v1714
      %v1833 = vadd.f32 %v1539, %v1719
      %v1834 = vadd.f32 %v1540, %v1722
      %v1835 = vadd.f32 %v1541, %v1727
      %v1836 = vadd.f32 %v1542, %v1730
      %v1837 = vadd.f32 %v1543, %v1735
      %v1838 = vadd.f32 %v1544, %v1738
      %v1839 = vadd.f32 %v1545, %v1743
      %v1840 = vadd.f32 %v1546, %v1746
      %v1841 = vadd.f32 %v1547, %v1751
      %v1842 = vadd.f32 %v1548, %v1754
      %v1843 = vadd.f32 %v1549, %v1759
      %v1844 = vadd.f32 %v1550, %v1762
      %v1845 = vadd.f32 %v1551, %v1767
      %v1846 = vadd.f32 %v1552, %v1770
      %v1847 = vadd.f32 %v1553, %v1775
      %v1848 = vadd.f32 %v1554, %v1778
      %v1849 = vadd.f32 %v1555, %v1783
      %v1850 = vadd.f32 %v1556, %v1786
      %v1851 = vadd.f32 %v1557, %v1791
      %v1852 = vadd.f32 %v1558, %v1794
      %v1853 = vadd.f32 %v1559, %v1799
      %v1854 = vadd.f32 %v1560, %v1802
      %v1855 = vadd.f32 %v1561, %v1807
      %v1856 = vadd.f32 %v1562, %v1810
      %v1857 = vadd.f32 %v1563, %v1815
      %v1858 = vadd.f32 %v1564, %v1818
      %v1859 = vadd.f32 %v1565, %v1823
      %v1860 = vadd.f32 %v1566, %v1826
      %v1861 = vld [vmem:[%s678 + $0x1] sm:$0xff]
      %v1862 = vld [vmem:[%s678 + $0x9] sm:$0xff]
      %v1863 = vld [vmem:[%s678 + $0x19] sm:$0xff]
      %v1864 = vld [vmem:[%s678 + $0x21] sm:$0xff]
      %v1865 = vld [vmem:[%s678 + $0x31] sm:$0xff]
      %v1866 = vld [vmem:[%s678 + $0x39] sm:$0xff]
      %v1867 = vld [vmem:[%s678 + $0x49] sm:$0xff]
      %v1868 = vld [vmem:[%s678 + $0x51] sm:$0xff]
      %v1869 = vld [vmem:[%s678 + $0x61] sm:$0xff]
      %v1870 = vld [vmem:[%s678 + $0x69] sm:$0xff]
      %v1871 = vld [vmem:[%s678 + $0x79] sm:$0xff]
      %v1872 = vld [vmem:[%s678 + $0x81] sm:$0xff]
      %v1873 = vld [vmem:[%s678 + $0x91] sm:$0xff]
      %v1874 = vld [vmem:[%s678 + $0x99] sm:$0xff]
      %v1875 = vld [vmem:[%s678 + $0xa9] sm:$0xff]
      %v1876 = vld [vmem:[%s678 + $0xb1] sm:$0xff]
      %v1877 = vld [vmem:[%s678 + $0xc1] sm:$0xff]
      %v1878 = vld [vmem:[%s678 + $0xc9] sm:$0xff]
      %v1879 = vld [vmem:[%s678 + $0xd9] sm:$0xff]
      %v1880 = vld [vmem:[%s678 + $0xe1] sm:$0xff]
      %v1881 = vld [vmem:[%s678 + $0xf1] sm:$0xff]
      %v1882 = vld [vmem:[%s678 + $0xf9] sm:$0xff]
      %v1883 = vld [vmem:[%s678 + $0x109] sm:$0xff]
      %v1884 = vld [vmem:[%s678 + $0x111] sm:$0xff]
      %v1885 = vld [vmem:[%s678 + $0x121] sm:$0xff]
      %v1886 = vld [vmem:[%s678 + $0x129] sm:$0xff]
      %v1887 = vld [vmem:[%s678 + $0x139] sm:$0xff]
      %v1888 = vld [vmem:[%s678 + $0x141] sm:$0xff]
      %v1889 = vld [vmem:[%s678 + $0x151] sm:$0xff]
      %v1890 = vld [vmem:[%s678 + $0x159] sm:$0xff]
      %v1891 = vld [vmem:[%s678 + $0x169] sm:$0xff]
      %v1892 = vld [vmem:[%s678 + $0x171] sm:$0xff]
      %v1893 = vpack.c.bf16 %v1862, %v1861
      %v1894 = vpack.c.bf16 %v1864, %v1863
      %v1895 = vpack.c.bf16 %v1866, %v1865
      %v1896 = vpack.c.bf16 %v1868, %v1867
      %v1897 = vpack.c.bf16 %v1870, %v1869
      %v1898 = vpack.c.bf16 %v1872, %v1871
      %v1899 = vpack.c.bf16 %v1874, %v1873
      %v1900 = vpack.c.bf16 %v1876, %v1875
      %v1901 = vpack.c.bf16 %v1878, %v1877
      %v1902 = vpack.c.bf16 %v1880, %v1879
      %v1903 = vpack.c.bf16 %v1882, %v1881
      %v1904 = vpack.c.bf16 %v1884, %v1883
      %v1905 = vpack.c.bf16 %v1886, %v1885
      %v1906 = vpack.c.bf16 %v1888, %v1887
      %v1907 = vpack.c.bf16 %v1890, %v1889
      %v1908 = vpack.c.bf16 %v1892, %v1891
      %s1909 = scalar_lea.vmem %s3, 16
      %v1910 = vld [vmem:[%s1909] sm:$0xf]
      %v1912 = vsel %vm679, %v1893, 0
      %v1915 = vsel %vm679, %v1894, 0
      %v1918 = vsel %vm679, %v1895, 0
      %v1921 = vsel %vm679, %v1896, 0
      %v1924 = vsel %vm679, %v1897, 0
      %v1927 = vsel %vm679, %v1898, 0
      %v1930 = vsel %vm679, %v1899, 0
      %v1933 = vsel %vm679, %v1900, 0
      %v1936 = vsel %vm679, %v1901, 0
      %v1939 = vsel %vm679, %v1902, 0
      %v1942 = vsel %vm679, %v1903, 0
      %v1945 = vsel %vm679, %v1904, 0
      %v1948 = vsel %vm679, %v1905, 0
      %v1951 = vsel %vm679, %v1906, 0
      %v1954 = vsel %vm679, %v1907, 0
      %v1957 = vsel %vm679, %v1908, 0
      %v1960 = vsel %vm896, %v1910, 0
      %1962 = vmatprep.subr.bf16.mxu0 0
      %1963 = vmatpush1.bf16.msra.mxu0 %v1960
      %1964 = vmatprep.subr.bf16.mxu0 0
      %1965 = vmatpush1.bf16.msra.mxu0 0
      %1966 = vmatprep.subr.bf16.mxu0 0
      %1967 = vmatpush1.bf16.msra.mxu0 0
      %1968 = vmatprep.subr.bf16.mxu0 0
      %1969 = vmatpush1.bf16.msra.mxu0 0
      %1970 = vmatprep.subr.bf16.mxu0 0
      %1971 = vmatpush1.bf16.msra.mxu0 0
      %1972 = vmatprep.subr.bf16.mxu0 0
      %1973 = vmatpush1.bf16.msra.mxu0 0
      %1974 = vmatprep.subr.bf16.mxu0 0
      %1975 = vmatpush1.bf16.msra.mxu0 0
      %1976 = vmatprep.subr.bf16.mxu0 0
      %1977 = vmatpush1.bf16.msra.mxu0 0
      %1978 = vmatprep.subr.bf16.mxu0 0
      %1979 = vmatpush1.bf16.msra.mxu0 0
      %1980 = vmatprep.subr.bf16.mxu0 0
      %1981 = vmatpush1.bf16.msra.mxu0 0
      %1982 = vmatprep.subr.bf16.mxu0 0
      %1983 = vmatpush1.bf16.msra.mxu0 0
      %1984 = vmatprep.subr.bf16.mxu0 0
      %1985 = vmatpush1.bf16.msra.mxu0 0
      %1986 = vmatprep.subr.bf16.mxu0 0
      %1987 = vmatpush1.bf16.msra.mxu0 0
      %1988 = vmatprep.subr.bf16.mxu0 0
      %1989 = vmatpush1.bf16.msra.mxu0 0
      %1990 = vmatprep.subr.bf16.mxu0 0
      %1991 = vmatpush1.bf16.msra.mxu0 0
      %1992 = vmatprep.subr.bf16.mxu0 0
      %1993 = vmatpush1.bf16.msra.mxu0 0
      %1994 = vmatprep.mubr.bf16.mxu0 0
      %1995 = vmatmul.mubr.bf16.gmra.mrb[0].mxu0 %v1912
      %v1996 = vpop.f32.mrb[0].mxu0
      %v1997 = vadd.f32 0.0, %v1996
      %v1998 = vpop.f32.mrb[0].mxu0
      %v1999 = vpop.f32.mrb[0].mxu0
      %v2000 = vadd.f32 0.0, %v1999
      %v2001 = vpop.f32.mrb[0].mxu0
      %2002 = vmatprep.mubr.bf16.mxu0 0
      %2003 = vmatmul.mubr.bf16.gmra.mrb[0].mxu0 %v1915
      %v2004 = vpop.f32.mrb[0].mxu0
      %v2005 = vadd.f32 0.0, %v2004
      %v2006 = vpop.f32.mrb[0].mxu0
      %v2007 = vpop.f32.mrb[0].mxu0
      %v2008 = vadd.f32 0.0, %v2007
      %v2009 = vpop.f32.mrb[0].mxu0
      %2010 = vmatprep.mubr.bf16.mxu0 0
      %2011 = vmatmul.mubr.bf16.gmra.mrb[0].mxu0 %v1918
      %v2012 = vpop.f32.mrb[0].mxu0
      %v2013 = vadd.f32 0.0, %v2012
      %v2014 = vpop.f32.mrb[0].mxu0
      %v2015 = vpop.f32.mrb[0].mxu0
      %v2016 = vadd.f32 0.0, %v2015
      %v2017 = vpop.f32.mrb[0].mxu0
      %2018 = vmatprep.mubr.bf16.mxu0 0
      %2019 = vmatmul.mubr.bf16.gmra.mrb[0].mxu0 %v1921
      %v2020 = vpop.f32.mrb[0].mxu0
      %v2021 = vadd.f32 0.0, %v2020
      %v2022 = vpop.f32.mrb[0].mxu0
      %v2023 = vpop.f32.mrb[0].mxu0
      %v2024 = vadd.f32 0.0, %v2023
      %v2025 = vpop.f32.mrb[0].mxu0
      %2026 = vmatprep.mubr.bf16.mxu0 0
      %2027 = vmatmul.mubr.bf16.gmra.mrb[0].mxu0 %v1924
      %v2028 = vpop.f32.mrb[0].mxu0
      %v2029 = vadd.f32 0.0, %v2028
      %v2030 = vpop.f32.mrb[0].mxu0
      %v2031 = vpop.f32.mrb[0].mxu0
      %v2032 = vadd.f32 0.0, %v2031
      %v2033 = vpop.f32.mrb[0].mxu0
      %2034 = vmatprep.mubr.bf16.mxu0 0
      %2035 = vmatmul.mubr.bf16.gmra.mrb[0].mxu0 %v1927
      %v2036 = vpop.f32.mrb[0].mxu0
      %v2037 = vadd.f32 0.0, %v2036
      %v2038 = vpop.f32.mrb[0].mxu0
      %v2039 = vpop.f32.mrb[0].mxu0
      %v2040 = vadd.f32 0.0, %v2039
      %v2041 = vpop.f32.mrb[0].mxu0
      %2042 = vmatprep.mubr.bf16.mxu0 0
      %2043 = vmatmul.mubr.bf16.gmra.mrb[0].mxu0 %v1930
      %v2044 = vpop.f32.mrb[0].mxu0
      %v2045 = vadd.f32 0.0, %v2044
      %v2046 = vpop.f32.mrb[0].mxu0
      %v2047 = vpop.f32.mrb[0].mxu0
      %v2048 = vadd.f32 0.0, %v2047
      %v2049 = vpop.f32.mrb[0].mxu0
      %2050 = vmatprep.mubr.bf16.mxu0 0
      %2051 = vmatmul.mubr.bf16.gmra.mrb[0].mxu0 %v1933
      %v2052 = vpop.f32.mrb[0].mxu0
      %v2053 = vadd.f32 0.0, %v2052
      %v2054 = vpop.f32.mrb[0].mxu0
      %v2055 = vpop.f32.mrb[0].mxu0
      %v2056 = vadd.f32 0.0, %v2055
      %v2057 = vpop.f32.mrb[0].mxu0
      %2058 = vmatprep.mubr.bf16.mxu0 0
      %2059 = vmatmul.mubr.bf16.gmra.mrb[0].mxu0 %v1936
      %v2060 = vpop.f32.mrb[0].mxu0
      %v2061 = vadd.f32 0.0, %v2060
      %v2062 = vpop.f32.mrb[0].mxu0
      %v2063 = vpop.f32.mrb[0].mxu0
      %v2064 = vadd.f32 0.0, %v2063
      %v2065 = vpop.f32.mrb[0].mxu0
      %2066 = vmatprep.mubr.bf16.mxu0 0
      %2067 = vmatmul.mubr.bf16.gmra.mrb[0].mxu0 %v1939
      %v2068 = vpop.f32.mrb[0].mxu0
      %v2069 = vadd.f32 0.0, %v2068
      %v2070 = vpop.f32.mrb[0].mxu0
      %v2071 = vpop.f32.mrb[0].mxu0
      %v2072 = vadd.f32 0.0, %v2071
      %v2073 = vpop.f32.mrb[0].mxu0
      %2074 = vmatprep.mubr.bf16.mxu0 0
      %2075 = vmatmul.mubr.bf16.gmra.mrb[0].mxu0 %v1942
      %v2076 = vpop.f32.mrb[0].mxu0
      %v2077 = vadd.f32 0.0, %v2076
      %v2078 = vpop.f32.mrb[0].mxu0
      %v2079 = vpop.f32.mrb[0].mxu0
      %v2080 = vadd.f32 0.0, %v2079
      %v2081 = vpop.f32.mrb[0].mxu0
      %2082 = vmatprep.mubr.bf16.mxu0 0
      %2083 = vmatmul.mubr.bf16.gmra.mrb[0].mxu0 %v1945
      %v2084 = vpop.f32.mrb[0].mxu0
      %v2085 = vadd.f32 0.0, %v2084
      %v2086 = vpop.f32.mrb[0].mxu0
      %v2087 = vpop.f32.mrb[0].mxu0
      %v2088 = vadd.f32 0.0, %v2087
      %v2089 = vpop.f32.mrb[0].mxu0
      %2090 = vmatprep.mubr.bf16.mxu0 0
      %2091 = vmatmul.mubr.bf16.gmra.mrb[0].mxu0 %v1948
      %v2092 = vpop.f32.mrb[0].mxu0
      %v2093 = vadd.f32 0.0, %v2092
      %v2094 = vpop.f32.mrb[0].mxu0
      %v2095 = vpop.f32.mrb[0].mxu0
      %v2096 = vadd.f32 0.0, %v2095
      %v2097 = vpop.f32.mrb[0].mxu0
      %2098 = vmatprep.mubr.bf16.mxu0 0
      %2099 = vmatmul.mubr.bf16.gmra.mrb[0].mxu0 %v1951
      %v2100 = vpop.f32.mrb[0].mxu0
      %v2101 = vadd.f32 0.0, %v2100
      %v2102 = vpop.f32.mrb[0].mxu0
      %v2103 = vpop.f32.mrb[0].mxu0
      %v2104 = vadd.f32 0.0, %v2103
      %v2105 = vpop.f32.mrb[0].mxu0
      %2106 = vmatprep.mubr.bf16.mxu0 0
      %2107 = vmatmul.mubr.bf16.gmra.mrb[0].mxu0 %v1954
      %v2108 = vpop.f32.mrb[0].mxu0
      %v2109 = vadd.f32 0.0, %v2108
      %v2110 = vpop.f32.mrb[0].mxu0
      %v2111 = vpop.f32.mrb[0].mxu0
      %v2112 = vadd.f32 0.0, %v2111
      %v2113 = vpop.f32.mrb[0].mxu0
      %2114 = vmatprep.mubr.bf16.mxu0 0
      %2115 = vmatmul.mubr.bf16.gmra.mrb[0].mxu0 %v1957
      %v2116 = vpop.f32.mrb[0].mxu0
      %v2117 = vadd.f32 0.0, %v2116
      %v2118 = vpop.f32.mrb[0].mxu0
      %v2119 = vpop.f32.mrb[0].mxu0
      %v2120 = vadd.f32 0.0, %v2119
      %v2121 = vpop.f32.mrb[0].mxu0
      %2122 = vdwg.mxu0
      %v2123 = vadd.f32 %v1829, %v1997
      %v2124 = vadd.f32 %v1830, %v2000
      %v2125 = vadd.f32 %v1831, %v2005
      %v2126 = vadd.f32 %v1832, %v2008
      %v2127 = vadd.f32 %v1833, %v2013
      %v2128 = vadd.f32 %v1834, %v2016
      %v2129 = vadd.f32 %v1835, %v2021
      %v2130 = vadd.f32 %v1836, %v2024
      %v2131 = vadd.f32 %v1837, %v2029
      %v2132 = vadd.f32 %v1838, %v2032
      %v2133 = vadd.f32 %v1839, %v2037
      %v2134 = vadd.f32 %v1840, %v2040
      %v2135 = vadd.f32 %v1841, %v2045
      %v2136 = vadd.f32 %v1842, %v2048
      %v2137 = vadd.f32 %v1843, %v2053
      %v2138 = vadd.f32 %v1844, %v2056
      %v2139 = vadd.f32 %v1845, %v2061
      %v2140 = vadd.f32 %v1846, %v2064
      %v2141 = vadd.f32 %v1847, %v2069
      %v2142 = vadd.f32 %v1848, %v2072
      %v2143 = vadd.f32 %v1849, %v2077
      %v2144 = vadd.f32 %v1850, %v2080
      %v2145 = vadd.f32 %v1851, %v2085
      %v2146 = vadd.f32 %v1852, %v2088
      %v2147 = vadd.f32 %v1853, %v2093
      %v2148 = vadd.f32 %v1854, %v2096
      %v2149 = vadd.f32 %v1855, %v2101
      %v2150 = vadd.f32 %v1856, %v2104
      %v2151 = vadd.f32 %v1857, %v2109
      %v2152 = vadd.f32 %v1858, %v2112
      %v2153 = vadd.f32 %v1859, %v2117
      %v2154 = vadd.f32 %v1860, %v2120
      %v2155 = vld [vmem:[%s678 + $0x2] sm:$0xff]
      %v2156 = vld [vmem:[%s678 + $0xa] sm:$0xff]
      %v2157 = vld [vmem:[%s678 + $0x1a] sm:$0xff]
      %v2158 = vld [vmem:[%s678 + $0x22] sm:$0xff]
      %v2159 = vld [vmem:[%s678 + $0x32] sm:$0xff]
      %v2160 = vld [vmem:[%s678 + $0x3a] sm:$0xff]
      %v2161 = vld [vmem:[%s678 + $0x4a] sm:$0xff]
      %v2162 = vld [vmem:[%s678 + $0x52] sm:$0xff]
      %v2163 = vld [vmem:[%s678 + $0x62] sm:$0xff]
      %v2164 = vld [vmem:[%s678 + $0x6a] sm:$0xff]
      %v2165 = vld [vmem:[%s678 + $0x7a] sm:$0xff]
      %v2166 = vld [vmem:[%s678 + $0x82] sm:$0xff]
      %v2167 = vld [vmem:[%s678 + $0x92] sm:$0xff]
      %v2168 = vld [vmem:[%s678 + $0x9a] sm:$0xff]
      %v2169 = vld [vmem:[%s678 + $0xaa] sm:$0xff]
      %v2170 = vld [vmem:[%s678 + $0xb2] sm:$0xff]
      %v2171 = vld [vmem:[%s678 + $0xc2] sm:$0xff]
      %v2172 = vld [vmem:[%s678 + $0xca] sm:$0xff]
      %v2173 = vld [vmem:[%s678 + $0xda] sm:$0xff]
      %v2174 = vld [vmem:[%s678 + $0xe2] sm:$0xff]
      %v2175 = vld [vmem:[%s678 + $0xf2] sm:$0xff]
      %v2176 = vld [vmem:[%s678 + $0xfa] sm:$0xff]
      %v2177 = vld [vmem:[%s678 + $0x10a] sm:$0xff]
      %v2178 = vld [vmem:[%s678 + $0x112] sm:$0xff]
      %v2179 = vld [vmem:[%s678 + $0x122] sm:$0xff]
      %v2180 = vld [vmem:[%s678 + $0x12a] sm:$0xff]
      %v2181 = vld [vmem:[%s678 + $0x13a] sm:$0xff]
      %v2182 = vld [vmem:[%s678 + $0x142] sm:$0xff]
      %v2183 = vld [vmem:[%s678 + $0x152] sm:$0xff]
      %v2184 = vld [vmem:[%s678 + $0x15a] sm:$0xff]
      %v2185 = vld [vmem:[%s678 + $0x16a] sm:$0xff]
      %v2186 = vld [vmem:[%s678 + $0x172] sm:$0xff]
      %v2187 = vpack.c.bf16 %v2156, %v2155
      %v2188 = vpack.c.bf16 %v2158, %v2157
      %v2189 = vpack.c.bf16 %v2160, %v2159
      %v2190 = vpack.c.bf16 %v2162, %v2161
      %v2191 = vpack.c.bf16 %v2164, %v2163
      %v2192 = vpack.c.bf16 %v2166, %v2165
      %v2193 = vpack.c.bf16 %v2168, %v2167
      %v2194 = vpack.c.bf16 %v2170, %v2169
      %v2195 = vpack.c.bf16 %v2172, %v2171
      %v2196 = vpack.c.bf16 %v2174, %v2173
      %v2197 = vpack.c.bf16 %v2176, %v2175
      %v2198 = vpack.c.bf16 %v2178, %v2177
      %v2199 = vpack.c.bf16 %v2180, %v2179
      %v2200 = vpack.c.bf16 %v2182, %v2181
      %v2201 = vpack.c.bf16 %v2184, %v2183
      %v2202 = vpack.c.bf16 %v2186, %v2185
      %s2203 = scalar_lea.vmem %s3, 20
      %v2204 = vld [vmem:[%s2203] sm:$0xf]
      %v2206 = vsel %vm679, %v2187, 0
      %v2209 = vsel %vm679, %v2188, 0
      %v2212 = vsel %vm679, %v2189, 0
      %v2215 = vsel %vm679, %v2190, 0
      %v2218 = vsel %vm679, %v2191, 0
      %v2221 = vsel %vm679, %v2192, 0
      %v2224 = vsel %vm679, %v2193, 0
      %v2227 = vsel %vm679, %v2194, 0
      %v2230 = vsel %vm679, %v2195, 0
      %v2233 = vsel %vm679, %v2196, 0
      %v2236 = vsel %vm679, %v2197, 0
      %v2239 = vsel %vm679, %v2198, 0
      %v2242 = vsel %vm679, %v2199, 0
      %v2245 = vsel %vm679, %v2200, 0
      %v2248 = vsel %vm679, %v2201, 0
      %v2251 = vsel %vm679, %v2202, 0
      %v2254 = vsel %vm896, %v2204, 0
      %2256 = vmatprep.subr.bf16.mxu0 0
      %2257 = vmatpush1.bf16.msra.mxu0 %v2254
      %2258 = vmatprep.subr.bf16.mxu0 0
      %2259 = vmatpush1.bf16.msra.mxu0 0
      %2260 = vmatprep.subr.bf16.mxu0 0
      %2261 = vmatpush1.bf16.msra.mxu0 0
      %2262 = vmatprep.subr.bf16.mxu0 0
      %2263 = vmatpush1.bf16.msra.mxu0 0
      %2264 = vmatprep.subr.bf16.mxu0 0
      %2265 = vmatpush1.bf16.msra.mxu0 0
      %2266 = vmatprep.subr.bf16.mxu0 0
      %2267 = vmatpush1.bf16.msra.mxu0 0
      %2268 = vmatprep.subr.bf16.mxu0 0
      %2269 = vmatpush1.bf16.msra.mxu0 0
      %2270 = vmatprep.subr.bf16.mxu0 0
      %2271 = vmatpush1.bf16.msra.mxu0 0
      %2272 = vmatprep.subr.bf16.mxu0 0
      %2273 = vmatpush1.bf16.msra.mxu0 0
      %2274 = vmatprep.subr.bf16.mxu0 0
      %2275 = vmatpush1.bf16.msra.mxu0 0
      %2276 = vmatprep.subr.bf16.mxu0 0
      %2277 = vmatpush1.bf16.msra.mxu0 0
      %2278 = vmatprep.subr.bf16.mxu0 0
      %2279 = vmatpush1.bf16.msra.mxu0 0
      %2280 = vmatprep.subr.bf16.mxu0 0
      %2281 = vmatpush1.bf16.msra.mxu0 0
      %2282 = vmatprep.subr.bf16.mxu0 0
      %2283 = vmatpush1.bf16.msra.mxu0 0
      %2284 = vmatprep.subr.bf16.mxu0 0
      %2285 = vmatpush1.bf16.msra.mxu0 0
      %2286 = vmatprep.subr.bf16.mxu0 0
      %2287 = vmatpush1.bf16.msra.mxu0 0
      %2288 = vmatprep.mubr.bf16.mxu0 0
      %2289 = vmatmul.mubr.bf16.gmra.mrb[0].mxu0 %v2206
      %v2290 = vpop.f32.mrb[0].mxu0
      %v2291 = vadd.f32 0.0, %v2290
      %v2292 = vpop.f32.mrb[0].mxu0
      %v2293 = vpop.f32.mrb[0].mxu0
      %v2294 = vadd.f32 0.0, %v2293
      %v2295 = vpop.f32.mrb[0].mxu0
      %2296 = vmatprep.mubr.bf16.mxu0 0
      %2297 = vmatmul.mubr.bf16.gmra.mrb[0].mxu0 %v2209
      %v2298 = vpop.f32.mrb[0].mxu0
      %v2299 = vadd.f32 0.0, %v2298
      %v2300 = vpop.f32.mrb[0].mxu0
      %v2301 = vpop.f32.mrb[0].mxu0
      %v2302 = vadd.f32 0.0, %v2301
      %v2303 = vpop.f32.mrb[0].mxu0
      %2304 = vmatprep.mubr.bf16.mxu0 0
      %2305 = vmatmul.mubr.bf16.gmra.mrb[0].mxu0 %v2212
      %v2306 = vpop.f32.mrb[0].mxu0
      %v2307 = vadd.f32 0.0, %v2306
      %v2308 = vpop.f32.mrb[0].mxu0
      %v2309 = vpop.f32.mrb[0].mxu0
      %v2310 = vadd.f32 0.0, %v2309
      %v2311 = vpop.f32.mrb[0].mxu0
      %2312 = vmatprep.mubr.bf16.mxu0 0
      %2313 = vmatmul.mubr.bf16.gmra.mrb[0].mxu0 %v2215
      %v2314 = vpop.f32.mrb[0].mxu0
      %v2315 = vadd.f32 0.0, %v2314
      %v2316 = vpop.f32.mrb[0].mxu0
      %v2317 = vpop.f32.mrb[0].mxu0
      %v2318 = vadd.f32 0.0, %v2317
      %v2319 = vpop.f32.mrb[0].mxu0
      %2320 = vmatprep.mubr.bf16.mxu0 0
      %2321 = vmatmul.mubr.bf16.gmra.mrb[0].mxu0 %v2218
      %v2322 = vpop.f32.mrb[0].mxu0
      %v2323 = vadd.f32 0.0, %v2322
      %v2324 = vpop.f32.mrb[0].mxu0
      %v2325 = vpop.f32.mrb[0].mxu0
      %v2326 = vadd.f32 0.0, %v2325
      %v2327 = vpop.f32.mrb[0].mxu0
      %2328 = vmatprep.mubr.bf16.mxu0 0
      %2329 = vmatmul.mubr.bf16.gmra.mrb[0].mxu0 %v2221
      %v2330 = vpop.f32.mrb[0].mxu0
      %v2331 = vadd.f32 0.0, %v2330
      %v2332 = vpop.f32.mrb[0].mxu0
      %v2333 = vpop.f32.mrb[0].mxu0
      %v2334 = vadd.f32 0.0, %v2333
      %v2335 = vpop.f32.mrb[0].mxu0
      %2336 = vmatprep.mubr.bf16.mxu0 0
      %2337 = vmatmul.mubr.bf16.gmra.mrb[0].mxu0 %v2224
      %v2338 = vpop.f32.mrb[0].mxu0
      %v2339 = vadd.f32 0.0, %v2338
      %v2340 = vpop.f32.mrb[0].mxu0
      %v2341 = vpop.f32.mrb[0].mxu0
      %v2342 = vadd.f32 0.0, %v2341
      %v2343 = vpop.f32.mrb[0].mxu0
      %2344 = vmatprep.mubr.bf16.mxu0 0
      %2345 = vmatmul.mubr.bf16.gmra.mrb[0].mxu0 %v2227
      %v2346 = vpop.f32.mrb[0].mxu0
      %v2347 = vadd.f32 0.0, %v2346
      %v2348 = vpop.f32.mrb[0].mxu0
      %v2349 = vpop.f32.mrb[0].mxu0
      %v2350 = vadd.f32 0.0, %v2349
      %v2351 = vpop.f32.mrb[0].mxu0
      %2352 = vmatprep.mubr.bf16.mxu0 0
      %2353 = vmatmul.mubr.bf16.gmra.mrb[0].mxu0 %v2230
      %v2354 = vpop.f32.mrb[0].mxu0
      %v2355 = vadd.f32 0.0, %v2354
      %v2356 = vpop.f32.mrb[0].mxu0
      %v2357 = vpop.f32.mrb[0].mxu0
      %v2358 = vadd.f32 0.0, %v2357
      %v2359 = vpop.f32.mrb[0].mxu0
      %2360 = vmatprep.mubr.bf16.mxu0 0
      %2361 = vmatmul.mubr.bf16.gmra.mrb[0].mxu0 %v2233
      %v2362 = vpop.f32.mrb[0].mxu0
      %v2363 = vadd.f32 0.0, %v2362
      %v2364 = vpop.f32.mrb[0].mxu0
      %v2365 = vpop.f32.mrb[0].mxu0
      %v2366 = vadd.f32 0.0, %v2365
      %v2367 = vpop.f32.mrb[0].mxu0
      %2368 = vmatprep.mubr.bf16.mxu0 0
      %2369 = vmatmul.mubr.bf16.gmra.mrb[0].mxu0 %v2236
      %v2370 = vpop.f32.mrb[0].mxu0
      %v2371 = vadd.f32 0.0, %v2370
      %v2372 = vpop.f32.mrb[0].mxu0
      %v2373 = vpop.f32.mrb[0].mxu0
      %v2374 = vadd.f32 0.0, %v2373
      %v2375 = vpop.f32.mrb[0].mxu0
      %2376 = vmatprep.mubr.bf16.mxu0 0
      %2377 = vmatmul.mubr.bf16.gmra.mrb[0].mxu0 %v2239
      %v2378 = vpop.f32.mrb[0].mxu0
      %v2379 = vadd.f32 0.0, %v2378
      %v2380 = vpop.f32.mrb[0].mxu0
      %v2381 = vpop.f32.mrb[0].mxu0
      %v2382 = vadd.f32 0.0, %v2381
      %v2383 = vpop.f32.mrb[0].mxu0
      %2384 = vmatprep.mubr.bf16.mxu0 0
      %2385 = vmatmul.mubr.bf16.gmra.mrb[0].mxu0 %v2242
      %v2386 = vpop.f32.mrb[0].mxu0
      %v2387 = vadd.f32 0.0, %v2386
      %v2388 = vpop.f32.mrb[0].mxu0
      %v2389 = vpop.f32.mrb[0].mxu0
      %v2390 = vadd.f32 0.0, %v2389
      %v2391 = vpop.f32.mrb[0].mxu0
      %2392 = vmatprep.mubr.bf16.mxu0 0
      %2393 = vmatmul.mubr.bf16.gmra.mrb[0].mxu0 %v2245
      %v2394 = vpop.f32.mrb[0].mxu0
      %v2395 = vadd.f32 0.0, %v2394
      %v2396 = vpop.f32.mrb[0].mxu0
      %v2397 = vpop.f32.mrb[0].mxu0
      %v2398 = vadd.f32 0.0, %v2397
      %v2399 = vpop.f32.mrb[0].mxu0
      %2400 = vmatprep.mubr.bf16.mxu0 0
      %2401 = vmatmul.mubr.bf16.gmra.mrb[0].mxu0 %v2248
      %v2402 = vpop.f32.mrb[0].mxu0
      %v2403 = vadd.f32 0.0, %v2402
      %v2404 = vpop.f32.mrb[0].mxu0
      %v2405 = vpop.f32.mrb[0].mxu0
      %v2406 = vadd.f32 0.0, %v2405
      %v2407 = vpop.f32.mrb[0].mxu0
      %2408 = vmatprep.mubr.bf16.mxu0 0
      %2409 = vmatmul.mubr.bf16.gmra.mrb[0].mxu0 %v2251
      %v2410 = vpop.f32.mrb[0].mxu0
      %v2411 = vadd.f32 0.0, %v2410
      %v2412 = vpop.f32.mrb[0].mxu0
      %v2413 = vpop.f32.mrb[0].mxu0
      %v2414 = vadd.f32 0.0, %v2413
      %v2415 = vpop.f32.mrb[0].mxu0
      %2416 = vdwg.mxu0
      %v2417 = vadd.f32 %v2123, %v2291
      %v2418 = vadd.f32 %v2124, %v2294
      %v2419 = vadd.f32 %v2125, %v2299
      %v2420 = vadd.f32 %v2126, %v2302
      %v2421 = vadd.f32 %v2127, %v2307
      %v2422 = vadd.f32 %v2128, %v2310
      %v2423 = vadd.f32 %v2129, %v2315
      %v2424 = vadd.f32 %v2130, %v2318
      %v2425 = vadd.f32 %v2131, %v2323
      %v2426 = vadd.f32 %v2132, %v2326
      %v2427 = vadd.f32 %v2133, %v2331
      %v2428 = vadd.f32 %v2134, %v2334
      %v2429 = vadd.f32 %v2135, %v2339
      %v2430 = vadd.f32 %v2136, %v2342
      %v2431 = vadd.f32 %v2137, %v2347
      %v2432 = vadd.f32 %v2138, %v2350
      %v2433 = vadd.f32 %v2139, %v2355
      %v2434 = vadd.f32 %v2140, %v2358
      %v2435 = vadd.f32 %v2141, %v2363
      %v2436 = vadd.f32 %v2142, %v2366
      %v2437 = vadd.f32 %v2143, %v2371
      %v2438 = vadd.f32 %v2144, %v2374
      %v2439 = vadd.f32 %v2145, %v2379
      %v2440 = vadd.f32 %v2146, %v2382
      %v2441 = vadd.f32 %v2147, %v2387
      %v2442 = vadd.f32 %v2148, %v2390
      %v2443 = vadd.f32 %v2149, %v2395
      %v2444 = vadd.f32 %v2150, %v2398
      %v2445 = vadd.f32 %v2151, %v2403
      %v2446 = vadd.f32 %v2152, %v2406
      %v2447 = vadd.f32 %v2153, %v2411
      %v2448 = vadd.f32 %v2154, %v2414
      %s2449 = scalar_lea.vmem [#allocation2], 48
      %v2450 = vld [vmem:[%s2449] sm:$0xff]
      %v2451 = vld [vmem:[%s2449 + $0x8] sm:$0xff]
      %v2452 = vld [vmem:[%s2449 + $0x18] sm:$0xff]
      %v2453 = vld [vmem:[%s2449 + $0x20] sm:$0xff]
      %v2454 = vld [vmem:[%s2449 + $0x30] sm:$0xff]
      %v2455 = vld [vmem:[%s2449 + $0x38] sm:$0xff]
      %v2456 = vld [vmem:[%s2449 + $0x48] sm:$0xff]
      %v2457 = vld [vmem:[%s2449 + $0x50] sm:$0xff]
      %v2458 = vld [vmem:[%s2449 + $0x60] sm:$0xff]
      %v2459 = vld [vmem:[%s2449 + $0x68] sm:$0xff]
      %v2460 = vld [vmem:[%s2449 + $0x78] sm:$0xff]
      %v2461 = vld [vmem:[%s2449 + $0x80] sm:$0xff]
      %v2462 = vld [vmem:[%s2449 + $0x90] sm:$0xff]
      %v2463 = vld [vmem:[%s2449 + $0x98] sm:$0xff]
      %v2464 = vld [vmem:[%s2449 + $0xa8] sm:$0xff]
      %v2465 = vld [vmem:[%s2449 + $0xb0] sm:$0xff]
      %v2466 = vld [vmem:[%s2449 + $0xc0] sm:$0xff]
      %v2467 = vld [vmem:[%s2449 + $0xc8] sm:$0xff]
      %v2468 = vld [vmem:[%s2449 + $0xd8] sm:$0xff]
      %v2469 = vld [vmem:[%s2449 + $0xe0] sm:$0xff]
      %v2470 = vld [vmem:[%s2449 + $0xf0] sm:$0xff]
      %v2471 = vld [vmem:[%s2449 + $0xf8] sm:$0xff]
      %v2472 = vld [vmem:[%s2449 + $0x108] sm:$0xff]
      %v2473 = vld [vmem:[%s2449 + $0x110] sm:$0xff]
      %v2474 = vld [vmem:[%s2449 + $0x120] sm:$0xff]
      %v2475 = vld [vmem:[%s2449 + $0x128] sm:$0xff]
      %v2476 = vld [vmem:[%s2449 + $0x138] sm:$0xff]
      %v2477 = vld [vmem:[%s2449 + $0x140] sm:$0xff]
      %v2478 = vld [vmem:[%s2449 + $0x150] sm:$0xff]
      %v2479 = vld [vmem:[%s2449 + $0x158] sm:$0xff]
      %v2480 = vld [vmem:[%s2449 + $0x168] sm:$0xff]
      %v2481 = vld [vmem:[%s2449 + $0x170] sm:$0xff]
      %v2482 = vpack.c.bf16 %v2451, %v2450
      %v2483 = vpack.c.bf16 %v2453, %v2452
      %v2484 = vpack.c.bf16 %v2455, %v2454
      %v2485 = vpack.c.bf16 %v2457, %v2456
      %v2486 = vpack.c.bf16 %v2459, %v2458
      %v2487 = vpack.c.bf16 %v2461, %v2460
      %v2488 = vpack.c.bf16 %v2463, %v2462
      %v2489 = vpack.c.bf16 %v2465, %v2464
      %v2490 = vpack.c.bf16 %v2467, %v2466
      %v2491 = vpack.c.bf16 %v2469, %v2468
      %v2492 = vpack.c.bf16 %v2471, %v2470
      %v2493 = vpack.c.bf16 %v2473, %v2472
      %v2494 = vpack.c.bf16 %v2475, %v2474
      %v2495 = vpack.c.bf16 %v2477, %v2476
      %v2496 = vpack.c.bf16 %v2479, %v2478
      %v2497 = vpack.c.bf16 %v2481, %v2480
      %s2498 = scalar_lea.vmem %s3, 24
      %v2499 = vld [vmem:[%s2498] sm:$0xf]
      %v2501 = vsel %vm679, %v2482, 0
      %v2504 = vsel %vm679, %v2483, 0
      %v2507 = vsel %vm679, %v2484, 0
      %v2510 = vsel %vm679, %v2485, 0
      %v2513 = vsel %vm679, %v2486, 0
      %v2516 = vsel %vm679, %v2487, 0
      %v2519 = vsel %vm679, %v2488, 0
      %v2522 = vsel %vm679, %v2489, 0
      %v2525 = vsel %vm679, %v2490, 0
      %v2528 = vsel %vm679, %v2491, 0
      %v2531 = vsel %vm679, %v2492, 0
      %v2534 = vsel %vm679, %v2493, 0
      %v2537 = vsel %vm679, %v2494, 0
      %v2540 = vsel %vm679, %v2495, 0
      %v2543 = vsel %vm679, %v2496, 0
      %v2546 = vsel %vm679, %v2497, 0
      %v2549 = vsel %vm896, %v2499, 0
      %2551 = vmatprep.subr.bf16.mxu0 0
      %2552 = vmatpush1.bf16.msra.mxu0 %v2549
      %2553 = vmatprep.subr.bf16.mxu0 0
      %2554 = vmatpush1.bf16.msra.mxu0 0
      %2555 = vmatprep.subr.bf16.mxu0 0
      %2556 = vmatpush1.bf16.msra.mxu0 0
      %2557 = vmatprep.subr.bf16.mxu0 0
      %2558 = vmatpush1.bf16.msra.mxu0 0
      %2559 = vmatprep.subr.bf16.mxu0 0
      %2560 = vmatpush1.bf16.msra.mxu0 0
      %2561 = vmatprep.subr.bf16.mxu0 0
      %2562 = vmatpush1.bf16.msra.mxu0 0
      %2563 = vmatprep.subr.bf16.mxu0 0
      %2564 = vmatpush1.bf16.msra.mxu0 0
      %2565 = vmatprep.subr.bf16.mxu0 0
      %2566 = vmatpush1.bf16.msra.mxu0 0
      %2567 = vmatprep.subr.bf16.mxu0 0
      %2568 = vmatpush1.bf16.msra.mxu0 0
      %2569 = vmatprep.subr.bf16.mxu0 0
      %2570 = vmatpush1.bf16.msra.mxu0 0
      %2571 = vmatprep.subr.bf16.mxu0 0
      %2572 = vmatpush1.bf16.msra.mxu0 0
      %2573 = vmatprep.subr.bf16.mxu0 0
      %2574 = vmatpush1.bf16.msra.mxu0 0
      %2575 = vmatprep.subr.bf16.mxu0 0
      %2576 = vmatpush1.bf16.msra.mxu0 0
      %2577 = vmatprep.subr.bf16.mxu0 0
      %2578 = vmatpush1.bf16.msra.mxu0 0
      %2579 = vmatprep.subr.bf16.mxu0 0
      %2580 = vmatpush1.bf16.msra.mxu0 0
      %2581 = vmatprep.subr.bf16.mxu0 0
      %2582 = vmatpush1.bf16.msra.mxu0 0
      %2583 = vmatprep.mubr.bf16.mxu0 0
      %2584 = vmatmul.mubr.bf16.gmra.mrb[0].mxu0 %v2501
      %v2585 = vpop.f32.mrb[0].mxu0
      %v2586 = vadd.f32 0.0, %v2585
      %v2587 = vpop.f32.mrb[0].mxu0
      %v2588 = vpop.f32.mrb[0].mxu0
      %v2589 = vadd.f32 0.0, %v2588
      %v2590 = vpop.f32.mrb[0].mxu0
      %2591 = vmatprep.mubr.bf16.mxu0 0
      %2592 = vmatmul.mubr.bf16.gmra.mrb[0].mxu0 %v2504
      %v2593 = vpop.f32.mrb[0].mxu0
      %v2594 = vadd.f32 0.0, %v2593
      %v2595 = vpop.f32.mrb[0].mxu0
      %v2596 = vpop.f32.mrb[0].mxu0
      %v2597 = vadd.f32 0.0, %v2596
      %v2598 = vpop.f32.mrb[0].mxu0
      %2599 = vmatprep.mubr.bf16.mxu0 0
      %2600 = vmatmul.mubr.bf16.gmra.mrb[0].mxu0 %v2507
      %v2601 = vpop.f32.mrb[0].mxu0
      %v2602 = vadd.f32 0.0, %v2601
      %v2603 = vpop.f32.mrb[0].mxu0
      %v2604 = vpop.f32.mrb[0].mxu0
      %v2605 = vadd.f32 0.0, %v2604
      %v2606 = vpop.f32.mrb[0].mxu0
      %2607 = vmatprep.mubr.bf16.mxu0 0
      %2608 = vmatmul.mubr.bf16.gmra.mrb[0].mxu0 %v2510
      %v2609 = vpop.f32.mrb[0].mxu0
      %v2610 = vadd.f32 0.0, %v2609
      %v2611 = vpop.f32.mrb[0].mxu0
      %v2612 = vpop.f32.mrb[0].mxu0
      %v2613 = vadd.f32 0.0, %v2612
      %v2614 = vpop.f32.mrb[0].mxu0
      %2615 = vmatprep.mubr.bf16.mxu0 0
      %2616 = vmatmul.mubr.bf16.gmra.mrb[0].mxu0 %v2513
      %v2617 = vpop.f32.mrb[0].mxu0
      %v2618 = vadd.f32 0.0, %v2617
      %v2619 = vpop.f32.mrb[0].mxu0
      %v2620 = vpop.f32.mrb[0].mxu0
      %v2621 = vadd.f32 0.0, %v2620
      %v2622 = vpop.f32.mrb[0].mxu0
      %2623 = vmatprep.mubr.bf16.mxu0 0
      %2624 = vmatmul.mubr.bf16.gmra.mrb[0].mxu0 %v2516
      %v2625 = vpop.f32.mrb[0].mxu0
      %v2626 = vadd.f32 0.0, %v2625
      %v2627 = vpop.f32.mrb[0].mxu0
      %v2628 = vpop.f32.mrb[0].mxu0
      %v2629 = vadd.f32 0.0, %v2628
      %v2630 = vpop.f32.mrb[0].mxu0
      %2631 = vmatprep.mubr.bf16.mxu0 0
      %2632 = vmatmul.mubr.bf16.gmra.mrb[0].mxu0 %v2519
      %v2633 = vpop.f32.mrb[0].mxu0
      %v2634 = vadd.f32 0.0, %v2633
      %v2635 = vpop.f32.mrb[0].mxu0
      %v2636 = vpop.f32.mrb[0].mxu0
      %v2637 = vadd.f32 0.0, %v2636
      %v2638 = vpop.f32.mrb[0].mxu0
      %2639 = vmatprep.mubr.bf16.mxu0 0
      %2640 = vmatmul.mubr.bf16.gmra.mrb[0].mxu0 %v2522
      %v2641 = vpop.f32.mrb[0].mxu0
      %v2642 = vadd.f32 0.0, %v2641
      %v2643 = vpop.f32.mrb[0].mxu0
      %v2644 = vpop.f32.mrb[0].mxu0
      %v2645 = vadd.f32 0.0, %v2644
      %v2646 = vpop.f32.mrb[0].mxu0
      %2647 = vmatprep.mubr.bf16.mxu0 0
      %2648 = vmatmul.mubr.bf16.gmra.mrb[0].mxu0 %v2525
      %v2649 = vpop.f32.mrb[0].mxu0
      %v2650 = vadd.f32 0.0, %v2649
      %v2651 = vpop.f32.mrb[0].mxu0
      %v2652 = vpop.f32.mrb[0].mxu0
      %v2653 = vadd.f32 0.0, %v2652
      %v2654 = vpop.f32.mrb[0].mxu0
      %2655 = vmatprep.mubr.bf16.mxu0 0
      %2656 = vmatmul.mubr.bf16.gmra.mrb[0].mxu0 %v2528
      %v2657 = vpop.f32.mrb[0].mxu0
      %v2658 = vadd.f32 0.0, %v2657
      %v2659 = vpop.f32.mrb[0].mxu0
      %v2660 = vpop.f32.mrb[0].mxu0
      %v2661 = vadd.f32 0.0, %v2660
      %v2662 = vpop.f32.mrb[0].mxu0
      %2663 = vmatprep.mubr.bf16.mxu0 0
      %2664 = vmatmul.mubr.bf16.gmra.mrb[0].mxu0 %v2531
      %v2665 = vpop.f32.mrb[0].mxu0
      %v2666 = vadd.f32 0.0, %v2665
      %v2667 = vpop.f32.mrb[0].mxu0
      %v2668 = vpop.f32.mrb[0].mxu0
      %v2669 = vadd.f32 0.0, %v2668
      %v2670 = vpop.f32.mrb[0].mxu0
      %2671 = vmatprep.mubr.bf16.mxu0 0
      %2672 = vmatmul.mubr.bf16.gmra.mrb[0].mxu0 %v2534
      %v2673 = vpop.f32.mrb[0].mxu0
      %v2674 = vadd.f32 0.0, %v2673
      %v2675 = vpop.f32.mrb[0].mxu0
      %v2676 = vpop.f32.mrb[0].mxu0
      %v2677 = vadd.f32 0.0, %v2676
      %v2678 = vpop.f32.mrb[0].mxu0
      %2679 = vmatprep.mubr.bf16.mxu0 0
      %2680 = vmatmul.mubr.bf16.gmra.mrb[0].mxu0 %v2537
      %v2681 = vpop.f32.mrb[0].mxu0
      %v2682 = vadd.f32 0.0, %v2681
      %v2683 = vpop.f32.mrb[0].mxu0
      %v2684 = vpop.f32.mrb[0].mxu0
      %v2685 = vadd.f32 0.0, %v2684
      %v2686 = vpop.f32.mrb[0].mxu0
      %2687 = vmatprep.mubr.bf16.mxu0 0
      %2688 = vmatmul.mubr.bf16.gmra.mrb[0].mxu0 %v2540
      %v2689 = vpop.f32.mrb[0].mxu0
      %v2690 = vadd.f32 0.0, %v2689
      %v2691 = vpop.f32.mrb[0].mxu0
      %v2692 = vpop.f32.mrb[0].mxu0
      %v2693 = vadd.f32 0.0, %v2692
      %v2694 = vpop.f32.mrb[0].mxu0
      %2695 = vmatprep.mubr.bf16.mxu0 0
      %2696 = vmatmul.mubr.bf16.gmra.mrb[0].mxu0 %v2543
      %v2697 = vpop.f32.mrb[0].mxu0
      %v2698 = vadd.f32 0.0, %v2697
      %v2699 = vpop.f32.mrb[0].mxu0
      %v2700 = vpop.f32.mrb[0].mxu0
      %v2701 = vadd.f32 0.0, %v2700
      %v2702 = vpop.f32.mrb[0].mxu0
      %2703 = vmatprep.mubr.bf16.mxu0 0
      %2704 = vmatmul.mubr.bf16.gmra.mrb[0].mxu0 %v2546
      %v2705 = vpop.f32.mrb[0].mxu0
      %v2706 = vadd.f32 0.0, %v2705
      %v2707 = vpop.f32.mrb[0].mxu0
      %v2708 = vpop.f32.mrb[0].mxu0
      %v2709 = vadd.f32 0.0, %v2708
      %v2710 = vpop.f32.mrb[0].mxu0
      %2711 = vdwg.mxu0
      %v2712 = vadd.f32 %v2417, %v2586
      %v2713 = vadd.f32 %v2418, %v2589
      %v2714 = vadd.f32 %v2419, %v2594
      %v2715 = vadd.f32 %v2420, %v2597
      %v2716 = vadd.f32 %v2421, %v2602
      %v2717 = vadd.f32 %v2422, %v2605
      %v2718 = vadd.f32 %v2423, %v2610
      %v2719 = vadd.f32 %v2424, %v2613
      %v2720 = vadd.f32 %v2425, %v2618
      %v2721 = vadd.f32 %v2426, %v2621
      %v2722 = vadd.f32 %v2427, %v2626
      %v2723 = vadd.f32 %v2428, %v2629
      %v2724 = vadd.f32 %v2429, %v2634
      %v2725 = vadd.f32 %v2430, %v2637
      %v2726 = vadd.f32 %v2431, %v2642
      %v2727 = vadd.f32 %v2432, %v2645
      %v2728 = vadd.f32 %v2433, %v2650
      %v2729 = vadd.f32 %v2434, %v2653
      %v2730 = vadd.f32 %v2435, %v2658
      %v2731 = vadd.f32 %v2436, %v2661
      %v2732 = vadd.f32 %v2437, %v2666
      %v2733 = vadd.f32 %v2438, %v2669
      %v2734 = vadd.f32 %v2439, %v2674
      %v2735 = vadd.f32 %v2440, %v2677
      %v2736 = vadd.f32 %v2441, %v2682
      %v2737 = vadd.f32 %v2442, %v2685
      %v2738 = vadd.f32 %v2443, %v2690
      %v2739 = vadd.f32 %v2444, %v2693
      %v2740 = vadd.f32 %v2445, %v2698
      %v2741 = vadd.f32 %v2446, %v2701
      %v2742 = vadd.f32 %v2447, %v2706
      %v2743 = vadd.f32 %v2448, %v2709
      %v2744 = vld [vmem:[%s2449 + $0x1] sm:$0xff]
      %v2745 = vld [vmem:[%s2449 + $0x9] sm:$0xff]
      %v2746 = vld [vmem:[%s2449 + $0x19] sm:$0xff]
      %v2747 = vld [vmem:[%s2449 + $0x21] sm:$0xff]
      %v2748 = vld [vmem:[%s2449 + $0x31] sm:$0xff]
      %v2749 = vld [vmem:[%s2449 + $0x39] sm:$0xff]
      %v2750 = vld [vmem:[%s2449 + $0x49] sm:$0xff]
      %v2751 = vld [vmem:[%s2449 + $0x51] sm:$0xff]
      %v2752 = vld [vmem:[%s2449 + $0x61] sm:$0xff]
      %v2753 = vld [vmem:[%s2449 + $0x69] sm:$0xff]
      %v2754 = vld [vmem:[%s2449 + $0x79] sm:$0xff]
      %v2755 = vld [vmem:[%s2449 + $0x81] sm:$0xff]
      %v2756 = vld [vmem:[%s2449 + $0x91] sm:$0xff]
      %v2757 = vld [vmem:[%s2449 + $0x99] sm:$0xff]
      %v2758 = vld [vmem:[%s2449 + $0xa9] sm:$0xff]
      %v2759 = vld [vmem:[%s2449 + $0xb1] sm:$0xff]
      %v2760 = vld [vmem:[%s2449 + $0xc1] sm:$0xff]
      %v2761 = vld [vmem:[%s2449 + $0xc9] sm:$0xff]
      %v2762 = vld [vmem:[%s2449 + $0xd9] sm:$0xff]
      %v2763 = vld [vmem:[%s2449 + $0xe1] sm:$0xff]
      %v2764 = vld [vmem:[%s2449 + $0xf1] sm:$0xff]
      %v2765 = vld [vmem:[%s2449 + $0xf9] sm:$0xff]
      %v2766 = vld [vmem:[%s2449 + $0x109] sm:$0xff]
      %v2767 = vld [vmem:[%s2449 + $0x111] sm:$0xff]
      %v2768 = vld [vmem:[%s2449 + $0x121] sm:$0xff]
      %v2769 = vld [vmem:[%s2449 + $0x129] sm:$0xff]
      %v2770 = vld [vmem:[%s2449 + $0x139] sm:$0xff]
      %v2771 = vld [vmem:[%s2449 + $0x141] sm:$0xff]
      %v2772 = vld [vmem:[%s2449 + $0x151] sm:$0xff]
      %v2773 = vld [vmem:[%s2449 + $0x159] sm:$0xff]
      %v2774 = vld [vmem:[%s2449 + $0x169] sm:$0xff]
      %v2775 = vld [vmem:[%s2449 + $0x171] sm:$0xff]
      %v2776 = vpack.c.bf16 %v2745, %v2744
      %v2777 = vpack.c.bf16 %v2747, %v2746
      %v2778 = vpack.c.bf16 %v2749, %v2748
      %v2779 = vpack.c.bf16 %v2751, %v2750
      %v2780 = vpack.c.bf16 %v2753, %v2752
      %v2781 = vpack.c.bf16 %v2755, %v2754
      %v2782 = vpack.c.bf16 %v2757, %v2756
      %v2783 = vpack.c.bf16 %v2759, %v2758
      %v2784 = vpack.c.bf16 %v2761, %v2760
      %v2785 = vpack.c.bf16 %v2763, %v2762
      %v2786 = vpack.c.bf16 %v2765, %v2764
      %v2787 = vpack.c.bf16 %v2767, %v2766
      %v2788 = vpack.c.bf16 %v2769, %v2768
      %v2789 = vpack.c.bf16 %v2771, %v2770
      %v2790 = vpack.c.bf16 %v2773, %v2772
      %v2791 = vpack.c.bf16 %v2775, %v2774
      %s2792 = scalar_lea.vmem %s3, 28
      %v2793 = vld [vmem:[%s2792] sm:$0xf]
      %v2795 = vsel %vm679, %v2776, 0
      %v2798 = vsel %vm679, %v2777, 0
      %v2801 = vsel %vm679, %v2778, 0
      %v2804 = vsel %vm679, %v2779, 0
      %v2807 = vsel %vm679, %v2780, 0
      %v2810 = vsel %vm679, %v2781, 0
      %v2813 = vsel %vm679, %v2782, 0
      %v2816 = vsel %vm679, %v2783, 0
      %v2819 = vsel %vm679, %v2784, 0
      %v2822 = vsel %vm679, %v2785, 0
      %v2825 = vsel %vm679, %v2786, 0
      %v2828 = vsel %vm679, %v2787, 0
      %v2831 = vsel %vm679, %v2788, 0
      %v2834 = vsel %vm679, %v2789, 0
      %v2837 = vsel %vm679, %v2790, 0
      %v2840 = vsel %vm679, %v2791, 0
      %v2843 = vsel %vm896, %v2793, 0
      %2845 = vmatprep.subr.bf16.mxu0 0
      %2846 = vmatpush1.bf16.msra.mxu0 %v2843
      %2847 = vmatprep.subr.bf16.mxu0 0
      %2848 = vmatpush1.bf16.msra.mxu0 0
      %2849 = vmatprep.subr.bf16.mxu0 0
      %2850 = vmatpush1.bf16.msra.mxu0 0
      %2851 = vmatprep.subr.bf16.mxu0 0
      %2852 = vmatpush1.bf16.msra.mxu0 0
      %2853 = vmatprep.subr.bf16.mxu0 0
      %2854 = vmatpush1.bf16.msra.mxu0 0
      %2855 = vmatprep.subr.bf16.mxu0 0
      %2856 = vmatpush1.bf16.msra.mxu0 0
      %2857 = vmatprep.subr.bf16.mxu0 0
      %2858 = vmatpush1.bf16.msra.mxu0 0
      %2859 = vmatprep.subr.bf16.mxu0 0
      %2860 = vmatpush1.bf16.msra.mxu0 0
      %2861 = vmatprep.subr.bf16.mxu0 0
      %2862 = vmatpush1.bf16.msra.mxu0 0
      %2863 = vmatprep.subr.bf16.mxu0 0
      %2864 = vmatpush1.bf16.msra.mxu0 0
      %2865 = vmatprep.subr.bf16.mxu0 0
      %2866 = vmatpush1.bf16.msra.mxu0 0
      %2867 = vmatprep.subr.bf16.mxu0 0
      %2868 = vmatpush1.bf16.msra.mxu0 0
      %2869 = vmatprep.subr.bf16.mxu0 0
      %2870 = vmatpush1.bf16.msra.mxu0 0
      %2871 = vmatprep.subr.bf16.mxu0 0
      %2872 = vmatpush1.bf16.msra.mxu0 0
      %2873 = vmatprep.subr.bf16.mxu0 0
      %2874 = vmatpush1.bf16.msra.mxu0 0
      %2875 = vmatprep.subr.bf16.mxu0 0
      %2876 = vmatpush1.bf16.msra.mxu0 0
      %2877 = vmatprep.mubr.bf16.mxu0 0
      %2878 = vmatmul.mubr.bf16.gmra.mrb[0].mxu0 %v2795
      %v2879 = vpop.f32.mrb[0].mxu0
      %v2880 = vadd.f32 0.0, %v2879
      %v2881 = vpop.f32.mrb[0].mxu0
      %v2882 = vpop.f32.mrb[0].mxu0
      %v2883 = vadd.f32 0.0, %v2882
      %v2884 = vpop.f32.mrb[0].mxu0
      %2885 = vmatprep.mubr.bf16.mxu0 0
      %2886 = vmatmul.mubr.bf16.gmra.mrb[0].mxu0 %v2798
      %v2887 = vpop.f32.mrb[0].mxu0
      %v2888 = vadd.f32 0.0, %v2887
      %v2889 = vpop.f32.mrb[0].mxu0
      %v2890 = vpop.f32.mrb[0].mxu0
      %v2891 = vadd.f32 0.0, %v2890
      %v2892 = vpop.f32.mrb[0].mxu0
      %2893 = vmatprep.mubr.bf16.mxu0 0
      %2894 = vmatmul.mubr.bf16.gmra.mrb[0].mxu0 %v2801
      %v2895 = vpop.f32.mrb[0].mxu0
      %v2896 = vadd.f32 0.0, %v2895
      %v2897 = vpop.f32.mrb[0].mxu0
      %v2898 = vpop.f32.mrb[0].mxu0
      %v2899 = vadd.f32 0.0, %v2898
      %v2900 = vpop.f32.mrb[0].mxu0
      %2901 = vmatprep.mubr.bf16.mxu0 0
      %2902 = vmatmul.mubr.bf16.gmra.mrb[0].mxu0 %v2804
      %v2903 = vpop.f32.mrb[0].mxu0
      %v2904 = vadd.f32 0.0, %v2903
      %v2905 = vpop.f32.mrb[0].mxu0
      %v2906 = vpop.f32.mrb[0].mxu0
      %v2907 = vadd.f32 0.0, %v2906
      %v2908 = vpop.f32.mrb[0].mxu0
      %2909 = vmatprep.mubr.bf16.mxu0 0
      %2910 = vmatmul.mubr.bf16.gmra.mrb[0].mxu0 %v2807
      %v2911 = vpop.f32.mrb[0].mxu0
      %v2912 = vadd.f32 0.0, %v2911
      %v2913 = vpop.f32.mrb[0].mxu0
      %v2914 = vpop.f32.mrb[0].mxu0
      %v2915 = vadd.f32 0.0, %v2914
      %v2916 = vpop.f32.mrb[0].mxu0
      %2917 = vmatprep.mubr.bf16.mxu0 0
      %2918 = vmatmul.mubr.bf16.gmra.mrb[0].mxu0 %v2810
      %v2919 = vpop.f32.mrb[0].mxu0
      %v2920 = vadd.f32 0.0, %v2919
      %v2921 = vpop.f32.mrb[0].mxu0
      %v2922 = vpop.f32.mrb[0].mxu0
      %v2923 = vadd.f32 0.0, %v2922
      %v2924 = vpop.f32.mrb[0].mxu0
      %2925 = vmatprep.mubr.bf16.mxu0 0
      %2926 = vmatmul.mubr.bf16.gmra.mrb[0].mxu0 %v2813
      %v2927 = vpop.f32.mrb[0].mxu0
      %v2928 = vadd.f32 0.0, %v2927
      %v2929 = vpop.f32.mrb[0].mxu0
      %v2930 = vpop.f32.mrb[0].mxu0
      %v2931 = vadd.f32 0.0, %v2930
      %v2932 = vpop.f32.mrb[0].mxu0
      %2933 = vmatprep.mubr.bf16.mxu0 0
      %2934 = vmatmul.mubr.bf16.gmra.mrb[0].mxu0 %v2816
      %v2935 = vpop.f32.mrb[0].mxu0
      %v2936 = vadd.f32 0.0, %v2935
      %v2937 = vpop.f32.mrb[0].mxu0
      %v2938 = vpop.f32.mrb[0].mxu0
      %v2939 = vadd.f32 0.0, %v2938
      %v2940 = vpop.f32.mrb[0].mxu0
      %2941 = vmatprep.mubr.bf16.mxu0 0
      %2942 = vmatmul.mubr.bf16.gmra.mrb[0].mxu0 %v2819
      %v2943 = vpop.f32.mrb[0].mxu0
      %v2944 = vadd.f32 0.0, %v2943
      %v2945 = vpop.f32.mrb[0].mxu0
      %v2946 = vpop.f32.mrb[0].mxu0
      %v2947 = vadd.f32 0.0, %v2946
      %v2948 = vpop.f32.mrb[0].mxu0
      %2949 = vmatprep.mubr.bf16.mxu0 0
      %2950 = vmatmul.mubr.bf16.gmra.mrb[0].mxu0 %v2822
      %v2951 = vpop.f32.mrb[0].mxu0
      %v2952 = vadd.f32 0.0, %v2951
      %v2953 = vpop.f32.mrb[0].mxu0
      %v2954 = vpop.f32.mrb[0].mxu0
      %v2955 = vadd.f32 0.0, %v2954
      %v2956 = vpop.f32.mrb[0].mxu0
      %2957 = vmatprep.mubr.bf16.mxu0 0
      %2958 = vmatmul.mubr.bf16.gmra.mrb[0].mxu0 %v2825
      %v2959 = vpop.f32.mrb[0].mxu0
      %v2960 = vadd.f32 0.0, %v2959
      %v2961 = vpop.f32.mrb[0].mxu0
      %v2962 = vpop.f32.mrb[0].mxu0
      %v2963 = vadd.f32 0.0, %v2962
      %v2964 = vpop.f32.mrb[0].mxu0
      %2965 = vmatprep.mubr.bf16.mxu0 0
      %2966 = vmatmul.mubr.bf16.gmra.mrb[0].mxu0 %v2828
      %v2967 = vpop.f32.mrb[0].mxu0
      %v2968 = vadd.f32 0.0, %v2967
      %v2969 = vpop.f32.mrb[0].mxu0
      %v2970 = vpop.f32.mrb[0].mxu0
      %v2971 = vadd.f32 0.0, %v2970
      %v2972 = vpop.f32.mrb[0].mxu0
      %2973 = vmatprep.mubr.bf16.mxu0 0
      %2974 = vmatmul.mubr.bf16.gmra.mrb[0].mxu0 %v2831
      %v2975 = vpop.f32.mrb[0].mxu0
      %v2976 = vadd.f32 0.0, %v2975
      %v2977 = vpop.f32.mrb[0].mxu0
      %v2978 = vpop.f32.mrb[0].mxu0
      %v2979 = vadd.f32 0.0, %v2978
      %v2980 = vpop.f32.mrb[0].mxu0
      %2981 = vmatprep.mubr.bf16.mxu0 0
      %2982 = vmatmul.mubr.bf16.gmra.mrb[0].mxu0 %v2834
      %v2983 = vpop.f32.mrb[0].mxu0
      %v2984 = vadd.f32 0.0, %v2983
      %v2985 = vpop.f32.mrb[0].mxu0
      %v2986 = vpop.f32.mrb[0].mxu0
      %v2987 = vadd.f32 0.0, %v2986
      %v2988 = vpop.f32.mrb[0].mxu0
      %2989 = vmatprep.mubr.bf16.mxu0 0
      %2990 = vmatmul.mubr.bf16.gmra.mrb[0].mxu0 %v2837
      %v2991 = vpop.f32.mrb[0].mxu0
      %v2992 = vadd.f32 0.0, %v2991
      %v2993 = vpop.f32.mrb[0].mxu0
      %v2994 = vpop.f32.mrb[0].mxu0
      %v2995 = vadd.f32 0.0, %v2994
      %v2996 = vpop.f32.mrb[0].mxu0
      %2997 = vmatprep.mubr.bf16.mxu0 0
      %2998 = vmatmul.mubr.bf16.gmra.mrb[0].mxu0 %v2840
      %v2999 = vpop.f32.mrb[0].mxu0
      %v3000 = vadd.f32 0.0, %v2999
      %v3001 = vpop.f32.mrb[0].mxu0
      %v3002 = vpop.f32.mrb[0].mxu0
      %v3003 = vadd.f32 0.0, %v3002
      %v3004 = vpop.f32.mrb[0].mxu0
      %3005 = vdwg.mxu0
      %v3006 = vadd.f32 %v2712, %v2880
      %v3007 = vadd.f32 %v2713, %v2883
      %v3008 = vadd.f32 %v2714, %v2888
      %v3009 = vadd.f32 %v2715, %v2891
      %v3010 = vadd.f32 %v2716, %v2896
      %v3011 = vadd.f32 %v2717, %v2899
      %v3012 = vadd.f32 %v2718, %v2904
      %v3013 = vadd.f32 %v2719, %v2907
      %v3014 = vadd.f32 %v2720, %v2912
      %v3015 = vadd.f32 %v2721, %v2915
      %v3016 = vadd.f32 %v2722, %v2920
      %v3017 = vadd.f32 %v2723, %v2923
      %v3018 = vadd.f32 %v2724, %v2928
      %v3019 = vadd.f32 %v2725, %v2931
      %v3020 = vadd.f32 %v2726, %v2936
      %v3021 = vadd.f32 %v2727, %v2939
      %v3022 = vadd.f32 %v2728, %v2944
      %v3023 = vadd.f32 %v2729, %v2947
      %v3024 = vadd.f32 %v2730, %v2952
      %v3025 = vadd.f32 %v2731, %v2955
      %v3026 = vadd.f32 %v2732, %v2960
      %v3027 = vadd.f32 %v2733, %v2963
      %v3028 = vadd.f32 %v2734, %v2968
      %v3029 = vadd.f32 %v2735, %v2971
      %v3030 = vadd.f32 %v2736, %v2976
      %v3031 = vadd.f32 %v2737, %v2979
      %v3032 = vadd.f32 %v2738, %v2984
      %v3033 = vadd.f32 %v2739, %v2987
      %v3034 = vadd.f32 %v2740, %v2992
      %v3035 = vadd.f32 %v2741, %v2995
      %v3036 = vadd.f32 %v2742, %v3000
      %v3037 = vadd.f32 %v2743, %v3003
      %v3038 = vld [vmem:[%s2449 + $0x2] sm:$0xff]
      %v3039 = vld [vmem:[%s2449 + $0xa] sm:$0xff]
      %v3040 = vld [vmem:[%s2449 + $0x1a] sm:$0xff]
      %v3041 = vld [vmem:[%s2449 + $0x22] sm:$0xff]
      %v3042 = vld [vmem:[%s2449 + $0x32] sm:$0xff]
      %v3043 = vld [vmem:[%s2449 + $0x3a] sm:$0xff]
      %v3044 = vld [vmem:[%s2449 + $0x4a] sm:$0xff]
      %v3045 = vld [vmem:[%s2449 + $0x52] sm:$0xff]
      %v3046 = vld [vmem:[%s2449 + $0x62] sm:$0xff]
      %v3047 = vld [vmem:[%s2449 + $0x6a] sm:$0xff]
      %v3048 = vld [vmem:[%s2449 + $0x7a] sm:$0xff]
      %v3049 = vld [vmem:[%s2449 + $0x82] sm:$0xff]
      %v3050 = vld [vmem:[%s2449 + $0x92] sm:$0xff]
      %v3051 = vld [vmem:[%s2449 + $0x9a] sm:$0xff]
      %v3052 = vld [vmem:[%s2449 + $0xaa] sm:$0xff]
      %v3053 = vld [vmem:[%s2449 + $0xb2] sm:$0xff]
      %v3054 = vld [vmem:[%s2449 + $0xc2] sm:$0xff]
      %v3055 = vld [vmem:[%s2449 + $0xca] sm:$0xff]
      %v3056 = vld [vmem:[%s2449 + $0xda] sm:$0xff]
      %v3057 = vld [vmem:[%s2449 + $0xe2] sm:$0xff]
      %v3058 = vld [vmem:[%s2449 + $0xf2] sm:$0xff]
      %v3059 = vld [vmem:[%s2449 + $0xfa] sm:$0xff]
      %v3060 = vld [vmem:[%s2449 + $0x10a] sm:$0xff]
      %v3061 = vld [vmem:[%s2449 + $0x112] sm:$0xff]
      %v3062 = vld [vmem:[%s2449 + $0x122] sm:$0xff]
      %v3063 = vld [vmem:[%s2449 + $0x12a] sm:$0xff]
      %v3064 = vld [vmem:[%s2449 + $0x13a] sm:$0xff]
      %v3065 = vld [vmem:[%s2449 + $0x142] sm:$0xff]
      %v3066 = vld [vmem:[%s2449 + $0x152] sm:$0xff]
      %v3067 = vld [vmem:[%s2449 + $0x15a] sm:$0xff]
      %v3068 = vld [vmem:[%s2449 + $0x16a] sm:$0xff]
      %v3069 = vld [vmem:[%s2449 + $0x172] sm:$0xff]
      %v3070 = vpack.c.bf16 %v3039, %v3038
      %v3071 = vpack.c.bf16 %v3041, %v3040
      %v3072 = vpack.c.bf16 %v3043, %v3042
      %v3073 = vpack.c.bf16 %v3045, %v3044
      %v3074 = vpack.c.bf16 %v3047, %v3046
      %v3075 = vpack.c.bf16 %v3049, %v3048
      %v3076 = vpack.c.bf16 %v3051, %v3050
      %v3077 = vpack.c.bf16 %v3053, %v3052
      %v3078 = vpack.c.bf16 %v3055, %v3054
      %v3079 = vpack.c.bf16 %v3057, %v3056
      %v3080 = vpack.c.bf16 %v3059, %v3058
      %v3081 = vpack.c.bf16 %v3061, %v3060
      %v3082 = vpack.c.bf16 %v3063, %v3062
      %v3083 = vpack.c.bf16 %v3065, %v3064
      %v3084 = vpack.c.bf16 %v3067, %v3066
      %v3085 = vpack.c.bf16 %v3069, %v3068
      %s3086 = scalar_lea.vmem %s3, 32
      %v3087 = vld [vmem:[%s3086] sm:$0xf]
      %v3089 = vsel %vm679, %v3070, 0
      %v3092 = vsel %vm679, %v3071, 0
      %v3095 = vsel %vm679, %v3072, 0
      %v3098 = vsel %vm679, %v3073, 0
      %v3101 = vsel %vm679, %v3074, 0
      %v3104 = vsel %vm679, %v3075, 0
      %v3107 = vsel %vm679, %v3076, 0
      %v3110 = vsel %vm679, %v3077, 0
      %v3113 = vsel %vm679, %v3078, 0
      %v3116 = vsel %vm679, %v3079, 0
      %v3119 = vsel %vm679, %v3080, 0
      %v3122 = vsel %vm679, %v3081, 0
      %v3125 = vsel %vm679, %v3082, 0
      %v3128 = vsel %vm679, %v3083, 0
      %v3131 = vsel %vm679, %v3084, 0
      %v3134 = vsel %vm679, %v3085, 0
      %v3137 = vsel %vm896, %v3087, 0
      %3139 = vmatprep.subr.bf16.mxu0 0
      %3140 = vmatpush1.bf16.msra.mxu0 %v3137
      %3141 = vmatprep.subr.bf16.mxu0 0
      %3142 = vmatpush1.bf16.msra.mxu0 0
      %3143 = vmatprep.subr.bf16.mxu0 0
      %3144 = vmatpush1.bf16.msra.mxu0 0
      %3145 = vmatprep.subr.bf16.mxu0 0
      %3146 = vmatpush1.bf16.msra.mxu0 0
      %3147 = vmatprep.subr.bf16.mxu0 0
      %3148 = vmatpush1.bf16.msra.mxu0 0
      %3149 = vmatprep.subr.bf16.mxu0 0
      %3150 = vmatpush1.bf16.msra.mxu0 0
      %3151 = vmatprep.subr.bf16.mxu0 0
      %3152 = vmatpush1.bf16.msra.mxu0 0
      %3153 = vmatprep.subr.bf16.mxu0 0
      %3154 = vmatpush1.bf16.msra.mxu0 0
      %3155 = vmatprep.subr.bf16.mxu0 0
      %3156 = vmatpush1.bf16.msra.mxu0 0
      %3157 = vmatprep.subr.bf16.mxu0 0
      %3158 = vmatpush1.bf16.msra.mxu0 0
      %3159 = vmatprep.subr.bf16.mxu0 0
      %3160 = vmatpush1.bf16.msra.mxu0 0
      %3161 = vmatprep.subr.bf16.mxu0 0
      %3162 = vmatpush1.bf16.msra.mxu0 0
      %3163 = vmatprep.subr.bf16.mxu0 0
      %3164 = vmatpush1.bf16.msra.mxu0 0
      %3165 = vmatprep.subr.bf16.mxu0 0
      %3166 = vmatpush1.bf16.msra.mxu0 0
      %3167 = vmatprep.subr.bf16.mxu0 0
      %3168 = vmatpush1.bf16.msra.mxu0 0
      %3169 = vmatprep.subr.bf16.mxu0 0
      %3170 = vmatpush1.bf16.msra.mxu0 0
      %3171 = vmatprep.mubr.bf16.mxu0 0
      %3172 = vmatmul.mubr.bf16.gmra.mrb[0].mxu0 %v3089
      %v3173 = vpop.f32.mrb[0].mxu0
      %v3174 = vadd.f32 0.0, %v3173
      %v3175 = vpop.f32.mrb[0].mxu0
      %v3176 = vpop.f32.mrb[0].mxu0
      %v3177 = vadd.f32 0.0, %v3176
      %v3178 = vpop.f32.mrb[0].mxu0
      %3179 = vmatprep.mubr.bf16.mxu0 0
      %3180 = vmatmul.mubr.bf16.gmra.mrb[0].mxu0 %v3092
      %v3181 = vpop.f32.mrb[0].mxu0
      %v3182 = vadd.f32 0.0, %v3181
      %v3183 = vpop.f32.mrb[0].mxu0
      %v3184 = vpop.f32.mrb[0].mxu0
      %v3185 = vadd.f32 0.0, %v3184
      %v3186 = vpop.f32.mrb[0].mxu0
      %3187 = vmatprep.mubr.bf16.mxu0 0
      %3188 = vmatmul.mubr.bf16.gmra.mrb[0].mxu0 %v3095
      %v3189 = vpop.f32.mrb[0].mxu0
      %v3190 = vadd.f32 0.0, %v3189
      %v3191 = vpop.f32.mrb[0].mxu0
      %v3192 = vpop.f32.mrb[0].mxu0
      %v3193 = vadd.f32 0.0, %v3192
      %v3194 = vpop.f32.mrb[0].mxu0
      %3195 = vmatprep.mubr.bf16.mxu0 0
      %3196 = vmatmul.mubr.bf16.gmra.mrb[0].mxu0 %v3098
      %v3197 = vpop.f32.mrb[0].mxu0
      %v3198 = vadd.f32 0.0, %v3197
      %v3199 = vpop.f32.mrb[0].mxu0
      %v3200 = vpop.f32.mrb[0].mxu0
      %v3201 = vadd.f32 0.0, %v3200
      %v3202 = vpop.f32.mrb[0].mxu0
      %3203 = vmatprep.mubr.bf16.mxu0 0
      %3204 = vmatmul.mubr.bf16.gmra.mrb[0].mxu0 %v3101
      %v3205 = vpop.f32.mrb[0].mxu0
      %v3206 = vadd.f32 0.0, %v3205
      %v3207 = vpop.f32.mrb[0].mxu0
      %v3208 = vpop.f32.mrb[0].mxu0
      %v3209 = vadd.f32 0.0, %v3208
      %v3210 = vpop.f32.mrb[0].mxu0
      %3211 = vmatprep.mubr.bf16.mxu0 0
      %3212 = vmatmul.mubr.bf16.gmra.mrb[0].mxu0 %v3104
      %v3213 = vpop.f32.mrb[0].mxu0
      %v3214 = vadd.f32 0.0, %v3213
      %v3215 = vpop.f32.mrb[0].mxu0
      %v3216 = vpop.f32.mrb[0].mxu0
      %v3217 = vadd.f32 0.0, %v3216
      %v3218 = vpop.f32.mrb[0].mxu0
      %3219 = vmatprep.mubr.bf16.mxu0 0
      %3220 = vmatmul.mubr.bf16.gmra.mrb[0].mxu0 %v3107
      %v3221 = vpop.f32.mrb[0].mxu0
      %v3222 = vadd.f32 0.0, %v3221
      %v3223 = vpop.f32.mrb[0].mxu0
      %v3224 = vpop.f32.mrb[0].mxu0
      %v3225 = vadd.f32 0.0, %v3224
      %v3226 = vpop.f32.mrb[0].mxu0
      %3227 = vmatprep.mubr.bf16.mxu0 0
      %3228 = vmatmul.mubr.bf16.gmra.mrb[0].mxu0 %v3110
      %v3229 = vpop.f32.mrb[0].mxu0
      %v3230 = vadd.f32 0.0, %v3229
      %v3231 = vpop.f32.mrb[0].mxu0
      %v3232 = vpop.f32.mrb[0].mxu0
      %v3233 = vadd.f32 0.0, %v3232
      %v3234 = vpop.f32.mrb[0].mxu0
      %3235 = vmatprep.mubr.bf16.mxu0 0
      %3236 = vmatmul.mubr.bf16.gmra.mrb[0].mxu0 %v3113
      %v3237 = vpop.f32.mrb[0].mxu0
      %v3238 = vadd.f32 0.0, %v3237
      %v3239 = vpop.f32.mrb[0].mxu0
      %v3240 = vpop.f32.mrb[0].mxu0
      %v3241 = vadd.f32 0.0, %v3240
      %v3242 = vpop.f32.mrb[0].mxu0
      %3243 = vmatprep.mubr.bf16.mxu0 0
      %3244 = vmatmul.mubr.bf16.gmra.mrb[0].mxu0 %v3116
      %v3245 = vpop.f32.mrb[0].mxu0
      %v3246 = vadd.f32 0.0, %v3245
      %v3247 = vpop.f32.mrb[0].mxu0
      %v3248 = vpop.f32.mrb[0].mxu0
      %v3249 = vadd.f32 0.0, %v3248
      %v3250 = vpop.f32.mrb[0].mxu0
      %3251 = vmatprep.mubr.bf16.mxu0 0
      %3252 = vmatmul.mubr.bf16.gmra.mrb[0].mxu0 %v3119
      %v3253 = vpop.f32.mrb[0].mxu0
      %v3254 = vadd.f32 0.0, %v3253
      %v3255 = vpop.f32.mrb[0].mxu0
      %v3256 = vpop.f32.mrb[0].mxu0
      %v3257 = vadd.f32 0.0, %v3256
      %v3258 = vpop.f32.mrb[0].mxu0
      %3259 = vmatprep.mubr.bf16.mxu0 0
      %3260 = vmatmul.mubr.bf16.gmra.mrb[0].mxu0 %v3122
      %v3261 = vpop.f32.mrb[0].mxu0
      %v3262 = vadd.f32 0.0, %v3261
      %v3263 = vpop.f32.mrb[0].mxu0
      %v3264 = vpop.f32.mrb[0].mxu0
      %v3265 = vadd.f32 0.0, %v3264
      %v3266 = vpop.f32.mrb[0].mxu0
      %3267 = vmatprep.mubr.bf16.mxu0 0
      %3268 = vmatmul.mubr.bf16.gmra.mrb[0].mxu0 %v3125
      %v3269 = vpop.f32.mrb[0].mxu0
      %v3270 = vadd.f32 0.0, %v3269
      %v3271 = vpop.f32.mrb[0].mxu0
      %v3272 = vpop.f32.mrb[0].mxu0
      %v3273 = vadd.f32 0.0, %v3272
      %v3274 = vpop.f32.mrb[0].mxu0
      %3275 = vmatprep.mubr.bf16.mxu0 0
      %3276 = vmatmul.mubr.bf16.gmra.mrb[0].mxu0 %v3128
      %v3277 = vpop.f32.mrb[0].mxu0
      %v3278 = vadd.f32 0.0, %v3277
      %v3279 = vpop.f32.mrb[0].mxu0
      %v3280 = vpop.f32.mrb[0].mxu0
      %v3281 = vadd.f32 0.0, %v3280
      %v3282 = vpop.f32.mrb[0].mxu0
      %3283 = vmatprep.mubr.bf16.mxu0 0
      %3284 = vmatmul.mubr.bf16.gmra.mrb[0].mxu0 %v3131
      %v3285 = vpop.f32.mrb[0].mxu0
      %v3286 = vadd.f32 0.0, %v3285
      %v3287 = vpop.f32.mrb[0].mxu0
      %v3288 = vpop.f32.mrb[0].mxu0
      %v3289 = vadd.f32 0.0, %v3288
      %v3290 = vpop.f32.mrb[0].mxu0
      %3291 = vmatprep.mubr.bf16.mxu0 0
      %3292 = vmatmul.mubr.bf16.gmra.mrb[0].mxu0 %v3134
      %v3293 = vpop.f32.mrb[0].mxu0
      %v3294 = vadd.f32 0.0, %v3293
      %v3295 = vpop.f32.mrb[0].mxu0
      %v3296 = vpop.f32.mrb[0].mxu0
      %v3297 = vadd.f32 0.0, %v3296
      %v3298 = vpop.f32.mrb[0].mxu0
      %3299 = vdwg.mxu0
      %v3300 = vadd.f32 %v3006, %v3174
      %v3301 = vadd.f32 %v3007, %v3177
      %v3302 = vadd.f32 %v3008, %v3182
      %v3303 = vadd.f32 %v3009, %v3185
      %v3304 = vadd.f32 %v3010, %v3190
      %v3305 = vadd.f32 %v3011, %v3193
      %v3306 = vadd.f32 %v3012, %v3198
      %v3307 = vadd.f32 %v3013, %v3201
      %v3308 = vadd.f32 %v3014, %v3206
      %v3309 = vadd.f32 %v3015, %v3209
      %v3310 = vadd.f32 %v3016, %v3214
      %v3311 = vadd.f32 %v3017, %v3217
      %v3312 = vadd.f32 %v3018, %v3222
      %v3313 = vadd.f32 %v3019, %v3225
      %v3314 = vadd.f32 %v3020, %v3230
      %v3315 = vadd.f32 %v3021, %v3233
      %v3316 = vadd.f32 %v3022, %v3238
      %v3317 = vadd.f32 %v3023, %v3241
      %v3318 = vadd.f32 %v3024, %v3246
      %v3319 = vadd.f32 %v3025, %v3249
      %v3320 = vadd.f32 %v3026, %v3254
      %v3321 = vadd.f32 %v3027, %v3257
      %v3322 = vadd.f32 %v3028, %v3262
      %v3323 = vadd.f32 %v3029, %v3265
      %v3324 = vadd.f32 %v3030, %v3270
      %v3325 = vadd.f32 %v3031, %v3273
      %v3326 = vadd.f32 %v3032, %v3278
      %v3327 = vadd.f32 %v3033, %v3281
      %v3328 = vadd.f32 %v3034, %v3286
      %v3329 = vadd.f32 %v3035, %v3289
      %v3330 = vadd.f32 %v3036, %v3294
      %v3331 = vadd.f32 %v3037, %v3297
      %v3332 = vpack.c.bf16 %v3301, %v3300
      %v3333 = vpack.c.bf16 %v3303, %v3302
      %v3334 = vpack.c.bf16 %v3305, %v3304
      %v3335 = vpack.c.bf16 %v3307, %v3306
      %v3336 = vpack.c.bf16 %v3309, %v3308
      %v3337 = vpack.c.bf16 %v3311, %v3310
      %v3338 = vpack.c.bf16 %v3313, %v3312
      %v3339 = vpack.c.bf16 %v3315, %v3314
      %v3340 = vpack.c.bf16 %v3317, %v3316
      %v3341 = vpack.c.bf16 %v3319, %v3318
      %v3342 = vpack.c.bf16 %v3321, %v3320
      %v3343 = vpack.c.bf16 %v3323, %v3322
      %v3344 = vpack.c.bf16 %v3325, %v3324
      %v3345 = vpack.c.bf16 %v3327, %v3326
      %v3346 = vpack.c.bf16 %v3329, %v3328
      %v3347 = vpack.c.bf16 %v3331, %v3330
      %v3364 = vunpack.c.l.b16 %v3332
      %v3365 = vunpack.c.h.b16 %v3332
      %v3366 = vunpack.c.l.b16 %v3333
      %v3367 = vunpack.c.h.b16 %v3333
      %v3368 = vunpack.c.l.b16 %v3334
      %v3369 = vunpack.c.h.b16 %v3334
      %v3370 = vunpack.c.l.b16 %v3335
      %v3371 = vunpack.c.h.b16 %v3335
      %v3372 = vunpack.c.l.b16 %v3336
      %v3373 = vunpack.c.h.b16 %v3336
      %v3374 = vunpack.c.l.b16 %v3337
      %v3375 = vunpack.c.h.b16 %v3337
      %v3376 = vunpack.c.l.b16 %v3338
      %v3377 = vunpack.c.h.b16 %v3338
      %v3378 = vunpack.c.l.b16 %v3339
      %v3379 = vunpack.c.h.b16 %v3339
      %v3380 = vunpack.c.l.b16 %v3340
      %v3381 = vunpack.c.h.b16 %v3340
      %v3382 = vunpack.c.l.b16 %v3341
      %v3383 = vunpack.c.h.b16 %v3341
      %v3384 = vunpack.c.l.b16 %v3342
      %v3385 = vunpack.c.h.b16 %v3342
      %v3386 = vunpack.c.l.b16 %v3343
      %v3387 = vunpack.c.h.b16 %v3343
      %v3388 = vunpack.c.l.b16 %v3344
      %v3389 = vunpack.c.h.b16 %v3344
      %v3390 = vunpack.c.l.b16 %v3345
      %v3391 = vunpack.c.h.b16 %v3345
      %v3392 = vunpack.c.l.b16 %v3346
      %v3393 = vunpack.c.h.b16 %v3346
      %v3394 = vunpack.c.l.b16 %v3347
      %v3395 = vunpack.c.h.b16 %v3347
      %v3396 = vpack.c.b16 %v3364, %v3364
      %v3397 = vpack.c.b16 %v3365, %v3365
      %v3398 = vpack.c.b16 %v3366, %v3366
      %v3399 = vpack.c.b16 %v3367, %v3367
      %v3400 = vpack.c.b16 %v3368, %v3368
      %v3401 = vpack.c.b16 %v3369, %v3369
      %v3402 = vpack.c.b16 %v3370, %v3370
      %v3403 = vpack.c.b16 %v3371, %v3371
      %v3404 = vpack.c.b16 %v3372, %v3372
      %v3405 = vpack.c.b16 %v3373, %v3373
      %v3406 = vpack.c.b16 %v3374, %v3374
      %v3407 = vpack.c.b16 %v3375, %v3375
      %v3408 = vpack.c.b16 %v3376, %v3376
      %v3409 = vpack.c.b16 %v3377, %v3377
      %v3410 = vpack.c.b16 %v3378, %v3378
      %v3411 = vpack.c.b16 %v3379, %v3379
      %v3412 = vpack.c.b16 %v3380, %v3380
      %v3413 = vpack.c.b16 %v3381, %v3381
      %v3414 = vpack.c.b16 %v3382, %v3382
      %v3415 = vpack.c.b16 %v3383, %v3383
      %v3416 = vpack.c.b16 %v3384, %v3384
      %v3417 = vpack.c.b16 %v3385, %v3385
      %v3418 = vpack.c.b16 %v3386, %v3386
      %v3419 = vpack.c.b16 %v3387, %v3387
      %v3420 = vpack.c.b16 %v3388, %v3388
      %v3421 = vpack.c.b16 %v3389, %v3389
      %v3422 = vpack.c.b16 %v3390, %v3390
      %v3423 = vpack.c.b16 %v3391, %v3391
      %v3424 = vpack.c.b16 %v3392, %v3392
      %v3425 = vpack.c.b16 %v3393, %v3393
      %v3426 = vpack.c.b16 %v3394, %v3394
      %v3427 = vpack.c.b16 %v3395, %v3395
      %vm3460 = vcmask 27648
      %3461 = vst.msk [vmem:[%s457] sm:$0xf] %vm3460, %v3396
      %3462 = vst.msk [vmem:[%s457 + $0x4] sm:$0xf] %vm3460, %v3397
      %3463 = vst.msk [vmem:[%s457 + $0x8] sm:$0xf] %vm3460, %v3398
      %3464 = vst.msk [vmem:[%s457 + $0xc] sm:$0xf] %vm3460, %v3399
      %3465 = vst.msk [vmem:[%s457 + $0x10] sm:$0xf] %vm3460, %v3400
      %3466 = vst.msk [vmem:[%s457 + $0x14] sm:$0xf] %vm3460, %v3401
      %3467 = vst.msk [vmem:[%s457 + $0x18] sm:$0xf] %vm3460, %v3402
      %3468 = vst.msk [vmem:[%s457 + $0x1c] sm:$0xf] %vm3460, %v3403
      %3469 = vst.msk [vmem:[%s457 + $0x20] sm:$0xf] %vm3460, %v3404
      %3470 = vst.msk [vmem:[%s457 + $0x24] sm:$0xf] %vm3460, %v3405
      %3471 = vst.msk [vmem:[%s457 + $0x28] sm:$0xf] %vm3460, %v3406
      %3472 = vst.msk [vmem:[%s457 + $0x2c] sm:$0xf] %vm3460, %v3407
      %3473 = vst.msk [vmem:[%s457 + $0x30] sm:$0xf] %vm3460, %v3408
      %3474 = vst.msk [vmem:[%s457 + $0x34] sm:$0xf] %vm3460, %v3409
      %3475 = vst.msk [vmem:[%s457 + $0x38] sm:$0xf] %vm3460, %v3410
      %3476 = vst.msk [vmem:[%s457 + $0x3c] sm:$0xf] %vm3460, %v3411
      %3477 = vst.msk [vmem:[%s457 + $0x40] sm:$0xf] %vm3460, %v3412
      %3478 = vst.msk [vmem:[%s457 + $0x44] sm:$0xf] %vm3460, %v3413
      %3479 = vst.msk [vmem:[%s457 + $0x48] sm:$0xf] %vm3460, %v3414
      %3480 = vst.msk [vmem:[%s457 + $0x4c] sm:$0xf] %vm3460, %v3415
      %3481 = vst.msk [vmem:[%s457 + $0x50] sm:$0xf] %vm3460, %v3416
      %3482 = vst.msk [vmem:[%s457 + $0x54] sm:$0xf] %vm3460, %v3417
      %3483 = vst.msk [vmem:[%s457 + $0x58] sm:$0xf] %vm3460, %v3418
      %3484 = vst.msk [vmem:[%s457 + $0x5c] sm:$0xf] %vm3460, %v3419
      %3485 = vst.msk [vmem:[%s457 + $0x60] sm:$0xf] %vm3460, %v3420
      %3486 = vst.msk [vmem:[%s457 + $0x64] sm:$0xf] %vm3460, %v3421
      %3487 = vst.msk [vmem:[%s457 + $0x68] sm:$0xf] %vm3460, %v3422
      %3488 = vst.msk [vmem:[%s457 + $0x6c] sm:$0xf] %vm3460, %v3423
      %3489 = vst.msk [vmem:[%s457 + $0x70] sm:$0xf] %vm3460, %v3424
      %3490 = vst.msk [vmem:[%s457 + $0x74] sm:$0xf] %vm3460, %v3425
      %3491 = vst.msk [vmem:[%s457 + $0x78] sm:$0xf] %vm3460, %v3426
      %3492 = vst.msk [vmem:[%s457 + $0x7c] sm:$0xf] %vm3460, %v3427
      %vm3493 = vcmask 31744
      %v3494 = vsel %vm3493, %v3300, 0.0
      %v3495 = vsel %vm3493, %v3301, 0.0
      %v3496 = vadd.f32 %v3494, %v3495
      %v3497 = vsel %vm3493, %v3302, 0.0
      %v3498 = vadd.f32 %v3496, %v3497
      %v3499 = vsel %vm3493, %v3303, 0.0
      %v3500 = vadd.f32 %v3498, %v3499
      %v3501 = vsel %vm3493, %v3304, 0.0
      %v3502 = vadd.f32 %v3500, %v3501
      %v3503 = vsel %vm3493, %v3305, 0.0
      %v3504 = vadd.f32 %v3502, %v3503
      %v3505 = vsel %vm3493, %v3306, 0.0
      %v3506 = vadd.f32 %v3504, %v3505
      %v3507 = vsel %vm3493, %v3307, 0.0
      %v3508 = vadd.f32 %v3506, %v3507
      %v3509 = vsel %vm3493, %v3308, 0.0
      %v3510 = vadd.f32 %v3508, %v3509
      %v3511 = vsel %vm3493, %v3309, 0.0
      %v3512 = vadd.f32 %v3510, %v3511
      %v3513 = vsel %vm3493, %v3310, 0.0
      %v3514 = vadd.f32 %v3512, %v3513
      %v3515 = vsel %vm3493, %v3311, 0.0
      %v3516 = vadd.f32 %v3514, %v3515
      %v3517 = vsel %vm3493, %v3312, 0.0
      %v3518 = vadd.f32 %v3516, %v3517
      %v3519 = vsel %vm3493, %v3313, 0.0
      %v3520 = vadd.f32 %v3518, %v3519
      %v3521 = vsel %vm3493, %v3314, 0.0
      %v3522 = vadd.f32 %v3520, %v3521
      %v3523 = vsel %vm3493, %v3315, 0.0
      %v3524 = vadd.f32 %v3522, %v3523
      %v3525 = vsel %vm3493, %v3316, 0.0
      %v3526 = vadd.f32 %v3524, %v3525
      %v3527 = vsel %vm3493, %v3317, 0.0
      %v3528 = vadd.f32 %v3526, %v3527
      %v3529 = vsel %vm3493, %v3318, 0.0
      %v3530 = vadd.f32 %v3528, %v3529
      %v3531 = vsel %vm3493, %v3319, 0.0
      %v3532 = vadd.f32 %v3530, %v3531
      %v3533 = vsel %vm3493, %v3320, 0.0
      %v3534 = vadd.f32 %v3532, %v3533
      %v3535 = vsel %vm3493, %v3321, 0.0
      %v3536 = vadd.f32 %v3534, %v3535
      %v3537 = vsel %vm3493, %v3322, 0.0
      %v3538 = vadd.f32 %v3536, %v3537
      %v3539 = vsel %vm3493, %v3323, 0.0
      %v3540 = vadd.f32 %v3538, %v3539
      %v3541 = vsel %vm3493, %v3324, 0.0
      %v3542 = vadd.f32 %v3540, %v3541
      %v3543 = vsel %vm3493, %v3325, 0.0
      %v3544 = vadd.f32 %v3542, %v3543
      %v3545 = vsel %vm3493, %v3326, 0.0
      %v3546 = vadd.f32 %v3544, %v3545
      %v3547 = vsel %vm3493, %v3327, 0.0
      %v3548 = vadd.f32 %v3546, %v3547
      %v3549 = vsel %vm3493, %v3328, 0.0
      %v3550 = vadd.f32 %v3548, %v3549
      %v3551 = vsel %vm3493, %v3329, 0.0
      %v3552 = vadd.f32 %v3550, %v3551
      %v3553 = vsel %vm3493, %v3330, 0.0
      %v3554 = vadd.f32 %v3552, %v3553
      %v3555 = vsel %vm3493, %v3331, 0.0
      %v3556 = vadd.f32 %v3554, %v3555
      %v3557 = vrot.slane %v3556, 4
      %v3558 = vadd.f32 %v3556, %v3557
      %v3559 = vrot.slane %v3558, 2
      %v3560 = vadd.f32 %v3558, %v3559
      %v3561 = vrot.slane %v3560, 1
      %v3562 = vadd.f32 %v3560, %v3561
      %vm3563 = vcmask 24576
      %3564 = vst.msk [vmem:[%s465] sm:$0x1] %vm3563, %v3562
      %v3565 = vmul.f32 %v3300, %v3300
      %v3566 = vmul.f32 %v3301, %v3301
      %v3567 = vmul.f32 %v3302, %v3302
      %v3568 = vmul.f32 %v3303, %v3303
      %v3569 = vmul.f32 %v3304, %v3304
      %v3570 = vmul.f32 %v3305, %v3305
      %v3571 = vmul.f32 %v3306, %v3306
      %v3572 = vmul.f32 %v3307, %v3307
      %v3573 = vmul.f32 %v3308, %v3308
      %v3574 = vmul.f32 %v3309, %v3309
      %v3575 = vmul.f32 %v3310, %v3310
      %v3576 = vmul.f32 %v3311, %v3311
      %v3577 = vmul.f32 %v3312, %v3312
      %v3578 = vmul.f32 %v3313, %v3313
      %v3579 = vmul.f32 %v3314, %v3314
      %v3580 = vmul.f32 %v3315, %v3315
      %v3581 = vmul.f32 %v3316, %v3316
      %v3582 = vmul.f32 %v3317, %v3317
      %v3583 = vmul.f32 %v3318, %v3318
      %v3584 = vmul.f32 %v3319, %v3319
      %v3585 = vmul.f32 %v3320, %v3320
      %v3586 = vmul.f32 %v3321, %v3321
      %v3587 = vmul.f32 %v3322, %v3322
      %v3588 = vmul.f32 %v3323, %v3323
      %v3589 = vmul.f32 %v3324, %v3324
      %v3590 = vmul.f32 %v3325, %v3325
      %v3591 = vmul.f32 %v3326, %v3326
      %v3592 = vmul.f32 %v3327, %v3327
      %v3593 = vmul.f32 %v3328, %v3328
      %v3594 = vmul.f32 %v3329, %v3329
      %v3595 = vmul.f32 %v3330, %v3330
      %v3596 = vmul.f32 %v3331, %v3331
      %v3597 = vsel %vm3493, %v3565, 0.0
      %v3598 = vsel %vm3493, %v3566, 0.0
      %v3599 = vadd.f32 %v3597, %v3598
      %v3600 = vsel %vm3493, %v3567, 0.0
      %v3601 = vadd.f32 %v3599, %v3600
      %v3602 = vsel %vm3493, %v3568, 0.0
      %v3603 = vadd.f32 %v3601, %v3602
      %v3604 = vsel %vm3493, %v3569, 0.0
      %v3605 = vadd.f32 %v3603, %v3604
      %v3606 = vsel %vm3493, %v3570, 0.0
      %v3607 = vadd.f32 %v3605, %v3606
      %v3608 = vsel %vm3493, %v3571, 0.0
      %v3609 = vadd.f32 %v3607, %v3608
      %v3610 = vsel %vm3493, %v3572, 0.0
      %v3611 = vadd.f32 %v3609, %v3610
      %v3612 = vsel %vm3493, %v3573, 0.0
      %v3613 = vadd.f32 %v3611, %v3612
      %v3614 = vsel %vm3493, %v3574, 0.0
      %v3615 = vadd.f32 %v3613, %v3614
      %v3616 = vsel %vm3493, %v3575, 0.0
      %v3617 = vadd.f32 %v3615, %v3616
      %v3618 = vsel %vm3493, %v3576, 0.0
      %v3619 = vadd.f32 %v3617, %v3618
      %v3620 = vsel %vm3493, %v3577, 0.0
      %v3621 = vadd.f32 %v3619, %v3620
      %v3622 = vsel %vm3493, %v3578, 0.0
      %v3623 = vadd.f32 %v3621, %v3622
      %v3624 = vsel %vm3493, %v3579, 0.0
      %v3625 = vadd.f32 %v3623, %v3624
      %v3626 = vsel %vm3493, %v3580, 0.0
      %v3627 = vadd.f32 %v3625, %v3626
      %v3628 = vsel %vm3493, %v3581, 0.0
      %v3629 = vadd.f32 %v3627, %v3628
      %v3630 = vsel %vm3493, %v3582, 0.0
      %v3631 = vadd.f32 %v3629, %v3630
      %v3632 = vsel %vm3493, %v3583, 0.0
      %v3633 = vadd.f32 %v3631, %v3632
      %v3634 = vsel %vm3493, %v3584, 0.0
      %v3635 = vadd.f32 %v3633, %v3634
      %v3636 = vsel %vm3493, %v3585, 0.0
      %v3637 = vadd.f32 %v3635, %v3636
      %v3638 = vsel %vm3493, %v3586, 0.0
      %v3639 = vadd.f32 %v3637, %v3638
      %v3640 = vsel %vm3493, %v3587, 0.0
      %v3641 = vadd.f32 %v3639, %v3640
      %v3642 = vsel %vm3493, %v3588, 0.0
      %v3643 = vadd.f32 %v3641, %v3642
      %v3644 = vsel %vm3493, %v3589, 0.0
      %v3645 = vadd.f32 %v3643, %v3644
      %v3646 = vsel %vm3493, %v3590, 0.0
      %v3647 = vadd.f32 %v3645, %v3646
      %v3648 = vsel %vm3493, %v3591, 0.0
      %v3649 = vadd.f32 %v3647, %v3648
      %v3650 = vsel %vm3493, %v3592, 0.0
      %v3651 = vadd.f32 %v3649, %v3650
      %v3652 = vsel %vm3493, %v3593, 0.0
      %v3653 = vadd.f32 %v3651, %v3652
      %v3654 = vsel %vm3493, %v3594, 0.0
      %v3655 = vadd.f32 %v3653, %v3654
      %v3656 = vsel %vm3493, %v3595, 0.0
      %v3657 = vadd.f32 %v3655, %v3656
      %v3658 = vsel %vm3493, %v3596, 0.0
      %v3659 = vadd.f32 %v3657, %v3658
      %v3660 = vrot.slane %v3659, 4
      %v3661 = vadd.f32 %v3659, %v3660
      %v3662 = vrot.slane %v3661, 2
      %v3663 = vadd.f32 %v3661, %v3662
      %v3664 = vrot.slane %v3663, 1
      %v3665 = vadd.f32 %v3663, %v3664
      %3666 = vst.msk [vmem:[%s465 + $0x1] sm:$0x1] %vm3563, %v3665
      %s3667 = smul.u32 16, %s24
      %p3668 = scmp.lt.s32.totalorder %s23, 1
      %s3669 = scalar_select %p3668, %s23, 1
      %p3670 = scmp.lt.s32.totalorder %s3667, 15
      %s3671 = scalar_select %p3670, %s3667, 15
      %s3672 = smul.addr %s3671, 2
      %s3673 = smul.addr %s3669, 32
      %s3674 = sadd.s32 %s3672, %s3673
      %s3675 = smul.addr %s3674, 4
      %s3676 = scalar_lea.vmem %s6, %s3675
      %p3677 = scmp.lt.s32.totalorder %s23, 1
      %s3678 = scalar_select %p3677, %s23, 1
      %p3679 = scmp.lt.s32.totalorder %s24, 0
      %s3680 = scalar_select %p3679, %s24, 0
      %s3681 = sadd.s32 %s3680, %s3678
      %s3682 = smul.addr %s3681, 2
      %s3683 = scalar_lea.vmem %s7, %s3682
      // Predicated region
      $region45: #{double_conv_forward.4} parent=43 // pred_check
        %p3684 = pneg %p214
      $region46: #{double_conv_forward.4} parent=43 // pred_check_branch
        %3686 = sbr.rel (%p3684) target = $region48
      $region47: #{double_conv_forward.4} parent=43 // pred_region
        %s3687 = smul.u32 16, %s24
      $region48: #{double_conv_forward.4} parent=43 // pred_fallthru
        _
      // Predicated region
      $region49: #{double_conv_forward.4} parent=43 // pred_check
        %p3688 = pneg %p242
      $region50: #{double_conv_forward.4} parent=43 // pred_check_branch
        %3690 = sbr.rel (%p3688) target = $region52
      $region51: #{double_conv_forward.4} parent=43 // pred_region
        _
      $region52: #{double_conv_forward.4} parent=43 // pred_fallthru
        _
    $region44: #{double_conv_forward.4} parent=5 // pred_fallthru
      _
    %p3691 = scmp.le.s32.totalorder 2, %s14
    // Predicated region
    $region53: #{double_conv_forward.4} parent=5 // pred_check
      %p3692 = pneg %p3691
    $region54: #{double_conv_forward.4} parent=5 // pred_check_branch
      %3694 = sbr.rel (%p3692) target = $region56
    $region55: #{double_conv_forward.4} parent=5 // pred_region
      %s3695 = ssub.s32 %s14, 2
      // Predicated region
      $region57: #{double_conv_forward.4} parent=55 // pred_check
        %p3696 = pneg %p220
      $region58: #{double_conv_forward.4} parent=55 // pred_check_branch
        %3698 = sbr.rel (%p3696) target = $region60
      $region59: #{double_conv_forward.4} parent=55 // pred_region
        %s3699 = smul.u32 16, %s26
        %p3700 = scmp.lt.s32.totalorder %s25, 1
        %s3701 = scalar_select %p3700, %s25, 1
        %p3702 = scmp.lt.s32.totalorder %s3699, 15
        %s3703 = scalar_select %p3702, %s3699, 15
        %s3704 = smul.addr %s3703, 2
        %s3705 = smul.addr %s3701, 32
        %s3706 = sadd.s32 %s3704, %s3705
        %s3707 = smul.addr %s3706, 4
        %s3708 = scalar_lea.vmem %s6, %s3707
      $region60: #{double_conv_forward.4} parent=55 // pred_fallthru
        _
      // Predicated region
      $region61: #{double_conv_forward.4} parent=55 // pred_check
        %p3709 = pneg %p248
      $region62: #{double_conv_forward.4} parent=55 // pred_check_branch
        %3711 = sbr.rel (%p3709) target = $region64
      $region63: #{double_conv_forward.4} parent=55 // pred_region
        %p3712 = scmp.lt.s32.totalorder %s25, 1
        %s3713 = scalar_select %p3712, %s25, 1
        %p3714 = scmp.lt.s32.totalorder %s26, 0
        %s3715 = scalar_select %p3714, %s26, 0
        %s3716 = sadd.s32 %s3715, %s3713
        %s3717 = smul.addr %s3716, 2
        %s3718 = scalar_lea.vmem %s7, %s3717
      $region64: #{double_conv_forward.4} parent=55 // pred_fallthru
        _
    $region56: #{double_conv_forward.4} parent=5 // pred_fallthru
      _
  $region6: #{double_conv_forward.4} parent=0 // loop_footer
    %s18 = sadd.s32 1, %s14
  $region7: #{double_conv_forward.4} parent=0 // loop_footer_branch
    %13 = sbr.rel target = $region3
  $region8: #{double_conv_forward.4} parent=0 // loop_exit
    _

</llo_original>
